<compile_context>
chip_gen: v5e
topology: v5e:2x2
jax: 0.10.0
libtpu: 0.0.40
codegen_flags: <defaults>
</compile_context>

<pallas_src>
import functools
import math

import jax
import jax.numpy as jnp
from jax import lax
from jax.experimental import pallas as pl
from jax.experimental.pallas import tpu as pltpu

# Small synthetic channel counts (the real model uses M=96, N=64).
OUT_CHANNEL_M = 8
OUT_CHANNEL_N = 16
OUT_CHANNELS = 5

_VMEM_LIMIT = 32 * 1024 * 1024          # portable across v5e / v6e / v7x
_TILE_BUDGET = 4 * 1024 * 1024          # per-tile working-set target


def _pick_tile_h(h, w, cin, cout, budget_bytes=_TILE_BUDGET):
    """Largest divisor TH of h whose (double-buffered) tile fits the budget."""
    best = 1
    for th in range(1, h + 1):
        if h % th:
            continue
        tile_bytes = 4 * (2 * (th * w * cin + 2 * w * cin + th * w * cout)
                          + (th + 2) * (w + 2) * cin)
        if tile_bytes <= budget_bytes:
            best = th
    return best


# ----------------------------------------------------------------------------
# Pallas kernels
# ----------------------------------------------------------------------------
def _conv3x3_same_igdn_kernel(x_ref, xt_ref, xb_ref, w_ref, b_ref, g_ref,
                              bt_ref, o_ref, xpad_ref):
    """Fused 3x3 SAME conv (== stride-1 deconv) + inverse GDN, one row tile.

    x_ref  : (1, TH, W, Cin)     current row tile
    xt_ref : (1, 1,  W, Cin)     top halo (previous tile's last row)
    xb_ref : (1, 1,  W, Cin)     bottom halo (next tile's first row)
    w_ref  : (3, 3, Cin, Cout)   HWIO (already spatially flipped)
    b_ref  : (1, Cout)
    g_ref  : (Cout, Cout)        gamma^T  (norm = x^2 @ g + beta)
    bt_ref : (1, Cout)           beta
    o_ref  : (1, TH, W, Cout)
    xpad_ref: VMEM scratch (TH+2, W+2, Cin) -- zero padding done on-chip.
    """
    THp, Wp, Cin = xpad_ref.shape
    TH, W = THp - 2, Wp - 2
    Cout = o_ref.shape[-1]
    dt = xpad_ref.dtype
    t = pl.program_id(1)
    nt = pl.num_programs(1)

    # Assemble the padded tile in VMEM: only halo cells get zero-filled.
    zcol = jnp.zeros((THp, 1, Cin), dt)
    xpad_ref[:, 0:1, :] = zcol
    xpad_ref[:, W + 1:W + 2, :] = zcol
    zrow = jnp.zeros((1, W, Cin), dt)
    top = jnp.where(t > 0, xt_ref[0].astype(dt), zrow)
    bot = jnp.where(t + 1 < nt, xb_ref[0].astype(dt), zrow)
    xpad_ref[0:1, 1:W + 1, :] = top
    xpad_ref[TH + 1:TH + 2, 1:W + 1, :] = bot
    xpad_ref[1:TH + 1, 1:W + 1, :] = x_ref[0].astype(dt)

    acc = jnp.zeros((TH * W, Cout), jnp.float32)
    for dy in range(3):
        for dx in range(3):
            patch = xpad_ref[dy:dy + TH, dx:dx + W, :].reshape(TH * W, Cin)
            acc = acc + jnp.dot(patch, w_ref[dy, dx],
                                preferred_element_type=jnp.float32)
    acc = acc + b_ref[...]

    # inverse GDN: y = x * sqrt(beta + x^2 @ gamma^T)   (sqrt -> EUP slot)
    norm = jnp.dot(acc * acc, g_ref[...], preferred_element_type=jnp.float32)
    acc = acc * jnp.sqrt(norm + bt_ref[...])

    o_ref[...] = acc.reshape(1, TH, W, Cout).astype(o_ref.dtype)


def _subpixel_deconv_kernel(apply_igdn, x_ref, xh_ref, w_ref, b_ref, *rest):
    """Sub-pixel stride-2 ConvTranspose2d (+ optional fused inverse GDN).

    Works on the ORIGINAL (un-dilated) input row tile; all 4 output phases are
    produced at once in a packed channel layout:
        out_phase[r, c, (py*2+px)*Cout + co] == deconv_out[2r+py, 2c+px, co]

    x_ref : (1, TH, W, Cin)        current row tile
    xh_ref: (1, 1,  W, Cin)        next tile's first row (bottom halo)
    w_ref : (2, 2, Cin, 4*Cout)    per-tap phase-packed weights
    b_ref : (1, 4*Cout)            bias tiled over the 4 phases
    if apply_igdn: g_ref (4C,4C) block-diag gamma^T, bt_ref (1,4C) tiled beta
    o_ref : (1, TH, W, 4*Cout)
    xpad_ref: VMEM scratch (TH+1, W+1, Cin)
    """
    if apply_igdn:
        g_ref, bt_ref, o_ref, xpad_ref = rest
    else:
        o_ref, xpad_ref = rest

    THp, Wp, Cin = xpad_ref.shape
    TH, W = THp - 1, Wp - 1
    C4 = o_ref.shape[-1]
    dt = xpad_ref.dtype
    t = pl.program_id(1)
    nt = pl.num_programs(1)

    # On-chip padding: right halo column is always zero; bottom halo row is
    # the next tile's first row (zero at the image bottom boundary).
    xpad_ref[:, W:W + 1, :] = jnp.zeros((THp, 1, Cin), dt)
    halo = jnp.where(t + 1 < nt, xh_ref[0].astype(dt),
                     jnp.zeros((1, W, Cin), dt))
    xpad_ref[TH:TH + 1, 0:W, :] = halo
    xpad_ref[0:TH, 0:W, :] = x_ref[0].astype(dt)

    acc = jnp.zeros((TH * W, C4), jnp.float32)
    for dy in range(2):
        for dx in range(2):
            patch = xpad_ref[dy:dy + TH, dx:dx + W, :].reshape(TH * W, Cin)
            acc = acc + jnp.dot(patch, w_ref[dy, dx],
                                preferred_element_type=jnp.float32)
    acc = acc + b_ref[...]

    if apply_igdn:
        norm = jnp.dot(acc * acc, g_ref[...],
                       preferred_element_type=jnp.float32)
        acc = acc * jnp.sqrt(norm + bt_ref[...])

    o_ref[...] = acc.reshape(1, TH, W, C4).astype(o_ref.dtype)


# ----------------------------------------------------------------------------
# Wrappers around pallas_call
# ----------------------------------------------------------------------------
def conv3x3_same_igdn_pallas(x, w_hwio, bias, gamma_t, beta):
    B, H, W, Cin = x.shape
    Cout = w_hwio.shape[-1]
    TH = _pick_tile_h(H, W, Cin, Cout)
    nt = H // TH

    flops = 2 * B * H * W * Cin * Cout * 9 + 2 * B * H * W * Cout * Cout
    bytes_accessed = 4 * (x.size + w_hwio.size + gamma_t.size
                          + B * H * W * Cout)

    return pl.pallas_call(
        _conv3x3_same_igdn_kernel,
        out_shape=jax.ShapeDtypeStruct((B, H, W, Cout), x.dtype),
        grid=(B, nt),
        in_specs=[
            pl.BlockSpec((1, TH, W, Cin), lambda b, t: (b, t, 0, 0)),
            # top halo: previous tile's last row (clamped; masked in-kernel)
            pl.BlockSpec((1, 1, W, Cin),
                         lambda b, t: (b, jnp.maximum(t * TH - 1, 0), 0, 0)),
            # bottom halo: next tile's first row (clamped; masked in-kernel)
            pl.BlockSpec((1, 1, W, Cin),
                         lambda b, t: (b, jnp.minimum((t + 1) * TH, H - 1),
                                       0, 0)),
            pl.BlockSpec((3, 3, Cin, Cout), lambda b, t: (0, 0, 0, 0)),
            pl.BlockSpec((1, Cout), lambda b, t: (0, 0)),
            pl.BlockSpec((Cout, Cout), lambda b, t: (0, 0)),
            pl.BlockSpec((1, Cout), lambda b, t: (0, 0)),
        ],
        out_specs=pl.BlockSpec((1, TH, W, Cout), lambda b, t: (b, t, 0, 0)),
        scratch_shapes=[pltpu.VMEM((TH + 2, W + 2, Cin), jnp.float32)],
        compiler_params=pltpu.CompilerParams(
            dimension_semantics=("parallel", "parallel"),
            vmem_limit_bytes=_VMEM_LIMIT),
        cost_estimate=pl.CostEstimate(
            flops=flops, transcendentals=B * H * W * Cout,
            bytes_accessed=bytes_accessed),
    )(x, x, x, w_hwio, bias, gamma_t, beta)


def subpixel_deconv_pallas(x, w_taps, bias4, g4=None, beta4=None):
    """Stride-2 deconv (sub-pixel form), output in phase layout (B,H,W,4*Cout)."""
    B, H, W, Cin = x.shape
    C4 = w_taps.shape[-1]
    TH = _pick_tile_h(H, W, Cin, C4)
    nt = H // TH
    apply_igdn = g4 is not None

    kernel = functools.partial(_subpixel_deconv_kernel, apply_igdn)

    in_specs = [
        pl.BlockSpec((1, TH, W, Cin), lambda b, t: (b, t, 0, 0)),
        # one-row bottom halo (next tile's first row; clamped here, masked to
        # zero inside the kernel at the bottom image boundary).
        pl.BlockSpec((1, 1, W, Cin),
                     lambda b, t: (b, jnp.minimum((t + 1) * TH, H - 1), 0, 0)),
        pl.BlockSpec((2, 2, Cin, C4), lambda b, t: (0, 0, 0, 0)),
        pl.BlockSpec((1, C4), lambda b, t: (0, 0)),
    ]
    args = [x, x, w_taps, bias4]
    if apply_igdn:
        in_specs += [
            pl.BlockSpec((C4, C4), lambda b, t: (0, 0)),
            pl.BlockSpec((1, C4), lambda b, t: (0, 0)),
        ]
        args += [g4, beta4]

    flops = 2 * B * H * W * Cin * C4 * 4
    trans = 0
    if apply_igdn:
        flops += 2 * B * H * W * C4 * C4
        trans = B * H * W * C4
    bytes_accessed = 4 * (x.size + w_taps.size + B * H * W * C4
                          + (C4 * C4 if apply_igdn else 0))

    return pl.pallas_call(
        kernel,
        out_shape=jax.ShapeDtypeStruct((B, H, W, C4), x.dtype),
        grid=(B, nt),
        in_specs=in_specs,
        out_specs=pl.BlockSpec((1, TH, W, C4), lambda b, t: (b, t, 0, 0)),
        scratch_shapes=[pltpu.VMEM((TH + 1, W + 1, Cin), jnp.float32)],
        compiler_params=pltpu.CompilerParams(
            dimension_semantics=("parallel", "parallel"),
            vmem_limit_bytes=_VMEM_LIMIT),
        cost_estimate=pl.CostEstimate(
            flops=flops, transcendentals=trans,
            bytes_accessed=bytes_accessed),
    )(*args)


def _pixel_shuffle_2x(y_phase):
    """(B, H, W, 4*C) phase layout -> (B, 2H, 2W, C) spatial layout."""
    B, H, W, C4 = y_phase.shape
    C = C4 // 4
    y = y_phase.reshape(B, H, W, 2, 2, C)
    y = jnp.transpose(y, (0, 1, 3, 2, 4, 5))
    return y.reshape(B, 2 * H, 2 * W, C)


# ----------------------------------------------------------------------------
# One-time parameter preparation (hoisted out of the per-call path)
# ----------------------------------------------------------------------------
def _convT_weight_to_hwio(w_t):
    # PyTorch ConvTranspose2d weight (Cin, Cout, kH, kW) -> equivalent forward
    # conv weight (HWIO): spatial flip + transpose.  (stride-1 case)
    return jnp.transpose(w_t[:, :, ::-1, ::-1], (2, 3, 0, 1))


def _convT_weight_to_subpixel_taps(w_t):
    """(Cin, Cout, 3, 3) transposed-conv weight -> (2, 2, Cin, 4*Cout) taps.

    For stride=2, padding=1, output_padding=1:
      out[2r+py, 2c+px, co] = sum_{dy,dx in {0,1}} in[r+dy, c+dx, :]
                              @ taps[dy, dx, :, (py*2+px)*Cout + co]
    with taps[dy,dx,:,p*Cout+co] = w_t[:, co, py-2*dy+1, px-2*dx+1] (0 if OOB).
    """
    Cin, Cout = w_t.shape[0], w_t.shape[1]
    taps = jnp.zeros((2, 2, Cin, 4, Cout), w_t.dtype)
    for dy in range(2):
        for dx in range(2):
            for py in range(2):
                for px in range(2):
                    ky, kx = py - 2 * dy + 1, px - 2 * dx + 1
                    if 0 <= ky < 3 and 0 <= kx < 3:
                        taps = taps.at[dy, dx, :, py * 2 + px, :].set(
                            w_t[:, :, ky, kx])
    return taps.reshape(2, 2, Cin, 4 * Cout)


def prepare_decoder_params(p):
    prep = {}
    prep["w1"] = _convT_weight_to_hwio(p["w1"])
    prep["b1"] = p["b1"].reshape(1, -1)
    prep["g1"] = jnp.transpose(p["gdn1_gamma"])
    prep["beta1"] = p["gdn1_beta"].reshape(1, -1)
    for i in (2, 3, 4):
        prep[f"w{i}"] = _convT_weight_to_subpixel_taps(p[f"w{i}"])
        prep[f"b{i}"] = jnp.tile(p[f"b{i}"], 4).reshape(1, -1)
    for i in (2, 3):
        # block-diagonal gamma^T so the IGDN matmul works in the phase layout
        prep[f"g{i}"] = jnp.kron(jnp.eye(4, dtype=jnp.float32),
                                 jnp.transpose(p[f"gdn{i}_gamma"]))
        prep[f"beta{i}"] = jnp.tile(p[f"gdn{i}_beta"], 4).reshape(1, -1)
    return prep


# ----------------------------------------------------------------------------
# Full forward (NCHW in, NCHW out -- matches the PyTorch module)
# ----------------------------------------------------------------------------
def semantic_decoder_forward(x_nchw, prep):
    x = jnp.transpose(x_nchw, (0, 2, 3, 1))  # -> NHWC
    x = conv3x3_same_igdn_pallas(x, prep["w1"], prep["b1"],
                                 prep["g1"], prep["beta1"])
    y = subpixel_deconv_pallas(x, prep["w2"], prep["b2"],
                               prep["g2"], prep["beta2"])
    x = _pixel_shuffle_2x(y)
    y = subpixel_deconv_pallas(x, prep["w3"], prep["b3"],
                               prep["g3"], prep["beta3"])
    x = _pixel_shuffle_2x(y)
    y = subpixel_deconv_pallas(x, prep["w4"], prep["b4"])  # no IGDN
    x = _pixel_shuffle_2x(y)
    return jnp.transpose(x, (0, 3, 1, 2))  # -> NCHW


# ----------------------------------------------------------------------------
# Pure-JAX reference (independent dilate+pad+conv formulation)
# ----------------------------------------------------------------------------
def _prep_deconv_input(x_nhwc, stride, padding, output_padding, k=3):
    B, H, W, C = x_nhwc.shape
    if stride > 1:
        Hd, Wd = (H - 1) * stride + 1, (W - 1) * stride + 1
        xd = jnp.zeros((B, Hd, Wd, C), x_nhwc.dtype)
        xd = xd.at[:, ::stride, ::stride, :].set(x_nhwc)
    else:
        xd = x_nhwc
    lo = k - 1 - padding
    hi = k - 1 - padding + output_padding
    return jnp.pad(xd, ((0, 0), (lo, hi), (lo, hi), (0, 0)))


def deconv_ref(x_nhwc, w_t, b, stride, padding, output_padding):
    xp = _prep_deconv_input(x_nhwc, stride, padding, output_padding)
    w = _convT_weight_to_hwio(w_t)
    out = lax.conv_general_dilated(
        xp, w, window_strides=(1, 1), padding="VALID",
        dimension_numbers=("NHWC", "HWIO", "NHWC"))
    return out + b.reshape(1, 1, 1, -1)


def igdn_ref(x, gamma, beta):
    norm = jnp.einsum("bhwj,ij->bhwi", x * x, gamma) + beta.reshape(1, 1, 1, -1)
    return x * jnp.sqrt(norm)


def semantic_decoder_forward_ref(x_nchw, params):
    x = jnp.transpose(x_nchw, (0, 2, 3, 1))
    x = deconv_ref(x, params["w1"], params["b1"], 1, 1, 0)
    x = igdn_ref(x, params["gdn1_gamma"], params["gdn1_beta"])
    x = deconv_ref(x, params["w2"], params["b2"], 2, 1, 1)
    x = igdn_ref(x, params["gdn2_gamma"], params["gdn2_beta"])
    x = deconv_ref(x, params["w3"], params["b3"], 2, 1, 1)
    x = igdn_ref(x, params["gdn3_gamma"], params["gdn3_beta"])
    x = deconv_ref(x, params["w4"], params["b4"], 2, 1, 1)
    return jnp.transpose(x, (0, 3, 1, 2))


# ----------------------------------------------------------------------------
# Parameter init (deterministic, synthetic xavier-normal-like)
# ----------------------------------------------------------------------------
def _xavier_normal(key, shape, gain):
    # shape = (Cin, Cout, kH, kW) (PyTorch ConvTranspose2d layout)
    fan_in = shape[1] * shape[2] * shape[3]
    fan_out = shape[0] * shape[2] * shape[3]
    std = gain * math.sqrt(2.0 / (fan_in + fan_out))
    return std * jax.random.normal(key, shape, dtype=jnp.float32)


def init_params(key, M=OUT_CHANNEL_M, N=OUT_CHANNEL_N, C_out=OUT_CHANNELS):
    ks = jax.random.split(key, 8)
    p = {}
    p["w1"] = _xavier_normal(ks[0], (M, N, 3, 3),
                             math.sqrt(2 * 1 * (M + N) / (M + M)))
    p["b1"] = jnp.full((N,), 0.01, jnp.float32)
    p["w2"] = _xavier_normal(ks[1], (N, N, 3, 3), math.sqrt(2.0))
    p["b2"] = jnp.full((N,), 0.01, jnp.float32)
    p["w3"] = _xavier_normal(ks[2], (N, N, 3, 3), math.sqrt(2.0))
    p["b3"] = jnp.full((N,), 0.01, jnp.float32)
    p["w4"] = _xavier_normal(ks[3], (N, C_out, 3, 3),
                             math.sqrt(2 * 1 * (N + 3) / (N + N)))
    p["b4"] = jnp.full((C_out,), 0.01, jnp.float32)
    # GDN (inverse) params: beta = 1, gamma = 0.1*I + small non-negative,
    # NON-symmetric perturbation (exercises the gamma-transpose path).
    for idx, i in enumerate((1, 2, 3)):
        noise = 0.01 * jnp.abs(jax.random.normal(ks[4 + idx], (N, N),
                                                 dtype=jnp.float32))
        p[f"gdn{i}_gamma"] = 0.1 * jnp.eye(N, dtype=jnp.float32) + noise
        p[f"gdn{i}_beta"] = jnp.ones((N,), jnp.float32)
    return p


if __name__ == "__main__":
    key = jax.random.PRNGKey(0)
    k_x, k_p = jax.random.split(key)

    B, H, W = 2, 8, 8
    x = jax.random.normal(k_x, (B, OUT_CHANNEL_M, H, W), dtype=jnp.float32)
    params = init_params(k_p)
    prep = prepare_decoder_params(params)

    fwd = jax.jit(lambda a: semantic_decoder_forward(a, prep))
    out = jax.block_until_ready(fwd(x))

    ref_fn = jax.jit(lambda a: semantic_decoder_forward_ref(a, params))
    ref = jax.block_until_ready(ref_fn(x))

    assert out.shape == (B, OUT_CHANNELS, 8 * H, 8 * W), out.shape
    assert jnp.all(jnp.isfinite(out))
    max_err = float(jnp.max(jnp.abs(out - ref)))
    assert jnp.allclose(out, ref, rtol=1e-3, atol=1e-3), max_err

    print("KERNEL_OK")
</pallas_src>

<mosaic_0001>
module attributes {stable_mosaic.version = 11 : i64} {
  func.func @_conv3x3_same_igdn_kernel(%arg0: i32, %arg1: i32, %arg2: memref<1x8x8x8xf32, #tpu.memory_space<vmem>>, %arg3: memref<1x1x8x8xf32, #tpu.memory_space<vmem>>, %arg4: memref<1x1x8x8xf32, #tpu.memory_space<vmem>>, %arg5: memref<3x3x8x16xf32, #tpu.memory_space<vmem>>, %arg6: memref<1x16xf32, #tpu.memory_space<vmem>>, %arg7: memref<16x16xf32, #tpu.memory_space<vmem>>, %arg8: memref<1x16xf32, #tpu.memory_space<vmem>>, %arg9: memref<1x8x8x16xf32, #tpu.memory_space<vmem>>, %arg10: memref<10x10x8xf32, #tpu.memory_space<vmem>>) attributes {dimension_semantics = [#tpu.dimension_semantics<parallel>, #tpu.dimension_semantics<parallel>], iteration_bounds = array<i64: 2, 1>, scalar_prefetch = 0 : i64, scratch_operands = 1 : i64, tpu.core_type = #tpu.core_type<tc>, window_params = [{transform_indices = @transform_0, window_bounds = array<i64: 1, 8, 8, 8>}, {transform_indices = @transform_1, window_bounds = array<i64: 1, 1, 8, 8>}, {transform_indices = @transform_2, window_bounds = array<i64: 1, 1, 8, 8>}, {pipeline_mode = #tpu.pipeline_mode<synchronous>, transform_indices = @transform_3, window_bounds = array<i64: 3, 3, 8, 16>}, {pipeline_mode = #tpu.pipeline_mode<synchronous>, transform_indices = @transform_4, window_bounds = array<i64: 1, 16>}, {pipeline_mode = #tpu.pipeline_mode<synchronous>, transform_indices = @transform_5, window_bounds = array<i64: 16, 16>}, {pipeline_mode = #tpu.pipeline_mode<synchronous>, transform_indices = @transform_6, window_bounds = array<i64: 1, 16>}, {transform_indices = @transform_7, window_bounds = array<i64: 1, 8, 8, 16>}]} {
    %cst = arith.constant 0.000000e+00 : f32
    %0 = vector.broadcast %cst : f32 to vector<10x1x8xf32>
    %c0 = arith.constant 0 : index
    %c0_0 = arith.constant 0 : index
    %c0_1 = arith.constant 0 : index
    %1 = vector.load %arg10[%c0, %c0_0, %c0_1] : memref<10x10x8xf32, #tpu.memory_space<vmem>>, vector<10x1x8xf32>
    tpu.vector_store %arg10[%c0, %c0_0, %c0_1], %0 {strides = array<i32>} : memref<10x10x8xf32, #tpu.memory_space<vmem>>, vector<10x1x8xf32>,
    %c0_2 = arith.constant 0 : index
    %c9 = arith.constant 9 : index
    %c0_3 = arith.constant 0 : index
    %2 = vector.load %arg10[%c0_2, %c9, %c0_3] : memref<10x10x8xf32, #tpu.memory_space<vmem>>, vector<10x1x8xf32>
    tpu.vector_store %arg10[%c0_2, %c9, %c0_3], %0 {strides = array<i32>} : memref<10x10x8xf32, #tpu.memory_space<vmem>>, vector<10x1x8xf32>,
    %cst_4 = arith.constant 0.000000e+00 : f32
    %3 = vector.broadcast %cst_4 : f32 to vector<1x8x8xf32>
    %c0_i32 = arith.constant 0 : i32
    %4 = arith.cmpi sgt, %arg1, %c0_i32 : i32
    %c0_5 = arith.constant 0 : index
    %c0_6 = arith.constant 0 : index
    %c0_7 = arith.constant 0 : index
    %c0_8 = arith.constant 0 : index
    %5 = vector.load %arg3[%c0_5, %c0_6, %c0_7, %c0_8] : memref<1x1x8x8xf32, #tpu.memory_space<vmem>>, vector<1x1x8x8xf32>
    %6 = vector.shape_cast %5 : vector<1x1x8x8xf32> to vector<1x8x8xf32>
    %7 = arith.select %4, %6, %3 : vector<1x8x8xf32>
    %c1_i32 = arith.constant 1 : i32
    %8 = arith.addi %arg1, %c1_i32 : i32
    %c1_i32_9 = arith.constant 1 : i32
    %9 = arith.cmpi slt, %8, %c1_i32_9 : i32
    %c0_10 = arith.constant 0 : index
    %c0_11 = arith.constant 0 : index
    %c0_12 = arith.constant 0 : index
    %c0_13 = arith.constant 0 : index
    %10 = vector.load %arg4[%c0_10, %c0_11, %c0_12, %c0_13] : memref<1x1x8x8xf32, #tpu.memory_space<vmem>>, vector<1x1x8x8xf32>
    %11 = vector.shape_cast %10 : vector<1x1x8x8xf32> to vector<1x8x8xf32>
    %12 = arith.select %9, %11, %3 : vector<1x8x8xf32>
    %c0_14 = arith.constant 0 : index
    %c1 = arith.constant 1 : index
    %c0_15 = arith.constant 0 : index
    %13 = vector.load %arg10[%c0_14, %c1, %c0_15] : memref<10x10x8xf32, #tpu.memory_space<vmem>>, vector<1x8x8xf32>
    tpu.vector_store %arg10[%c0_14, %c1, %c0_15], %7 {strides = array<i32>} : memref<10x10x8xf32, #tpu.memory_space<vmem>>, vector<1x8x8xf32>,
    %c9_16 = arith.constant 9 : index
    %c1_17 = arith.constant 1 : index
    %c0_18 = arith.constant 0 : index
    %14 = vector.load %arg10[%c9_16, %c1_17, %c0_18] : memref<10x10x8xf32, #tpu.memory_space<vmem>>, vector<1x8x8xf32>
    tpu.vector_store %arg10[%c9_16, %c1_17, %c0_18], %12 {strides = array<i32>} : memref<10x10x8xf32, #tpu.memory_space<vmem>>, vector<1x8x8xf32>,
    %c0_19 = arith.constant 0 : index
    %c0_20 = arith.constant 0 : index
    %c0_21 = arith.constant 0 : index
    %c0_22 = arith.constant 0 : index
    %15 = vector.load %arg2[%c0_19, %c0_20, %c0_21, %c0_22] : memref<1x8x8x8xf32, #tpu.memory_space<vmem>>, vector<1x8x8x8xf32>
    %16 = vector.shape_cast %15 : vector<1x8x8x8xf32> to vector<8x8x8xf32>
    %c1_23 = arith.constant 1 : index
    %c1_24 = arith.constant 1 : index
    %c0_25 = arith.constant 0 : index
    %17 = vector.load %arg10[%c1_23, %c1_24, %c0_25] : memref<10x10x8xf32, #tpu.memory_space<vmem>>, vector<8x8x8xf32>
    tpu.vector_store %arg10[%c1_23, %c1_24, %c0_25], %16 {strides = array<i32>} : memref<10x10x8xf32, #tpu.memory_space<vmem>>, vector<8x8x8xf32>,
    %cst_26 = arith.constant 0.000000e+00 : f32
    %18 = vector.broadcast %cst_26 : f32 to vector<64x16xf32>
    %c0_27 = arith.constant 0 : index
    %c0_28 = arith.constant 0 : index
    %c0_29 = arith.constant 0 : index
    %19 = vector.load %arg10[%c0_27, %c0_28, %c0_29] : memref<10x10x8xf32, #tpu.memory_space<vmem>>, vector<8x8x8xf32>
    %20 = vector.shape_cast %19 : vector<8x8x8xf32> to vector<64x8xf32>
    %c0_30 = arith.constant 0 : index
    %c0_31 = arith.constant 0 : index
    %c0_32 = arith.constant 0 : index
    %c0_33 = arith.constant 0 : index
    %21 = vector.load %arg5[%c0_30, %c0_31, %c0_32, %c0_33] : memref<3x3x8x16xf32, #tpu.memory_space<vmem>>, vector<1x1x8x16xf32>
    %22 = vector.shape_cast %21 : vector<1x1x8x16xf32> to vector<8x16xf32>
    %cst_34 = arith.constant dense<0.000000e+00> : vector<64x16xf32>
    %23 = tpu.matmul %20, %22, %cst_34 {dimension_numbers = #tpu.dot_dimension_numbers<[1], [0], [0], [1], [0, 0, 1, 1], [], []>} : vector<64x8xf32>, vector<8x16xf32>, vector<64x16xf32> -> vector<64x16xf32>
    %24 = arith.addf %18, %23 : vector<64x16xf32>
    %c0_35 = arith.constant 0 : index
    %c1_36 = arith.constant 1 : index
    %c0_37 = arith.constant 0 : index
    %25 = vector.load %arg10[%c0_35, %c1_36, %c0_37] : memref<10x10x8xf32, #tpu.memory_space<vmem>>, vector<8x8x8xf32>
    %26 = vector.shape_cast %25 : vector<8x8x8xf32> to vector<64x8xf32>
    %c0_38 = arith.constant 0 : index
    %c1_39 = arith.constant 1 : index
    %c0_40 = arith.constant 0 : index
    %c0_41 = arith.constant 0 : index
    %27 = vector.load %arg5[%c0_38, %c1_39, %c0_40, %c0_41] : memref<3x3x8x16xf32, #tpu.memory_space<vmem>>, vector<1x1x8x16xf32>
    %28 = vector.shape_cast %27 : vector<1x1x8x16xf32> to vector<8x16xf32>
    %cst_42 = arith.constant dense<0.000000e+00> : vector<64x16xf32>
    %29 = tpu.matmul %26, %28, %cst_42 {dimension_numbers = #tpu.dot_dimension_numbers<[1], [0], [0], [1], [0, 0, 1, 1], [], []>} : vector<64x8xf32>, vector<8x16xf32>, vector<64x16xf32> -> vector<64x16xf32>
    %30 = arith.addf %24, %29 : vector<64x16xf32>
    %c0_43 = arith.constant 0 : index
    %c2 = arith.constant 2 : index
    %c0_44 = arith.constant 0 : index
    %31 = vector.load %arg10[%c0_43, %c2, %c0_44] : memref<10x10x8xf32, #tpu.memory_space<vmem>>, vector<8x8x8xf32>
    %32 = vector.shape_cast %31 : vector<8x8x8xf32> to vector<64x8xf32>
    %c0_45 = arith.constant 0 : index
    %c2_46 = arith.constant 2 : index
    %c0_47 = arith.constant 0 : index
    %c0_48 = arith.constant 0 : index
    %33 = vector.load %arg5[%c0_45, %c2_46, %c0_47, %c0_48] : memref<3x3x8x16xf32, #tpu.memory_space<vmem>>, vector<1x1x8x16xf32>
    %34 = vector.shape_cast %33 : vector<1x1x8x16xf32> to vector<8x16xf32>
    %cst_49 = arith.constant dense<0.000000e+00> : vector<64x16xf32>
    %35 = tpu.matmul %32, %34, %cst_49 {dimension_numbers = #tpu.dot_dimension_numbers<[1], [0], [0], [1], [0, 0, 1, 1], [], []>} : vector<64x8xf32>, vector<8x16xf32>, vector<64x16xf32> -> vector<64x16xf32>
    %36 = arith.addf %30, %35 : vector<64x16xf32>
    %c1_50 = arith.constant 1 : index
    %c0_51 = arith.constant 0 : index
    %c0_52 = arith.constant 0 : index
    %37 = vector.load %arg10[%c1_50, %c0_51, %c0_52] : memref<10x10x8xf32, #tpu.memory_space<vmem>>, vector<8x8x8xf32>
    %38 = vector.shape_cast %37 : vector<8x8x8xf32> to vector<64x8xf32>
    %c1_53 = arith.constant 1 : index
    %c0_54 = arith.constant 0 : index
    %c0_55 = arith.constant 0 : index
    %c0_56 = arith.constant 0 : index
    %39 = vector.load %arg5[%c1_53, %c0_54, %c0_55, %c0_56] : memref<3x3x8x16xf32, #tpu.memory_space<vmem>>, vector<1x1x8x16xf32>
    %40 = vector.shape_cast %39 : vector<1x1x8x16xf32> to vector<8x16xf32>
    %cst_57 = arith.constant dense<0.000000e+00> : vector<64x16xf32>
    %41 = tpu.matmul %38, %40, %cst_57 {dimension_numbers = #tpu.dot_dimension_numbers<[1], [0], [0], [1], [0, 0, 1, 1], [], []>} : vector<64x8xf32>, vector<8x16xf32>, vector<64x16xf32> -> vector<64x16xf32>
    %42 = arith.addf %36, %41 : vector<64x16xf32>
    %c1_58 = arith.constant 1 : index
    %c1_59 = arith.constant 1 : index
    %c0_60 = arith.constant 0 : index
    %43 = vector.load %arg10[%c1_58, %c1_59, %c0_60] : memref<10x10x8xf32, #tpu.memory_space<vmem>>, vector<8x8x8xf32>
    %44 = vector.shape_cast %43 : vector<8x8x8xf32> to vector<64x8xf32>
    %c1_61 = arith.constant 1 : index
    %c1_62 = arith.constant 1 : index
    %c0_63 = arith.constant 0 : index
    %c0_64 = arith.constant 0 : index
    %45 = vector.load %arg5[%c1_61, %c1_62, %c0_63, %c0_64] : memref<3x3x8x16xf32, #tpu.memory_space<vmem>>, vector<1x1x8x16xf32>
    %46 = vector.shape_cast %45 : vector<1x1x8x16xf32> to vector<8x16xf32>
    %cst_65 = arith.constant dense<0.000000e+00> : vector<64x16xf32>
    %47 = tpu.matmul %44, %46, %cst_65 {dimension_numbers = #tpu.dot_dimension_numbers<[1], [0], [0], [1], [0, 0, 1, 1], [], []>} : vector<64x8xf32>, vector<8x16xf32>, vector<64x16xf32> -> vector<64x16xf32>
    %48 = arith.addf %42, %47 : vector<64x16xf32>
    %c1_66 = arith.constant 1 : index
    %c2_67 = arith.constant 2 : index
    %c0_68 = arith.constant 0 : index
    %49 = vector.load %arg10[%c1_66, %c2_67, %c0_68] : memref<10x10x8xf32, #tpu.memory_space<vmem>>, vector<8x8x8xf32>
    %50 = vector.shape_cast %49 : vector<8x8x8xf32> to vector<64x8xf32>
    %c1_69 = arith.constant 1 : index
    %c2_70 = arith.constant 2 : index
    %c0_71 = arith.constant 0 : index
    %c0_72 = arith.constant 0 : index
    %51 = vector.load %arg5[%c1_69, %c2_70, %c0_71, %c0_72] : memref<3x3x8x16xf32, #tpu.memory_space<vmem>>, vector<1x1x8x16xf32>
    %52 = vector.shape_cast %51 : vector<1x1x8x16xf32> to vector<8x16xf32>
    %cst_73 = arith.constant dense<0.000000e+00> : vector<64x16xf32>
    %53 = tpu.matmul %50, %52, %cst_73 {dimension_numbers = #tpu.dot_dimension_numbers<[1], [0], [0], [1], [0, 0, 1, 1], [], []>} : vector<64x8xf32>, vector<8x16xf32>, vector<64x16xf32> -> vector<64x16xf32>
    %54 = arith.addf %48, %53 : vector<64x16xf32>
    %c2_74 = arith.constant 2 : index
    %c0_75 = arith.constant 0 : index
    %c0_76 = arith.constant 0 : index
    %55 = vector.load %arg10[%c2_74, %c0_75, %c0_76] : memref<10x10x8xf32, #tpu.memory_space<vmem>>, vector<8x8x8xf32>
    %56 = vector.shape_cast %55 : vector<8x8x8xf32> to vector<64x8xf32>
    %c2_77 = arith.constant 2 : index
    %c0_78 = arith.constant 0 : index
    %c0_79 = arith.constant 0 : index
    %c0_80 = arith.constant 0 : index
    %57 = vector.load %arg5[%c2_77, %c0_78, %c0_79, %c0_80] : memref<3x3x8x16xf32, #tpu.memory_space<vmem>>, vector<1x1x8x16xf32>
    %58 = vector.shape_cast %57 : vector<1x1x8x16xf32> to vector<8x16xf32>
    %cst_81 = arith.constant dense<0.000000e+00> : vector<64x16xf32>
    %59 = tpu.matmul %56, %58, %cst_81 {dimension_numbers = #tpu.dot_dimension_numbers<[1], [0], [0], [1], [0, 0, 1, 1], [], []>} : vector<64x8xf32>, vector<8x16xf32>, vector<64x16xf32> -> vector<64x16xf32>
    %60 = arith.addf %54, %59 : vector<64x16xf32>
    %c2_82 = arith.constant 2 : index
    %c1_83 = arith.constant 1 : index
    %c0_84 = arith.constant 0 : index
    %61 = vector.load %arg10[%c2_82, %c1_83, %c0_84] : memref<10x10x8xf32, #tpu.memory_space<vmem>>, vector<8x8x8xf32>
    %62 = vector.shape_cast %61 : vector<8x8x8xf32> to vector<64x8xf32>
    %c2_85 = arith.constant 2 : index
    %c1_86 = arith.constant 1 : index
    %c0_87 = arith.constant 0 : index
    %c0_88 = arith.constant 0 : index
    %63 = vector.load %arg5[%c2_85, %c1_86, %c0_87, %c0_88] : memref<3x3x8x16xf32, #tpu.memory_space<vmem>>, vector<1x1x8x16xf32>
    %64 = vector.shape_cast %63 : vector<1x1x8x16xf32> to vector<8x16xf32>
    %cst_89 = arith.constant dense<0.000000e+00> : vector<64x16xf32>
    %65 = tpu.matmul %62, %64, %cst_89 {dimension_numbers = #tpu.dot_dimension_numbers<[1], [0], [0], [1], [0, 0, 1, 1], [], []>} : vector<64x8xf32>, vector<8x16xf32>, vector<64x16xf32> -> vector<64x16xf32>
    %66 = arith.addf %60, %65 : vector<64x16xf32>
    %c2_90 = arith.constant 2 : index
    %c2_91 = arith.constant 2 : index
    %c0_92 = arith.constant 0 : index
    %67 = vector.load %arg10[%c2_90, %c2_91, %c0_92] : memref<10x10x8xf32, #tpu.memory_space<vmem>>, vector<8x8x8xf32>
    %68 = vector.shape_cast %67 : vector<8x8x8xf32> to vector<64x8xf32>
    %c2_93 = arith.constant 2 : index
    %c2_94 = arith.constant 2 : index
    %c0_95 = arith.constant 0 : index
    %c0_96 = arith.constant 0 : index
    %69 = vector.load %arg5[%c2_93, %c2_94, %c0_95, %c0_96] : memref<3x3x8x16xf32, #tpu.memory_space<vmem>>, vector<1x1x8x16xf32>
    %70 = vector.shape_cast %69 : vector<1x1x8x16xf32> to vector<8x16xf32>
    %cst_97 = arith.constant dense<0.000000e+00> : vector<64x16xf32>
    %71 = tpu.matmul %68, %70, %cst_97 {dimension_numbers = #tpu.dot_dimension_numbers<[1], [0], [0], [1], [0, 0, 1, 1], [], []>} : vector<64x8xf32>, vector<8x16xf32>, vector<64x16xf32> -> vector<64x16xf32>
    %72 = arith.addf %66, %71 : vector<64x16xf32>
    %c0_98 = arith.constant 0 : index
    %c0_99 = arith.constant 0 : index
    %73 = vector.load %arg6[%c0_98, %c0_99] : memref<1x16xf32, #tpu.memory_space<vmem>>, vector<1x16xf32>
    %74 = vector.broadcast %73 : vector<1x16xf32> to vector<64x16xf32>
    %75 = arith.addf %72, %74 : vector<64x16xf32>
    %76 = arith.mulf %75, %75 : vector<64x16xf32>
    %c0_100 = arith.constant 0 : index
    %c0_101 = arith.constant 0 : index
    %77 = vector.load %arg7[%c0_100, %c0_101] : memref<16x16xf32, #tpu.memory_space<vmem>>, vector<16x16xf32>
    %cst_102 = arith.constant dense<0.000000e+00> : vector<64x16xf32>
    %78 = tpu.matmul %76, %77, %cst_102 {dimension_numbers = #tpu.dot_dimension_numbers<[1], [0], [0], [1], [0, 0, 1, 1], [], []>} : vector<64x16xf32>, vector<16x16xf32>, vector<64x16xf32> -> vector<64x16xf32>
    %c0_103 = arith.constant 0 : index
    %c0_104 = arith.constant 0 : index
    %79 = vector.load %arg8[%c0_103, %c0_104] : memref<1x16xf32, #tpu.memory_space<vmem>>, vector<1x16xf32>
    %80 = vector.broadcast %79 : vector<1x16xf32> to vector<64x16xf32>
    %81 = arith.addf %78, %80 : vector<64x16xf32>
    %82 = math.sqrt %81 : vector<64x16xf32>
    %83 = arith.mulf %75, %82 : vector<64x16xf32>
    %84 = vector.shape_cast %83 : vector<64x16xf32> to vector<1x8x8x16xf32>
    %c0_105 = arith.constant 0 : index
    %c0_106 = arith.constant 0 : index
    %c0_107 = arith.constant 0 : index
    %c0_108 = arith.constant 0 : index
    %85 = vector.load %arg9[%c0_105, %c0_106, %c0_107, %c0_108] : memref<1x8x8x16xf32, #tpu.memory_space<vmem>>, vector<1x8x8x16xf32>
    tpu.vector_store %arg9[%c0_105, %c0_106, %c0_107, %c0_108], %84 {strides = array<i32>} : memref<1x8x8x16xf32, #tpu.memory_space<vmem>>, vector<1x8x8x16xf32>,
    return
  }
  func.func @transform_0(%arg0: i32, %arg1: i32) -> (i32, i32, i32, i32) {
    %c0_i32 = arith.constant 0 : i32
    %c0_i32_0 = arith.constant 0 : i32
    %c0_i32_1 = arith.constant 0 : i32
    return %arg0, %arg1, %c0_i32, %c0_i32_0 : i32, i32, i32, i32
  }
  func.func @transform_1(%arg0: i32, %arg1: i32) -> (i32, i32, i32, i32) {
    %c8_i32 = arith.constant 8 : i32
    %0 = arith.muli %arg1, %c8_i32 : i32
    %c1_i32 = arith.constant 1 : i32
    %1 = arith.subi %0, %c1_i32 : i32
    %c0_i32 = arith.constant 0 : i32
    %2 = arith.maxsi %1, %c0_i32 : i32
    %c0_i32_0 = arith.constant 0 : i32
    %c0_i32_1 = arith.constant 0 : i32
    %c0_i32_2 = arith.constant 0 : i32
    return %arg0, %2, %c0_i32_0, %c0_i32_1 : i32, i32, i32, i32
  }
  func.func @transform_2(%arg0: i32, %arg1: i32) -> (i32, i32, i32, i32) {
    %c1_i32 = arith.constant 1 : i32
    %0 = arith.addi %arg1, %c1_i32 : i32
    %c8_i32 = arith.constant 8 : i32
    %1 = arith.muli %0, %c8_i32 : i32
    %c7_i32 = arith.constant 7 : i32
    %2 = arith.minsi %1, %c7_i32 : i32
    %c0_i32 = arith.constant 0 : i32
    %c0_i32_0 = arith.constant 0 : i32
    %c0_i32_1 = arith.constant 0 : i32
    return %arg0, %2, %c0_i32, %c0_i32_0 : i32, i32, i32, i32
  }
  func.func @transform_3(%arg0: i32, %arg1: i32) -> (i32, i32, i32, i32) {
    %c0_i32 = arith.constant 0 : i32
    %c0_i32_0 = arith.constant 0 : i32
    %c0_i32_1 = arith.constant 0 : i32
    %c0_i32_2 = arith.constant 0 : i32
    %c0_i32_3 = arith.constant 0 : i32
    return %c0_i32, %c0_i32_0, %c0_i32_1, %c0_i32_2 : i32, i32, i32, i32
  }
  func.func @transform_4(%arg0: i32, %arg1: i32) -> (i32, i32) {
    %c0_i32 = arith.constant 0 : i32
    %c0_i32_0 = arith.constant 0 : i32
    %c0_i32_1 = arith.constant 0 : i32
    return %c0_i32, %c0_i32_0 : i32, i32
  }
  func.func @transform_5(%arg0: i32, %arg1: i32) -> (i32, i32) {
    %c0_i32 = arith.constant 0 : i32
    %c0_i32_0 = arith.constant 0 : i32
    %c0_i32_1 = arith.constant 0 : i32
    return %c0_i32, %c0_i32_0 : i32, i32
  }
  func.func @transform_6(%arg0: i32, %arg1: i32) -> (i32, i32) {
    %c0_i32 = arith.constant 0 : i32
    %c0_i32_0 = arith.constant 0 : i32
    %c0_i32_1 = arith.constant 0 : i32
    return %c0_i32, %c0_i32_0 : i32, i32
  }
  func.func @transform_7(%arg0: i32, %arg1: i32) -> (i32, i32, i32, i32) {
    %c0_i32 = arith.constant 0 : i32
    %c0_i32_0 = arith.constant 0 : i32
    %c0_i32_1 = arith.constant 0 : i32
    return %arg0, %arg1, %c0_i32, %c0_i32_0 : i32, i32, i32, i32
  }
}

module attributes {stable_mosaic.version = 11 : i64} {
  func.func @_subpixel_deconv_kernel(%arg0: i32, %arg1: i32, %arg2: memref<1x8x8x16xf32, #tpu.memory_space<vmem>>, %arg3: memref<1x1x8x16xf32, #tpu.memory_space<vmem>>, %arg4: memref<2x2x16x64xf32, #tpu.memory_space<vmem>>, %arg5: memref<1x64xf32, #tpu.memory_space<vmem>>, %arg6: memref<64x64xf32, #tpu.memory_space<vmem>>, %arg7: memref<1x64xf32, #tpu.memory_space<vmem>>, %arg8: memref<1x8x8x64xf32, #tpu.memory_space<vmem>>, %arg9: memref<9x9x16xf32, #tpu.memory_space<vmem>>) attributes {dimension_semantics = [#tpu.dimension_semantics<parallel>, #tpu.dimension_semantics<parallel>], iteration_bounds = array<i64: 2, 1>, scalar_prefetch = 0 : i64, scratch_operands = 1 : i64, tpu.core_type = #tpu.core_type<tc>, window_params = [{transform_indices = @transform_0, window_bounds = array<i64: 1, 8, 8, 16>}, {transform_indices = @transform_1, window_bounds = array<i64: 1, 1, 8, 16>}, {pipeline_mode = #tpu.pipeline_mode<synchronous>, transform_indices = @transform_2, window_bounds = array<i64: 2, 2, 16, 64>}, {pipeline_mode = #tpu.pipeline_mode<synchronous>, transform_indices = @transform_3, window_bounds = array<i64: 1, 64>}, {pipeline_mode = #tpu.pipeline_mode<synchronous>, transform_indices = @transform_4, window_bounds = array<i64: 64, 64>}, {pipeline_mode = #tpu.pipeline_mode<synchronous>, transform_indices = @transform_5, window_bounds = array<i64: 1, 64>}, {transform_indices = @transform_6, window_bounds = array<i64: 1, 8, 8, 64>}]} {
    %cst = arith.constant 0.000000e+00 : f32
    %0 = vector.broadcast %cst : f32 to vector<9x1x16xf32>
    %c0 = arith.constant 0 : index
    %c8 = arith.constant 8 : index
    %c0_0 = arith.constant 0 : index
    %1 = vector.load %arg9[%c0, %c8, %c0_0] : memref<9x9x16xf32, #tpu.memory_space<vmem>>, vector<9x1x16xf32>
    tpu.vector_store %arg9[%c0, %c8, %c0_0], %0 {strides = array<i32>} : memref<9x9x16xf32, #tpu.memory_space<vmem>>, vector<9x1x16xf32>,
    %c1_i32 = arith.constant 1 : i32
    %2 = arith.addi %arg1, %c1_i32 : i32
    %c1_i32_1 = arith.constant 1 : i32
    %3 = arith.cmpi slt, %2, %c1_i32_1 : i32
    %c0_2 = arith.constant 0 : index
    %c0_3 = arith.constant 0 : index
    %c0_4 = arith.constant 0 : index
    %c0_5 = arith.constant 0 : index
    %4 = vector.load %arg3[%c0_2, %c0_3, %c0_4, %c0_5] : memref<1x1x8x16xf32, #tpu.memory_space<vmem>>, vector<1x1x8x16xf32>
    %5 = vector.shape_cast %4 : vector<1x1x8x16xf32> to vector<1x8x16xf32>
    %cst_6 = arith.constant 0.000000e+00 : f32
    %6 = vector.broadcast %cst_6 : f32 to vector<1x8x16xf32>
    %7 = arith.select %3, %5, %6 : vector<1x8x16xf32>
    %c8_7 = arith.constant 8 : index
    %c0_8 = arith.constant 0 : index
    %c0_9 = arith.constant 0 : index
    %8 = vector.load %arg9[%c8_7, %c0_8, %c0_9] : memref<9x9x16xf32, #tpu.memory_space<vmem>>, vector<1x8x16xf32>
    tpu.vector_store %arg9[%c8_7, %c0_8, %c0_9], %7 {strides = array<i32>} : memref<9x9x16xf32, #tpu.memory_space<vmem>>, vector<1x8x16xf32>,
    %c0_10 = arith.constant 0 : index
    %c0_11 = arith.constant 0 : index
    %c0_12 = arith.constant 0 : index
    %c0_13 = arith.constant 0 : index
    %9 = vector.load %arg2[%c0_10, %c0_11, %c0_12, %c0_13] : memref<1x8x8x16xf32, #tpu.memory_space<vmem>>, vector<1x8x8x16xf32>
    %10 = vector.shape_cast %9 : vector<1x8x8x16xf32> to vector<8x8x16xf32>
    %c0_14 = arith.constant 0 : index
    %c0_15 = arith.constant 0 : index
    %c0_16 = arith.constant 0 : index
    %11 = vector.load %arg9[%c0_14, %c0_15, %c0_16] : memref<9x9x16xf32, #tpu.memory_space<vmem>>, vector<8x8x16xf32>
    tpu.vector_store %arg9[%c0_14, %c0_15, %c0_16], %10 {strides = array<i32>} : memref<9x9x16xf32, #tpu.memory_space<vmem>>, vector<8x8x16xf32>,
    %cst_17 = arith.constant 0.000000e+00 : f32
    %12 = vector.broadcast %cst_17 : f32 to vector<64x64xf32>
    %c0_18 = arith.constant 0 : index
    %c0_19 = arith.constant 0 : index
    %c0_20 = arith.constant 0 : index
    %13 = vector.load %arg9[%c0_18, %c0_19, %c0_20] : memref<9x9x16xf32, #tpu.memory_space<vmem>>, vector<8x8x16xf32>
    %14 = vector.shape_cast %13 : vector<8x8x16xf32> to vector<64x16xf32>
    %c0_21 = arith.constant 0 : index
    %c0_22 = arith.constant 0 : index
    %c0_23 = arith.constant 0 : index
    %c0_24 = arith.constant 0 : index
    %15 = vector.load %arg4[%c0_21, %c0_22, %c0_23, %c0_24] : memref<2x2x16x64xf32, #tpu.memory_space<vmem>>, vector<1x1x16x64xf32>
    %16 = vector.shape_cast %15 : vector<1x1x16x64xf32> to vector<16x64xf32>
    %cst_25 = arith.constant dense<0.000000e+00> : vector<64x64xf32>
    %17 = tpu.matmul %14, %16, %cst_25 {dimension_numbers = #tpu.dot_dimension_numbers<[1], [0], [0], [1], [0, 0, 1, 1], [], []>} : vector<64x16xf32>, vector<16x64xf32>, vector<64x64xf32> -> vector<64x64xf32>
    %18 = arith.addf %12, %17 : vector<64x64xf32>
    %c0_26 = arith.constant 0 : index
    %c1 = arith.constant 1 : index
    %c0_27 = arith.constant 0 : index
    %19 = vector.load %arg9[%c0_26, %c1, %c0_27] : memref<9x9x16xf32, #tpu.memory_space<vmem>>, vector<8x8x16xf32>
    %20 = vector.shape_cast %19 : vector<8x8x16xf32> to vector<64x16xf32>
    %c0_28 = arith.constant 0 : index
    %c1_29 = arith.constant 1 : index
    %c0_30 = arith.constant 0 : index
    %c0_31 = arith.constant 0 : index
    %21 = vector.load %arg4[%c0_28, %c1_29, %c0_30, %c0_31] : memref<2x2x16x64xf32, #tpu.memory_space<vmem>>, vector<1x1x16x64xf32>
    %22 = vector.shape_cast %21 : vector<1x1x16x64xf32> to vector<16x64xf32>
    %cst_32 = arith.constant dense<0.000000e+00> : vector<64x64xf32>
    %23 = tpu.matmul %20, %22, %cst_32 {dimension_numbers = #tpu.dot_dimension_numbers<[1], [0], [0], [1], [0, 0, 1, 1], [], []>} : vector<64x16xf32>, vector<16x64xf32>, vector<64x64xf32> -> vector<64x64xf32>
    %24 = arith.addf %18, %23 : vector<64x64xf32>
    %c1_33 = arith.constant 1 : index
    %c0_34 = arith.constant 0 : index
    %c0_35 = arith.constant 0 : index
    %25 = vector.load %arg9[%c1_33, %c0_34, %c0_35] : memref<9x9x16xf32, #tpu.memory_space<vmem>>, vector<8x8x16xf32>
    %26 = vector.shape_cast %25 : vector<8x8x16xf32> to vector<64x16xf32>
    %c1_36 = arith.constant 1 : index
    %c0_37 = arith.constant 0 : index
    %c0_38 = arith.constant 0 : index
    %c0_39 = arith.constant 0 : index
    %27 = vector.load %arg4[%c1_36, %c0_37, %c0_38, %c0_39] : memref<2x2x16x64xf32, #tpu.memory_space<vmem>>, vector<1x1x16x64xf32>
    %28 = vector.shape_cast %27 : vector<1x1x16x64xf32> to vector<16x64xf32>
    %cst_40 = arith.constant dense<0.000000e+00> : vector<64x64xf32>
    %29 = tpu.matmul %26, %28, %cst_40 {dimension_numbers = #tpu.dot_dimension_numbers<[1], [0], [0], [1], [0, 0, 1, 1], [], []>} : vector<64x16xf32>, vector<16x64xf32>, vector<64x64xf32> -> vector<64x64xf32>
    %30 = arith.addf %24, %29 : vector<64x64xf32>
    %c1_41 = arith.constant 1 : index
    %c1_42 = arith.constant 1 : index
    %c0_43 = arith.constant 0 : index
    %31 = vector.load %arg9[%c1_41, %c1_42, %c0_43] : memref<9x9x16xf32, #tpu.memory_space<vmem>>, vector<8x8x16xf32>
    %32 = vector.shape_cast %31 : vector<8x8x16xf32> to vector<64x16xf32>
    %c1_44 = arith.constant 1 : index
    %c1_45 = arith.constant 1 : index
    %c0_46 = arith.constant 0 : index
    %c0_47 = arith.constant 0 : index
    %33 = vector.load %arg4[%c1_44, %c1_45, %c0_46, %c0_47] : memref<2x2x16x64xf32, #tpu.memory_space<vmem>>, vector<1x1x16x64xf32>
    %34 = vector.shape_cast %33 : vector<1x1x16x64xf32> to vector<16x64xf32>
    %cst_48 = arith.constant dense<0.000000e+00> : vector<64x64xf32>
    %35 = tpu.matmul %32, %34, %cst_48 {dimension_numbers = #tpu.dot_dimension_numbers<[1], [0], [0], [1], [0, 0, 1, 1], [], []>} : vector<64x16xf32>, vector<16x64xf32>, vector<64x64xf32> -> vector<64x64xf32>
    %36 = arith.addf %30, %35 : vector<64x64xf32>
    %c0_49 = arith.constant 0 : index
    %c0_50 = arith.constant 0 : index
    %37 = vector.load %arg5[%c0_49, %c0_50] : memref<1x64xf32, #tpu.memory_space<vmem>>, vector<1x64xf32>
    %38 = vector.broadcast %37 : vector<1x64xf32> to vector<64x64xf32>
    %39 = arith.addf %36, %38 : vector<64x64xf32>
    %40 = arith.mulf %39, %39 : vector<64x64xf32>
    %c0_51 = arith.constant 0 : index
    %c0_52 = arith.constant 0 : index
    %41 = vector.load %arg6[%c0_51, %c0_52] : memref<64x64xf32, #tpu.memory_space<vmem>>, vector<64x64xf32>
    %cst_53 = arith.constant dense<0.000000e+00> : vector<64x64xf32>
    %42 = tpu.matmul %40, %41, %cst_53 {dimension_numbers = #tpu.dot_dimension_numbers<[1], [0], [0], [1], [0, 0, 1, 1], [], []>} : vector<64x64xf32>, vector<64x64xf32>, vector<64x64xf32> -> vector<64x64xf32>
    %c0_54 = arith.constant 0 : index
    %c0_55 = arith.constant 0 : index
    %43 = vector.load %arg7[%c0_54, %c0_55] : memref<1x64xf32, #tpu.memory_space<vmem>>, vector<1x64xf32>
    %44 = vector.broadcast %43 : vector<1x64xf32> to vector<64x64xf32>
    %45 = arith.addf %42, %44 : vector<64x64xf32>
    %46 = math.sqrt %45 : vector<64x64xf32>
    %47 = arith.mulf %39, %46 : vector<64x64xf32>
    %48 = vector.shape_cast %47 : vector<64x64xf32> to vector<1x8x8x64xf32>
    %c0_56 = arith.constant 0 : index
    %c0_57 = arith.constant 0 : index
    %c0_58 = arith.constant 0 : index
    %c0_59 = arith.constant 0 : index
    %49 = vector.load %arg8[%c0_56, %c0_57, %c0_58, %c0_59] : memref<1x8x8x64xf32, #tpu.memory_space<vmem>>, vector<1x8x8x64xf32>
    tpu.vector_store %arg8[%c0_56, %c0_57, %c0_58, %c0_59], %48 {strides = array<i32>} : memref<1x8x8x64xf32, #tpu.memory_space<vmem>>, vector<1x8x8x64xf32>,
    return
  }
  func.func @transform_0(%arg0: i32, %arg1: i32) -> (i32, i32, i32, i32) {
    %c0_i32 = arith.constant 0 : i32
    %c0_i32_0 = arith.constant 0 : i32
    %c0_i32_1 = arith.constant 0 : i32
    return %arg0, %arg1, %c0_i32, %c0_i32_0 : i32, i32, i32, i32
  }
  func.func @transform_1(%arg0: i32, %arg1: i32) -> (i32, i32, i32, i32) {
    %c1_i32 = arith.constant 1 : i32
    %0 = arith.addi %arg1, %c1_i32 : i32
    %c8_i32 = arith.constant 8 : i32
    %1 = arith.muli %0, %c8_i32 : i32
    %c7_i32 = arith.constant 7 : i32
    %2 = arith.minsi %1, %c7_i32 : i32
    %c0_i32 = arith.constant 0 : i32
    %c0_i32_0 = arith.constant 0 : i32
    %c0_i32_1 = arith.constant 0 : i32
    return %arg0, %2, %c0_i32, %c0_i32_0 : i32, i32, i32, i32
  }
  func.func @transform_2(%arg0: i32, %arg1: i32) -> (i32, i32, i32, i32) {
    %c0_i32 = arith.constant 0 : i32
    %c0_i32_0 = arith.constant 0 : i32
    %c0_i32_1 = arith.constant 0 : i32
    %c0_i32_2 = arith.constant 0 : i32
    %c0_i32_3 = arith.constant 0 : i32
    return %c0_i32, %c0_i32_0, %c0_i32_1, %c0_i32_2 : i32, i32, i32, i32
  }
  func.func @transform_3(%arg0: i32, %arg1: i32) -> (i32, i32) {
    %c0_i32 = arith.constant 0 : i32
    %c0_i32_0 = arith.constant 0 : i32
    %c0_i32_1 = arith.constant 0 : i32
    return %c0_i32, %c0_i32_0 : i32, i32
  }
  func.func @transform_4(%arg0: i32, %arg1: i32) -> (i32, i32) {
    %c0_i32 = arith.constant 0 : i32
    %c0_i32_0 = arith.constant 0 : i32
    %c0_i32_1 = arith.constant 0 : i32
    return %c0_i32, %c0_i32_0 : i32, i32
  }
  func.func @transform_5(%arg0: i32, %arg1: i32) -> (i32, i32) {
    %c0_i32 = arith.constant 0 : i32
    %c0_i32_0 = arith.constant 0 : i32
    %c0_i32_1 = arith.constant 0 : i32
    return %c0_i32, %c0_i32_0 : i32, i32
  }
  func.func @transform_6(%arg0: i32, %arg1: i32) -> (i32, i32, i32, i32) {
    %c0_i32 = arith.constant 0 : i32
    %c0_i32_0 = arith.constant 0 : i32
    %c0_i32_1 = arith.constant 0 : i32
    return %arg0, %arg1, %c0_i32, %c0_i32_0 : i32, i32, i32, i32
  }
}

module attributes {stable_mosaic.version = 11 : i64} {
  func.func @_subpixel_deconv_kernel(%arg0: i32, %arg1: i32, %arg2: memref<1x16x16x16xf32, #tpu.memory_space<vmem>>, %arg3: memref<1x1x16x16xf32, #tpu.memory_space<vmem>>, %arg4: memref<2x2x16x64xf32, #tpu.memory_space<vmem>>, %arg5: memref<1x64xf32, #tpu.memory_space<vmem>>, %arg6: memref<64x64xf32, #tpu.memory_space<vmem>>, %arg7: memref<1x64xf32, #tpu.memory_space<vmem>>, %arg8: memref<1x16x16x64xf32, #tpu.memory_space<vmem>>, %arg9: memref<17x17x16xf32, #tpu.memory_space<vmem>>) attributes {dimension_semantics = [#tpu.dimension_semantics<parallel>, #tpu.dimension_semantics<parallel>], iteration_bounds = array<i64: 2, 1>, scalar_prefetch = 0 : i64, scratch_operands = 1 : i64, tpu.core_type = #tpu.core_type<tc>, window_params = [{transform_indices = @transform_0, window_bounds = array<i64: 1, 16, 16, 16>}, {transform_indices = @transform_1, window_bounds = array<i64: 1, 1, 16, 16>}, {pipeline_mode = #tpu.pipeline_mode<synchronous>, transform_indices = @transform_2, window_bounds = array<i64: 2, 2, 16, 64>}, {pipeline_mode = #tpu.pipeline_mode<synchronous>, transform_indices = @transform_3, window_bounds = array<i64: 1, 64>}, {pipeline_mode = #tpu.pipeline_mode<synchronous>, transform_indices = @transform_4, window_bounds = array<i64: 64, 64>}, {pipeline_mode = #tpu.pipeline_mode<synchronous>, transform_indices = @transform_5, window_bounds = array<i64: 1, 64>}, {transform_indices = @transform_6, window_bounds = array<i64: 1, 16, 16, 64>}]} {
    %cst = arith.constant 0.000000e+00 : f32
    %0 = vector.broadcast %cst : f32 to vector<17x1x16xf32>
    %c0 = arith.constant 0 : index
    %c16 = arith.constant 16 : index
    %c0_0 = arith.constant 0 : index
    %1 = vector.load %arg9[%c0, %c16, %c0_0] : memref<17x17x16xf32, #tpu.memory_space<vmem>>, vector<17x1x16xf32>
    tpu.vector_store %arg9[%c0, %c16, %c0_0], %0 {strides = array<i32>} : memref<17x17x16xf32, #tpu.memory_space<vmem>>, vector<17x1x16xf32>,
    %c1_i32 = arith.constant 1 : i32
    %2 = arith.addi %arg1, %c1_i32 : i32
    %c1_i32_1 = arith.constant 1 : i32
    %3 = arith.cmpi slt, %2, %c1_i32_1 : i32
    %c0_2 = arith.constant 0 : index
    %c0_3 = arith.constant 0 : index
    %c0_4 = arith.constant 0 : index
    %c0_5 = arith.constant 0 : index
    %4 = vector.load %arg3[%c0_2, %c0_3, %c0_4, %c0_5] : memref<1x1x16x16xf32, #tpu.memory_space<vmem>>, vector<1x1x16x16xf32>
    %5 = vector.shape_cast %4 : vector<1x1x16x16xf32> to vector<1x16x16xf32>
    %cst_6 = arith.constant 0.000000e+00 : f32
    %6 = vector.broadcast %cst_6 : f32 to vector<1x16x16xf32>
    %7 = arith.select %3, %5, %6 : vector<1x16x16xf32>
    %c16_7 = arith.constant 16 : index
    %c0_8 = arith.constant 0 : index
    %c0_9 = arith.constant 0 : index
    %8 = vector.load %arg9[%c16_7, %c0_8, %c0_9] : memref<17x17x16xf32, #tpu.memory_space<vmem>>, vector<1x16x16xf32>
    tpu.vector_store %arg9[%c16_7, %c0_8, %c0_9], %7 {strides = array<i32>} : memref<17x17x16xf32, #tpu.memory_space<vmem>>, vector<1x16x16xf32>,
    %c0_10 = arith.constant 0 : index
    %c0_11 = arith.constant 0 : index
    %c0_12 = arith.constant 0 : index
    %c0_13 = arith.constant 0 : index
    %9 = vector.load %arg2[%c0_10, %c0_11, %c0_12, %c0_13] : memref<1x16x16x16xf32, #tpu.memory_space<vmem>>, vector<1x16x16x16xf32>
    %10 = vector.shape_cast %9 : vector<1x16x16x16xf32> to vector<16x16x16xf32>
    %c0_14 = arith.constant 0 : index
    %c0_15 = arith.constant 0 : index
    %c0_16 = arith.constant 0 : index
    %11 = vector.load %arg9[%c0_14, %c0_15, %c0_16] : memref<17x17x16xf32, #tpu.memory_space<vmem>>, vector<16x16x16xf32>
    tpu.vector_store %arg9[%c0_14, %c0_15, %c0_16], %10 {strides = array<i32>} : memref<17x17x16xf32, #tpu.memory_space<vmem>>, vector<16x16x16xf32>,
    %cst_17 = arith.constant 0.000000e+00 : f32
    %12 = vector.broadcast %cst_17 : f32 to vector<256x64xf32>
    %c0_18 = arith.constant 0 : index
    %c0_19 = arith.constant 0 : index
    %c0_20 = arith.constant 0 : index
    %13 = vector.load %arg9[%c0_18, %c0_19, %c0_20] : memref<17x17x16xf32, #tpu.memory_space<vmem>>, vector<16x16x16xf32>
    %14 = vector.shape_cast %13 : vector<16x16x16xf32> to vector<256x16xf32>
    %c0_21 = arith.constant 0 : index
    %c0_22 = arith.constant 0 : index
    %c0_23 = arith.constant 0 : index
    %c0_24 = arith.constant 0 : index
    %15 = vector.load %arg4[%c0_21, %c0_22, %c0_23, %c0_24] : memref<2x2x16x64xf32, #tpu.memory_space<vmem>>, vector<1x1x16x64xf32>
    %16 = vector.shape_cast %15 : vector<1x1x16x64xf32> to vector<16x64xf32>
    %cst_25 = arith.constant dense<0.000000e+00> : vector<256x64xf32>
    %17 = tpu.matmul %14, %16, %cst_25 {dimension_numbers = #tpu.dot_dimension_numbers<[1], [0], [0], [1], [0, 0, 1, 1], [], []>} : vector<256x16xf32>, vector<16x64xf32>, vector<256x64xf32> -> vector<256x64xf32>
    %18 = arith.addf %12, %17 : vector<256x64xf32>
    %c0_26 = arith.constant 0 : index
    %c1 = arith.constant 1 : index
    %c0_27 = arith.constant 0 : index
    %19 = vector.load %arg9[%c0_26, %c1, %c0_27] : memref<17x17x16xf32, #tpu.memory_space<vmem>>, vector<16x16x16xf32>
    %20 = vector.shape_cast %19 : vector<16x16x16xf32> to vector<256x16xf32>
    %c0_28 = arith.constant 0 : index
    %c1_29 = arith.constant 1 : index
    %c0_30 = arith.constant 0 : index
    %c0_31 = arith.constant 0 : index
    %21 = vector.load %arg4[%c0_28, %c1_29, %c0_30, %c0_31] : memref<2x2x16x64xf32, #tpu.memory_space<vmem>>, vector<1x1x16x64xf32>
    %22 = vector.shape_cast %21 : vector<1x1x16x64xf32> to vector<16x64xf32>
    %cst_32 = arith.constant dense<0.000000e+00> : vector<256x64xf32>
    %23 = tpu.matmul %20, %22, %cst_32 {dimension_numbers = #tpu.dot_dimension_numbers<[1], [0], [0], [1], [0, 0, 1, 1], [], []>} : vector<256x16xf32>, vector<16x64xf32>, vector<256x64xf32> -> vector<256x64xf32>
    %24 = arith.addf %18, %23 : vector<256x64xf32>
    %c1_33 = arith.constant 1 : index
    %c0_34 = arith.constant 0 : index
    %c0_35 = arith.constant 0 : index
    %25 = vector.load %arg9[%c1_33, %c0_34, %c0_35] : memref<17x17x16xf32, #tpu.memory_space<vmem>>, vector<16x16x16xf32>
    %26 = vector.shape_cast %25 : vector<16x16x16xf32> to vector<256x16xf32>
    %c1_36 = arith.constant 1 : index
    %c0_37 = arith.constant 0 : index
    %c0_38 = arith.constant 0 : index
    %c0_39 = arith.constant 0 : index
    %27 = vector.load %arg4[%c1_36, %c0_37, %c0_38, %c0_39] : memref<2x2x16x64xf32, #tpu.memory_space<vmem>>, vector<1x1x16x64xf32>
    %28 = vector.shape_cast %27 : vector<1x1x16x64xf32> to vector<16x64xf32>
    %cst_40 = arith.constant dense<0.000000e+00> : vector<256x64xf32>
    %29 = tpu.matmul %26, %28, %cst_40 {dimension_numbers = #tpu.dot_dimension_numbers<[1], [0], [0], [1], [0, 0, 1, 1], [], []>} : vector<256x16xf32>, vector<16x64xf32>, vector<256x64xf32> -> vector<256x64xf32>
    %30 = arith.addf %24, %29 : vector<256x64xf32>
    %c1_41 = arith.constant 1 : index
    %c1_42 = arith.constant 1 : index
    %c0_43 = arith.constant 0 : index
    %31 = vector.load %arg9[%c1_41, %c1_42, %c0_43] : memref<17x17x16xf32, #tpu.memory_space<vmem>>, vector<16x16x16xf32>
    %32 = vector.shape_cast %31 : vector<16x16x16xf32> to vector<256x16xf32>
    %c1_44 = arith.constant 1 : index
    %c1_45 = arith.constant 1 : index
    %c0_46 = arith.constant 0 : index
    %c0_47 = arith.constant 0 : index
    %33 = vector.load %arg4[%c1_44, %c1_45, %c0_46, %c0_47] : memref<2x2x16x64xf32, #tpu.memory_space<vmem>>, vector<1x1x16x64xf32>
    %34 = vector.shape_cast %33 : vector<1x1x16x64xf32> to vector<16x64xf32>
    %cst_48 = arith.constant dense<0.000000e+00> : vector<256x64xf32>
    %35 = tpu.matmul %32, %34, %cst_48 {dimension_numbers = #tpu.dot_dimension_numbers<[1], [0], [0], [1], [0, 0, 1, 1], [], []>} : vector<256x16xf32>, vector<16x64xf32>, vector<256x64xf32> -> vector<256x64xf32>
    %36 = arith.addf %30, %35 : vector<256x64xf32>
    %c0_49 = arith.constant 0 : index
    %c0_50 = arith.constant 0 : index
    %37 = vector.load %arg5[%c0_49, %c0_50] : memref<1x64xf32, #tpu.memory_space<vmem>>, vector<1x64xf32>
    %38 = vector.broadcast %37 : vector<1x64xf32> to vector<256x64xf32>
    %39 = arith.addf %36, %38 : vector<256x64xf32>
    %40 = arith.mulf %39, %39 : vector<256x64xf32>
    %c0_51 = arith.constant 0 : index
    %c0_52 = arith.constant 0 : index
    %41 = vector.load %arg6[%c0_51, %c0_52] : memref<64x64xf32, #tpu.memory_space<vmem>>, vector<64x64xf32>
    %cst_53 = arith.constant dense<0.000000e+00> : vector<256x64xf32>
    %42 = tpu.matmul %40, %41, %cst_53 {dimension_numbers = #tpu.dot_dimension_numbers<[1], [0], [0], [1], [0, 0, 1, 1], [], []>} : vector<256x64xf32>, vector<64x64xf32>, vector<256x64xf32> -> vector<256x64xf32>
    %c0_54 = arith.constant 0 : index
    %c0_55 = arith.constant 0 : index
    %43 = vector.load %arg7[%c0_54, %c0_55] : memref<1x64xf32, #tpu.memory_space<vmem>>, vector<1x64xf32>
    %44 = vector.broadcast %43 : vector<1x64xf32> to vector<256x64xf32>
    %45 = arith.addf %42, %44 : vector<256x64xf32>
    %46 = math.sqrt %45 : vector<256x64xf32>
    %47 = arith.mulf %39, %46 : vector<256x64xf32>
    %48 = vector.shape_cast %47 : vector<256x64xf32> to vector<1x16x16x64xf32>
    %c0_56 = arith.constant 0 : index
    %c0_57 = arith.constant 0 : index
    %c0_58 = arith.constant 0 : index
    %c0_59 = arith.constant 0 : index
    %49 = vector.load %arg8[%c0_56, %c0_57, %c0_58, %c0_59] : memref<1x16x16x64xf32, #tpu.memory_space<vmem>>, vector<1x16x16x64xf32>
    tpu.vector_store %arg8[%c0_56, %c0_57, %c0_58, %c0_59], %48 {strides = array<i32>} : memref<1x16x16x64xf32, #tpu.memory_space<vmem>>, vector<1x16x16x64xf32>,
    return
  }
  func.func @transform_0(%arg0: i32, %arg1: i32) -> (i32, i32, i32, i32) {
    %c0_i32 = arith.constant 0 : i32
    %c0_i32_0 = arith.constant 0 : i32
    %c0_i32_1 = arith.constant 0 : i32
    return %arg0, %arg1, %c0_i32, %c0_i32_0 : i32, i32, i32, i32
  }
  func.func @transform_1(%arg0: i32, %arg1: i32) -> (i32, i32, i32, i32) {
    %c1_i32 = arith.constant 1 : i32
    %0 = arith.addi %arg1, %c1_i32 : i32
    %c16_i32 = arith.constant 16 : i32
    %1 = arith.muli %0, %c16_i32 : i32
    %c15_i32 = arith.constant 15 : i32
    %2 = arith.minsi %1, %c15_i32 : i32
    %c0_i32 = arith.constant 0 : i32
    %c0_i32_0 = arith.constant 0 : i32
    %c0_i32_1 = arith.constant 0 : i32
    return %arg0, %2, %c0_i32, %c0_i32_0 : i32, i32, i32, i32
  }
  func.func @transform_2(%arg0: i32, %arg1: i32) -> (i32, i32, i32, i32) {
    %c0_i32 = arith.constant 0 : i32
    %c0_i32_0 = arith.constant 0 : i32
    %c0_i32_1 = arith.constant 0 : i32
    %c0_i32_2 = arith.constant 0 : i32
    %c0_i32_3 = arith.constant 0 : i32
    return %c0_i32, %c0_i32_0, %c0_i32_1, %c0_i32_2 : i32, i32, i32, i32
  }
  func.func @transform_3(%arg0: i32, %arg1: i32) -> (i32, i32) {
    %c0_i32 = arith.constant 0 : i32
    %c0_i32_0 = arith.constant 0 : i32
    %c0_i32_1 = arith.constant 0 : i32
    return %c0_i32, %c0_i32_0 : i32, i32
  }
  func.func @transform_4(%arg0: i32, %arg1: i32) -> (i32, i32) {
    %c0_i32 = arith.constant 0 : i32
    %c0_i32_0 = arith.constant 0 : i32
    %c0_i32_1 = arith.constant 0 : i32
    return %c0_i32, %c0_i32_0 : i32, i32
  }
  func.func @transform_5(%arg0: i32, %arg1: i32) -> (i32, i32) {
    %c0_i32 = arith.constant 0 : i32
    %c0_i32_0 = arith.constant 0 : i32
    %c0_i32_1 = arith.constant 0 : i32
    return %c0_i32, %c0_i32_0 : i32, i32
  }
  func.func @transform_6(%arg0: i32, %arg1: i32) -> (i32, i32, i32, i32) {
    %c0_i32 = arith.constant 0 : i32
    %c0_i32_0 = arith.constant 0 : i32
    %c0_i32_1 = arith.constant 0 : i32
    return %arg0, %arg1, %c0_i32, %c0_i32_0 : i32, i32, i32, i32
  }
}

module attributes {stable_mosaic.version = 11 : i64} {
  func.func @_subpixel_deconv_kernel(%arg0: i32, %arg1: i32, %arg2: memref<1x32x32x16xf32, #tpu.memory_space<vmem>>, %arg3: memref<1x1x32x16xf32, #tpu.memory_space<vmem>>, %arg4: memref<2x2x16x20xf32, #tpu.memory_space<vmem>>, %arg5: memref<1x20xf32, #tpu.memory_space<vmem>>, %arg6: memref<1x32x32x20xf32, #tpu.memory_space<vmem>>, %arg7: memref<33x33x16xf32, #tpu.memory_space<vmem>>) attributes {dimension_semantics = [#tpu.dimension_semantics<parallel>, #tpu.dimension_semantics<parallel>], iteration_bounds = array<i64: 2, 1>, scalar_prefetch = 0 : i64, scratch_operands = 1 : i64, tpu.core_type = #tpu.core_type<tc>, window_params = [{transform_indices = @transform_0, window_bounds = array<i64: 1, 32, 32, 16>}, {transform_indices = @transform_1, window_bounds = array<i64: 1, 1, 32, 16>}, {pipeline_mode = #tpu.pipeline_mode<synchronous>, transform_indices = @transform_2, window_bounds = array<i64: 2, 2, 16, 20>}, {pipeline_mode = #tpu.pipeline_mode<synchronous>, transform_indices = @transform_3, window_bounds = array<i64: 1, 20>}, {transform_indices = @transform_4, window_bounds = array<i64: 1, 32, 32, 20>}]} {
    %cst = arith.constant 0.000000e+00 : f32
    %0 = vector.broadcast %cst : f32 to vector<33x1x16xf32>
    %c0 = arith.constant 0 : index
    %c32 = arith.constant 32 : index
    %c0_0 = arith.constant 0 : index
    %1 = vector.load %arg7[%c0, %c32, %c0_0] : memref<33x33x16xf32, #tpu.memory_space<vmem>>, vector<33x1x16xf32>
    tpu.vector_store %arg7[%c0, %c32, %c0_0], %0 {strides = array<i32>} : memref<33x33x16xf32, #tpu.memory_space<vmem>>, vector<33x1x16xf32>,
    %c1_i32 = arith.constant 1 : i32
    %2 = arith.addi %arg1, %c1_i32 : i32
    %c1_i32_1 = arith.constant 1 : i32
    %3 = arith.cmpi slt, %2, %c1_i32_1 : i32
    %c0_2 = arith.constant 0 : index
    %c0_3 = arith.constant 0 : index
    %c0_4 = arith.constant 0 : index
    %c0_5 = arith.constant 0 : index
    %4 = vector.load %arg3[%c0_2, %c0_3, %c0_4, %c0_5] : memref<1x1x32x16xf32, #tpu.memory_space<vmem>>, vector<1x1x32x16xf32>
    %5 = vector.shape_cast %4 : vector<1x1x32x16xf32> to vector<1x32x16xf32>
    %cst_6 = arith.constant 0.000000e+00 : f32
    %6 = vector.broadcast %cst_6 : f32 to vector<1x32x16xf32>
    %7 = arith.select %3, %5, %6 : vector<1x32x16xf32>
    %c32_7 = arith.constant 32 : index
    %c0_8 = arith.constant 0 : index
    %c0_9 = arith.constant 0 : index
    %8 = vector.load %arg7[%c32_7, %c0_8, %c0_9] : memref<33x33x16xf32, #tpu.memory_space<vmem>>, vector<1x32x16xf32>
    tpu.vector_store %arg7[%c32_7, %c0_8, %c0_9], %7 {strides = array<i32>} : memref<33x33x16xf32, #tpu.memory_space<vmem>>, vector<1x32x16xf32>,
    %c0_10 = arith.constant 0 : index
    %c0_11 = arith.constant 0 : index
    %c0_12 = arith.constant 0 : index
    %c0_13 = arith.constant 0 : index
    %9 = vector.load %arg2[%c0_10, %c0_11, %c0_12, %c0_13] : memref<1x32x32x16xf32, #tpu.memory_space<vmem>>, vector<1x32x32x16xf32>
    %10 = vector.shape_cast %9 : vector<1x32x32x16xf32> to vector<32x32x16xf32>
    %c0_14 = arith.constant 0 : index
    %c0_15 = arith.constant 0 : index
    %c0_16 = arith.constant 0 : index
    %11 = vector.load %arg7[%c0_14, %c0_15, %c0_16] : memref<33x33x16xf32, #tpu.memory_space<vmem>>, vector<32x32x16xf32>
    tpu.vector_store %arg7[%c0_14, %c0_15, %c0_16], %10 {strides = array<i32>} : memref<33x33x16xf32, #tpu.memory_space<vmem>>, vector<32x32x16xf32>,
    %cst_17 = arith.constant 0.000000e+00 : f32
    %12 = vector.broadcast %cst_17 : f32 to vector<1024x20xf32>
    %c0_18 = arith.constant 0 : index
    %c0_19 = arith.constant 0 : index
    %c0_20 = arith.constant 0 : index
    %13 = vector.load %arg7[%c0_18, %c0_19, %c0_20] : memref<33x33x16xf32, #tpu.memory_space<vmem>>, vector<32x32x16xf32>
    %14 = vector.shape_cast %13 : vector<32x32x16xf32> to vector<1024x16xf32>
    %c0_21 = arith.constant 0 : index
    %c0_22 = arith.constant 0 : index
    %c0_23 = arith.constant 0 : index
    %c0_24 = arith.constant 0 : index
    %15 = vector.load %arg4[%c0_21, %c0_22, %c0_23, %c0_24] : memref<2x2x16x20xf32, #tpu.memory_space<vmem>>, vector<1x1x16x20xf32>
    %16 = vector.shape_cast %15 : vector<1x1x16x20xf32> to vector<16x20xf32>
    %cst_25 = arith.constant dense<0.000000e+00> : vector<1024x20xf32>
    %17 = tpu.matmul %14, %16, %cst_25 {dimension_numbers = #tpu.dot_dimension_numbers<[1], [0], [0], [1], [0, 0, 1, 1], [], []>} : vector<1024x16xf32>, vector<16x20xf32>, vector<1024x20xf32> -> vector<1024x20xf32>
    %18 = arith.addf %12, %17 : vector<1024x20xf32>
    %c0_26 = arith.constant 0 : index
    %c1 = arith.constant 1 : index
    %c0_27 = arith.constant 0 : index
    %19 = vector.load %arg7[%c0_26, %c1, %c0_27] : memref<33x33x16xf32, #tpu.memory_space<vmem>>, vector<32x32x16xf32>
    %20 = vector.shape_cast %19 : vector<32x32x16xf32> to vector<1024x16xf32>
    %c0_28 = arith.constant 0 : index
    %c1_29 = arith.constant 1 : index
    %c0_30 = arith.constant 0 : index
    %c0_31 = arith.constant 0 : index
    %21 = vector.load %arg4[%c0_28, %c1_29, %c0_30, %c0_31] : memref<2x2x16x20xf32, #tpu.memory_space<vmem>>, vector<1x1x16x20xf32>
    %22 = vector.shape_cast %21 : vector<1x1x16x20xf32> to vector<16x20xf32>
    %cst_32 = arith.constant dense<0.000000e+00> : vector<1024x20xf32>
    %23 = tpu.matmul %20, %22, %cst_32 {dimension_numbers = #tpu.dot_dimension_numbers<[1], [0], [0], [1], [0, 0, 1, 1], [], []>} : vector<1024x16xf32>, vector<16x20xf32>, vector<1024x20xf32> -> vector<1024x20xf32>
    %24 = arith.addf %18, %23 : vector<1024x20xf32>
    %c1_33 = arith.constant 1 : index
    %c0_34 = arith.constant 0 : index
    %c0_35 = arith.constant 0 : index
    %25 = vector.load %arg7[%c1_33, %c0_34, %c0_35] : memref<33x33x16xf32, #tpu.memory_space<vmem>>, vector<32x32x16xf32>
    %26 = vector.shape_cast %25 : vector<32x32x16xf32> to vector<1024x16xf32>
    %c1_36 = arith.constant 1 : index
    %c0_37 = arith.constant 0 : index
    %c0_38 = arith.constant 0 : index
    %c0_39 = arith.constant 0 : index
    %27 = vector.load %arg4[%c1_36, %c0_37, %c0_38, %c0_39] : memref<2x2x16x20xf32, #tpu.memory_space<vmem>>, vector<1x1x16x20xf32>
    %28 = vector.shape_cast %27 : vector<1x1x16x20xf32> to vector<16x20xf32>
    %cst_40 = arith.constant dense<0.000000e+00> : vector<1024x20xf32>
    %29 = tpu.matmul %26, %28, %cst_40 {dimension_numbers = #tpu.dot_dimension_numbers<[1], [0], [0], [1], [0, 0, 1, 1], [], []>} : vector<1024x16xf32>, vector<16x20xf32>, vector<1024x20xf32> -> vector<1024x20xf32>
    %30 = arith.addf %24, %29 : vector<1024x20xf32>
    %c1_41 = arith.constant 1 : index
    %c1_42 = arith.constant 1 : index
    %c0_43 = arith.constant 0 : index
    %31 = vector.load %arg7[%c1_41, %c1_42, %c0_43] : memref<33x33x16xf32, #tpu.memory_space<vmem>>, vector<32x32x16xf32>
    %32 = vector.shape_cast %31 : vector<32x32x16xf32> to vector<1024x16xf32>
    %c1_44 = arith.constant 1 : index
    %c1_45 = arith.constant 1 : index
    %c0_46 = arith.constant 0 : index
    %c0_47 = arith.constant 0 : index
    %33 = vector.load %arg4[%c1_44, %c1_45, %c0_46, %c0_47] : memref<2x2x16x20xf32, #tpu.memory_space<vmem>>, vector<1x1x16x20xf32>
    %34 = vector.shape_cast %33 : vector<1x1x16x20xf32> to vector<16x20xf32>
    %cst_48 = arith.constant dense<0.000000e+00> : vector<1024x20xf32>
    %35 = tpu.matmul %32, %34, %cst_48 {dimension_numbers = #tpu.dot_dimension_numbers<[1], [0], [0], [1], [0, 0, 1, 1], [], []>} : vector<1024x16xf32>, vector<16x20xf32>, vector<1024x20xf32> -> vector<1024x20xf32>
    %36 = arith.addf %30, %35 : vector<1024x20xf32>
    %c0_49 = arith.constant 0 : index
    %c0_50 = arith.constant 0 : index
    %37 = vector.load %arg5[%c0_49, %c0_50] : memref<1x20xf32, #tpu.memory_space<vmem>>, vector<1x20xf32>
    %38 = vector.broadcast %37 : vector<1x20xf32> to vector<1024x20xf32>
    %39 = arith.addf %36, %38 : vector<1024x20xf32>
    %40 = vector.shape_cast %39 : vector<1024x20xf32> to vector<1x32x32x20xf32>
    %c0_51 = arith.constant 0 : index
    %c0_52 = arith.constant 0 : index
    %c0_53 = arith.constant 0 : index
    %c0_54 = arith.constant 0 : index
    %41 = vector.load %arg6[%c0_51, %c0_52, %c0_53, %c0_54] : memref<1x32x32x20xf32, #tpu.memory_space<vmem>>, vector<1x32x32x20xf32>
    tpu.vector_store %arg6[%c0_51, %c0_52, %c0_53, %c0_54], %40 {strides = array<i32>} : memref<1x32x32x20xf32, #tpu.memory_space<vmem>>, vector<1x32x32x20xf32>,
    return
  }
  func.func @transform_0(%arg0: i32, %arg1: i32) -> (i32, i32, i32, i32) {
    %c0_i32 = arith.constant 0 : i32
    %c0_i32_0 = arith.constant 0 : i32
    %c0_i32_1 = arith.constant 0 : i32
    return %arg0, %arg1, %c0_i32, %c0_i32_0 : i32, i32, i32, i32
  }
  func.func @transform_1(%arg0: i32, %arg1: i32) -> (i32, i32, i32, i32) {
    %c1_i32 = arith.constant 1 : i32
    %0 = arith.addi %arg1, %c1_i32 : i32
    %c32_i32 = arith.constant 32 : i32
    %1 = arith.muli %0, %c32_i32 : i32
    %c31_i32 = arith.constant 31 : i32
    %2 = arith.minsi %1, %c31_i32 : i32
    %c0_i32 = arith.constant 0 : i32
    %c0_i32_0 = arith.constant 0 : i32
    %c0_i32_1 = arith.constant 0 : i32
    return %arg0, %2, %c0_i32, %c0_i32_0 : i32, i32, i32, i32
  }
  func.func @transform_2(%arg0: i32, %arg1: i32) -> (i32, i32, i32, i32) {
    %c0_i32 = arith.constant 0 : i32
    %c0_i32_0 = arith.constant 0 : i32
    %c0_i32_1 = arith.constant 0 : i32
    %c0_i32_2 = arith.constant 0 : i32
    %c0_i32_3 = arith.constant 0 : i32
    return %c0_i32, %c0_i32_0, %c0_i32_1, %c0_i32_2 : i32, i32, i32, i32
  }
  func.func @transform_3(%arg0: i32, %arg1: i32) -> (i32, i32) {
    %c0_i32 = arith.constant 0 : i32
    %c0_i32_0 = arith.constant 0 : i32
    %c0_i32_1 = arith.constant 0 : i32
    return %c0_i32, %c0_i32_0 : i32, i32
  }
  func.func @transform_4(%arg0: i32, %arg1: i32) -> (i32, i32, i32, i32) {
    %c0_i32 = arith.constant 0 : i32
    %c0_i32_0 = arith.constant 0 : i32
    %c0_i32_1 = arith.constant 0 : i32
    return %arg0, %arg1, %c0_i32, %c0_i32_0 : i32, i32, i32, i32
  }
}

</mosaic_0001>

<llo_original>
// kernel: _lambda_.5
$region0: #{_lambda_.5}
  #allocation0 [shape = 'u32[]', space=smem, size = 0x4, offset = 0x4, fixed_abs, tag = 'smem constant byte address 0x4 - core index']
  #allocation1 [shape = 'u32[72,128]{1,0:T(1,128)}', space=vmem, size = 0x9000, scoped, tag = 'internal scratch']
  #allocation2 [shape = 'f32[9,9,16]{2,1,0:T(8,128)}', space=vmem, size = 0x12000, scoped, tag = 'scratch operand']
  %s0 = inlined_call_operand.vmem [shape: f32[2,8,8,16], index: 0, kind: input, shape index: {}, may-alias: {0,1}]
  %s1 = inlined_call_operand.vmem [shape: f32[2,8,8,16], index: 1, kind: input, shape index: {}, may-alias: {0,1}]
  %s2 = inlined_call_operand.hbm [shape: f32[2,2,16,64], index: 2, kind: input, shape index: {}]
  %s3 = inlined_call_operand.vmem [shape: f32[1,64], index: 3, kind: input, shape index: {}]
  %s4 = inlined_call_operand.hbm [shape: f32[64,64], index: 4, kind: input, shape index: {}]
  %s5 = inlined_call_operand.vmem [shape: f32[1,64], index: 5, kind: input, shape index: {}]
  %s6 = inlined_call_operand.vmem [shape: f32[2,8,8,64], index: 6, kind: output, shape index: {}]
  %s7 = sld [smem:[#allocation0]]
  $region65: #{_lambda_.5} parent=0
    _
  %s9 = ssub.s32 1, %s7
  %s10 = scalar_select 0, %s9, %s7
  $region1: #{_lambda_.5} parent=0
    #allocation3 [shape = 'u8[32768]{0}', space=vmem, size = 0x8000, scoped, tag = 'input window, operand 2, single buffered']
    #allocation4 [shape = 's32[2]{0}', space=sflag, size = 0x8, scoped, tag = 'scoped memory for _lambda_.5']
    #allocation5 [shape = 'u8[32768]{0}', space=vmem, size = 0x8000, scoped, tag = 'input window, operand 4, single buffered']
    #allocation6 [shape = 's32[1]{0}', space=sflag, size = 0x4, scoped, tag = 'scoped memory for _lambda_.5']
    %11 = vsyncpa [#allocation4], 0
    %12 = vsyncpa [#allocation6], 0
    loop: start=0, step=1, limit=4
    $region2: #{_lambda_.5} parent=1 // loop_pre_header
      _
    $region3: #{_lambda_.5} parent=1 // loop_header
      %s14 = sphi 0, %s18
      %p15 = scmp.ge.s32.totalorder %s14, 4
      %s21 = sphi 0, %s33
      %s22 = sphi 0, %s29
      %s23 = sphi 0, %s21
      %s24 = sphi 0, %s22
      %s25 = sphi 0, %s23
      %s26 = sphi 0, %s24
      %s38 = sphi 0, %s40
      %s41 = sphi 0, %s38
      %s42 = sphi 0, %s41
      %s58 = sphi 0, %s42
      %s74 = sphi 0, %s76
      %s77 = sphi 0, %s74
      %s78 = sphi 0, %s77
      %s94 = sphi 0, %s78
      %s98 = sphi 0, %s98
      %s100 = sphi 0, %s98
      %s101 = sphi 0, %s100
      %s115 = sphi 0, %s101
      %s119 = sphi 0, %s119
      %s121 = sphi 0, %s119
      %s122 = sphi 0, %s121
      %s136 = sphi 0, %s122
      %s140 = sphi 0, %s140
      %s142 = sphi 0, %s140
      %s143 = sphi 0, %s142
      %s157 = sphi 0, %s143
      %s161 = sphi 0, %s161
      %s163 = sphi 0, %s161
      %s164 = sphi 0, %s163
      %s178 = sphi 0, %s164
      %s186 = sphi 0, %s188
      %s189 = sphi 0, %s186
      %s190 = sphi 0, %s189
      %s206 = sphi 0, %s190
    $region4: #{_lambda_.5} parent=1 // loop_header_branch
      %17 = sbr.rel (%p15) target = $region8
    $region5: #{_lambda_.5} parent=1 // loop_body
      %s19 = ssub.s32 %s14, 1
      %s20 = ssub.s32 %s14, 2
      %s27 = sadd.s32 1, %s22
      %p28 = scmp.ge.s32.totalorder %s27, 1
      %s29 = scalar_select %p28, 0, %s27
      %s30 = sadd.s32 1, %s21
      %s31 = scalar_select %p28, %s30, %s21
      %p32 = scmp.ge.s32.totalorder %s31, 2
      %s33 = scalar_select %p32, 0, %s31
      %s34 = ssub.s32 %s21, %s33
      %s35 = ssub.s32 %s22, %s29
      %s36 = sor.u32 %s34, %s35
      %p37 = scmp.eq.s32.totalorder %s36, 0
      %s39 = sadd.s32 %s38, 1
      %s40 = scalar_select %p37, %s38, %s39
      %p43 = pneg %p37
      %p44 = scmp.eq.s32.totalorder %s14, 1
      %p45 = por %p43, %p44
      %p46 = scmp.ne.s32.totalorder %s38, %s41
      %p47 = scmp.eq.s32.totalorder %s14, 0
      %p48 = por %p46, %p47
      %p49 = scmp.ne.s32.totalorder %s38, %s41
      %p50 = scmp.eq.s32.totalorder %s19, 1
      %p51 = por %p49, %p50
      %p52 = scmp.ne.s32.totalorder %s41, %s42
      %p53 = scmp.eq.s32.totalorder %s19, 0
      %p54 = por %p52, %p53
      %p55 = scmp.ne.s32.totalorder %s41, %s42
      %p56 = scmp.eq.s32.totalorder %s20, 1
      %p57 = por %p55, %p56
      %p59 = scmp.ne.s32.totalorder %s42, %s58
      %p60 = scmp.eq.s32.totalorder %s20, 0
      %p61 = por %p59, %p60
      %s62 = sadd.s32 %s22, 1
      %s63 = smul.u32 %s62, 8
      %p64 = scmp.lt.s32.totalorder %s63, 7
      %s65 = scalar_select %p64, %s63, 7
      %s66 = sadd.s32 %s29, 1
      %s67 = smul.u32 %s66, 8
      %p68 = scmp.lt.s32.totalorder %s67, 7
      %s69 = scalar_select %p68, %s67, 7
      %s70 = ssub.s32 %s21, %s33
      %s71 = ssub.s32 %s65, %s69
      %s72 = sor.u32 %s70, %s71
      %p73 = scmp.eq.s32.totalorder %s72, 0
      %s75 = sadd.s32 %s74, 1
      %s76 = scalar_select %p73, %s74, %s75
      %p79 = pneg %p73
      %p80 = scmp.eq.s32.totalorder %s14, 1
      %p81 = por %p79, %p80
      %p82 = scmp.ne.s32.totalorder %s74, %s77
      %p83 = scmp.eq.s32.totalorder %s14, 0
      %p84 = por %p82, %p83
      %p85 = scmp.ne.s32.totalorder %s74, %s77
      %p86 = scmp.eq.s32.totalorder %s19, 1
      %p87 = por %p85, %p86
      %p88 = scmp.ne.s32.totalorder %s77, %s78
      %p89 = scmp.eq.s32.totalorder %s19, 0
      %p90 = por %p88, %p89
      %p91 = scmp.ne.s32.totalorder %s77, %s78
      %p92 = scmp.eq.s32.totalorder %s20, 1
      %p93 = por %p91, %p92
      %p95 = scmp.ne.s32.totalorder %s78, %s94
      %p96 = scmp.eq.s32.totalorder %s20, 0
      %p97 = por %p95, %p96
      %s99 = sadd.s32 %s98, 1
      %p102 = scmp.eq.s32.totalorder %s14, 1
      %p103 = scmp.ne.s32.totalorder %s98, %s100
      %p104 = scmp.eq.s32.totalorder %s14, 0
      %p105 = por %p103, %p104
      %p106 = scmp.ne.s32.totalorder %s98, %s100
      %p107 = scmp.eq.s32.totalorder %s19, 1
      %p108 = por %p106, %p107
      %p109 = scmp.ne.s32.totalorder %s100, %s101
      %p110 = scmp.eq.s32.totalorder %s19, 0
      %p111 = por %p109, %p110
      %p112 = scmp.ne.s32.totalorder %s100, %s101
      %p113 = scmp.eq.s32.totalorder %s20, 1
      %p114 = por %p112, %p113
      %p116 = scmp.ne.s32.totalorder %s101, %s115
      %p117 = scmp.eq.s32.totalorder %s20, 0
      %p118 = por %p116, %p117
      %s120 = sadd.s32 %s119, 1
      %p123 = scmp.eq.s32.totalorder %s14, 1
      %p124 = scmp.ne.s32.totalorder %s119, %s121
      %p125 = scmp.eq.s32.totalorder %s14, 0
      %p126 = por %p124, %p125
      %p127 = scmp.ne.s32.totalorder %s119, %s121
      %p128 = scmp.eq.s32.totalorder %s19, 1
      %p129 = por %p127, %p128
      %p130 = scmp.ne.s32.totalorder %s121, %s122
      %p131 = scmp.eq.s32.totalorder %s19, 0
      %p132 = por %p130, %p131
      %p133 = scmp.ne.s32.totalorder %s121, %s122
      %p134 = scmp.eq.s32.totalorder %s20, 1
      %p135 = por %p133, %p134
      %p137 = scmp.ne.s32.totalorder %s122, %s136
      %p138 = scmp.eq.s32.totalorder %s20, 0
      %p139 = por %p137, %p138
      %s141 = sadd.s32 %s140, 1
      %p144 = scmp.eq.s32.totalorder %s14, 1
      %p145 = scmp.ne.s32.totalorder %s140, %s142
      %p146 = scmp.eq.s32.totalorder %s14, 0
      %p147 = por %p145, %p146
      %p148 = scmp.ne.s32.totalorder %s140, %s142
      %p149 = scmp.eq.s32.totalorder %s19, 1
      %p150 = por %p148, %p149
      %p151 = scmp.ne.s32.totalorder %s142, %s143
      %p152 = scmp.eq.s32.totalorder %s19, 0
      %p153 = por %p151, %p152
      %p154 = scmp.ne.s32.totalorder %s142, %s143
      %p155 = scmp.eq.s32.totalorder %s20, 1
      %p156 = por %p154, %p155
      %p158 = scmp.ne.s32.totalorder %s143, %s157
      %p159 = scmp.eq.s32.totalorder %s20, 0
      %p160 = por %p158, %p159
      %s162 = sadd.s32 %s161, 1
      %p165 = scmp.eq.s32.totalorder %s14, 1
      %p166 = scmp.ne.s32.totalorder %s161, %s163
      %p167 = scmp.eq.s32.totalorder %s14, 0
      %p168 = por %p166, %p167
      %p169 = scmp.ne.s32.totalorder %s161, %s163
      %p170 = scmp.eq.s32.totalorder %s19, 1
      %p171 = por %p169, %p170
      %p172 = scmp.ne.s32.totalorder %s163, %s164
      %p173 = scmp.eq.s32.totalorder %s19, 0
      %p174 = por %p172, %p173
      %p175 = scmp.ne.s32.totalorder %s163, %s164
      %p176 = scmp.eq.s32.totalorder %s20, 1
      %p177 = por %p175, %p176
      %p179 = scmp.ne.s32.totalorder %s164, %s178
      %p180 = scmp.eq.s32.totalorder %s20, 0
      %p181 = por %p179, %p180
      %s182 = ssub.s32 %s21, %s33
      %s183 = ssub.s32 %s22, %s29
      %s184 = sor.u32 %s182, %s183
      %p185 = scmp.eq.s32.totalorder %s184, 0
      %s187 = sadd.s32 %s186, 1
      %s188 = scalar_select %p185, %s186, %s187
      %p191 = pneg %p185
      %p192 = scmp.eq.s32.totalorder %s14, 1
      %p193 = por %p191, %p192
      %p194 = scmp.ne.s32.totalorder %s186, %s189
      %p195 = scmp.eq.s32.totalorder %s14, 0
      %p196 = por %p194, %p195
      %p197 = scmp.ne.s32.totalorder %s186, %s189
      %p198 = scmp.eq.s32.totalorder %s19, 1
      %p199 = por %p197, %p198
      %p200 = scmp.ne.s32.totalorder %s189, %s190
      %p201 = scmp.eq.s32.totalorder %s19, 0
      %p202 = por %p200, %p201
      %p203 = scmp.ne.s32.totalorder %s189, %s190
      %p204 = scmp.eq.s32.totalorder %s20, 1
      %p205 = por %p203, %p204
      %p207 = scmp.ne.s32.totalorder %s190, %s206
      %p208 = scmp.eq.s32.totalorder %s20, 0
      %p209 = por %p207, %p208
      %p210 = scmp.le.s32.totalorder 1, %s14
      %p211 = scmp.lt.s32.totalorder %s14, 3
      %p212 = pnand %p210, %p211
      %p213 = pneg %p212
      // Predicated region
      $region9: #{_lambda_.5} parent=5 // pred_check
        _
      $region10: #{_lambda_.5} parent=5 // pred_check_branch
        %215 = sbr.rel (%p212) target = $region12
      $region11: #{_lambda_.5} parent=5 // pred_region
        %s216 = ssub.s32 %s14, 1
        // Predicated region
        $region13: #{_lambda_.5} parent=11 // pred_check
          %p217 = pneg %p111
        $region14: #{_lambda_.5} parent=11 // pred_check_branch
          %219 = sbr.rel (%p217) target = $region16
        $region15: #{_lambda_.5} parent=11 // pred_region
          %221 = vsyncadd [#allocation4], 0
          %s222 = sshll.u32 %s2, 4
          %s223 = int_to_ptr.hbm [resolvable:$true] %s222
          %s224 = sshll.u32 [#allocation3], 4
          %s225 = int_to_ptr.vmem [resolvable:$true] %s224
          %230 = dma.hbm_to_vmem [thread:$0]  %s223, 1024, %s225, [#allocation4], 128, 128, 8
        $region16: #{_lambda_.5} parent=11 // pred_fallthru
          _
        // Predicated region
        $region17: #{_lambda_.5} parent=11 // pred_check
          %p231 = pneg %p132
        $region18: #{_lambda_.5} parent=11 // pred_check_branch
          %233 = sbr.rel (%p231) target = $region20
        $region19: #{_lambda_.5} parent=11 // pred_region
          _
        $region20: #{_lambda_.5} parent=11 // pred_fallthru
          _
        // Predicated region
        $region21: #{_lambda_.5} parent=11 // pred_check
          %p234 = pneg %p153
        $region22: #{_lambda_.5} parent=11 // pred_check_branch
          %236 = sbr.rel (%p234) target = $region24
        $region23: #{_lambda_.5} parent=11 // pred_region
          %238 = vsyncadd [#allocation6], 0
          %s239 = sshll.u32 %s4, 4
          %s240 = int_to_ptr.hbm [resolvable:$true] %s239
          %s241 = sshll.u32 [#allocation5], 4
          %s242 = int_to_ptr.vmem [resolvable:$true] %s241
          %247 = dma.hbm_to_vmem [thread:$0]  %s240, 1024, %s242, [#allocation6], 128, 128, 8
        $region24: #{_lambda_.5} parent=11 // pred_fallthru
          _
        // Predicated region
        $region25: #{_lambda_.5} parent=11 // pred_check
          %p248 = pneg %p174
        $region26: #{_lambda_.5} parent=11 // pred_check_branch
          %250 = sbr.rel (%p248) target = $region28
        $region27: #{_lambda_.5} parent=11 // pred_region
          _
        $region28: #{_lambda_.5} parent=11 // pred_fallthru
          _
      $region12: #{_lambda_.5} parent=5 // pred_fallthru
        _
      %p251 = scmp.lt.s32.totalorder %s14, 2
      // Predicated region
      $region29: #{_lambda_.5} parent=5 // pred_check
        %p252 = pneg %p251
      $region30: #{_lambda_.5} parent=5 // pred_check_branch
        %254 = sbr.rel (%p252) target = $region32
      $region31: #{_lambda_.5} parent=5 // pred_region
        // Predicated region
        $region33: #{_lambda_.5} parent=31 // pred_check
          %p255 = pneg %p48
        $region34: #{_lambda_.5} parent=31 // pred_check_branch
          %257 = sbr.rel (%p255) target = $region36
        $region35: #{_lambda_.5} parent=31 // pred_region
          %s258 = smul.u32 8, %s22
          %p259 = scmp.lt.s32.totalorder %s21, 1
          %s260 = scalar_select %p259, %s21, 1
          %p261 = scmp.lt.s32.totalorder %s258, 7
          %s262 = scalar_select %p261, %s258, 7
          %s263 = smul.addr %s260, 8
          %s264 = sadd.s32 %s262, %s263
          %s265 = smul.addr %s264, 8
          %s266 = scalar_lea.vmem %s0, %s265
          %s267 = smul.u32 8, %s22
        $region36: #{_lambda_.5} parent=31 // pred_fallthru
          _
        // Predicated region
        $region37: #{_lambda_.5} parent=31 // pred_check
          %p268 = pneg %p84
        $region38: #{_lambda_.5} parent=31 // pred_check_branch
          %270 = sbr.rel (%p268) target = $region40
        $region39: #{_lambda_.5} parent=31 // pred_region
          %s271 = sadd.s32 %s22, 1
          %s272 = smul.u32 %s271, 8
          %p273 = scmp.lt.s32.totalorder %s272, 7
          %s274 = scalar_select %p273, %s272, 7
          %p275 = scmp.lt.s32.totalorder %s21, 1
          %s276 = scalar_select %p275, %s21, 1
          %p277 = scmp.lt.s32.totalorder %s274, 7
          %s278 = scalar_select %p277, %s274, 7
          %s279 = smul.addr %s276, 8
          %s280 = sadd.s32 %s278, %s279
          %s281 = smul.addr %s280, 8
          %s282 = scalar_lea.vmem %s1, %s281
          %s283 = sadd.s32 %s22, 1
          %s284 = smul.u32 %s283, 8
          %p285 = scmp.lt.s32.totalorder %s284, 7
          %s286 = scalar_select %p285, %s284, 7
        $region40: #{_lambda_.5} parent=31 // pred_fallthru
          _
      $region32: #{_lambda_.5} parent=5 // pred_fallthru
        _
      %p287 = scmp.le.s32.totalorder 1, %s14
      %p288 = scmp.lt.s32.totalorder %s14, 3
      %p289 = pnand %p287, %p288
      %p290 = pneg %p289
      // Predicated region
      $region41: #{_lambda_.5} parent=5 // pred_check
        _
      $region42: #{_lambda_.5} parent=5 // pred_check_branch
        %292 = sbr.rel (%p289) target = $region44
      $region43: #{_lambda_.5} parent=5 // pred_region
        %s293 = ssub.s32 %s14, 1
        // Predicated region
        $region45: #{_lambda_.5} parent=43 // pred_check
          %p294 = pneg %p111
        $region46: #{_lambda_.5} parent=43 // pred_check_branch
          %296 = sbr.rel (%p294) target = $region48
        $region47: #{_lambda_.5} parent=43 // pred_region
          %298 = dma.done [#allocation4], 1024
        $region48: #{_lambda_.5} parent=43 // pred_fallthru
          _
        // Predicated region
        $region49: #{_lambda_.5} parent=43 // pred_check
          %p299 = pneg %p153
        $region50: #{_lambda_.5} parent=43 // pred_check_branch
          %301 = sbr.rel (%p299) target = $region52
        $region51: #{_lambda_.5} parent=43 // pred_region
          %303 = dma.done [#allocation6], 1024
        $region52: #{_lambda_.5} parent=43 // pred_fallthru
          _
        %s304 = smul.u32 8, %s24
        %p305 = scmp.lt.s32.totalorder %s23, 1
        %s306 = scalar_select %p305, %s23, 1
        %p307 = scmp.lt.s32.totalorder %s304, 7
        %s308 = scalar_select %p307, %s304, 7
        %s309 = smul.addr %s306, 8
        %s310 = sadd.s32 %s308, %s309
        %s311 = smul.addr %s310, 8
        %s312 = scalar_lea.vmem %s0, %s311
        %p313 = pneg %p54
        %p314 = pneg %p51
        %s315 = sadd.s32 %s24, 1
        %s316 = smul.u32 %s315, 8
        %p317 = scmp.lt.s32.totalorder %s316, 7
        %s318 = scalar_select %p317, %s316, 7
        %p319 = scmp.lt.s32.totalorder %s23, 1
        %s320 = scalar_select %p319, %s23, 1
        %p321 = scmp.lt.s32.totalorder %s318, 7
        %s322 = scalar_select %p321, %s318, 7
        %s323 = smul.addr %s320, 8
        %s324 = sadd.s32 %s322, %s323
        %s325 = smul.addr %s324, 8
        %s326 = scalar_lea.vmem %s1, %s325
        %p327 = pneg %p90
        %p328 = pneg %p87
        %p329 = pneg %p111
        %p330 = pneg %p108
        %p331 = pneg %p132
        %p332 = pneg %p129
        %p333 = pneg %p153
        %p334 = pneg %p150
        %p335 = pneg %p174
        %p336 = pneg %p171
        %p337 = pneg %p202
        %p338 = pneg %p199
        %s339 = smul.u32 8, %s24
        %p340 = scmp.lt.s32.totalorder %s23, 1
        %s341 = scalar_select %p340, %s23, 1
        %p342 = scmp.lt.s32.totalorder %s339, 7
        %s343 = scalar_select %p342, %s339, 7
        %s344 = smul.addr %s341, 8
        %s345 = sadd.s32 %s343, %s344
        %s346 = smul.addr %s345, 8
        %s347 = scalar_lea.vmem %s6, %s346
        %s348 = smul.u32 8, %s24
        %p349 = scmp.lt.s32.totalorder %s23, 1
        %s350 = scalar_select %p349, %s23, 1
        %p351 = scmp.lt.s32.totalorder %s348, 7
        %s352 = scalar_select %p351, %s348, 7
        %s353 = smul.addr %s350, 8
        %s354 = sadd.s32 %s352, %s353
        %s355 = smul.addr %s354, 8
        %s356 = scalar_lea.vmem %s0, %s355
        %s357 = smul.u32 8, %s24
        %s358 = sadd.s32 %s24, 1
        %s359 = smul.u32 %s358, 8
        %p360 = scmp.lt.s32.totalorder %s359, 7
        %s361 = scalar_select %p360, %s359, 7
        %p362 = scmp.lt.s32.totalorder %s23, 1
        %s363 = scalar_select %p362, %s23, 1
        %p364 = scmp.lt.s32.totalorder %s361, 7
        %s365 = scalar_select %p364, %s361, 7
        %s366 = smul.addr %s363, 8
        %s367 = sadd.s32 %s365, %s366
        %s368 = smul.addr %s367, 8
        %s369 = scalar_lea.vmem %s1, %s368
        %s370 = sadd.s32 %s24, 1
        %s371 = smul.u32 %s370, 8
        %p372 = scmp.lt.s32.totalorder %s371, 7
        %s373 = scalar_select %p372, %s371, 7
        %s374 = smul.u32 8, %s24
        %p375 = scmp.lt.s32.totalorder %s23, 1
        %s376 = scalar_select %p375, %s23, 1
        %p377 = scmp.lt.s32.totalorder %s374, 7
        %s378 = scalar_select %p377, %s374, 7
        %s379 = smul.addr %s376, 8
        %s380 = sadd.s32 %s378, %s379
        %s381 = smul.addr %s380, 8
        %s382 = scalar_lea.vmem %s6, %s381
        %s383 = smul.u32 8, %s24
        %vm384 = vcmask 122880
        %385 = vst.msk [vmem:[#allocation2 + $0x8] sm:$0x1] %vm384, 0.0
        %386 = vst.msk [vmem:[#allocation2 + $0x18] sm:$0x1] %vm384, 0.0
        %387 = vst.msk [vmem:[#allocation2 + $0x28] sm:$0x1] %vm384, 0.0
        %388 = vst.msk [vmem:[#allocation2 + $0x38] sm:$0x1] %vm384, 0.0
        %389 = vst.msk [vmem:[#allocation2 + $0x48] sm:$0x1] %vm384, 0.0
        %390 = vst.msk [vmem:[#allocation2 + $0x58] sm:$0x1] %vm384, 0.0
        %391 = vst.msk [vmem:[#allocation2 + $0x68] sm:$0x1] %vm384, 0.0
        %392 = vst.msk [vmem:[#allocation2 + $0x78] sm:$0x1] %vm384, 0.0
        %393 = vst.msk [vmem:[#allocation2 + $0x88] sm:$0x1] %vm384, 0.0
        %s394 = sadd.s32 %s24, 1
        %p395 = scmp.lt.s32.totalorder %s394, 1
        %v396 = vld [vmem:[%s369] sm:$0xff]
        %s397 = scalar_select %p395, 1, 0
        %v398 = vstv %s397
        %vm399 = vcmp.eq.s32.totalorder %v398, 1
        %v400 = vsel %vm399, %v396, 0.0
        %s401 = scalar_lea.vmem [#allocation2], 128
        %vm402 = vcmask 130048
        %403 = vst.msk [vmem:[%s401] sm:$0xff] %vm402, %v400
        %v404 = vld [vmem:[%s356] sm:$0xff]
        %v405 = vld [vmem:[%s356 + $0x8] sm:$0xff]
        %v406 = vld [vmem:[%s356 + $0x10] sm:$0xff]
        %v407 = vld [vmem:[%s356 + $0x18] sm:$0xff]
        %v408 = vld [vmem:[%s356 + $0x20] sm:$0xff]
        %v409 = vld [vmem:[%s356 + $0x28] sm:$0xff]
        %v410 = vld [vmem:[%s356 + $0x30] sm:$0xff]
        %v411 = vld [vmem:[%s356 + $0x38] sm:$0xff]
        %412 = vst.msk [vmem:[#allocation2] sm:$0xff] %vm402, %v404
        %413 = vst.msk [vmem:[#allocation2 + $0x10] sm:$0xff] %vm402, %v405
        %414 = vst.msk [vmem:[#allocation2 + $0x20] sm:$0xff] %vm402, %v406
        %415 = vst.msk [vmem:[#allocation2 + $0x30] sm:$0xff] %vm402, %v407
        %416 = vst.msk [vmem:[#allocation2 + $0x40] sm:$0xff] %vm402, %v408
        %417 = vst.msk [vmem:[#allocation2 + $0x50] sm:$0xff] %vm402, %v409
        %418 = vst.msk [vmem:[#allocation2 + $0x60] sm:$0xff] %vm402, %v410
        %419 = vst.msk [vmem:[#allocation2 + $0x70] sm:$0xff] %vm402, %v411
        %v420 = vld [vmem:[#allocation2] sm:$0xff]
        %v421 = vld [vmem:[#allocation2 + $0x10] sm:$0xff]
        %v422 = vld [vmem:[#allocation2 + $0x20] sm:$0xff]
        %v423 = vld [vmem:[#allocation2 + $0x30] sm:$0xff]
        %v424 = vld [vmem:[#allocation2 + $0x40] sm:$0xff]
        %v425 = vld [vmem:[#allocation2 + $0x50] sm:$0xff]
        %v426 = vld [vmem:[#allocation2 + $0x60] sm:$0xff]
        %v427 = vld [vmem:[#allocation2 + $0x70] sm:$0xff]
        %v428 = vld [vmem:[#allocation3] sm:$0xff]
        %v429 = vld [vmem:[#allocation3 + $0x8] sm:$0xff]
        %v430 = vld [vmem:[#allocation2 + $0x1] sm:$0xff]
        %v431 = vld [vmem:[#allocation2 + $0x11] sm:$0xff]
        %v432 = vld [vmem:[#allocation2 + $0x21] sm:$0xff]
        %v433 = vld [vmem:[#allocation2 + $0x31] sm:$0xff]
        %v434 = vld [vmem:[#allocation2 + $0x41] sm:$0xff]
        %v435 = vld [vmem:[#allocation2 + $0x51] sm:$0xff]
        %v436 = vld [vmem:[#allocation2 + $0x61] sm:$0xff]
        %v437 = vld [vmem:[#allocation2 + $0x71] sm:$0xff]
        %s438 = scalar_lea.vmem [#allocation3], 16
        %v439 = vld [vmem:[%s438] sm:$0xff]
        %v440 = vld [vmem:[%s438 + $0x8] sm:$0xff]
        %v442 = vsel %vm402, %v430, 0
        %v445 = vsel %vm402, %v431, 0
        %v448 = vsel %vm402, %v432, 0
        %v451 = vsel %vm402, %v433, 0
        %v454 = vsel %vm402, %v434, 0
        %v457 = vsel %vm402, %v435, 0
        %v460 = vsel %vm402, %v436, 0
        %v463 = vsel %vm402, %v437, 0
        %465 = vmatpush.msra.mxu0 0.0
        %466 = vmatpush.msra.mxu0 0.0
        %467 = vmatpush.msra.mxu0 0.0
        %468 = vmatpush.msra.mxu0 0.0
        %469 = vmatpush.msra.mxu0 0.0
        %470 = vmatpush.msra.mxu0 0.0
        %471 = vmatpush.msra.mxu0 0.0
        %472 = vmatpush.msra.mxu0 0.0
        %473 = vmatpush.msra.mxu0 0.0
        %474 = vmatpush.msra.mxu0 0.0
        %475 = vmatpush.msra.mxu0 0.0
        %476 = vmatpush.msra.mxu0 0.0
        %477 = vmatpush.msra.mxu0 0.0
        %478 = vmatpush.msra.mxu0 0.0
        %479 = vmatpush.msra.mxu0 %v440
        %480 = vmatpush.msra.mxu0 %v439
        %481 = vmatmul.f32.gmra.mxu0 %v442
        %v482 = vpop.f32.mrf.mxu0
        %v483 = vadd.f32 0.0, %v482
        %484 = vmatmul.f32.gmra.mxu0 %v445
        %v485 = vpop.f32.mrf.mxu0
        %v486 = vadd.f32 0.0, %v485
        %487 = vmatmul.f32.gmra.mxu0 %v448
        %v488 = vpop.f32.mrf.mxu0
        %v489 = vadd.f32 0.0, %v488
        %490 = vmatmul.f32.gmra.mxu0 %v451
        %v491 = vpop.f32.mrf.mxu0
        %v492 = vadd.f32 0.0, %v491
        %493 = vmatmul.f32.gmra.mxu0 %v454
        %v494 = vpop.f32.mrf.mxu0
        %v495 = vadd.f32 0.0, %v494
        %496 = vmatmul.f32.gmra.mxu0 %v457
        %v497 = vpop.f32.mrf.mxu0
        %v498 = vadd.f32 0.0, %v497
        %499 = vmatmul.f32.gmra.mxu0 %v460
        %v500 = vpop.f32.mrf.mxu0
        %v501 = vadd.f32 0.0, %v500
        %502 = vmatmul.f32.gmra.mxu0 %v463
        %v503 = vpop.f32.mrf.mxu0
        %v504 = vadd.f32 0.0, %v503
        %505 = vdwg.mxu0
        %v507 = vsel %vm402, %v420, 0
        %v510 = vsel %vm402, %v421, 0
        %v513 = vsel %vm402, %v422, 0
        %v516 = vsel %vm402, %v423, 0
        %v519 = vsel %vm402, %v424, 0
        %v522 = vsel %vm402, %v425, 0
        %v525 = vsel %vm402, %v426, 0
        %v528 = vsel %vm402, %v427, 0
        %530 = vmatpush.msra.mxu0 0.0
        %531 = vmatpush.msra.mxu0 0.0
        %532 = vmatpush.msra.mxu0 0.0
        %533 = vmatpush.msra.mxu0 0.0
        %534 = vmatpush.msra.mxu0 0.0
        %535 = vmatpush.msra.mxu0 0.0
        %536 = vmatpush.msra.mxu0 0.0
        %537 = vmatpush.msra.mxu0 0.0
        %538 = vmatpush.msra.mxu0 0.0
        %539 = vmatpush.msra.mxu0 0.0
        %540 = vmatpush.msra.mxu0 0.0
        %541 = vmatpush.msra.mxu0 0.0
        %542 = vmatpush.msra.mxu0 0.0
        %543 = vmatpush.msra.mxu0 0.0
        %544 = vmatpush.msra.mxu0 %v429
        %545 = vmatpush.msra.mxu0 %v428
        %546 = vmatmul.f32.gmra.mxu0 %v507
        %v547 = vpop.f32.mrf.mxu0
        %v548 = vadd.f32 %v483, %v547
        %549 = vmatmul.f32.gmra.mxu0 %v510
        %v550 = vpop.f32.mrf.mxu0
        %v551 = vadd.f32 %v486, %v550
        %552 = vmatmul.f32.gmra.mxu0 %v513
        %v553 = vpop.f32.mrf.mxu0
        %v554 = vadd.f32 %v489, %v553
        %555 = vmatmul.f32.gmra.mxu0 %v516
        %v556 = vpop.f32.mrf.mxu0
        %v557 = vadd.f32 %v492, %v556
        %558 = vmatmul.f32.gmra.mxu0 %v519
        %v559 = vpop.f32.mrf.mxu0
        %v560 = vadd.f32 %v495, %v559
        %561 = vmatmul.f32.gmra.mxu0 %v522
        %v562 = vpop.f32.mrf.mxu0
        %v563 = vadd.f32 %v498, %v562
        %564 = vmatmul.f32.gmra.mxu0 %v525
        %v565 = vpop.f32.mrf.mxu0
        %v566 = vadd.f32 %v501, %v565
        %567 = vmatmul.f32.gmra.mxu0 %v528
        %v568 = vpop.f32.mrf.mxu0
        %v569 = vadd.f32 %v504, %v568
        %570 = vdwg.mxu0
        %s571 = scalar_lea.vmem [#allocation2], 16
        %v572 = vld [vmem:[%s571] sm:$0xff]
        %v573 = vld [vmem:[%s571 + $0x10] sm:$0xff]
        %v574 = vld [vmem:[%s571 + $0x20] sm:$0xff]
        %v575 = vld [vmem:[%s571 + $0x30] sm:$0xff]
        %v576 = vld [vmem:[%s571 + $0x40] sm:$0xff]
        %v577 = vld [vmem:[%s571 + $0x50] sm:$0xff]
        %v578 = vld [vmem:[%s571 + $0x60] sm:$0xff]
        %v579 = vld [vmem:[%s571 + $0x70] sm:$0xff]
        %s580 = scalar_lea.vmem [#allocation3], 32
        %v581 = vld [vmem:[%s580] sm:$0xff]
        %v582 = vld [vmem:[%s580 + $0x8] sm:$0xff]
        %v584 = vsel %vm402, %v572, 0
        %v587 = vsel %vm402, %v573, 0
        %v590 = vsel %vm402, %v574, 0
        %v593 = vsel %vm402, %v575, 0
        %v596 = vsel %vm402, %v576, 0
        %v599 = vsel %vm402, %v577, 0
        %v602 = vsel %vm402, %v578, 0
        %v605 = vsel %vm402, %v579, 0
        %607 = vmatpush.msra.mxu0 0.0
        %608 = vmatpush.msra.mxu0 0.0
        %609 = vmatpush.msra.mxu0 0.0
        %610 = vmatpush.msra.mxu0 0.0
        %611 = vmatpush.msra.mxu0 0.0
        %612 = vmatpush.msra.mxu0 0.0
        %613 = vmatpush.msra.mxu0 0.0
        %614 = vmatpush.msra.mxu0 0.0
        %615 = vmatpush.msra.mxu0 0.0
        %616 = vmatpush.msra.mxu0 0.0
        %617 = vmatpush.msra.mxu0 0.0
        %618 = vmatpush.msra.mxu0 0.0
        %619 = vmatpush.msra.mxu0 0.0
        %620 = vmatpush.msra.mxu0 0.0
        %621 = vmatpush.msra.mxu0 %v582
        %622 = vmatpush.msra.mxu0 %v581
        %623 = vmatmul.f32.gmra.mxu0 %v584
        %v624 = vpop.f32.mrf.mxu0
        %v625 = vadd.f32 0.0, %v624
        %626 = vmatmul.f32.gmra.mxu0 %v587
        %v627 = vpop.f32.mrf.mxu0
        %v628 = vadd.f32 0.0, %v627
        %629 = vmatmul.f32.gmra.mxu0 %v590
        %v630 = vpop.f32.mrf.mxu0
        %v631 = vadd.f32 0.0, %v630
        %632 = vmatmul.f32.gmra.mxu0 %v593
        %v633 = vpop.f32.mrf.mxu0
        %v634 = vadd.f32 0.0, %v633
        %635 = vmatmul.f32.gmra.mxu0 %v596
        %v636 = vpop.f32.mrf.mxu0
        %v637 = vadd.f32 0.0, %v636
        %638 = vmatmul.f32.gmra.mxu0 %v599
        %v639 = vpop.f32.mrf.mxu0
        %v640 = vadd.f32 0.0, %v639
        %641 = vmatmul.f32.gmra.mxu0 %v602
        %v642 = vpop.f32.mrf.mxu0
        %v643 = vadd.f32 0.0, %v642
        %644 = vmatmul.f32.gmra.mxu0 %v605
        %v645 = vpop.f32.mrf.mxu0
        %v646 = vadd.f32 0.0, %v645
        %647 = vdwg.mxu0
        %v648 = vadd.f32 %v548, %v625
        %v649 = vadd.f32 %v551, %v628
        %v650 = vadd.f32 %v554, %v631
        %v651 = vadd.f32 %v557, %v634
        %v652 = vadd.f32 %v560, %v637
        %v653 = vadd.f32 %v563, %v640
        %v654 = vadd.f32 %v566, %v643
        %v655 = vadd.f32 %v569, %v646
        %v656 = vld [vmem:[%s571 + $0x1] sm:$0xff]
        %v657 = vld [vmem:[%s571 + $0x11] sm:$0xff]
        %v658 = vld [vmem:[%s571 + $0x21] sm:$0xff]
        %v659 = vld [vmem:[%s571 + $0x31] sm:$0xff]
        %v660 = vld [vmem:[%s571 + $0x41] sm:$0xff]
        %v661 = vld [vmem:[%s571 + $0x51] sm:$0xff]
        %v662 = vld [vmem:[%s571 + $0x61] sm:$0xff]
        %v663 = vld [vmem:[%s571 + $0x71] sm:$0xff]
        %s664 = scalar_lea.vmem [#allocation3], 48
        %v665 = vld [vmem:[%s664] sm:$0xff]
        %v666 = vld [vmem:[%s664 + $0x8] sm:$0xff]
        %v668 = vsel %vm402, %v656, 0
        %v671 = vsel %vm402, %v657, 0
        %v674 = vsel %vm402, %v658, 0
        %v677 = vsel %vm402, %v659, 0
        %v680 = vsel %vm402, %v660, 0
        %v683 = vsel %vm402, %v661, 0
        %v686 = vsel %vm402, %v662, 0
        %v689 = vsel %vm402, %v663, 0
        %691 = vmatpush.msra.mxu0 0.0
        %692 = vmatpush.msra.mxu0 0.0
        %693 = vmatpush.msra.mxu0 0.0
        %694 = vmatpush.msra.mxu0 0.0
        %695 = vmatpush.msra.mxu0 0.0
        %696 = vmatpush.msra.mxu0 0.0
        %697 = vmatpush.msra.mxu0 0.0
        %698 = vmatpush.msra.mxu0 0.0
        %699 = vmatpush.msra.mxu0 0.0
        %700 = vmatpush.msra.mxu0 0.0
        %701 = vmatpush.msra.mxu0 0.0
        %702 = vmatpush.msra.mxu0 0.0
        %703 = vmatpush.msra.mxu0 0.0
        %704 = vmatpush.msra.mxu0 0.0
        %705 = vmatpush.msra.mxu0 %v666
        %706 = vmatpush.msra.mxu0 %v665
        %707 = vmatmul.f32.gmra.mxu0 %v668
        %v708 = vpop.f32.mrf.mxu0
        %v709 = vadd.f32 0.0, %v708
        %710 = vmatmul.f32.gmra.mxu0 %v671
        %v711 = vpop.f32.mrf.mxu0
        %v712 = vadd.f32 0.0, %v711
        %713 = vmatmul.f32.gmra.mxu0 %v674
        %v714 = vpop.f32.mrf.mxu0
        %v715 = vadd.f32 0.0, %v714
        %716 = vmatmul.f32.gmra.mxu0 %v677
        %v717 = vpop.f32.mrf.mxu0
        %v718 = vadd.f32 0.0, %v717
        %719 = vmatmul.f32.gmra.mxu0 %v680
        %v720 = vpop.f32.mrf.mxu0
        %v721 = vadd.f32 0.0, %v720
        %722 = vmatmul.f32.gmra.mxu0 %v683
        %v723 = vpop.f32.mrf.mxu0
        %v724 = vadd.f32 0.0, %v723
        %725 = vmatmul.f32.gmra.mxu0 %v686
        %v726 = vpop.f32.mrf.mxu0
        %v727 = vadd.f32 0.0, %v726
        %728 = vmatmul.f32.gmra.mxu0 %v689
        %v729 = vpop.f32.mrf.mxu0
        %v730 = vadd.f32 0.0, %v729
        %731 = vdwg.mxu0
        %v732 = vadd.f32 %v648, %v709
        %v733 = vadd.f32 %v649, %v712
        %v734 = vadd.f32 %v650, %v715
        %v735 = vadd.f32 %v651, %v718
        %v736 = vadd.f32 %v652, %v721
        %v737 = vadd.f32 %v653, %v724
        %v738 = vadd.f32 %v654, %v727
        %v739 = vadd.f32 %v655, %v730
        %v740 = vld [vmem:[%s3] sm:$0x1]
        %v742 = vperm.slane %v740, 0
        %v744 = vadd.f32 %v732, %v742
        %v745 = vadd.f32 %v733, %v742
        %v746 = vadd.f32 %v734, %v742
        %v747 = vadd.f32 %v735, %v742
        %v748 = vadd.f32 %v736, %v742
        %v749 = vadd.f32 %v737, %v742
        %v750 = vadd.f32 %v738, %v742
        %v751 = vadd.f32 %v739, %v742
        %v752 = vmul.f32 %v744, %v744
        %v753 = vmul.f32 %v745, %v745
        %v754 = vmul.f32 %v746, %v746
        %v755 = vmul.f32 %v747, %v747
        %v756 = vmul.f32 %v748, %v748
        %v757 = vmul.f32 %v749, %v749
        %v758 = vmul.f32 %v750, %v750
        %v759 = vmul.f32 %v751, %v751
        %v760 = vld [vmem:[#allocation5] sm:$0xff]
        %v761 = vld [vmem:[#allocation5 + $0x8] sm:$0xff]
        %v762 = vld [vmem:[#allocation5 + $0x10] sm:$0xff]
        %v763 = vld [vmem:[#allocation5 + $0x18] sm:$0xff]
        %v764 = vld [vmem:[#allocation5 + $0x20] sm:$0xff]
        %v765 = vld [vmem:[#allocation5 + $0x28] sm:$0xff]
        %v766 = vld [vmem:[#allocation5 + $0x30] sm:$0xff]
        %v767 = vld [vmem:[#allocation5 + $0x38] sm:$0xff]
        %v768 = vld [vmem:[%s5] sm:$0x1]
        %v770 = vperm.slane %v768, 0
        %vm772 = vcmask 523264
        %v774 = vsel %vm772, %v752, 0
        %v777 = vsel %vm772, %v753, 0
        %v780 = vsel %vm772, %v754, 0
        %v783 = vsel %vm772, %v755, 0
        %v786 = vsel %vm772, %v756, 0
        %v789 = vsel %vm772, %v757, 0
        %v792 = vsel %vm772, %v758, 0
        %v795 = vsel %vm772, %v759, 0
        %797 = vmatpush.msra.mxu0 0.0
        %798 = vmatpush.msra.mxu0 0.0
        %799 = vmatpush.msra.mxu0 0.0
        %800 = vmatpush.msra.mxu0 0.0
        %801 = vmatpush.msra.mxu0 0.0
        %802 = vmatpush.msra.mxu0 0.0
        %803 = vmatpush.msra.mxu0 0.0
        %804 = vmatpush.msra.mxu0 0.0
        %805 = vmatpush.msra.mxu0 %v767
        %806 = vmatpush.msra.mxu0 %v766
        %807 = vmatpush.msra.mxu0 %v765
        %808 = vmatpush.msra.mxu0 %v764
        %809 = vmatpush.msra.mxu0 %v763
        %810 = vmatpush.msra.mxu0 %v762
        %811 = vmatpush.msra.mxu0 %v761
        %812 = vmatpush.msra.mxu0 %v760
        %813 = vmatmul.f32.gmra.mxu0 %v774
        %v814 = vpop.f32.mrf.mxu0
        %v815 = vadd.f32 %v770, %v814
        %816 = vmatmul.f32.gmra.mxu0 %v777
        %v817 = vpop.f32.mrf.mxu0
        %v818 = vadd.f32 %v770, %v817
        %819 = vmatmul.f32.gmra.mxu0 %v780
        %v820 = vpop.f32.mrf.mxu0
        %v821 = vadd.f32 %v770, %v820
        %822 = vmatmul.f32.gmra.mxu0 %v783
        %v823 = vpop.f32.mrf.mxu0
        %v824 = vadd.f32 %v770, %v823
        %825 = vmatmul.f32.gmra.mxu0 %v786
        %v826 = vpop.f32.mrf.mxu0
        %v827 = vadd.f32 %v770, %v826
        %828 = vmatmul.f32.gmra.mxu0 %v789
        %v829 = vpop.f32.mrf.mxu0
        %v830 = vadd.f32 %v770, %v829
        %831 = vmatmul.f32.gmra.mxu0 %v792
        %v832 = vpop.f32.mrf.mxu0
        %v833 = vadd.f32 %v770, %v832
        %834 = vmatmul.f32.gmra.mxu0 %v795
        %v835 = vpop.f32.mrf.mxu0
        %v836 = vadd.f32 %v770, %v835
        %837 = vdwg.mxu0
        %v838 = vrsqrt.pop %v815
        %v839 = vmul.f32 %v838, %v815
        %v840 = vmul.f32 %v839, %v838
        %v841 = vmul.f32 0.5, %v840
        %v842 = vsub.f32 1.5, %v841
        %v843 = vmul.f32 %v838, %v842
        %v844 = vmul.f32 %v815, %v843
        %vm845 = vcmp.eq.f32.partialorder %v815, inf
        %v846 = vsel %vm845, %v815, %v844
        %vm847 = vcmp.eq.f32.partialorder %v815, 0.0
        %v848 = vand.u32 %v815, 2147483648
        %v849 = vsel %vm847, %v848, %v846
        %v850 = vrsqrt.pop %v818
        %v851 = vmul.f32 %v850, %v818
        %v852 = vmul.f32 %v851, %v850
        %v853 = vmul.f32 0.5, %v852
        %v854 = vsub.f32 1.5, %v853
        %v855 = vmul.f32 %v850, %v854
        %v856 = vmul.f32 %v818, %v855
        %vm857 = vcmp.eq.f32.partialorder %v818, inf
        %v858 = vsel %vm857, %v818, %v856
        %vm859 = vcmp.eq.f32.partialorder %v818, 0.0
        %v860 = vand.u32 %v818, 2147483648
        %v861 = vsel %vm859, %v860, %v858
        %v862 = vrsqrt.pop %v821
        %v863 = vmul.f32 %v862, %v821
        %v864 = vmul.f32 %v863, %v862
        %v865 = vmul.f32 0.5, %v864
        %v866 = vsub.f32 1.5, %v865
        %v867 = vmul.f32 %v862, %v866
        %v868 = vmul.f32 %v821, %v867
        %vm869 = vcmp.eq.f32.partialorder %v821, inf
        %v870 = vsel %vm869, %v821, %v868
        %vm871 = vcmp.eq.f32.partialorder %v821, 0.0
        %v872 = vand.u32 %v821, 2147483648
        %v873 = vsel %vm871, %v872, %v870
        %v874 = vrsqrt.pop %v824
        %v875 = vmul.f32 %v874, %v824
        %v876 = vmul.f32 %v875, %v874
        %v877 = vmul.f32 0.5, %v876
        %v878 = vsub.f32 1.5, %v877
        %v879 = vmul.f32 %v874, %v878
        %v880 = vmul.f32 %v824, %v879
        %vm881 = vcmp.eq.f32.partialorder %v824, inf
        %v882 = vsel %vm881, %v824, %v880
        %vm883 = vcmp.eq.f32.partialorder %v824, 0.0
        %v884 = vand.u32 %v824, 2147483648
        %v885 = vsel %vm883, %v884, %v882
        %v886 = vrsqrt.pop %v827
        %v887 = vmul.f32 %v886, %v827
        %v888 = vmul.f32 %v887, %v886
        %v889 = vmul.f32 0.5, %v888
        %v890 = vsub.f32 1.5, %v889
        %v891 = vmul.f32 %v886, %v890
        %v892 = vmul.f32 %v827, %v891
        %vm893 = vcmp.eq.f32.partialorder %v827, inf
        %v894 = vsel %vm893, %v827, %v892
        %vm895 = vcmp.eq.f32.partialorder %v827, 0.0
        %v896 = vand.u32 %v827, 2147483648
        %v897 = vsel %vm895, %v896, %v894
        %v898 = vrsqrt.pop %v830
        %v899 = vmul.f32 %v898, %v830
        %v900 = vmul.f32 %v899, %v898
        %v901 = vmul.f32 0.5, %v900
        %v902 = vsub.f32 1.5, %v901
        %v903 = vmul.f32 %v898, %v902
        %v904 = vmul.f32 %v830, %v903
        %vm905 = vcmp.eq.f32.partialorder %v830, inf
        %v906 = vsel %vm905, %v830, %v904
        %vm907 = vcmp.eq.f32.partialorder %v830, 0.0
        %v908 = vand.u32 %v830, 2147483648
        %v909 = vsel %vm907, %v908, %v906
        %v910 = vrsqrt.pop %v833
        %v911 = vmul.f32 %v910, %v833
        %v912 = vmul.f32 %v911, %v910
        %v913 = vmul.f32 0.5, %v912
        %v914 = vsub.f32 1.5, %v913
        %v915 = vmul.f32 %v910, %v914
        %v916 = vmul.f32 %v833, %v915
        %vm917 = vcmp.eq.f32.partialorder %v833, inf
        %v918 = vsel %vm917, %v833, %v916
        %vm919 = vcmp.eq.f32.partialorder %v833, 0.0
        %v920 = vand.u32 %v833, 2147483648
        %v921 = vsel %vm919, %v920, %v918
        %v922 = vrsqrt.pop %v836
        %v923 = vmul.f32 %v922, %v836
        %v924 = vmul.f32 %v923, %v922
        %v925 = vmul.f32 0.5, %v924
        %v926 = vsub.f32 1.5, %v925
        %v927 = vmul.f32 %v922, %v926
        %v928 = vmul.f32 %v836, %v927
        %vm929 = vcmp.eq.f32.partialorder %v836, inf
        %v930 = vsel %vm929, %v836, %v928
        %vm931 = vcmp.eq.f32.partialorder %v836, 0.0
        %v932 = vand.u32 %v836, 2147483648
        %v933 = vsel %vm931, %v932, %v930
        %v934 = vmul.f32 %v744, %v849
        %v935 = vmul.f32 %v745, %v861
        %v936 = vmul.f32 %v746, %v873
        %v937 = vmul.f32 %v747, %v885
        %v938 = vmul.f32 %v748, %v897
        %v939 = vmul.f32 %v749, %v909
        %v940 = vmul.f32 %v750, %v921
        %v941 = vmul.f32 %v751, %v933
        %942 = vst.msk [vmem:[%s382] sm:$0xff] %vm772, %v934
        %943 = vst.msk [vmem:[%s382 + $0x8] sm:$0xff] %vm772, %v935
        %944 = vst.msk [vmem:[%s382 + $0x10] sm:$0xff] %vm772, %v936
        %945 = vst.msk [vmem:[%s382 + $0x18] sm:$0xff] %vm772, %v937
        %946 = vst.msk [vmem:[%s382 + $0x20] sm:$0xff] %vm772, %v938
        %947 = vst.msk [vmem:[%s382 + $0x28] sm:$0xff] %vm772, %v939
        %948 = vst.msk [vmem:[%s382 + $0x30] sm:$0xff] %vm772, %v940
        %949 = vst.msk [vmem:[%s382 + $0x38] sm:$0xff] %vm772, %v941
        %s950 = smul.u32 8, %s24
        %p951 = scmp.lt.s32.totalorder %s23, 1
        %s952 = scalar_select %p951, %s23, 1
        %p953 = scmp.lt.s32.totalorder %s950, 7
        %s954 = scalar_select %p953, %s950, 7
        %s955 = smul.addr %s952, 8
        %s956 = sadd.s32 %s954, %s955
        %s957 = smul.addr %s956, 8
        %s958 = scalar_lea.vmem %s6, %s957
        // Predicated region
        $region53: #{_lambda_.5} parent=43 // pred_check
          %p959 = pneg %p199
        $region54: #{_lambda_.5} parent=43 // pred_check_branch
          %961 = sbr.rel (%p959) target = $region56
        $region55: #{_lambda_.5} parent=43 // pred_region
          %s962 = smul.u32 8, %s24
        $region56: #{_lambda_.5} parent=43 // pred_fallthru
          _
      $region44: #{_lambda_.5} parent=5 // pred_fallthru
        _
      %p963 = scmp.le.s32.totalorder 2, %s14
      // Predicated region
      $region57: #{_lambda_.5} parent=5 // pred_check
        %p964 = pneg %p963
      $region58: #{_lambda_.5} parent=5 // pred_check_branch
        %966 = sbr.rel (%p964) target = $region60
      $region59: #{_lambda_.5} parent=5 // pred_region
        %s967 = ssub.s32 %s14, 2
        // Predicated region
        $region61: #{_lambda_.5} parent=59 // pred_check
          %p968 = pneg %p205
        $region62: #{_lambda_.5} parent=59 // pred_check_branch
          %970 = sbr.rel (%p968) target = $region64
        $region63: #{_lambda_.5} parent=59 // pred_region
          %s971 = smul.u32 8, %s26
          %p972 = scmp.lt.s32.totalorder %s25, 1
          %s973 = scalar_select %p972, %s25, 1
          %p974 = scmp.lt.s32.totalorder %s971, 7
          %s975 = scalar_select %p974, %s971, 7
          %s976 = smul.addr %s973, 8
          %s977 = sadd.s32 %s975, %s976
          %s978 = smul.addr %s977, 8
          %s979 = scalar_lea.vmem %s6, %s978
        $region64: #{_lambda_.5} parent=59 // pred_fallthru
          _
      $region60: #{_lambda_.5} parent=5 // pred_fallthru
        _
    $region6: #{_lambda_.5} parent=1 // loop_footer
      %s18 = sadd.s32 1, %s14
    $region7: #{_lambda_.5} parent=1 // loop_footer_branch
      %13 = sbr.rel target = $region3
    $region8: #{_lambda_.5} parent=1 // loop_exit
      _
    %980 = vsyncpa [#allocation4], 1
    %s981 = scalar_lea.sflag [#allocation4], 1
    %982 = vsyncpa %s981, 1
    %983 = vsyncpa [#allocation6], 1

// kernel: _lambda_.4
$region0: #{_lambda_.4}
  #allocation0 [shape = 'u32[]', space=smem, size = 0x4, offset = 0x4, fixed_abs, tag = 'smem constant byte address 0x4 - core index']
  #allocation1 [shape = 'u32[72,128]{1,0:T(1,128)}', space=vmem, size = 0x9000, scoped, tag = 'internal scratch']
  #allocation2 [shape = 'f32[10,10,8]{2,1,0:T(8,128)}', space=vmem, size = 0x14000, scoped, tag = 'scratch operand']
  %s0 = inlined_call_operand.vmem [shape: f32[2,8,8,8], index: 0, kind: input, shape index: {}, may-alias: {0,1,2}]
  %s1 = inlined_call_operand.vmem [shape: f32[2,8,8,8], index: 1, kind: input, shape index: {}, may-alias: {0,1,2}]
  %s2 = inlined_call_operand.vmem [shape: f32[2,8,8,8], index: 2, kind: input, shape index: {}, may-alias: {0,1,2}]
  %s3 = inlined_call_operand.hbm [shape: f32[3,3,8,16], index: 3, kind: input, shape index: {}]
  %s4 = inlined_call_operand.vmem [shape: f32[1,16], index: 4, kind: input, shape index: {}]
  %s5 = inlined_call_operand.hbm [shape: f32[16,16], index: 5, kind: input, shape index: {}]
  %s6 = inlined_call_operand.vmem [shape: f32[1,16], index: 6, kind: input, shape index: {}]
  %s7 = inlined_call_operand.vmem [shape: f32[2,8,8,16], index: 7, kind: output, shape index: {}]
  %s8 = sld [smem:[#allocation0]]
  $region69: #{_lambda_.4} parent=0
    _
  %s10 = ssub.s32 1, %s8
  %s11 = scalar_select 0, %s10, %s8
  $region1: #{_lambda_.4} parent=0
    #allocation3 [shape = 'u8[36864]{0}', space=vmem, size = 0x9000, scoped, tag = 'input window, operand 3, single buffered']
    #allocation4 [shape = 's32[2]{0}', space=sflag, size = 0x8, scoped, tag = 'scoped memory for _lambda_.4']
    #allocation5 [shape = 'u8[8192]{0}', space=vmem, size = 0x2000, scoped, tag = 'input window, operand 5, single buffered']
    #allocation6 [shape = 's32[1]{0}', space=sflag, size = 0x4, scoped, tag = 'scoped memory for _lambda_.4']
    %12 = vsyncpa [#allocation4], 0
    %13 = vsyncpa [#allocation6], 0
    loop: start=0, step=1, limit=4
    $region2: #{_lambda_.4} parent=1 // loop_pre_header
      _
    $region3: #{_lambda_.4} parent=1 // loop_header
      %s15 = sphi 0, %s19
      %p16 = scmp.ge.s32.totalorder %s15, 4
      %s22 = sphi 0, %s34
      %s23 = sphi 0, %s30
      %s24 = sphi 0, %s22
      %s25 = sphi 0, %s23
      %s26 = sphi 0, %s24
      %s27 = sphi 0, %s25
      %s39 = sphi 0, %s41
      %s42 = sphi 0, %s39
      %s43 = sphi 0, %s42
      %s59 = sphi 0, %s43
      %s75 = sphi 0, %s77
      %s78 = sphi 0, %s75
      %s79 = sphi 0, %s78
      %s95 = sphi 0, %s79
      %s111 = sphi 0, %s113
      %s114 = sphi 0, %s111
      %s115 = sphi 0, %s114
      %s131 = sphi 0, %s115
      %s135 = sphi 0, %s135
      %s137 = sphi 0, %s135
      %s138 = sphi 0, %s137
      %s152 = sphi 0, %s138
      %s156 = sphi 0, %s156
      %s158 = sphi 0, %s156
      %s159 = sphi 0, %s158
      %s173 = sphi 0, %s159
      %s177 = sphi 0, %s177
      %s179 = sphi 0, %s177
      %s180 = sphi 0, %s179
      %s194 = sphi 0, %s180
      %s198 = sphi 0, %s198
      %s200 = sphi 0, %s198
      %s201 = sphi 0, %s200
      %s215 = sphi 0, %s201
      %s223 = sphi 0, %s225
      %s226 = sphi 0, %s223
      %s227 = sphi 0, %s226
      %s243 = sphi 0, %s227
    $region4: #{_lambda_.4} parent=1 // loop_header_branch
      %18 = sbr.rel (%p16) target = $region8
    $region5: #{_lambda_.4} parent=1 // loop_body
      %s20 = ssub.s32 %s15, 1
      %s21 = ssub.s32 %s15, 2
      %s28 = sadd.s32 1, %s23
      %p29 = scmp.ge.s32.totalorder %s28, 1
      %s30 = scalar_select %p29, 0, %s28
      %s31 = sadd.s32 1, %s22
      %s32 = scalar_select %p29, %s31, %s22
      %p33 = scmp.ge.s32.totalorder %s32, 2
      %s34 = scalar_select %p33, 0, %s32
      %s35 = ssub.s32 %s22, %s34
      %s36 = ssub.s32 %s23, %s30
      %s37 = sor.u32 %s35, %s36
      %p38 = scmp.eq.s32.totalorder %s37, 0
      %s40 = sadd.s32 %s39, 1
      %s41 = scalar_select %p38, %s39, %s40
      %p44 = pneg %p38
      %p45 = scmp.eq.s32.totalorder %s15, 1
      %p46 = por %p44, %p45
      %p47 = scmp.ne.s32.totalorder %s39, %s42
      %p48 = scmp.eq.s32.totalorder %s15, 0
      %p49 = por %p47, %p48
      %p50 = scmp.ne.s32.totalorder %s39, %s42
      %p51 = scmp.eq.s32.totalorder %s20, 1
      %p52 = por %p50, %p51
      %p53 = scmp.ne.s32.totalorder %s42, %s43
      %p54 = scmp.eq.s32.totalorder %s20, 0
      %p55 = por %p53, %p54
      %p56 = scmp.ne.s32.totalorder %s42, %s43
      %p57 = scmp.eq.s32.totalorder %s21, 1
      %p58 = por %p56, %p57
      %p60 = scmp.ne.s32.totalorder %s43, %s59
      %p61 = scmp.eq.s32.totalorder %s21, 0
      %p62 = por %p60, %p61
      %s63 = smul.u32 %s23, 8
      %s64 = ssub.s32 %s63, 1
      %p65 = scmp.gt.s32.totalorder %s64, 0
      %s66 = scalar_select %p65, %s64, 0
      %s67 = smul.u32 %s30, 8
      %s68 = ssub.s32 %s67, 1
      %p69 = scmp.gt.s32.totalorder %s68, 0
      %s70 = scalar_select %p69, %s68, 0
      %s71 = ssub.s32 %s22, %s34
      %s72 = ssub.s32 %s66, %s70
      %s73 = sor.u32 %s71, %s72
      %p74 = scmp.eq.s32.totalorder %s73, 0
      %s76 = sadd.s32 %s75, 1
      %s77 = scalar_select %p74, %s75, %s76
      %p80 = pneg %p74
      %p81 = scmp.eq.s32.totalorder %s15, 1
      %p82 = por %p80, %p81
      %p83 = scmp.ne.s32.totalorder %s75, %s78
      %p84 = scmp.eq.s32.totalorder %s15, 0
      %p85 = por %p83, %p84
      %p86 = scmp.ne.s32.totalorder %s75, %s78
      %p87 = scmp.eq.s32.totalorder %s20, 1
      %p88 = por %p86, %p87
      %p89 = scmp.ne.s32.totalorder %s78, %s79
      %p90 = scmp.eq.s32.totalorder %s20, 0
      %p91 = por %p89, %p90
      %p92 = scmp.ne.s32.totalorder %s78, %s79
      %p93 = scmp.eq.s32.totalorder %s21, 1
      %p94 = por %p92, %p93
      %p96 = scmp.ne.s32.totalorder %s79, %s95
      %p97 = scmp.eq.s32.totalorder %s21, 0
      %p98 = por %p96, %p97
      %s99 = sadd.s32 %s23, 1
      %s100 = smul.u32 %s99, 8
      %p101 = scmp.lt.s32.totalorder %s100, 7
      %s102 = scalar_select %p101, %s100, 7
      %s103 = sadd.s32 %s30, 1
      %s104 = smul.u32 %s103, 8
      %p105 = scmp.lt.s32.totalorder %s104, 7
      %s106 = scalar_select %p105, %s104, 7
      %s107 = ssub.s32 %s22, %s34
      %s108 = ssub.s32 %s102, %s106
      %s109 = sor.u32 %s107, %s108
      %p110 = scmp.eq.s32.totalorder %s109, 0
      %s112 = sadd.s32 %s111, 1
      %s113 = scalar_select %p110, %s111, %s112
      %p116 = pneg %p110
      %p117 = scmp.eq.s32.totalorder %s15, 1
      %p118 = por %p116, %p117
      %p119 = scmp.ne.s32.totalorder %s111, %s114
      %p120 = scmp.eq.s32.totalorder %s15, 0
      %p121 = por %p119, %p120
      %p122 = scmp.ne.s32.totalorder %s111, %s114
      %p123 = scmp.eq.s32.totalorder %s20, 1
      %p124 = por %p122, %p123
      %p125 = scmp.ne.s32.totalorder %s114, %s115
      %p126 = scmp.eq.s32.totalorder %s20, 0
      %p127 = por %p125, %p126
      %p128 = scmp.ne.s32.totalorder %s114, %s115
      %p129 = scmp.eq.s32.totalorder %s21, 1
      %p130 = por %p128, %p129
      %p132 = scmp.ne.s32.totalorder %s115, %s131
      %p133 = scmp.eq.s32.totalorder %s21, 0
      %p134 = por %p132, %p133
      %s136 = sadd.s32 %s135, 1
      %p139 = scmp.eq.s32.totalorder %s15, 1
      %p140 = scmp.ne.s32.totalorder %s135, %s137
      %p141 = scmp.eq.s32.totalorder %s15, 0
      %p142 = por %p140, %p141
      %p143 = scmp.ne.s32.totalorder %s135, %s137
      %p144 = scmp.eq.s32.totalorder %s20, 1
      %p145 = por %p143, %p144
      %p146 = scmp.ne.s32.totalorder %s137, %s138
      %p147 = scmp.eq.s32.totalorder %s20, 0
      %p148 = por %p146, %p147
      %p149 = scmp.ne.s32.totalorder %s137, %s138
      %p150 = scmp.eq.s32.totalorder %s21, 1
      %p151 = por %p149, %p150
      %p153 = scmp.ne.s32.totalorder %s138, %s152
      %p154 = scmp.eq.s32.totalorder %s21, 0
      %p155 = por %p153, %p154
      %s157 = sadd.s32 %s156, 1
      %p160 = scmp.eq.s32.totalorder %s15, 1
      %p161 = scmp.ne.s32.totalorder %s156, %s158
      %p162 = scmp.eq.s32.totalorder %s15, 0
      %p163 = por %p161, %p162
      %p164 = scmp.ne.s32.totalorder %s156, %s158
      %p165 = scmp.eq.s32.totalorder %s20, 1
      %p166 = por %p164, %p165
      %p167 = scmp.ne.s32.totalorder %s158, %s159
      %p168 = scmp.eq.s32.totalorder %s20, 0
      %p169 = por %p167, %p168
      %p170 = scmp.ne.s32.totalorder %s158, %s159
      %p171 = scmp.eq.s32.totalorder %s21, 1
      %p172 = por %p170, %p171
      %p174 = scmp.ne.s32.totalorder %s159, %s173
      %p175 = scmp.eq.s32.totalorder %s21, 0
      %p176 = por %p174, %p175
      %s178 = sadd.s32 %s177, 1
      %p181 = scmp.eq.s32.totalorder %s15, 1
      %p182 = scmp.ne.s32.totalorder %s177, %s179
      %p183 = scmp.eq.s32.totalorder %s15, 0
      %p184 = por %p182, %p183
      %p185 = scmp.ne.s32.totalorder %s177, %s179
      %p186 = scmp.eq.s32.totalorder %s20, 1
      %p187 = por %p185, %p186
      %p188 = scmp.ne.s32.totalorder %s179, %s180
      %p189 = scmp.eq.s32.totalorder %s20, 0
      %p190 = por %p188, %p189
      %p191 = scmp.ne.s32.totalorder %s179, %s180
      %p192 = scmp.eq.s32.totalorder %s21, 1
      %p193 = por %p191, %p192
      %p195 = scmp.ne.s32.totalorder %s180, %s194
      %p196 = scmp.eq.s32.totalorder %s21, 0
      %p197 = por %p195, %p196
      %s199 = sadd.s32 %s198, 1
      %p202 = scmp.eq.s32.totalorder %s15, 1
      %p203 = scmp.ne.s32.totalorder %s198, %s200
      %p204 = scmp.eq.s32.totalorder %s15, 0
      %p205 = por %p203, %p204
      %p206 = scmp.ne.s32.totalorder %s198, %s200
      %p207 = scmp.eq.s32.totalorder %s20, 1
      %p208 = por %p206, %p207
      %p209 = scmp.ne.s32.totalorder %s200, %s201
      %p210 = scmp.eq.s32.totalorder %s20, 0
      %p211 = por %p209, %p210
      %p212 = scmp.ne.s32.totalorder %s200, %s201
      %p213 = scmp.eq.s32.totalorder %s21, 1
      %p214 = por %p212, %p213
      %p216 = scmp.ne.s32.totalorder %s201, %s215
      %p217 = scmp.eq.s32.totalorder %s21, 0
      %p218 = por %p216, %p217
      %s219 = ssub.s32 %s22, %s34
      %s220 = ssub.s32 %s23, %s30
      %s221 = sor.u32 %s219, %s220
      %p222 = scmp.eq.s32.totalorder %s221, 0
      %s224 = sadd.s32 %s223, 1
      %s225 = scalar_select %p222, %s223, %s224
      %p228 = pneg %p222
      %p229 = scmp.eq.s32.totalorder %s15, 1
      %p230 = por %p228, %p229
      %p231 = scmp.ne.s32.totalorder %s223, %s226
      %p232 = scmp.eq.s32.totalorder %s15, 0
      %p233 = por %p231, %p232
      %p234 = scmp.ne.s32.totalorder %s223, %s226
      %p235 = scmp.eq.s32.totalorder %s20, 1
      %p236 = por %p234, %p235
      %p237 = scmp.ne.s32.totalorder %s226, %s227
      %p238 = scmp.eq.s32.totalorder %s20, 0
      %p239 = por %p237, %p238
      %p240 = scmp.ne.s32.totalorder %s226, %s227
      %p241 = scmp.eq.s32.totalorder %s21, 1
      %p242 = por %p240, %p241
      %p244 = scmp.ne.s32.totalorder %s227, %s243
      %p245 = scmp.eq.s32.totalorder %s21, 0
      %p246 = por %p244, %p245
      %p247 = scmp.le.s32.totalorder 1, %s15
      %p248 = scmp.lt.s32.totalorder %s15, 3
      %p249 = pnand %p247, %p248
      %p250 = pneg %p249
      // Predicated region
      $region9: #{_lambda_.4} parent=5 // pred_check
        _
      $region10: #{_lambda_.4} parent=5 // pred_check_branch
        %252 = sbr.rel (%p249) target = $region12
      $region11: #{_lambda_.4} parent=5 // pred_region
        %s253 = ssub.s32 %s15, 1
        // Predicated region
        $region13: #{_lambda_.4} parent=11 // pred_check
          %p254 = pneg %p148
        $region14: #{_lambda_.4} parent=11 // pred_check_branch
          %256 = sbr.rel (%p254) target = $region16
        $region15: #{_lambda_.4} parent=11 // pred_region
          %258 = vsyncadd [#allocation4], 0
          %s259 = sshll.u32 %s3, 4
          %s260 = int_to_ptr.hbm [resolvable:$true] %s259
          %s261 = sshll.u32 [#allocation3], 4
          %s262 = int_to_ptr.vmem [resolvable:$true] %s261
          %267 = dma.hbm_to_vmem [thread:$0]  %s260, 1152, %s262, [#allocation4], 128, 128, 8
        $region16: #{_lambda_.4} parent=11 // pred_fallthru
          _
        // Predicated region
        $region17: #{_lambda_.4} parent=11 // pred_check
          %p268 = pneg %p169
        $region18: #{_lambda_.4} parent=11 // pred_check_branch
          %270 = sbr.rel (%p268) target = $region20
        $region19: #{_lambda_.4} parent=11 // pred_region
          _
        $region20: #{_lambda_.4} parent=11 // pred_fallthru
          _
        // Predicated region
        $region21: #{_lambda_.4} parent=11 // pred_check
          %p271 = pneg %p190
        $region22: #{_lambda_.4} parent=11 // pred_check_branch
          %273 = sbr.rel (%p271) target = $region24
        $region23: #{_lambda_.4} parent=11 // pred_region
          %275 = vsyncadd [#allocation6], 0
          %s276 = sshll.u32 %s5, 4
          %s277 = int_to_ptr.hbm [resolvable:$true] %s276
          %s278 = sshll.u32 [#allocation5], 4
          %s279 = int_to_ptr.vmem [resolvable:$true] %s278
          %284 = dma.hbm_to_vmem [thread:$0]  %s277, 256, %s279, [#allocation6], 128, 128, 8
        $region24: #{_lambda_.4} parent=11 // pred_fallthru
          _
        // Predicated region
        $region25: #{_lambda_.4} parent=11 // pred_check
          %p285 = pneg %p211
        $region26: #{_lambda_.4} parent=11 // pred_check_branch
          %287 = sbr.rel (%p285) target = $region28
        $region27: #{_lambda_.4} parent=11 // pred_region
          _
        $region28: #{_lambda_.4} parent=11 // pred_fallthru
          _
      $region12: #{_lambda_.4} parent=5 // pred_fallthru
        _
      %p288 = scmp.lt.s32.totalorder %s15, 2
      // Predicated region
      $region29: #{_lambda_.4} parent=5 // pred_check
        %p289 = pneg %p288
      $region30: #{_lambda_.4} parent=5 // pred_check_branch
        %291 = sbr.rel (%p289) target = $region32
      $region31: #{_lambda_.4} parent=5 // pred_region
        // Predicated region
        $region33: #{_lambda_.4} parent=31 // pred_check
          %p292 = pneg %p49
        $region34: #{_lambda_.4} parent=31 // pred_check_branch
          %294 = sbr.rel (%p292) target = $region36
        $region35: #{_lambda_.4} parent=31 // pred_region
          %s295 = smul.u32 8, %s23
          %p296 = scmp.lt.s32.totalorder %s22, 1
          %s297 = scalar_select %p296, %s22, 1
          %p298 = scmp.lt.s32.totalorder %s295, 7
          %s299 = scalar_select %p298, %s295, 7
          %s300 = smul.addr %s297, 8
          %s301 = sadd.s32 %s299, %s300
          %s302 = smul.addr %s301, 8
          %s303 = scalar_lea.vmem %s0, %s302
          %s304 = smul.u32 8, %s23
        $region36: #{_lambda_.4} parent=31 // pred_fallthru
          _
        // Predicated region
        $region37: #{_lambda_.4} parent=31 // pred_check
          %p305 = pneg %p85
        $region38: #{_lambda_.4} parent=31 // pred_check_branch
          %307 = sbr.rel (%p305) target = $region40
        $region39: #{_lambda_.4} parent=31 // pred_region
          %s308 = smul.u32 %s23, 8
          %s309 = ssub.s32 %s308, 1
          %p310 = scmp.gt.s32.totalorder %s309, 0
          %s311 = scalar_select %p310, %s309, 0
          %p312 = scmp.lt.s32.totalorder %s22, 1
          %s313 = scalar_select %p312, %s22, 1
          %p314 = scmp.lt.s32.totalorder %s311, 7
          %s315 = scalar_select %p314, %s311, 7
          %s316 = smul.addr %s313, 8
          %s317 = sadd.s32 %s315, %s316
          %s318 = smul.addr %s317, 8
          %s319 = scalar_lea.vmem %s1, %s318
          %s320 = smul.u32 %s23, 8
          %s321 = ssub.s32 %s320, 1
          %p322 = scmp.gt.s32.totalorder %s321, 0
          %s323 = scalar_select %p322, %s321, 0
        $region40: #{_lambda_.4} parent=31 // pred_fallthru
          _
        // Predicated region
        $region41: #{_lambda_.4} parent=31 // pred_check
          %p324 = pneg %p121
        $region42: #{_lambda_.4} parent=31 // pred_check_branch
          %326 = sbr.rel (%p324) target = $region44
        $region43: #{_lambda_.4} parent=31 // pred_region
          %s327 = sadd.s32 %s23, 1
          %s328 = smul.u32 %s327, 8
          %p329 = scmp.lt.s32.totalorder %s328, 7
          %s330 = scalar_select %p329, %s328, 7
          %p331 = scmp.lt.s32.totalorder %s22, 1
          %s332 = scalar_select %p331, %s22, 1
          %p333 = scmp.lt.s32.totalorder %s330, 7
          %s334 = scalar_select %p333, %s330, 7
          %s335 = smul.addr %s332, 8
          %s336 = sadd.s32 %s334, %s335
          %s337 = smul.addr %s336, 8
          %s338 = scalar_lea.vmem %s2, %s337
          %s339 = sadd.s32 %s23, 1
          %s340 = smul.u32 %s339, 8
          %p341 = scmp.lt.s32.totalorder %s340, 7
          %s342 = scalar_select %p341, %s340, 7
        $region44: #{_lambda_.4} parent=31 // pred_fallthru
          _
      $region32: #{_lambda_.4} parent=5 // pred_fallthru
        _
      %p343 = scmp.le.s32.totalorder 1, %s15
      %p344 = scmp.lt.s32.totalorder %s15, 3
      %p345 = pnand %p343, %p344
      %p346 = pneg %p345
      // Predicated region
      $region45: #{_lambda_.4} parent=5 // pred_check
        _
      $region46: #{_lambda_.4} parent=5 // pred_check_branch
        %348 = sbr.rel (%p345) target = $region48
      $region47: #{_lambda_.4} parent=5 // pred_region
        %s349 = ssub.s32 %s15, 1
        // Predicated region
        $region49: #{_lambda_.4} parent=47 // pred_check
          %p350 = pneg %p148
        $region50: #{_lambda_.4} parent=47 // pred_check_branch
          %352 = sbr.rel (%p350) target = $region52
        $region51: #{_lambda_.4} parent=47 // pred_region
          %354 = dma.done [#allocation4], 1152
        $region52: #{_lambda_.4} parent=47 // pred_fallthru
          _
        // Predicated region
        $region53: #{_lambda_.4} parent=47 // pred_check
          %p355 = pneg %p190
        $region54: #{_lambda_.4} parent=47 // pred_check_branch
          %357 = sbr.rel (%p355) target = $region56
        $region55: #{_lambda_.4} parent=47 // pred_region
          %359 = dma.done [#allocation6], 256
        $region56: #{_lambda_.4} parent=47 // pred_fallthru
          _
        %s360 = smul.u32 8, %s25
        %p361 = scmp.lt.s32.totalorder %s24, 1
        %s362 = scalar_select %p361, %s24, 1
        %p363 = scmp.lt.s32.totalorder %s360, 7
        %s364 = scalar_select %p363, %s360, 7
        %s365 = smul.addr %s362, 8
        %s366 = sadd.s32 %s364, %s365
        %s367 = smul.addr %s366, 8
        %s368 = scalar_lea.vmem %s0, %s367
        %p369 = pneg %p55
        %p370 = pneg %p52
        %s371 = smul.u32 %s25, 8
        %s372 = ssub.s32 %s371, 1
        %p373 = scmp.gt.s32.totalorder %s372, 0
        %s374 = scalar_select %p373, %s372, 0
        %p375 = scmp.lt.s32.totalorder %s24, 1
        %s376 = scalar_select %p375, %s24, 1
        %p377 = scmp.lt.s32.totalorder %s374, 7
        %s378 = scalar_select %p377, %s374, 7
        %s379 = smul.addr %s376, 8
        %s380 = sadd.s32 %s378, %s379
        %s381 = smul.addr %s380, 8
        %s382 = scalar_lea.vmem %s1, %s381
        %p383 = pneg %p91
        %p384 = pneg %p88
        %s385 = sadd.s32 %s25, 1
        %s386 = smul.u32 %s385, 8
        %p387 = scmp.lt.s32.totalorder %s386, 7
        %s388 = scalar_select %p387, %s386, 7
        %p389 = scmp.lt.s32.totalorder %s24, 1
        %s390 = scalar_select %p389, %s24, 1
        %p391 = scmp.lt.s32.totalorder %s388, 7
        %s392 = scalar_select %p391, %s388, 7
        %s393 = smul.addr %s390, 8
        %s394 = sadd.s32 %s392, %s393
        %s395 = smul.addr %s394, 8
        %s396 = scalar_lea.vmem %s2, %s395
        %p397 = pneg %p127
        %p398 = pneg %p124
        %p399 = pneg %p148
        %p400 = pneg %p145
        %p401 = pneg %p169
        %p402 = pneg %p166
        %p403 = pneg %p190
        %p404 = pneg %p187
        %p405 = pneg %p211
        %p406 = pneg %p208
        %p407 = pneg %p239
        %p408 = pneg %p236
        %s409 = smul.u32 8, %s25
        %p410 = scmp.lt.s32.totalorder %s24, 1
        %s411 = scalar_select %p410, %s24, 1
        %p412 = scmp.lt.s32.totalorder %s409, 7
        %s413 = scalar_select %p412, %s409, 7
        %s414 = smul.addr %s411, 8
        %s415 = sadd.s32 %s413, %s414
        %s416 = smul.addr %s415, 8
        %s417 = scalar_lea.vmem %s7, %s416
        %s418 = smul.u32 8, %s25
        %p419 = scmp.lt.s32.totalorder %s24, 1
        %s420 = scalar_select %p419, %s24, 1
        %p421 = scmp.lt.s32.totalorder %s418, 7
        %s422 = scalar_select %p421, %s418, 7
        %s423 = smul.addr %s420, 8
        %s424 = sadd.s32 %s422, %s423
        %s425 = smul.addr %s424, 8
        %s426 = scalar_lea.vmem %s0, %s425
        %s427 = smul.u32 8, %s25
        %s428 = smul.u32 %s25, 8
        %s429 = ssub.s32 %s428, 1
        %p430 = scmp.gt.s32.totalorder %s429, 0
        %s431 = scalar_select %p430, %s429, 0
        %p432 = scmp.lt.s32.totalorder %s24, 1
        %s433 = scalar_select %p432, %s24, 1
        %p434 = scmp.lt.s32.totalorder %s431, 7
        %s435 = scalar_select %p434, %s431, 7
        %s436 = smul.addr %s433, 8
        %s437 = sadd.s32 %s435, %s436
        %s438 = smul.addr %s437, 8
        %s439 = scalar_lea.vmem %s1, %s438
        %s440 = smul.u32 %s25, 8
        %s441 = ssub.s32 %s440, 1
        %p442 = scmp.gt.s32.totalorder %s441, 0
        %s443 = scalar_select %p442, %s441, 0
        %s444 = sadd.s32 %s25, 1
        %s445 = smul.u32 %s444, 8
        %p446 = scmp.lt.s32.totalorder %s445, 7
        %s447 = scalar_select %p446, %s445, 7
        %p448 = scmp.lt.s32.totalorder %s24, 1
        %s449 = scalar_select %p448, %s24, 1
        %p450 = scmp.lt.s32.totalorder %s447, 7
        %s451 = scalar_select %p450, %s447, 7
        %s452 = smul.addr %s449, 8
        %s453 = sadd.s32 %s451, %s452
        %s454 = smul.addr %s453, 8
        %s455 = scalar_lea.vmem %s2, %s454
        %s456 = sadd.s32 %s25, 1
        %s457 = smul.u32 %s456, 8
        %p458 = scmp.lt.s32.totalorder %s457, 7
        %s459 = scalar_select %p458, %s457, 7
        %s460 = smul.u32 8, %s25
        %p461 = scmp.lt.s32.totalorder %s24, 1
        %s462 = scalar_select %p461, %s24, 1
        %p463 = scmp.lt.s32.totalorder %s460, 7
        %s464 = scalar_select %p463, %s460, 7
        %s465 = smul.addr %s462, 8
        %s466 = sadd.s32 %s464, %s465
        %s467 = smul.addr %s466, 8
        %s468 = scalar_lea.vmem %s7, %s467
        %s469 = smul.u32 8, %s25
        %vm470 = vcmask 57344
        %471 = vst.msk [vmem:[#allocation2] sm:$0x1] %vm470, 0.0
        %472 = vst.msk [vmem:[#allocation2 + $0x10] sm:$0x1] %vm470, 0.0
        %473 = vst.msk [vmem:[#allocation2 + $0x20] sm:$0x1] %vm470, 0.0
        %474 = vst.msk [vmem:[#allocation2 + $0x30] sm:$0x1] %vm470, 0.0
        %475 = vst.msk [vmem:[#allocation2 + $0x40] sm:$0x1] %vm470, 0.0
        %476 = vst.msk [vmem:[#allocation2 + $0x50] sm:$0x1] %vm470, 0.0
        %477 = vst.msk [vmem:[#allocation2 + $0x60] sm:$0x1] %vm470, 0.0
        %478 = vst.msk [vmem:[#allocation2 + $0x70] sm:$0x1] %vm470, 0.0
        %479 = vst.msk [vmem:[#allocation2 + $0x80] sm:$0x1] %vm470, 0.0
        %480 = vst.msk [vmem:[#allocation2 + $0x90] sm:$0x1] %vm470, 0.0
        %481 = vst.msk [vmem:[#allocation2 + $0x9] sm:$0x1] %vm470, 0.0
        %482 = vst.msk [vmem:[#allocation2 + $0x19] sm:$0x1] %vm470, 0.0
        %483 = vst.msk [vmem:[#allocation2 + $0x29] sm:$0x1] %vm470, 0.0
        %484 = vst.msk [vmem:[#allocation2 + $0x39] sm:$0x1] %vm470, 0.0
        %485 = vst.msk [vmem:[#allocation2 + $0x49] sm:$0x1] %vm470, 0.0
        %486 = vst.msk [vmem:[#allocation2 + $0x59] sm:$0x1] %vm470, 0.0
        %487 = vst.msk [vmem:[#allocation2 + $0x69] sm:$0x1] %vm470, 0.0
        %488 = vst.msk [vmem:[#allocation2 + $0x79] sm:$0x1] %vm470, 0.0
        %489 = vst.msk [vmem:[#allocation2 + $0x89] sm:$0x1] %vm470, 0.0
        %490 = vst.msk [vmem:[#allocation2 + $0x99] sm:$0x1] %vm470, 0.0
        %p491 = scmp.gt.s32.totalorder %s25, 0
        %v492 = vld [vmem:[%s439] sm:$0xff]
        %s493 = scalar_select %p491, 1, 0
        %v494 = vstv %s493
        %vm495 = vcmp.eq.s32.totalorder %v494, 1
        %v496 = vsel %vm495, %v492, 0.0
        %s497 = sadd.s32 %s25, 1
        %p498 = scmp.lt.s32.totalorder %s497, 1
        %v499 = vld [vmem:[%s455] sm:$0xff]
        %s500 = scalar_select %p498, 1, 0
        %v501 = vstv %s500
        %vm502 = vcmp.eq.s32.totalorder %v501, 1
        %v503 = vsel %vm502, %v499, 0.0
        %vm504 = vcmask 64512
        %505 = vst.msk [vmem:[#allocation2 + $0x1] sm:$0xff] %vm504, %v496
        %s506 = scalar_lea.vmem [#allocation2], 144
        %507 = vst.msk [vmem:[%s506 + $0x1] sm:$0xff] %vm504, %v503
        %v508 = vld [vmem:[%s426] sm:$0xff]
        %v509 = vld [vmem:[%s426 + $0x8] sm:$0xff]
        %v510 = vld [vmem:[%s426 + $0x10] sm:$0xff]
        %v511 = vld [vmem:[%s426 + $0x18] sm:$0xff]
        %v512 = vld [vmem:[%s426 + $0x20] sm:$0xff]
        %v513 = vld [vmem:[%s426 + $0x28] sm:$0xff]
        %v514 = vld [vmem:[%s426 + $0x30] sm:$0xff]
        %v515 = vld [vmem:[%s426 + $0x38] sm:$0xff]
        %s516 = scalar_lea.vmem [#allocation2], 16
        %517 = vst.msk [vmem:[%s516 + $0x1] sm:$0xff] %vm504, %v508
        %518 = vst.msk [vmem:[%s516 + $0x11] sm:$0xff] %vm504, %v509
        %519 = vst.msk [vmem:[%s516 + $0x21] sm:$0xff] %vm504, %v510
        %520 = vst.msk [vmem:[%s516 + $0x31] sm:$0xff] %vm504, %v511
        %521 = vst.msk [vmem:[%s516 + $0x41] sm:$0xff] %vm504, %v512
        %522 = vst.msk [vmem:[%s516 + $0x51] sm:$0xff] %vm504, %v513
        %523 = vst.msk [vmem:[%s516 + $0x61] sm:$0xff] %vm504, %v514
        %524 = vst.msk [vmem:[%s516 + $0x71] sm:$0xff] %vm504, %v515
        %v525 = vld [vmem:[#allocation2] sm:$0xff]
        %v526 = vld [vmem:[#allocation2 + $0x10] sm:$0xff]
        %v527 = vld [vmem:[#allocation2 + $0x20] sm:$0xff]
        %v528 = vld [vmem:[#allocation2 + $0x30] sm:$0xff]
        %v529 = vld [vmem:[#allocation2 + $0x40] sm:$0xff]
        %v530 = vld [vmem:[#allocation2 + $0x50] sm:$0xff]
        %v531 = vld [vmem:[#allocation2 + $0x60] sm:$0xff]
        %v532 = vld [vmem:[#allocation2 + $0x70] sm:$0xff]
        %v533 = vld [vmem:[#allocation3] sm:$0xff]
        %v534 = vld [vmem:[#allocation2 + $0x1] sm:$0xff]
        %v535 = vld [vmem:[#allocation2 + $0x11] sm:$0xff]
        %v536 = vld [vmem:[#allocation2 + $0x21] sm:$0xff]
        %v537 = vld [vmem:[#allocation2 + $0x31] sm:$0xff]
        %v538 = vld [vmem:[#allocation2 + $0x41] sm:$0xff]
        %v539 = vld [vmem:[#allocation2 + $0x51] sm:$0xff]
        %v540 = vld [vmem:[#allocation2 + $0x61] sm:$0xff]
        %v541 = vld [vmem:[#allocation2 + $0x71] sm:$0xff]
        %s542 = scalar_lea.vmem [#allocation3], 8
        %v543 = vld [vmem:[%s542] sm:$0xff]
        %v545 = vsel %vm504, %v534, 0
        %v548 = vsel %vm504, %v535, 0
        %v551 = vsel %vm504, %v536, 0
        %v554 = vsel %vm504, %v537, 0
        %v557 = vsel %vm504, %v538, 0
        %v560 = vsel %vm504, %v539, 0
        %v563 = vsel %vm504, %v540, 0
        %v566 = vsel %vm504, %v541, 0
        %568 = vmatpush.msra.mxu0 0.0
        %569 = vmatpush.msra.mxu0 0.0
        %570 = vmatpush.msra.mxu0 0.0
        %571 = vmatpush.msra.mxu0 0.0
        %572 = vmatpush.msra.mxu0 0.0
        %573 = vmatpush.msra.mxu0 0.0
        %574 = vmatpush.msra.mxu0 0.0
        %575 = vmatpush.msra.mxu0 0.0
        %576 = vmatpush.msra.mxu0 0.0
        %577 = vmatpush.msra.mxu0 0.0
        %578 = vmatpush.msra.mxu0 0.0
        %579 = vmatpush.msra.mxu0 0.0
        %580 = vmatpush.msra.mxu0 0.0
        %581 = vmatpush.msra.mxu0 0.0
        %582 = vmatpush.msra.mxu0 0.0
        %583 = vmatpush.msra.mxu0 %v543
        %584 = vmatmul.f32.gmra.mxu0 %v545
        %v585 = vpop.f32.mrf.mxu0
        %v586 = vadd.f32 0.0, %v585
        %587 = vmatmul.f32.gmra.mxu0 %v548
        %v588 = vpop.f32.mrf.mxu0
        %v589 = vadd.f32 0.0, %v588
        %590 = vmatmul.f32.gmra.mxu0 %v551
        %v591 = vpop.f32.mrf.mxu0
        %v592 = vadd.f32 0.0, %v591
        %593 = vmatmul.f32.gmra.mxu0 %v554
        %v594 = vpop.f32.mrf.mxu0
        %v595 = vadd.f32 0.0, %v594
        %596 = vmatmul.f32.gmra.mxu0 %v557
        %v597 = vpop.f32.mrf.mxu0
        %v598 = vadd.f32 0.0, %v597
        %599 = vmatmul.f32.gmra.mxu0 %v560
        %v600 = vpop.f32.mrf.mxu0
        %v601 = vadd.f32 0.0, %v600
        %602 = vmatmul.f32.gmra.mxu0 %v563
        %v603 = vpop.f32.mrf.mxu0
        %v604 = vadd.f32 0.0, %v603
        %605 = vmatmul.f32.gmra.mxu0 %v566
        %v606 = vpop.f32.mrf.mxu0
        %v607 = vadd.f32 0.0, %v606
        %608 = vdwg.mxu0
        %v610 = vsel %vm504, %v525, 0
        %v613 = vsel %vm504, %v526, 0
        %v616 = vsel %vm504, %v527, 0
        %v619 = vsel %vm504, %v528, 0
        %v622 = vsel %vm504, %v529, 0
        %v625 = vsel %vm504, %v530, 0
        %v628 = vsel %vm504, %v531, 0
        %v631 = vsel %vm504, %v532, 0
        %633 = vmatpush.msra.mxu0 0.0
        %634 = vmatpush.msra.mxu0 0.0
        %635 = vmatpush.msra.mxu0 0.0
        %636 = vmatpush.msra.mxu0 0.0
        %637 = vmatpush.msra.mxu0 0.0
        %638 = vmatpush.msra.mxu0 0.0
        %639 = vmatpush.msra.mxu0 0.0
        %640 = vmatpush.msra.mxu0 0.0
        %641 = vmatpush.msra.mxu0 0.0
        %642 = vmatpush.msra.mxu0 0.0
        %643 = vmatpush.msra.mxu0 0.0
        %644 = vmatpush.msra.mxu0 0.0
        %645 = vmatpush.msra.mxu0 0.0
        %646 = vmatpush.msra.mxu0 0.0
        %647 = vmatpush.msra.mxu0 0.0
        %648 = vmatpush.msra.mxu0 %v533
        %649 = vmatmul.f32.gmra.mxu0 %v610
        %v650 = vpop.f32.mrf.mxu0
        %v651 = vadd.f32 %v586, %v650
        %652 = vmatmul.f32.gmra.mxu0 %v613
        %v653 = vpop.f32.mrf.mxu0
        %v654 = vadd.f32 %v589, %v653
        %655 = vmatmul.f32.gmra.mxu0 %v616
        %v656 = vpop.f32.mrf.mxu0
        %v657 = vadd.f32 %v592, %v656
        %658 = vmatmul.f32.gmra.mxu0 %v619
        %v659 = vpop.f32.mrf.mxu0
        %v660 = vadd.f32 %v595, %v659
        %661 = vmatmul.f32.gmra.mxu0 %v622
        %v662 = vpop.f32.mrf.mxu0
        %v663 = vadd.f32 %v598, %v662
        %664 = vmatmul.f32.gmra.mxu0 %v625
        %v665 = vpop.f32.mrf.mxu0
        %v666 = vadd.f32 %v601, %v665
        %667 = vmatmul.f32.gmra.mxu0 %v628
        %v668 = vpop.f32.mrf.mxu0
        %v669 = vadd.f32 %v604, %v668
        %670 = vmatmul.f32.gmra.mxu0 %v631
        %v671 = vpop.f32.mrf.mxu0
        %v672 = vadd.f32 %v607, %v671
        %673 = vdwg.mxu0
        %v674 = vld [vmem:[#allocation2 + $0x2] sm:$0xff]
        %v675 = vld [vmem:[#allocation2 + $0x12] sm:$0xff]
        %v676 = vld [vmem:[#allocation2 + $0x22] sm:$0xff]
        %v677 = vld [vmem:[#allocation2 + $0x32] sm:$0xff]
        %v678 = vld [vmem:[#allocation2 + $0x42] sm:$0xff]
        %v679 = vld [vmem:[#allocation2 + $0x52] sm:$0xff]
        %v680 = vld [vmem:[#allocation2 + $0x62] sm:$0xff]
        %v681 = vld [vmem:[#allocation2 + $0x72] sm:$0xff]
        %s682 = scalar_lea.vmem [#allocation3], 16
        %v683 = vld [vmem:[%s682] sm:$0xff]
        %v685 = vsel %vm504, %v674, 0
        %v688 = vsel %vm504, %v675, 0
        %v691 = vsel %vm504, %v676, 0
        %v694 = vsel %vm504, %v677, 0
        %v697 = vsel %vm504, %v678, 0
        %v700 = vsel %vm504, %v679, 0
        %v703 = vsel %vm504, %v680, 0
        %v706 = vsel %vm504, %v681, 0
        %708 = vmatpush.msra.mxu0 0.0
        %709 = vmatpush.msra.mxu0 0.0
        %710 = vmatpush.msra.mxu0 0.0
        %711 = vmatpush.msra.mxu0 0.0
        %712 = vmatpush.msra.mxu0 0.0
        %713 = vmatpush.msra.mxu0 0.0
        %714 = vmatpush.msra.mxu0 0.0
        %715 = vmatpush.msra.mxu0 0.0
        %716 = vmatpush.msra.mxu0 0.0
        %717 = vmatpush.msra.mxu0 0.0
        %718 = vmatpush.msra.mxu0 0.0
        %719 = vmatpush.msra.mxu0 0.0
        %720 = vmatpush.msra.mxu0 0.0
        %721 = vmatpush.msra.mxu0 0.0
        %722 = vmatpush.msra.mxu0 0.0
        %723 = vmatpush.msra.mxu0 %v683
        %724 = vmatmul.f32.gmra.mxu0 %v685
        %v725 = vpop.f32.mrf.mxu0
        %v726 = vadd.f32 0.0, %v725
        %727 = vmatmul.f32.gmra.mxu0 %v688
        %v728 = vpop.f32.mrf.mxu0
        %v729 = vadd.f32 0.0, %v728
        %730 = vmatmul.f32.gmra.mxu0 %v691
        %v731 = vpop.f32.mrf.mxu0
        %v732 = vadd.f32 0.0, %v731
        %733 = vmatmul.f32.gmra.mxu0 %v694
        %v734 = vpop.f32.mrf.mxu0
        %v735 = vadd.f32 0.0, %v734
        %736 = vmatmul.f32.gmra.mxu0 %v697
        %v737 = vpop.f32.mrf.mxu0
        %v738 = vadd.f32 0.0, %v737
        %739 = vmatmul.f32.gmra.mxu0 %v700
        %v740 = vpop.f32.mrf.mxu0
        %v741 = vadd.f32 0.0, %v740
        %742 = vmatmul.f32.gmra.mxu0 %v703
        %v743 = vpop.f32.mrf.mxu0
        %v744 = vadd.f32 0.0, %v743
        %745 = vmatmul.f32.gmra.mxu0 %v706
        %v746 = vpop.f32.mrf.mxu0
        %v747 = vadd.f32 0.0, %v746
        %748 = vdwg.mxu0
        %v749 = vadd.f32 %v651, %v726
        %v750 = vadd.f32 %v654, %v729
        %v751 = vadd.f32 %v657, %v732
        %v752 = vadd.f32 %v660, %v735
        %v753 = vadd.f32 %v663, %v738
        %v754 = vadd.f32 %v666, %v741
        %v755 = vadd.f32 %v669, %v744
        %v756 = vadd.f32 %v672, %v747
        %v757 = vld [vmem:[%s516] sm:$0xff]
        %v758 = vld [vmem:[%s516 + $0x10] sm:$0xff]
        %v759 = vld [vmem:[%s516 + $0x20] sm:$0xff]
        %v760 = vld [vmem:[%s516 + $0x30] sm:$0xff]
        %v761 = vld [vmem:[%s516 + $0x40] sm:$0xff]
        %v762 = vld [vmem:[%s516 + $0x50] sm:$0xff]
        %v763 = vld [vmem:[%s516 + $0x60] sm:$0xff]
        %v764 = vld [vmem:[%s516 + $0x70] sm:$0xff]
        %s765 = scalar_lea.vmem [#allocation3], 24
        %v766 = vld [vmem:[%s765] sm:$0xff]
        %v768 = vsel %vm504, %v757, 0
        %v771 = vsel %vm504, %v758, 0
        %v774 = vsel %vm504, %v759, 0
        %v777 = vsel %vm504, %v760, 0
        %v780 = vsel %vm504, %v761, 0
        %v783 = vsel %vm504, %v762, 0
        %v786 = vsel %vm504, %v763, 0
        %v789 = vsel %vm504, %v764, 0
        %791 = vmatpush.msra.mxu0 0.0
        %792 = vmatpush.msra.mxu0 0.0
        %793 = vmatpush.msra.mxu0 0.0
        %794 = vmatpush.msra.mxu0 0.0
        %795 = vmatpush.msra.mxu0 0.0
        %796 = vmatpush.msra.mxu0 0.0
        %797 = vmatpush.msra.mxu0 0.0
        %798 = vmatpush.msra.mxu0 0.0
        %799 = vmatpush.msra.mxu0 0.0
        %800 = vmatpush.msra.mxu0 0.0
        %801 = vmatpush.msra.mxu0 0.0
        %802 = vmatpush.msra.mxu0 0.0
        %803 = vmatpush.msra.mxu0 0.0
        %804 = vmatpush.msra.mxu0 0.0
        %805 = vmatpush.msra.mxu0 0.0
        %806 = vmatpush.msra.mxu0 %v766
        %807 = vmatmul.f32.gmra.mxu0 %v768
        %v808 = vpop.f32.mrf.mxu0
        %v809 = vadd.f32 0.0, %v808
        %810 = vmatmul.f32.gmra.mxu0 %v771
        %v811 = vpop.f32.mrf.mxu0
        %v812 = vadd.f32 0.0, %v811
        %813 = vmatmul.f32.gmra.mxu0 %v774
        %v814 = vpop.f32.mrf.mxu0
        %v815 = vadd.f32 0.0, %v814
        %816 = vmatmul.f32.gmra.mxu0 %v777
        %v817 = vpop.f32.mrf.mxu0
        %v818 = vadd.f32 0.0, %v817
        %819 = vmatmul.f32.gmra.mxu0 %v780
        %v820 = vpop.f32.mrf.mxu0
        %v821 = vadd.f32 0.0, %v820
        %822 = vmatmul.f32.gmra.mxu0 %v783
        %v823 = vpop.f32.mrf.mxu0
        %v824 = vadd.f32 0.0, %v823
        %825 = vmatmul.f32.gmra.mxu0 %v786
        %v826 = vpop.f32.mrf.mxu0
        %v827 = vadd.f32 0.0, %v826
        %828 = vmatmul.f32.gmra.mxu0 %v789
        %v829 = vpop.f32.mrf.mxu0
        %v830 = vadd.f32 0.0, %v829
        %831 = vdwg.mxu0
        %v832 = vadd.f32 %v749, %v809
        %v833 = vadd.f32 %v750, %v812
        %v834 = vadd.f32 %v751, %v815
        %v835 = vadd.f32 %v752, %v818
        %v836 = vadd.f32 %v753, %v821
        %v837 = vadd.f32 %v754, %v824
        %v838 = vadd.f32 %v755, %v827
        %v839 = vadd.f32 %v756, %v830
        %v840 = vld [vmem:[%s516 + $0x1] sm:$0xff]
        %v841 = vld [vmem:[%s516 + $0x11] sm:$0xff]
        %v842 = vld [vmem:[%s516 + $0x21] sm:$0xff]
        %v843 = vld [vmem:[%s516 + $0x31] sm:$0xff]
        %v844 = vld [vmem:[%s516 + $0x41] sm:$0xff]
        %v845 = vld [vmem:[%s516 + $0x51] sm:$0xff]
        %v846 = vld [vmem:[%s516 + $0x61] sm:$0xff]
        %v847 = vld [vmem:[%s516 + $0x71] sm:$0xff]
        %s848 = scalar_lea.vmem [#allocation3], 32
        %v849 = vld [vmem:[%s848] sm:$0xff]
        %v851 = vsel %vm504, %v840, 0
        %v854 = vsel %vm504, %v841, 0
        %v857 = vsel %vm504, %v842, 0
        %v860 = vsel %vm504, %v843, 0
        %v863 = vsel %vm504, %v844, 0
        %v866 = vsel %vm504, %v845, 0
        %v869 = vsel %vm504, %v846, 0
        %v872 = vsel %vm504, %v847, 0
        %874 = vmatpush.msra.mxu0 0.0
        %875 = vmatpush.msra.mxu0 0.0
        %876 = vmatpush.msra.mxu0 0.0
        %877 = vmatpush.msra.mxu0 0.0
        %878 = vmatpush.msra.mxu0 0.0
        %879 = vmatpush.msra.mxu0 0.0
        %880 = vmatpush.msra.mxu0 0.0
        %881 = vmatpush.msra.mxu0 0.0
        %882 = vmatpush.msra.mxu0 0.0
        %883 = vmatpush.msra.mxu0 0.0
        %884 = vmatpush.msra.mxu0 0.0
        %885 = vmatpush.msra.mxu0 0.0
        %886 = vmatpush.msra.mxu0 0.0
        %887 = vmatpush.msra.mxu0 0.0
        %888 = vmatpush.msra.mxu0 0.0
        %889 = vmatpush.msra.mxu0 %v849
        %890 = vmatmul.f32.gmra.mxu0 %v851
        %v891 = vpop.f32.mrf.mxu0
        %v892 = vadd.f32 0.0, %v891
        %893 = vmatmul.f32.gmra.mxu0 %v854
        %v894 = vpop.f32.mrf.mxu0
        %v895 = vadd.f32 0.0, %v894
        %896 = vmatmul.f32.gmra.mxu0 %v857
        %v897 = vpop.f32.mrf.mxu0
        %v898 = vadd.f32 0.0, %v897
        %899 = vmatmul.f32.gmra.mxu0 %v860
        %v900 = vpop.f32.mrf.mxu0
        %v901 = vadd.f32 0.0, %v900
        %902 = vmatmul.f32.gmra.mxu0 %v863
        %v903 = vpop.f32.mrf.mxu0
        %v904 = vadd.f32 0.0, %v903
        %905 = vmatmul.f32.gmra.mxu0 %v866
        %v906 = vpop.f32.mrf.mxu0
        %v907 = vadd.f32 0.0, %v906
        %908 = vmatmul.f32.gmra.mxu0 %v869
        %v909 = vpop.f32.mrf.mxu0
        %v910 = vadd.f32 0.0, %v909
        %911 = vmatmul.f32.gmra.mxu0 %v872
        %v912 = vpop.f32.mrf.mxu0
        %v913 = vadd.f32 0.0, %v912
        %914 = vdwg.mxu0
        %v915 = vadd.f32 %v832, %v892
        %v916 = vadd.f32 %v833, %v895
        %v917 = vadd.f32 %v834, %v898
        %v918 = vadd.f32 %v835, %v901
        %v919 = vadd.f32 %v836, %v904
        %v920 = vadd.f32 %v837, %v907
        %v921 = vadd.f32 %v838, %v910
        %v922 = vadd.f32 %v839, %v913
        %v923 = vld [vmem:[%s516 + $0x2] sm:$0xff]
        %v924 = vld [vmem:[%s516 + $0x12] sm:$0xff]
        %v925 = vld [vmem:[%s516 + $0x22] sm:$0xff]
        %v926 = vld [vmem:[%s516 + $0x32] sm:$0xff]
        %v927 = vld [vmem:[%s516 + $0x42] sm:$0xff]
        %v928 = vld [vmem:[%s516 + $0x52] sm:$0xff]
        %v929 = vld [vmem:[%s516 + $0x62] sm:$0xff]
        %v930 = vld [vmem:[%s516 + $0x72] sm:$0xff]
        %s931 = scalar_lea.vmem [#allocation3], 40
        %v932 = vld [vmem:[%s931] sm:$0xff]
        %v934 = vsel %vm504, %v923, 0
        %v937 = vsel %vm504, %v924, 0
        %v940 = vsel %vm504, %v925, 0
        %v943 = vsel %vm504, %v926, 0
        %v946 = vsel %vm504, %v927, 0
        %v949 = vsel %vm504, %v928, 0
        %v952 = vsel %vm504, %v929, 0
        %v955 = vsel %vm504, %v930, 0
        %957 = vmatpush.msra.mxu0 0.0
        %958 = vmatpush.msra.mxu0 0.0
        %959 = vmatpush.msra.mxu0 0.0
        %960 = vmatpush.msra.mxu0 0.0
        %961 = vmatpush.msra.mxu0 0.0
        %962 = vmatpush.msra.mxu0 0.0
        %963 = vmatpush.msra.mxu0 0.0
        %964 = vmatpush.msra.mxu0 0.0
        %965 = vmatpush.msra.mxu0 0.0
        %966 = vmatpush.msra.mxu0 0.0
        %967 = vmatpush.msra.mxu0 0.0
        %968 = vmatpush.msra.mxu0 0.0
        %969 = vmatpush.msra.mxu0 0.0
        %970 = vmatpush.msra.mxu0 0.0
        %971 = vmatpush.msra.mxu0 0.0
        %972 = vmatpush.msra.mxu0 %v932
        %973 = vmatmul.f32.gmra.mxu0 %v934
        %v974 = vpop.f32.mrf.mxu0
        %v975 = vadd.f32 0.0, %v974
        %976 = vmatmul.f32.gmra.mxu0 %v937
        %v977 = vpop.f32.mrf.mxu0
        %v978 = vadd.f32 0.0, %v977
        %979 = vmatmul.f32.gmra.mxu0 %v940
        %v980 = vpop.f32.mrf.mxu0
        %v981 = vadd.f32 0.0, %v980
        %982 = vmatmul.f32.gmra.mxu0 %v943
        %v983 = vpop.f32.mrf.mxu0
        %v984 = vadd.f32 0.0, %v983
        %985 = vmatmul.f32.gmra.mxu0 %v946
        %v986 = vpop.f32.mrf.mxu0
        %v987 = vadd.f32 0.0, %v986
        %988 = vmatmul.f32.gmra.mxu0 %v949
        %v989 = vpop.f32.mrf.mxu0
        %v990 = vadd.f32 0.0, %v989
        %991 = vmatmul.f32.gmra.mxu0 %v952
        %v992 = vpop.f32.mrf.mxu0
        %v993 = vadd.f32 0.0, %v992
        %994 = vmatmul.f32.gmra.mxu0 %v955
        %v995 = vpop.f32.mrf.mxu0
        %v996 = vadd.f32 0.0, %v995
        %997 = vdwg.mxu0
        %v998 = vadd.f32 %v915, %v975
        %v999 = vadd.f32 %v916, %v978
        %v1000 = vadd.f32 %v917, %v981
        %v1001 = vadd.f32 %v918, %v984
        %v1002 = vadd.f32 %v919, %v987
        %v1003 = vadd.f32 %v920, %v990
        %v1004 = vadd.f32 %v921, %v993
        %v1005 = vadd.f32 %v922, %v996
        %s1006 = scalar_lea.vmem [#allocation2], 32
        %v1007 = vld [vmem:[%s1006] sm:$0xff]
        %v1008 = vld [vmem:[%s1006 + $0x10] sm:$0xff]
        %v1009 = vld [vmem:[%s1006 + $0x20] sm:$0xff]
        %v1010 = vld [vmem:[%s1006 + $0x30] sm:$0xff]
        %v1011 = vld [vmem:[%s1006 + $0x40] sm:$0xff]
        %v1012 = vld [vmem:[%s1006 + $0x50] sm:$0xff]
        %v1013 = vld [vmem:[%s1006 + $0x60] sm:$0xff]
        %v1014 = vld [vmem:[%s1006 + $0x70] sm:$0xff]
        %s1015 = scalar_lea.vmem [#allocation3], 48
        %v1016 = vld [vmem:[%s1015] sm:$0xff]
        %v1018 = vsel %vm504, %v1007, 0
        %v1021 = vsel %vm504, %v1008, 0
        %v1024 = vsel %vm504, %v1009, 0
        %v1027 = vsel %vm504, %v1010, 0
        %v1030 = vsel %vm504, %v1011, 0
        %v1033 = vsel %vm504, %v1012, 0
        %v1036 = vsel %vm504, %v1013, 0
        %v1039 = vsel %vm504, %v1014, 0
        %1041 = vmatpush.msra.mxu0 0.0
        %1042 = vmatpush.msra.mxu0 0.0
        %1043 = vmatpush.msra.mxu0 0.0
        %1044 = vmatpush.msra.mxu0 0.0
        %1045 = vmatpush.msra.mxu0 0.0
        %1046 = vmatpush.msra.mxu0 0.0
        %1047 = vmatpush.msra.mxu0 0.0
        %1048 = vmatpush.msra.mxu0 0.0
        %1049 = vmatpush.msra.mxu0 0.0
        %1050 = vmatpush.msra.mxu0 0.0
        %1051 = vmatpush.msra.mxu0 0.0
        %1052 = vmatpush.msra.mxu0 0.0
        %1053 = vmatpush.msra.mxu0 0.0
        %1054 = vmatpush.msra.mxu0 0.0
        %1055 = vmatpush.msra.mxu0 0.0
        %1056 = vmatpush.msra.mxu0 %v1016
        %1057 = vmatmul.f32.gmra.mxu0 %v1018
        %v1058 = vpop.f32.mrf.mxu0
        %v1059 = vadd.f32 0.0, %v1058
        %1060 = vmatmul.f32.gmra.mxu0 %v1021
        %v1061 = vpop.f32.mrf.mxu0
        %v1062 = vadd.f32 0.0, %v1061
        %1063 = vmatmul.f32.gmra.mxu0 %v1024
        %v1064 = vpop.f32.mrf.mxu0
        %v1065 = vadd.f32 0.0, %v1064
        %1066 = vmatmul.f32.gmra.mxu0 %v1027
        %v1067 = vpop.f32.mrf.mxu0
        %v1068 = vadd.f32 0.0, %v1067
        %1069 = vmatmul.f32.gmra.mxu0 %v1030
        %v1070 = vpop.f32.mrf.mxu0
        %v1071 = vadd.f32 0.0, %v1070
        %1072 = vmatmul.f32.gmra.mxu0 %v1033
        %v1073 = vpop.f32.mrf.mxu0
        %v1074 = vadd.f32 0.0, %v1073
        %1075 = vmatmul.f32.gmra.mxu0 %v1036
        %v1076 = vpop.f32.mrf.mxu0
        %v1077 = vadd.f32 0.0, %v1076
        %1078 = vmatmul.f32.gmra.mxu0 %v1039
        %v1079 = vpop.f32.mrf.mxu0
        %v1080 = vadd.f32 0.0, %v1079
        %1081 = vdwg.mxu0
        %v1082 = vadd.f32 %v998, %v1059
        %v1083 = vadd.f32 %v999, %v1062
        %v1084 = vadd.f32 %v1000, %v1065
        %v1085 = vadd.f32 %v1001, %v1068
        %v1086 = vadd.f32 %v1002, %v1071
        %v1087 = vadd.f32 %v1003, %v1074
        %v1088 = vadd.f32 %v1004, %v1077
        %v1089 = vadd.f32 %v1005, %v1080
        %v1090 = vld [vmem:[%s1006 + $0x1] sm:$0xff]
        %v1091 = vld [vmem:[%s1006 + $0x11] sm:$0xff]
        %v1092 = vld [vmem:[%s1006 + $0x21] sm:$0xff]
        %v1093 = vld [vmem:[%s1006 + $0x31] sm:$0xff]
        %v1094 = vld [vmem:[%s1006 + $0x41] sm:$0xff]
        %v1095 = vld [vmem:[%s1006 + $0x51] sm:$0xff]
        %v1096 = vld [vmem:[%s1006 + $0x61] sm:$0xff]
        %v1097 = vld [vmem:[%s1006 + $0x71] sm:$0xff]
        %s1098 = scalar_lea.vmem [#allocation3], 56
        %v1099 = vld [vmem:[%s1098] sm:$0xff]
        %v1101 = vsel %vm504, %v1090, 0
        %v1104 = vsel %vm504, %v1091, 0
        %v1107 = vsel %vm504, %v1092, 0
        %v1110 = vsel %vm504, %v1093, 0
        %v1113 = vsel %vm504, %v1094, 0
        %v1116 = vsel %vm504, %v1095, 0
        %v1119 = vsel %vm504, %v1096, 0
        %v1122 = vsel %vm504, %v1097, 0
        %1124 = vmatpush.msra.mxu0 0.0
        %1125 = vmatpush.msra.mxu0 0.0
        %1126 = vmatpush.msra.mxu0 0.0
        %1127 = vmatpush.msra.mxu0 0.0
        %1128 = vmatpush.msra.mxu0 0.0
        %1129 = vmatpush.msra.mxu0 0.0
        %1130 = vmatpush.msra.mxu0 0.0
        %1131 = vmatpush.msra.mxu0 0.0
        %1132 = vmatpush.msra.mxu0 0.0
        %1133 = vmatpush.msra.mxu0 0.0
        %1134 = vmatpush.msra.mxu0 0.0
        %1135 = vmatpush.msra.mxu0 0.0
        %1136 = vmatpush.msra.mxu0 0.0
        %1137 = vmatpush.msra.mxu0 0.0
        %1138 = vmatpush.msra.mxu0 0.0
        %1139 = vmatpush.msra.mxu0 %v1099
        %1140 = vmatmul.f32.gmra.mxu0 %v1101
        %v1141 = vpop.f32.mrf.mxu0
        %v1142 = vadd.f32 0.0, %v1141
        %1143 = vmatmul.f32.gmra.mxu0 %v1104
        %v1144 = vpop.f32.mrf.mxu0
        %v1145 = vadd.f32 0.0, %v1144
        %1146 = vmatmul.f32.gmra.mxu0 %v1107
        %v1147 = vpop.f32.mrf.mxu0
        %v1148 = vadd.f32 0.0, %v1147
        %1149 = vmatmul.f32.gmra.mxu0 %v1110
        %v1150 = vpop.f32.mrf.mxu0
        %v1151 = vadd.f32 0.0, %v1150
        %1152 = vmatmul.f32.gmra.mxu0 %v1113
        %v1153 = vpop.f32.mrf.mxu0
        %v1154 = vadd.f32 0.0, %v1153
        %1155 = vmatmul.f32.gmra.mxu0 %v1116
        %v1156 = vpop.f32.mrf.mxu0
        %v1157 = vadd.f32 0.0, %v1156
        %1158 = vmatmul.f32.gmra.mxu0 %v1119
        %v1159 = vpop.f32.mrf.mxu0
        %v1160 = vadd.f32 0.0, %v1159
        %1161 = vmatmul.f32.gmra.mxu0 %v1122
        %v1162 = vpop.f32.mrf.mxu0
        %v1163 = vadd.f32 0.0, %v1162
        %1164 = vdwg.mxu0
        %v1165 = vadd.f32 %v1082, %v1142
        %v1166 = vadd.f32 %v1083, %v1145
        %v1167 = vadd.f32 %v1084, %v1148
        %v1168 = vadd.f32 %v1085, %v1151
        %v1169 = vadd.f32 %v1086, %v1154
        %v1170 = vadd.f32 %v1087, %v1157
        %v1171 = vadd.f32 %v1088, %v1160
        %v1172 = vadd.f32 %v1089, %v1163
        %v1173 = vld [vmem:[%s1006 + $0x2] sm:$0xff]
        %v1174 = vld [vmem:[%s1006 + $0x12] sm:$0xff]
        %v1175 = vld [vmem:[%s1006 + $0x22] sm:$0xff]
        %v1176 = vld [vmem:[%s1006 + $0x32] sm:$0xff]
        %v1177 = vld [vmem:[%s1006 + $0x42] sm:$0xff]
        %v1178 = vld [vmem:[%s1006 + $0x52] sm:$0xff]
        %v1179 = vld [vmem:[%s1006 + $0x62] sm:$0xff]
        %v1180 = vld [vmem:[%s1006 + $0x72] sm:$0xff]
        %s1181 = scalar_lea.vmem [#allocation3], 64
        %v1182 = vld [vmem:[%s1181] sm:$0xff]
        %v1184 = vsel %vm504, %v1173, 0
        %v1187 = vsel %vm504, %v1174, 0
        %v1190 = vsel %vm504, %v1175, 0
        %v1193 = vsel %vm504, %v1176, 0
        %v1196 = vsel %vm504, %v1177, 0
        %v1199 = vsel %vm504, %v1178, 0
        %v1202 = vsel %vm504, %v1179, 0
        %v1205 = vsel %vm504, %v1180, 0
        %1207 = vmatpush.msra.mxu0 0.0
        %1208 = vmatpush.msra.mxu0 0.0
        %1209 = vmatpush.msra.mxu0 0.0
        %1210 = vmatpush.msra.mxu0 0.0
        %1211 = vmatpush.msra.mxu0 0.0
        %1212 = vmatpush.msra.mxu0 0.0
        %1213 = vmatpush.msra.mxu0 0.0
        %1214 = vmatpush.msra.mxu0 0.0
        %1215 = vmatpush.msra.mxu0 0.0
        %1216 = vmatpush.msra.mxu0 0.0
        %1217 = vmatpush.msra.mxu0 0.0
        %1218 = vmatpush.msra.mxu0 0.0
        %1219 = vmatpush.msra.mxu0 0.0
        %1220 = vmatpush.msra.mxu0 0.0
        %1221 = vmatpush.msra.mxu0 0.0
        %1222 = vmatpush.msra.mxu0 %v1182
        %1223 = vmatmul.f32.gmra.mxu0 %v1184
        %v1224 = vpop.f32.mrf.mxu0
        %v1225 = vadd.f32 0.0, %v1224
        %1226 = vmatmul.f32.gmra.mxu0 %v1187
        %v1227 = vpop.f32.mrf.mxu0
        %v1228 = vadd.f32 0.0, %v1227
        %1229 = vmatmul.f32.gmra.mxu0 %v1190
        %v1230 = vpop.f32.mrf.mxu0
        %v1231 = vadd.f32 0.0, %v1230
        %1232 = vmatmul.f32.gmra.mxu0 %v1193
        %v1233 = vpop.f32.mrf.mxu0
        %v1234 = vadd.f32 0.0, %v1233
        %1235 = vmatmul.f32.gmra.mxu0 %v1196
        %v1236 = vpop.f32.mrf.mxu0
        %v1237 = vadd.f32 0.0, %v1236
        %1238 = vmatmul.f32.gmra.mxu0 %v1199
        %v1239 = vpop.f32.mrf.mxu0
        %v1240 = vadd.f32 0.0, %v1239
        %1241 = vmatmul.f32.gmra.mxu0 %v1202
        %v1242 = vpop.f32.mrf.mxu0
        %v1243 = vadd.f32 0.0, %v1242
        %1244 = vmatmul.f32.gmra.mxu0 %v1205
        %v1245 = vpop.f32.mrf.mxu0
        %v1246 = vadd.f32 0.0, %v1245
        %1247 = vdwg.mxu0
        %v1248 = vadd.f32 %v1165, %v1225
        %v1249 = vadd.f32 %v1166, %v1228
        %v1250 = vadd.f32 %v1167, %v1231
        %v1251 = vadd.f32 %v1168, %v1234
        %v1252 = vadd.f32 %v1169, %v1237
        %v1253 = vadd.f32 %v1170, %v1240
        %v1254 = vadd.f32 %v1171, %v1243
        %v1255 = vadd.f32 %v1172, %v1246
        %v1256 = vld [vmem:[%s4] sm:$0x1]
        %v1258 = vperm.slane %v1256, 0
        %v1260 = vadd.f32 %v1248, %v1258
        %v1261 = vadd.f32 %v1249, %v1258
        %v1262 = vadd.f32 %v1250, %v1258
        %v1263 = vadd.f32 %v1251, %v1258
        %v1264 = vadd.f32 %v1252, %v1258
        %v1265 = vadd.f32 %v1253, %v1258
        %v1266 = vadd.f32 %v1254, %v1258
        %v1267 = vadd.f32 %v1255, %v1258
        %v1268 = vmul.f32 %v1260, %v1260
        %v1269 = vmul.f32 %v1261, %v1261
        %v1270 = vmul.f32 %v1262, %v1262
        %v1271 = vmul.f32 %v1263, %v1263
        %v1272 = vmul.f32 %v1264, %v1264
        %v1273 = vmul.f32 %v1265, %v1265
        %v1274 = vmul.f32 %v1266, %v1266
        %v1275 = vmul.f32 %v1267, %v1267
        %v1276 = vld [vmem:[#allocation5] sm:$0xff]
        %v1277 = vld [vmem:[#allocation5 + $0x8] sm:$0xff]
        %v1278 = vld [vmem:[%s6] sm:$0x1]
        %v1280 = vperm.slane %v1278, 0
        %vm1282 = vcmask 130048
        %v1284 = vsel %vm1282, %v1268, 0
        %v1287 = vsel %vm1282, %v1269, 0
        %v1290 = vsel %vm1282, %v1270, 0
        %v1293 = vsel %vm1282, %v1271, 0
        %v1296 = vsel %vm1282, %v1272, 0
        %v1299 = vsel %vm1282, %v1273, 0
        %v1302 = vsel %vm1282, %v1274, 0
        %v1305 = vsel %vm1282, %v1275, 0
        %1307 = vmatpush.msra.mxu0 0.0
        %1308 = vmatpush.msra.mxu0 0.0
        %1309 = vmatpush.msra.mxu0 0.0
        %1310 = vmatpush.msra.mxu0 0.0
        %1311 = vmatpush.msra.mxu0 0.0
        %1312 = vmatpush.msra.mxu0 0.0
        %1313 = vmatpush.msra.mxu0 0.0
        %1314 = vmatpush.msra.mxu0 0.0
        %1315 = vmatpush.msra.mxu0 0.0
        %1316 = vmatpush.msra.mxu0 0.0
        %1317 = vmatpush.msra.mxu0 0.0
        %1318 = vmatpush.msra.mxu0 0.0
        %1319 = vmatpush.msra.mxu0 0.0
        %1320 = vmatpush.msra.mxu0 0.0
        %1321 = vmatpush.msra.mxu0 %v1277
        %1322 = vmatpush.msra.mxu0 %v1276
        %1323 = vmatmul.f32.gmra.mxu0 %v1284
        %v1324 = vpop.f32.mrf.mxu0
        %v1325 = vadd.f32 %v1280, %v1324
        %1326 = vmatmul.f32.gmra.mxu0 %v1287
        %v1327 = vpop.f32.mrf.mxu0
        %v1328 = vadd.f32 %v1280, %v1327
        %1329 = vmatmul.f32.gmra.mxu0 %v1290
        %v1330 = vpop.f32.mrf.mxu0
        %v1331 = vadd.f32 %v1280, %v1330
        %1332 = vmatmul.f32.gmra.mxu0 %v1293
        %v1333 = vpop.f32.mrf.mxu0
        %v1334 = vadd.f32 %v1280, %v1333
        %1335 = vmatmul.f32.gmra.mxu0 %v1296
        %v1336 = vpop.f32.mrf.mxu0
        %v1337 = vadd.f32 %v1280, %v1336
        %1338 = vmatmul.f32.gmra.mxu0 %v1299
        %v1339 = vpop.f32.mrf.mxu0
        %v1340 = vadd.f32 %v1280, %v1339
        %1341 = vmatmul.f32.gmra.mxu0 %v1302
        %v1342 = vpop.f32.mrf.mxu0
        %v1343 = vadd.f32 %v1280, %v1342
        %1344 = vmatmul.f32.gmra.mxu0 %v1305
        %v1345 = vpop.f32.mrf.mxu0
        %v1346 = vadd.f32 %v1280, %v1345
        %1347 = vdwg.mxu0
        %v1348 = vrsqrt.pop %v1325
        %v1349 = vmul.f32 %v1348, %v1325
        %v1350 = vmul.f32 %v1349, %v1348
        %v1351 = vmul.f32 0.5, %v1350
        %v1352 = vsub.f32 1.5, %v1351
        %v1353 = vmul.f32 %v1348, %v1352
        %v1354 = vmul.f32 %v1325, %v1353
        %vm1355 = vcmp.eq.f32.partialorder %v1325, inf
        %v1356 = vsel %vm1355, %v1325, %v1354
        %vm1357 = vcmp.eq.f32.partialorder %v1325, 0.0
        %v1358 = vand.u32 %v1325, 2147483648
        %v1359 = vsel %vm1357, %v1358, %v1356
        %v1360 = vrsqrt.pop %v1328
        %v1361 = vmul.f32 %v1360, %v1328
        %v1362 = vmul.f32 %v1361, %v1360
        %v1363 = vmul.f32 0.5, %v1362
        %v1364 = vsub.f32 1.5, %v1363
        %v1365 = vmul.f32 %v1360, %v1364
        %v1366 = vmul.f32 %v1328, %v1365
        %vm1367 = vcmp.eq.f32.partialorder %v1328, inf
        %v1368 = vsel %vm1367, %v1328, %v1366
        %vm1369 = vcmp.eq.f32.partialorder %v1328, 0.0
        %v1370 = vand.u32 %v1328, 2147483648
        %v1371 = vsel %vm1369, %v1370, %v1368
        %v1372 = vrsqrt.pop %v1331
        %v1373 = vmul.f32 %v1372, %v1331
        %v1374 = vmul.f32 %v1373, %v1372
        %v1375 = vmul.f32 0.5, %v1374
        %v1376 = vsub.f32 1.5, %v1375
        %v1377 = vmul.f32 %v1372, %v1376
        %v1378 = vmul.f32 %v1331, %v1377
        %vm1379 = vcmp.eq.f32.partialorder %v1331, inf
        %v1380 = vsel %vm1379, %v1331, %v1378
        %vm1381 = vcmp.eq.f32.partialorder %v1331, 0.0
        %v1382 = vand.u32 %v1331, 2147483648
        %v1383 = vsel %vm1381, %v1382, %v1380
        %v1384 = vrsqrt.pop %v1334
        %v1385 = vmul.f32 %v1384, %v1334
        %v1386 = vmul.f32 %v1385, %v1384
        %v1387 = vmul.f32 0.5, %v1386
        %v1388 = vsub.f32 1.5, %v1387
        %v1389 = vmul.f32 %v1384, %v1388
        %v1390 = vmul.f32 %v1334, %v1389
        %vm1391 = vcmp.eq.f32.partialorder %v1334, inf
        %v1392 = vsel %vm1391, %v1334, %v1390
        %vm1393 = vcmp.eq.f32.partialorder %v1334, 0.0
        %v1394 = vand.u32 %v1334, 2147483648
        %v1395 = vsel %vm1393, %v1394, %v1392
        %v1396 = vrsqrt.pop %v1337
        %v1397 = vmul.f32 %v1396, %v1337
        %v1398 = vmul.f32 %v1397, %v1396
        %v1399 = vmul.f32 0.5, %v1398
        %v1400 = vsub.f32 1.5, %v1399
        %v1401 = vmul.f32 %v1396, %v1400
        %v1402 = vmul.f32 %v1337, %v1401
        %vm1403 = vcmp.eq.f32.partialorder %v1337, inf
        %v1404 = vsel %vm1403, %v1337, %v1402
        %vm1405 = vcmp.eq.f32.partialorder %v1337, 0.0
        %v1406 = vand.u32 %v1337, 2147483648
        %v1407 = vsel %vm1405, %v1406, %v1404
        %v1408 = vrsqrt.pop %v1340
        %v1409 = vmul.f32 %v1408, %v1340
        %v1410 = vmul.f32 %v1409, %v1408
        %v1411 = vmul.f32 0.5, %v1410
        %v1412 = vsub.f32 1.5, %v1411
        %v1413 = vmul.f32 %v1408, %v1412
        %v1414 = vmul.f32 %v1340, %v1413
        %vm1415 = vcmp.eq.f32.partialorder %v1340, inf
        %v1416 = vsel %vm1415, %v1340, %v1414
        %vm1417 = vcmp.eq.f32.partialorder %v1340, 0.0
        %v1418 = vand.u32 %v1340, 2147483648
        %v1419 = vsel %vm1417, %v1418, %v1416
        %v1420 = vrsqrt.pop %v1343
        %v1421 = vmul.f32 %v1420, %v1343
        %v1422 = vmul.f32 %v1421, %v1420
        %v1423 = vmul.f32 0.5, %v1422
        %v1424 = vsub.f32 1.5, %v1423
        %v1425 = vmul.f32 %v1420, %v1424
        %v1426 = vmul.f32 %v1343, %v1425
        %vm1427 = vcmp.eq.f32.partialorder %v1343, inf
        %v1428 = vsel %vm1427, %v1343, %v1426
        %vm1429 = vcmp.eq.f32.partialorder %v1343, 0.0
        %v1430 = vand.u32 %v1343, 2147483648
        %v1431 = vsel %vm1429, %v1430, %v1428
        %v1432 = vrsqrt.pop %v1346
        %v1433 = vmul.f32 %v1432, %v1346
        %v1434 = vmul.f32 %v1433, %v1432
        %v1435 = vmul.f32 0.5, %v1434
        %v1436 = vsub.f32 1.5, %v1435
        %v1437 = vmul.f32 %v1432, %v1436
        %v1438 = vmul.f32 %v1346, %v1437
        %vm1439 = vcmp.eq.f32.partialorder %v1346, inf
        %v1440 = vsel %vm1439, %v1346, %v1438
        %vm1441 = vcmp.eq.f32.partialorder %v1346, 0.0
        %v1442 = vand.u32 %v1346, 2147483648
        %v1443 = vsel %vm1441, %v1442, %v1440
        %v1444 = vmul.f32 %v1260, %v1359
        %v1445 = vmul.f32 %v1261, %v1371
        %v1446 = vmul.f32 %v1262, %v1383
        %v1447 = vmul.f32 %v1263, %v1395
        %v1448 = vmul.f32 %v1264, %v1407
        %v1449 = vmul.f32 %v1265, %v1419
        %v1450 = vmul.f32 %v1266, %v1431
        %v1451 = vmul.f32 %v1267, %v1443
        %1452 = vst.msk [vmem:[%s468] sm:$0xff] %vm1282, %v1444
        %1453 = vst.msk [vmem:[%s468 + $0x8] sm:$0xff] %vm1282, %v1445
        %1454 = vst.msk [vmem:[%s468 + $0x10] sm:$0xff] %vm1282, %v1446
        %1455 = vst.msk [vmem:[%s468 + $0x18] sm:$0xff] %vm1282, %v1447
        %1456 = vst.msk [vmem:[%s468 + $0x20] sm:$0xff] %vm1282, %v1448
        %1457 = vst.msk [vmem:[%s468 + $0x28] sm:$0xff] %vm1282, %v1449
        %1458 = vst.msk [vmem:[%s468 + $0x30] sm:$0xff] %vm1282, %v1450
        %1459 = vst.msk [vmem:[%s468 + $0x38] sm:$0xff] %vm1282, %v1451
        %s1460 = smul.u32 8, %s25
        %p1461 = scmp.lt.s32.totalorder %s24, 1
        %s1462 = scalar_select %p1461, %s24, 1
        %p1463 = scmp.lt.s32.totalorder %s1460, 7
        %s1464 = scalar_select %p1463, %s1460, 7
        %s1465 = smul.addr %s1462, 8
        %s1466 = sadd.s32 %s1464, %s1465
        %s1467 = smul.addr %s1466, 8
        %s1468 = scalar_lea.vmem %s7, %s1467
        // Predicated region
        $region57: #{_lambda_.4} parent=47 // pred_check
          %p1469 = pneg %p236
        $region58: #{_lambda_.4} parent=47 // pred_check_branch
          %1471 = sbr.rel (%p1469) target = $region60
        $region59: #{_lambda_.4} parent=47 // pred_region
          %s1472 = smul.u32 8, %s25
        $region60: #{_lambda_.4} parent=47 // pred_fallthru
          _
      $region48: #{_lambda_.4} parent=5 // pred_fallthru
        _
      %p1473 = scmp.le.s32.totalorder 2, %s15
      // Predicated region
      $region61: #{_lambda_.4} parent=5 // pred_check
        %p1474 = pneg %p1473
      $region62: #{_lambda_.4} parent=5 // pred_check_branch
        %1476 = sbr.rel (%p1474) target = $region64
      $region63: #{_lambda_.4} parent=5 // pred_region
        %s1477 = ssub.s32 %s15, 2
        // Predicated region
        $region65: #{_lambda_.4} parent=63 // pred_check
          %p1478 = pneg %p242
        $region66: #{_lambda_.4} parent=63 // pred_check_branch
          %1480 = sbr.rel (%p1478) target = $region68
        $region67: #{_lambda_.4} parent=63 // pred_region
          %s1481 = smul.u32 8, %s27
          %p1482 = scmp.lt.s32.totalorder %s26, 1
          %s1483 = scalar_select %p1482, %s26, 1
          %p1484 = scmp.lt.s32.totalorder %s1481, 7
          %s1485 = scalar_select %p1484, %s1481, 7
          %s1486 = smul.addr %s1483, 8
          %s1487 = sadd.s32 %s1485, %s1486
          %s1488 = smul.addr %s1487, 8
          %s1489 = scalar_lea.vmem %s7, %s1488
        $region68: #{_lambda_.4} parent=63 // pred_fallthru
          _
      $region64: #{_lambda_.4} parent=5 // pred_fallthru
        _
    $region6: #{_lambda_.4} parent=1 // loop_footer
      %s19 = sadd.s32 1, %s15
    $region7: #{_lambda_.4} parent=1 // loop_footer_branch
      %14 = sbr.rel target = $region3
    $region8: #{_lambda_.4} parent=1 // loop_exit
      _
    %1490 = vsyncpa [#allocation4], 1
    %s1491 = scalar_lea.sflag [#allocation4], 1
    %1492 = vsyncpa %s1491, 1
    %1493 = vsyncpa [#allocation6], 1

// kernel: _lambda_.6
$region0: #{_lambda_.6}
  #allocation0 [shape = 'u32[]', space=smem, size = 0x4, offset = 0x4, fixed_abs, tag = 'smem constant byte address 0x4 - core index']
  #allocation1 [shape = 'u32[72,128]{1,0:T(1,128)}', space=vmem, size = 0x9000, scoped, tag = 'internal scratch']
  #allocation2 [shape = 'f32[17,17,16]{2,1,0:T(8,128)}', space=vmem, size = 0x33000, scoped, tag = 'scratch operand']
  %s0 = inlined_call_operand.vmem [shape: f32[2,16,16,16], index: 0, kind: input, shape index: {}, may-alias: {0,1}]
  %s1 = inlined_call_operand.vmem [shape: f32[2,16,16,16], index: 1, kind: input, shape index: {}, may-alias: {0,1}]
  %s2 = inlined_call_operand.hbm [shape: f32[2,2,16,64], index: 2, kind: input, shape index: {}]
  %s3 = inlined_call_operand.vmem [shape: f32[1,64], index: 3, kind: input, shape index: {}]
  %s4 = inlined_call_operand.hbm [shape: f32[64,64], index: 4, kind: input, shape index: {}]
  %s5 = inlined_call_operand.vmem [shape: f32[1,64], index: 5, kind: input, shape index: {}]
  %s6 = inlined_call_operand.vmem [shape: f32[2,16,16,64], index: 6, kind: output, shape index: {}]
  %s7 = sld [smem:[#allocation0]]
  $region65: #{_lambda_.6} parent=0
    _
  %s9 = ssub.s32 1, %s7
  %s10 = scalar_select 0, %s9, %s7
  $region1: #{_lambda_.6} parent=0
    #allocation3 [shape = 'u8[32768]{0}', space=vmem, size = 0x8000, scoped, tag = 'input window, operand 2, single buffered']
    #allocation4 [shape = 's32[2]{0}', space=sflag, size = 0x8, scoped, tag = 'scoped memory for _lambda_.6']
    #allocation5 [shape = 'u8[32768]{0}', space=vmem, size = 0x8000, scoped, tag = 'input window, operand 4, single buffered']
    #allocation6 [shape = 's32[1]{0}', space=sflag, size = 0x4, scoped, tag = 'scoped memory for _lambda_.6']
    %11 = vsyncpa [#allocation4], 0
    %12 = vsyncpa [#allocation6], 0
    loop: start=0, step=1, limit=4
    $region2: #{_lambda_.6} parent=1 // loop_pre_header
      _
    $region3: #{_lambda_.6} parent=1 // loop_header
      %s14 = sphi 0, %s18
      %p15 = scmp.ge.s32.totalorder %s14, 4
      %s21 = sphi 0, %s33
      %s22 = sphi 0, %s29
      %s23 = sphi 0, %s21
      %s24 = sphi 0, %s22
      %s25 = sphi 0, %s23
      %s26 = sphi 0, %s24
      %s38 = sphi 0, %s40
      %s41 = sphi 0, %s38
      %s42 = sphi 0, %s41
      %s58 = sphi 0, %s42
      %s74 = sphi 0, %s76
      %s77 = sphi 0, %s74
      %s78 = sphi 0, %s77
      %s94 = sphi 0, %s78
      %s98 = sphi 0, %s98
      %s100 = sphi 0, %s98
      %s101 = sphi 0, %s100
      %s115 = sphi 0, %s101
      %s119 = sphi 0, %s119
      %s121 = sphi 0, %s119
      %s122 = sphi 0, %s121
      %s136 = sphi 0, %s122
      %s140 = sphi 0, %s140
      %s142 = sphi 0, %s140
      %s143 = sphi 0, %s142
      %s157 = sphi 0, %s143
      %s161 = sphi 0, %s161
      %s163 = sphi 0, %s161
      %s164 = sphi 0, %s163
      %s178 = sphi 0, %s164
      %s186 = sphi 0, %s188
      %s189 = sphi 0, %s186
      %s190 = sphi 0, %s189
      %s206 = sphi 0, %s190
    $region4: #{_lambda_.6} parent=1 // loop_header_branch
      %17 = sbr.rel (%p15) target = $region8
    $region5: #{_lambda_.6} parent=1 // loop_body
      %s19 = ssub.s32 %s14, 1
      %s20 = ssub.s32 %s14, 2
      %s27 = sadd.s32 1, %s22
      %p28 = scmp.ge.s32.totalorder %s27, 1
      %s29 = scalar_select %p28, 0, %s27
      %s30 = sadd.s32 1, %s21
      %s31 = scalar_select %p28, %s30, %s21
      %p32 = scmp.ge.s32.totalorder %s31, 2
      %s33 = scalar_select %p32, 0, %s31
      %s34 = ssub.s32 %s21, %s33
      %s35 = ssub.s32 %s22, %s29
      %s36 = sor.u32 %s34, %s35
      %p37 = scmp.eq.s32.totalorder %s36, 0
      %s39 = sadd.s32 %s38, 1
      %s40 = scalar_select %p37, %s38, %s39
      %p43 = pneg %p37
      %p44 = scmp.eq.s32.totalorder %s14, 1
      %p45 = por %p43, %p44
      %p46 = scmp.ne.s32.totalorder %s38, %s41
      %p47 = scmp.eq.s32.totalorder %s14, 0
      %p48 = por %p46, %p47
      %p49 = scmp.ne.s32.totalorder %s38, %s41
      %p50 = scmp.eq.s32.totalorder %s19, 1
      %p51 = por %p49, %p50
      %p52 = scmp.ne.s32.totalorder %s41, %s42
      %p53 = scmp.eq.s32.totalorder %s19, 0
      %p54 = por %p52, %p53
      %p55 = scmp.ne.s32.totalorder %s41, %s42
      %p56 = scmp.eq.s32.totalorder %s20, 1
      %p57 = por %p55, %p56
      %p59 = scmp.ne.s32.totalorder %s42, %s58
      %p60 = scmp.eq.s32.totalorder %s20, 0
      %p61 = por %p59, %p60
      %s62 = sadd.s32 %s22, 1
      %s63 = smul.u32 %s62, 16
      %p64 = scmp.lt.s32.totalorder %s63, 15
      %s65 = scalar_select %p64, %s63, 15
      %s66 = sadd.s32 %s29, 1
      %s67 = smul.u32 %s66, 16
      %p68 = scmp.lt.s32.totalorder %s67, 15
      %s69 = scalar_select %p68, %s67, 15
      %s70 = ssub.s32 %s21, %s33
      %s71 = ssub.s32 %s65, %s69
      %s72 = sor.u32 %s70, %s71
      %p73 = scmp.eq.s32.totalorder %s72, 0
      %s75 = sadd.s32 %s74, 1
      %s76 = scalar_select %p73, %s74, %s75
      %p79 = pneg %p73
      %p80 = scmp.eq.s32.totalorder %s14, 1
      %p81 = por %p79, %p80
      %p82 = scmp.ne.s32.totalorder %s74, %s77
      %p83 = scmp.eq.s32.totalorder %s14, 0
      %p84 = por %p82, %p83
      %p85 = scmp.ne.s32.totalorder %s74, %s77
      %p86 = scmp.eq.s32.totalorder %s19, 1
      %p87 = por %p85, %p86
      %p88 = scmp.ne.s32.totalorder %s77, %s78
      %p89 = scmp.eq.s32.totalorder %s19, 0
      %p90 = por %p88, %p89
      %p91 = scmp.ne.s32.totalorder %s77, %s78
      %p92 = scmp.eq.s32.totalorder %s20, 1
      %p93 = por %p91, %p92
      %p95 = scmp.ne.s32.totalorder %s78, %s94
      %p96 = scmp.eq.s32.totalorder %s20, 0
      %p97 = por %p95, %p96
      %s99 = sadd.s32 %s98, 1
      %p102 = scmp.eq.s32.totalorder %s14, 1
      %p103 = scmp.ne.s32.totalorder %s98, %s100
      %p104 = scmp.eq.s32.totalorder %s14, 0
      %p105 = por %p103, %p104
      %p106 = scmp.ne.s32.totalorder %s98, %s100
      %p107 = scmp.eq.s32.totalorder %s19, 1
      %p108 = por %p106, %p107
      %p109 = scmp.ne.s32.totalorder %s100, %s101
      %p110 = scmp.eq.s32.totalorder %s19, 0
      %p111 = por %p109, %p110
      %p112 = scmp.ne.s32.totalorder %s100, %s101
      %p113 = scmp.eq.s32.totalorder %s20, 1
      %p114 = por %p112, %p113
      %p116 = scmp.ne.s32.totalorder %s101, %s115
      %p117 = scmp.eq.s32.totalorder %s20, 0
      %p118 = por %p116, %p117
      %s120 = sadd.s32 %s119, 1
      %p123 = scmp.eq.s32.totalorder %s14, 1
      %p124 = scmp.ne.s32.totalorder %s119, %s121
      %p125 = scmp.eq.s32.totalorder %s14, 0
      %p126 = por %p124, %p125
      %p127 = scmp.ne.s32.totalorder %s119, %s121
      %p128 = scmp.eq.s32.totalorder %s19, 1
      %p129 = por %p127, %p128
      %p130 = scmp.ne.s32.totalorder %s121, %s122
      %p131 = scmp.eq.s32.totalorder %s19, 0
      %p132 = por %p130, %p131
      %p133 = scmp.ne.s32.totalorder %s121, %s122
      %p134 = scmp.eq.s32.totalorder %s20, 1
      %p135 = por %p133, %p134
      %p137 = scmp.ne.s32.totalorder %s122, %s136
      %p138 = scmp.eq.s32.totalorder %s20, 0
      %p139 = por %p137, %p138
      %s141 = sadd.s32 %s140, 1
      %p144 = scmp.eq.s32.totalorder %s14, 1
      %p145 = scmp.ne.s32.totalorder %s140, %s142
      %p146 = scmp.eq.s32.totalorder %s14, 0
      %p147 = por %p145, %p146
      %p148 = scmp.ne.s32.totalorder %s140, %s142
      %p149 = scmp.eq.s32.totalorder %s19, 1
      %p150 = por %p148, %p149
      %p151 = scmp.ne.s32.totalorder %s142, %s143
      %p152 = scmp.eq.s32.totalorder %s19, 0
      %p153 = por %p151, %p152
      %p154 = scmp.ne.s32.totalorder %s142, %s143
      %p155 = scmp.eq.s32.totalorder %s20, 1
      %p156 = por %p154, %p155
      %p158 = scmp.ne.s32.totalorder %s143, %s157
      %p159 = scmp.eq.s32.totalorder %s20, 0
      %p160 = por %p158, %p159
      %s162 = sadd.s32 %s161, 1
      %p165 = scmp.eq.s32.totalorder %s14, 1
      %p166 = scmp.ne.s32.totalorder %s161, %s163
      %p167 = scmp.eq.s32.totalorder %s14, 0
      %p168 = por %p166, %p167
      %p169 = scmp.ne.s32.totalorder %s161, %s163
      %p170 = scmp.eq.s32.totalorder %s19, 1
      %p171 = por %p169, %p170
      %p172 = scmp.ne.s32.totalorder %s163, %s164
      %p173 = scmp.eq.s32.totalorder %s19, 0
      %p174 = por %p172, %p173
      %p175 = scmp.ne.s32.totalorder %s163, %s164
      %p176 = scmp.eq.s32.totalorder %s20, 1
      %p177 = por %p175, %p176
      %p179 = scmp.ne.s32.totalorder %s164, %s178
      %p180 = scmp.eq.s32.totalorder %s20, 0
      %p181 = por %p179, %p180
      %s182 = ssub.s32 %s21, %s33
      %s183 = ssub.s32 %s22, %s29
      %s184 = sor.u32 %s182, %s183
      %p185 = scmp.eq.s32.totalorder %s184, 0
      %s187 = sadd.s32 %s186, 1
      %s188 = scalar_select %p185, %s186, %s187
      %p191 = pneg %p185
      %p192 = scmp.eq.s32.totalorder %s14, 1
      %p193 = por %p191, %p192
      %p194 = scmp.ne.s32.totalorder %s186, %s189
      %p195 = scmp.eq.s32.totalorder %s14, 0
      %p196 = por %p194, %p195
      %p197 = scmp.ne.s32.totalorder %s186, %s189
      %p198 = scmp.eq.s32.totalorder %s19, 1
      %p199 = por %p197, %p198
      %p200 = scmp.ne.s32.totalorder %s189, %s190
      %p201 = scmp.eq.s32.totalorder %s19, 0
      %p202 = por %p200, %p201
      %p203 = scmp.ne.s32.totalorder %s189, %s190
      %p204 = scmp.eq.s32.totalorder %s20, 1
      %p205 = por %p203, %p204
      %p207 = scmp.ne.s32.totalorder %s190, %s206
      %p208 = scmp.eq.s32.totalorder %s20, 0
      %p209 = por %p207, %p208
      %p210 = scmp.le.s32.totalorder 1, %s14
      %p211 = scmp.lt.s32.totalorder %s14, 3
      %p212 = pnand %p210, %p211
      %p213 = pneg %p212
      // Predicated region
      $region9: #{_lambda_.6} parent=5 // pred_check
        _
      $region10: #{_lambda_.6} parent=5 // pred_check_branch
        %215 = sbr.rel (%p212) target = $region12
      $region11: #{_lambda_.6} parent=5 // pred_region
        %s216 = ssub.s32 %s14, 1
        // Predicated region
        $region13: #{_lambda_.6} parent=11 // pred_check
          %p217 = pneg %p111
        $region14: #{_lambda_.6} parent=11 // pred_check_branch
          %219 = sbr.rel (%p217) target = $region16
        $region15: #{_lambda_.6} parent=11 // pred_region
          %221 = vsyncadd [#allocation4], 0
          %s222 = sshll.u32 %s2, 4
          %s223 = int_to_ptr.hbm [resolvable:$true] %s222
          %s224 = sshll.u32 [#allocation3], 4
          %s225 = int_to_ptr.vmem [resolvable:$true] %s224
          %230 = dma.hbm_to_vmem [thread:$0]  %s223, 1024, %s225, [#allocation4], 128, 128, 8
        $region16: #{_lambda_.6} parent=11 // pred_fallthru
          _
        // Predicated region
        $region17: #{_lambda_.6} parent=11 // pred_check
          %p231 = pneg %p132
        $region18: #{_lambda_.6} parent=11 // pred_check_branch
          %233 = sbr.rel (%p231) target = $region20
        $region19: #{_lambda_.6} parent=11 // pred_region
          _
        $region20: #{_lambda_.6} parent=11 // pred_fallthru
          _
        // Predicated region
        $region21: #{_lambda_.6} parent=11 // pred_check
          %p234 = pneg %p153
        $region22: #{_lambda_.6} parent=11 // pred_check_branch
          %236 = sbr.rel (%p234) target = $region24
        $region23: #{_lambda_.6} parent=11 // pred_region
          %238 = vsyncadd [#allocation6], 0
          %s239 = sshll.u32 %s4, 4
          %s240 = int_to_ptr.hbm [resolvable:$true] %s239
          %s241 = sshll.u32 [#allocation5], 4
          %s242 = int_to_ptr.vmem [resolvable:$true] %s241
          %247 = dma.hbm_to_vmem [thread:$0]  %s240, 1024, %s242, [#allocation6], 128, 128, 8
        $region24: #{_lambda_.6} parent=11 // pred_fallthru
          _
        // Predicated region
        $region25: #{_lambda_.6} parent=11 // pred_check
          %p248 = pneg %p174
        $region26: #{_lambda_.6} parent=11 // pred_check_branch
          %250 = sbr.rel (%p248) target = $region28
        $region27: #{_lambda_.6} parent=11 // pred_region
          _
        $region28: #{_lambda_.6} parent=11 // pred_fallthru
          _
      $region12: #{_lambda_.6} parent=5 // pred_fallthru
        _
      %p251 = scmp.lt.s32.totalorder %s14, 2
      // Predicated region
      $region29: #{_lambda_.6} parent=5 // pred_check
        %p252 = pneg %p251
      $region30: #{_lambda_.6} parent=5 // pred_check_branch
        %254 = sbr.rel (%p252) target = $region32
      $region31: #{_lambda_.6} parent=5 // pred_region
        // Predicated region
        $region33: #{_lambda_.6} parent=31 // pred_check
          %p255 = pneg %p48
        $region34: #{_lambda_.6} parent=31 // pred_check_branch
          %257 = sbr.rel (%p255) target = $region36
        $region35: #{_lambda_.6} parent=31 // pred_region
          %s258 = smul.u32 16, %s22
          %p259 = scmp.lt.s32.totalorder %s21, 1
          %s260 = scalar_select %p259, %s21, 1
          %p261 = scmp.lt.s32.totalorder %s258, 15
          %s262 = scalar_select %p261, %s258, 15
          %s263 = smul.addr %s262, 2
          %s264 = smul.addr %s260, 32
          %s265 = sadd.s32 %s263, %s264
          %s266 = smul.addr %s265, 8
          %s267 = scalar_lea.vmem %s0, %s266
          %s268 = smul.u32 16, %s22
        $region36: #{_lambda_.6} parent=31 // pred_fallthru
          _
        // Predicated region
        $region37: #{_lambda_.6} parent=31 // pred_check
          %p269 = pneg %p84
        $region38: #{_lambda_.6} parent=31 // pred_check_branch
          %271 = sbr.rel (%p269) target = $region40
        $region39: #{_lambda_.6} parent=31 // pred_region
          %s272 = sadd.s32 %s22, 1
          %s273 = smul.u32 %s272, 16
          %p274 = scmp.lt.s32.totalorder %s273, 15
          %s275 = scalar_select %p274, %s273, 15
          %p276 = scmp.lt.s32.totalorder %s21, 1
          %s277 = scalar_select %p276, %s21, 1
          %p278 = scmp.lt.s32.totalorder %s275, 15
          %s279 = scalar_select %p278, %s275, 15
          %s280 = smul.addr %s279, 2
          %s281 = smul.addr %s277, 32
          %s282 = sadd.s32 %s280, %s281
          %s283 = smul.addr %s282, 8
          %s284 = scalar_lea.vmem %s1, %s283
          %s285 = sadd.s32 %s22, 1
          %s286 = smul.u32 %s285, 16
          %p287 = scmp.lt.s32.totalorder %s286, 15
          %s288 = scalar_select %p287, %s286, 15
        $region40: #{_lambda_.6} parent=31 // pred_fallthru
          _
      $region32: #{_lambda_.6} parent=5 // pred_fallthru
        _
      %p289 = scmp.le.s32.totalorder 1, %s14
      %p290 = scmp.lt.s32.totalorder %s14, 3
      %p291 = pnand %p289, %p290
      %p292 = pneg %p291
      // Predicated region
      $region41: #{_lambda_.6} parent=5 // pred_check
        _
      $region42: #{_lambda_.6} parent=5 // pred_check_branch
        %294 = sbr.rel (%p291) target = $region44
      $region43: #{_lambda_.6} parent=5 // pred_region
        %s295 = ssub.s32 %s14, 1
        // Predicated region
        $region45: #{_lambda_.6} parent=43 // pred_check
          %p296 = pneg %p111
        $region46: #{_lambda_.6} parent=43 // pred_check_branch
          %298 = sbr.rel (%p296) target = $region48
        $region47: #{_lambda_.6} parent=43 // pred_region
          %300 = dma.done [#allocation4], 1024
        $region48: #{_lambda_.6} parent=43 // pred_fallthru
          _
        // Predicated region
        $region49: #{_lambda_.6} parent=43 // pred_check
          %p301 = pneg %p153
        $region50: #{_lambda_.6} parent=43 // pred_check_branch
          %303 = sbr.rel (%p301) target = $region52
        $region51: #{_lambda_.6} parent=43 // pred_region
          %305 = dma.done [#allocation6], 1024
        $region52: #{_lambda_.6} parent=43 // pred_fallthru
          _
        %s306 = smul.u32 16, %s24
        %p307 = scmp.lt.s32.totalorder %s23, 1
        %s308 = scalar_select %p307, %s23, 1
        %p309 = scmp.lt.s32.totalorder %s306, 15
        %s310 = scalar_select %p309, %s306, 15
        %s311 = smul.addr %s310, 2
        %s312 = smul.addr %s308, 32
        %s313 = sadd.s32 %s311, %s312
        %s314 = smul.addr %s313, 8
        %s315 = scalar_lea.vmem %s0, %s314
        %p316 = pneg %p54
        %p317 = pneg %p51
        %s318 = sadd.s32 %s24, 1
        %s319 = smul.u32 %s318, 16
        %p320 = scmp.lt.s32.totalorder %s319, 15
        %s321 = scalar_select %p320, %s319, 15
        %p322 = scmp.lt.s32.totalorder %s23, 1
        %s323 = scalar_select %p322, %s23, 1
        %p324 = scmp.lt.s32.totalorder %s321, 15
        %s325 = scalar_select %p324, %s321, 15
        %s326 = smul.addr %s325, 2
        %s327 = smul.addr %s323, 32
        %s328 = sadd.s32 %s326, %s327
        %s329 = smul.addr %s328, 8
        %s330 = scalar_lea.vmem %s1, %s329
        %p331 = pneg %p90
        %p332 = pneg %p87
        %p333 = pneg %p111
        %p334 = pneg %p108
        %p335 = pneg %p132
        %p336 = pneg %p129
        %p337 = pneg %p153
        %p338 = pneg %p150
        %p339 = pneg %p174
        %p340 = pneg %p171
        %p341 = pneg %p202
        %p342 = pneg %p199
        %s343 = smul.u32 16, %s24
        %p344 = scmp.lt.s32.totalorder %s23, 1
        %s345 = scalar_select %p344, %s23, 1
        %p346 = scmp.lt.s32.totalorder %s343, 15
        %s347 = scalar_select %p346, %s343, 15
        %s348 = smul.addr %s347, 2
        %s349 = smul.addr %s345, 32
        %s350 = sadd.s32 %s348, %s349
        %s351 = smul.addr %s350, 8
        %s352 = scalar_lea.vmem %s6, %s351
        %s353 = smul.u32 16, %s24
        %p354 = scmp.lt.s32.totalorder %s23, 1
        %s355 = scalar_select %p354, %s23, 1
        %p356 = scmp.lt.s32.totalorder %s353, 15
        %s357 = scalar_select %p356, %s353, 15
        %s358 = smul.addr %s357, 2
        %s359 = smul.addr %s355, 32
        %s360 = sadd.s32 %s358, %s359
        %s361 = smul.addr %s360, 8
        %s362 = scalar_lea.vmem %s0, %s361
        %s363 = smul.u32 16, %s24
        %s364 = sadd.s32 %s24, 1
        %s365 = smul.u32 %s364, 16
        %p366 = scmp.lt.s32.totalorder %s365, 15
        %s367 = scalar_select %p366, %s365, 15
        %p368 = scmp.lt.s32.totalorder %s23, 1
        %s369 = scalar_select %p368, %s23, 1
        %p370 = scmp.lt.s32.totalorder %s367, 15
        %s371 = scalar_select %p370, %s367, 15
        %s372 = smul.addr %s371, 2
        %s373 = smul.addr %s369, 32
        %s374 = sadd.s32 %s372, %s373
        %s375 = smul.addr %s374, 8
        %s376 = scalar_lea.vmem %s1, %s375
        %s377 = sadd.s32 %s24, 1
        %s378 = smul.u32 %s377, 16
        %p379 = scmp.lt.s32.totalorder %s378, 15
        %s380 = scalar_select %p379, %s378, 15
        %s381 = smul.u32 16, %s24
        %p382 = scmp.lt.s32.totalorder %s23, 1
        %s383 = scalar_select %p382, %s23, 1
        %p384 = scmp.lt.s32.totalorder %s381, 15
        %s385 = scalar_select %p384, %s381, 15
        %s386 = smul.addr %s385, 2
        %s387 = smul.addr %s383, 32
        %s388 = sadd.s32 %s386, %s387
        %s389 = smul.addr %s388, 8
        %s390 = scalar_lea.vmem %s6, %s389
        %s391 = smul.u32 16, %s24
        %vm392 = vcmask 122880
        %393 = vst.msk [vmem:[#allocation2 + $0x10] sm:$0x1] %vm392, 0.0
        %394 = vst.msk [vmem:[#allocation2 + $0x28] sm:$0x1] %vm392, 0.0
        %395 = vst.msk [vmem:[#allocation2 + $0x40] sm:$0x1] %vm392, 0.0
        %396 = vst.msk [vmem:[#allocation2 + $0x58] sm:$0x1] %vm392, 0.0
        %397 = vst.msk [vmem:[#allocation2 + $0x70] sm:$0x1] %vm392, 0.0
        %398 = vst.msk [vmem:[#allocation2 + $0x88] sm:$0x1] %vm392, 0.0
        %399 = vst.msk [vmem:[#allocation2 + $0xa0] sm:$0x1] %vm392, 0.0
        %400 = vst.msk [vmem:[#allocation2 + $0xb8] sm:$0x1] %vm392, 0.0
        %401 = vst.msk [vmem:[#allocation2 + $0xd0] sm:$0x1] %vm392, 0.0
        %402 = vst.msk [vmem:[#allocation2 + $0xe8] sm:$0x1] %vm392, 0.0
        %403 = vst.msk [vmem:[#allocation2 + $0x100] sm:$0x1] %vm392, 0.0
        %404 = vst.msk [vmem:[#allocation2 + $0x118] sm:$0x1] %vm392, 0.0
        %405 = vst.msk [vmem:[#allocation2 + $0x130] sm:$0x1] %vm392, 0.0
        %406 = vst.msk [vmem:[#allocation2 + $0x148] sm:$0x1] %vm392, 0.0
        %407 = vst.msk [vmem:[#allocation2 + $0x160] sm:$0x1] %vm392, 0.0
        %408 = vst.msk [vmem:[#allocation2 + $0x178] sm:$0x1] %vm392, 0.0
        %409 = vst.msk [vmem:[#allocation2 + $0x190] sm:$0x1] %vm392, 0.0
        %s410 = sadd.s32 %s24, 1
        %p411 = scmp.lt.s32.totalorder %s410, 1
        %v412 = vld [vmem:[%s376] sm:$0xff]
        %v413 = vld [vmem:[%s376 + $0x8] sm:$0xff]
        %s414 = scalar_select %p411, 1, 0
        %v415 = vstv %s414
        %vm416 = vcmp.eq.s32.totalorder %v415, 1
        %v417 = vsel %vm416, %v412, 0.0
        %v418 = vsel %vm416, %v413, 0.0
        %s419 = scalar_lea.vmem [#allocation2], 384
        %vm420 = vcmask 130048
        %421 = vst.msk [vmem:[%s419] sm:$0xff] %vm420, %v417
        %422 = vst.msk [vmem:[%s419 + $0x8] sm:$0xff] %vm420, %v418
        %v423 = vld [vmem:[%s362] sm:$0xff]
        %v424 = vld [vmem:[%s362 + $0x8] sm:$0xff]
        %v425 = vld [vmem:[%s362 + $0x10] sm:$0xff]
        %v426 = vld [vmem:[%s362 + $0x18] sm:$0xff]
        %v427 = vld [vmem:[%s362 + $0x20] sm:$0xff]
        %v428 = vld [vmem:[%s362 + $0x28] sm:$0xff]
        %v429 = vld [vmem:[%s362 + $0x30] sm:$0xff]
        %v430 = vld [vmem:[%s362 + $0x38] sm:$0xff]
        %v431 = vld [vmem:[%s362 + $0x40] sm:$0xff]
        %v432 = vld [vmem:[%s362 + $0x48] sm:$0xff]
        %v433 = vld [vmem:[%s362 + $0x50] sm:$0xff]
        %v434 = vld [vmem:[%s362 + $0x58] sm:$0xff]
        %v435 = vld [vmem:[%s362 + $0x60] sm:$0xff]
        %v436 = vld [vmem:[%s362 + $0x68] sm:$0xff]
        %v437 = vld [vmem:[%s362 + $0x70] sm:$0xff]
        %v438 = vld [vmem:[%s362 + $0x78] sm:$0xff]
        %v439 = vld [vmem:[%s362 + $0x80] sm:$0xff]
        %v440 = vld [vmem:[%s362 + $0x88] sm:$0xff]
        %v441 = vld [vmem:[%s362 + $0x90] sm:$0xff]
        %v442 = vld [vmem:[%s362 + $0x98] sm:$0xff]
        %v443 = vld [vmem:[%s362 + $0xa0] sm:$0xff]
        %v444 = vld [vmem:[%s362 + $0xa8] sm:$0xff]
        %v445 = vld [vmem:[%s362 + $0xb0] sm:$0xff]
        %v446 = vld [vmem:[%s362 + $0xb8] sm:$0xff]
        %v447 = vld [vmem:[%s362 + $0xc0] sm:$0xff]
        %v448 = vld [vmem:[%s362 + $0xc8] sm:$0xff]
        %v449 = vld [vmem:[%s362 + $0xd0] sm:$0xff]
        %v450 = vld [vmem:[%s362 + $0xd8] sm:$0xff]
        %v451 = vld [vmem:[%s362 + $0xe0] sm:$0xff]
        %v452 = vld [vmem:[%s362 + $0xe8] sm:$0xff]
        %v453 = vld [vmem:[%s362 + $0xf0] sm:$0xff]
        %v454 = vld [vmem:[%s362 + $0xf8] sm:$0xff]
        %455 = vst.msk [vmem:[#allocation2] sm:$0xff] %vm420, %v423
        %456 = vst.msk [vmem:[#allocation2 + $0x8] sm:$0xff] %vm420, %v424
        %457 = vst.msk [vmem:[#allocation2 + $0x18] sm:$0xff] %vm420, %v425
        %458 = vst.msk [vmem:[#allocation2 + $0x20] sm:$0xff] %vm420, %v426
        %459 = vst.msk [vmem:[#allocation2 + $0x30] sm:$0xff] %vm420, %v427
        %460 = vst.msk [vmem:[#allocation2 + $0x38] sm:$0xff] %vm420, %v428
        %461 = vst.msk [vmem:[#allocation2 + $0x48] sm:$0xff] %vm420, %v429
        %462 = vst.msk [vmem:[#allocation2 + $0x50] sm:$0xff] %vm420, %v430
        %463 = vst.msk [vmem:[#allocation2 + $0x60] sm:$0xff] %vm420, %v431
        %464 = vst.msk [vmem:[#allocation2 + $0x68] sm:$0xff] %vm420, %v432
        %465 = vst.msk [vmem:[#allocation2 + $0x78] sm:$0xff] %vm420, %v433
        %466 = vst.msk [vmem:[#allocation2 + $0x80] sm:$0xff] %vm420, %v434
        %467 = vst.msk [vmem:[#allocation2 + $0x90] sm:$0xff] %vm420, %v435
        %468 = vst.msk [vmem:[#allocation2 + $0x98] sm:$0xff] %vm420, %v436
        %469 = vst.msk [vmem:[#allocation2 + $0xa8] sm:$0xff] %vm420, %v437
        %470 = vst.msk [vmem:[#allocation2 + $0xb0] sm:$0xff] %vm420, %v438
        %471 = vst.msk [vmem:[#allocation2 + $0xc0] sm:$0xff] %vm420, %v439
        %472 = vst.msk [vmem:[#allocation2 + $0xc8] sm:$0xff] %vm420, %v440
        %473 = vst.msk [vmem:[#allocation2 + $0xd8] sm:$0xff] %vm420, %v441
        %474 = vst.msk [vmem:[#allocation2 + $0xe0] sm:$0xff] %vm420, %v442
        %475 = vst.msk [vmem:[#allocation2 + $0xf0] sm:$0xff] %vm420, %v443
        %476 = vst.msk [vmem:[#allocation2 + $0xf8] sm:$0xff] %vm420, %v444
        %477 = vst.msk [vmem:[#allocation2 + $0x108] sm:$0xff] %vm420, %v445
        %478 = vst.msk [vmem:[#allocation2 + $0x110] sm:$0xff] %vm420, %v446
        %479 = vst.msk [vmem:[#allocation2 + $0x120] sm:$0xff] %vm420, %v447
        %480 = vst.msk [vmem:[#allocation2 + $0x128] sm:$0xff] %vm420, %v448
        %481 = vst.msk [vmem:[#allocation2 + $0x138] sm:$0xff] %vm420, %v449
        %482 = vst.msk [vmem:[#allocation2 + $0x140] sm:$0xff] %vm420, %v450
        %483 = vst.msk [vmem:[#allocation2 + $0x150] sm:$0xff] %vm420, %v451
        %484 = vst.msk [vmem:[#allocation2 + $0x158] sm:$0xff] %vm420, %v452
        %485 = vst.msk [vmem:[#allocation2 + $0x168] sm:$0xff] %vm420, %v453
        %486 = vst.msk [vmem:[#allocation2 + $0x170] sm:$0xff] %vm420, %v454
        %v487 = vld [vmem:[#allocation2] sm:$0xff]
        %v488 = vld [vmem:[#allocation2 + $0x8] sm:$0xff]
        %v489 = vld [vmem:[#allocation2 + $0x18] sm:$0xff]
        %v490 = vld [vmem:[#allocation2 + $0x20] sm:$0xff]
        %v491 = vld [vmem:[#allocation2 + $0x30] sm:$0xff]
        %v492 = vld [vmem:[#allocation2 + $0x38] sm:$0xff]
        %v493 = vld [vmem:[#allocation2 + $0x48] sm:$0xff]
        %v494 = vld [vmem:[#allocation2 + $0x50] sm:$0xff]
        %v495 = vld [vmem:[#allocation2 + $0x60] sm:$0xff]
        %v496 = vld [vmem:[#allocation2 + $0x68] sm:$0xff]
        %v497 = vld [vmem:[#allocation2 + $0x78] sm:$0xff]
        %v498 = vld [vmem:[#allocation2 + $0x80] sm:$0xff]
        %v499 = vld [vmem:[#allocation2 + $0x90] sm:$0xff]
        %v500 = vld [vmem:[#allocation2 + $0x98] sm:$0xff]
        %v501 = vld [vmem:[#allocation2 + $0xa8] sm:$0xff]
        %v502 = vld [vmem:[#allocation2 + $0xb0] sm:$0xff]
        %v503 = vld [vmem:[#allocation2 + $0xc0] sm:$0xff]
        %v504 = vld [vmem:[#allocation2 + $0xc8] sm:$0xff]
        %v505 = vld [vmem:[#allocation2 + $0xd8] sm:$0xff]
        %v506 = vld [vmem:[#allocation2 + $0xe0] sm:$0xff]
        %v507 = vld [vmem:[#allocation2 + $0xf0] sm:$0xff]
        %v508 = vld [vmem:[#allocation2 + $0xf8] sm:$0xff]
        %v509 = vld [vmem:[#allocation2 + $0x108] sm:$0xff]
        %v510 = vld [vmem:[#allocation2 + $0x110] sm:$0xff]
        %v511 = vld [vmem:[#allocation2 + $0x120] sm:$0xff]
        %v512 = vld [vmem:[#allocation2 + $0x128] sm:$0xff]
        %v513 = vld [vmem:[#allocation2 + $0x138] sm:$0xff]
        %v514 = vld [vmem:[#allocation2 + $0x140] sm:$0xff]
        %v515 = vld [vmem:[#allocation2 + $0x150] sm:$0xff]
        %v516 = vld [vmem:[#allocation2 + $0x158] sm:$0xff]
        %v517 = vld [vmem:[#allocation2 + $0x168] sm:$0xff]
        %v518 = vld [vmem:[#allocation2 + $0x170] sm:$0xff]
        %v519 = vld [vmem:[#allocation3] sm:$0xff]
        %v520 = vld [vmem:[#allocation3 + $0x8] sm:$0xff]
        %v521 = vld [vmem:[#allocation2 + $0x1] sm:$0xff]
        %v522 = vld [vmem:[#allocation2 + $0x9] sm:$0xff]
        %v523 = vld [vmem:[#allocation2 + $0x19] sm:$0xff]
        %v524 = vld [vmem:[#allocation2 + $0x21] sm:$0xff]
        %v525 = vld [vmem:[#allocation2 + $0x31] sm:$0xff]
        %v526 = vld [vmem:[#allocation2 + $0x39] sm:$0xff]
        %v527 = vld [vmem:[#allocation2 + $0x49] sm:$0xff]
        %v528 = vld [vmem:[#allocation2 + $0x51] sm:$0xff]
        %v529 = vld [vmem:[#allocation2 + $0x61] sm:$0xff]
        %v530 = vld [vmem:[#allocation2 + $0x69] sm:$0xff]
        %v531 = vld [vmem:[#allocation2 + $0x79] sm:$0xff]
        %v532 = vld [vmem:[#allocation2 + $0x81] sm:$0xff]
        %v533 = vld [vmem:[#allocation2 + $0x91] sm:$0xff]
        %v534 = vld [vmem:[#allocation2 + $0x99] sm:$0xff]
        %v535 = vld [vmem:[#allocation2 + $0xa9] sm:$0xff]
        %v536 = vld [vmem:[#allocation2 + $0xb1] sm:$0xff]
        %v537 = vld [vmem:[#allocation2 + $0xc1] sm:$0xff]
        %v538 = vld [vmem:[#allocation2 + $0xc9] sm:$0xff]
        %v539 = vld [vmem:[#allocation2 + $0xd9] sm:$0xff]
        %v540 = vld [vmem:[#allocation2 + $0xe1] sm:$0xff]
        %v541 = vld [vmem:[#allocation2 + $0xf1] sm:$0xff]
        %v542 = vld [vmem:[#allocation2 + $0xf9] sm:$0xff]
        %v543 = vld [vmem:[#allocation2 + $0x109] sm:$0xff]
        %v544 = vld [vmem:[#allocation2 + $0x111] sm:$0xff]
        %v545 = vld [vmem:[#allocation2 + $0x121] sm:$0xff]
        %v546 = vld [vmem:[#allocation2 + $0x129] sm:$0xff]
        %v547 = vld [vmem:[#allocation2 + $0x139] sm:$0xff]
        %v548 = vld [vmem:[#allocation2 + $0x141] sm:$0xff]
        %v549 = vld [vmem:[#allocation2 + $0x151] sm:$0xff]
        %v550 = vld [vmem:[#allocation2 + $0x159] sm:$0xff]
        %v551 = vld [vmem:[#allocation2 + $0x169] sm:$0xff]
        %v552 = vld [vmem:[#allocation2 + $0x171] sm:$0xff]
        %s553 = scalar_lea.vmem [#allocation3], 16
        %v554 = vld [vmem:[%s553] sm:$0xff]
        %v555 = vld [vmem:[%s553 + $0x8] sm:$0xff]
        %v557 = vsel %vm420, %v521, 0
        %v560 = vsel %vm420, %v522, 0
        %v563 = vsel %vm420, %v523, 0
        %v566 = vsel %vm420, %v524, 0
        %v569 = vsel %vm420, %v525, 0
        %v572 = vsel %vm420, %v526, 0
        %v575 = vsel %vm420, %v527, 0
        %v578 = vsel %vm420, %v528, 0
        %v581 = vsel %vm420, %v529, 0
        %v584 = vsel %vm420, %v530, 0
        %v587 = vsel %vm420, %v531, 0
        %v590 = vsel %vm420, %v532, 0
        %v593 = vsel %vm420, %v533, 0
        %v596 = vsel %vm420, %v534, 0
        %v599 = vsel %vm420, %v535, 0
        %v602 = vsel %vm420, %v536, 0
        %v605 = vsel %vm420, %v537, 0
        %v608 = vsel %vm420, %v538, 0
        %v611 = vsel %vm420, %v539, 0
        %v614 = vsel %vm420, %v540, 0
        %v617 = vsel %vm420, %v541, 0
        %v620 = vsel %vm420, %v542, 0
        %v623 = vsel %vm420, %v543, 0
        %v626 = vsel %vm420, %v544, 0
        %v629 = vsel %vm420, %v545, 0
        %v632 = vsel %vm420, %v546, 0
        %v635 = vsel %vm420, %v547, 0
        %v638 = vsel %vm420, %v548, 0
        %v641 = vsel %vm420, %v549, 0
        %v644 = vsel %vm420, %v550, 0
        %v647 = vsel %vm420, %v551, 0
        %v650 = vsel %vm420, %v552, 0
        %652 = vmatpush.msra.mxu0 0.0
        %653 = vmatpush.msra.mxu0 0.0
        %654 = vmatpush.msra.mxu0 0.0
        %655 = vmatpush.msra.mxu0 0.0
        %656 = vmatpush.msra.mxu0 0.0
        %657 = vmatpush.msra.mxu0 0.0
        %658 = vmatpush.msra.mxu0 0.0
        %659 = vmatpush.msra.mxu0 0.0
        %660 = vmatpush.msra.mxu0 0.0
        %661 = vmatpush.msra.mxu0 0.0
        %662 = vmatpush.msra.mxu0 0.0
        %663 = vmatpush.msra.mxu0 0.0
        %664 = vmatpush.msra.mxu0 0.0
        %665 = vmatpush.msra.mxu0 0.0
        %666 = vmatpush.msra.mxu0 %v555
        %667 = vmatpush.msra.mxu0 %v554
        %668 = vmatmul.f32.gmra.mxu0 %v557
        %v669 = vpop.f32.mrf.mxu0
        %v670 = vadd.f32 0.0, %v669
        %671 = vmatmul.f32.gmra.mxu0 %v560
        %v672 = vpop.f32.mrf.mxu0
        %v673 = vadd.f32 0.0, %v672
        %674 = vmatmul.f32.gmra.mxu0 %v563
        %v675 = vpop.f32.mrf.mxu0
        %v676 = vadd.f32 0.0, %v675
        %677 = vmatmul.f32.gmra.mxu0 %v566
        %v678 = vpop.f32.mrf.mxu0
        %v679 = vadd.f32 0.0, %v678
        %680 = vmatmul.f32.gmra.mxu0 %v569
        %v681 = vpop.f32.mrf.mxu0
        %v682 = vadd.f32 0.0, %v681
        %683 = vmatmul.f32.gmra.mxu0 %v572
        %v684 = vpop.f32.mrf.mxu0
        %v685 = vadd.f32 0.0, %v684
        %686 = vmatmul.f32.gmra.mxu0 %v575
        %v687 = vpop.f32.mrf.mxu0
        %v688 = vadd.f32 0.0, %v687
        %689 = vmatmul.f32.gmra.mxu0 %v578
        %v690 = vpop.f32.mrf.mxu0
        %v691 = vadd.f32 0.0, %v690
        %692 = vmatmul.f32.gmra.mxu0 %v581
        %v693 = vpop.f32.mrf.mxu0
        %v694 = vadd.f32 0.0, %v693
        %695 = vmatmul.f32.gmra.mxu0 %v584
        %v696 = vpop.f32.mrf.mxu0
        %v697 = vadd.f32 0.0, %v696
        %698 = vmatmul.f32.gmra.mxu0 %v587
        %v699 = vpop.f32.mrf.mxu0
        %v700 = vadd.f32 0.0, %v699
        %701 = vmatmul.f32.gmra.mxu0 %v590
        %v702 = vpop.f32.mrf.mxu0
        %v703 = vadd.f32 0.0, %v702
        %704 = vmatmul.f32.gmra.mxu0 %v593
        %v705 = vpop.f32.mrf.mxu0
        %v706 = vadd.f32 0.0, %v705
        %707 = vmatmul.f32.gmra.mxu0 %v596
        %v708 = vpop.f32.mrf.mxu0
        %v709 = vadd.f32 0.0, %v708
        %710 = vmatmul.f32.gmra.mxu0 %v599
        %v711 = vpop.f32.mrf.mxu0
        %v712 = vadd.f32 0.0, %v711
        %713 = vmatmul.f32.gmra.mxu0 %v602
        %v714 = vpop.f32.mrf.mxu0
        %v715 = vadd.f32 0.0, %v714
        %716 = vmatmul.f32.gmra.mxu0 %v605
        %v717 = vpop.f32.mrf.mxu0
        %v718 = vadd.f32 0.0, %v717
        %719 = vmatmul.f32.gmra.mxu0 %v608
        %v720 = vpop.f32.mrf.mxu0
        %v721 = vadd.f32 0.0, %v720
        %722 = vmatmul.f32.gmra.mxu0 %v611
        %v723 = vpop.f32.mrf.mxu0
        %v724 = vadd.f32 0.0, %v723
        %725 = vmatmul.f32.gmra.mxu0 %v614
        %v726 = vpop.f32.mrf.mxu0
        %v727 = vadd.f32 0.0, %v726
        %728 = vmatmul.f32.gmra.mxu0 %v617
        %v729 = vpop.f32.mrf.mxu0
        %v730 = vadd.f32 0.0, %v729
        %731 = vmatmul.f32.gmra.mxu0 %v620
        %v732 = vpop.f32.mrf.mxu0
        %v733 = vadd.f32 0.0, %v732
        %734 = vmatmul.f32.gmra.mxu0 %v623
        %v735 = vpop.f32.mrf.mxu0
        %v736 = vadd.f32 0.0, %v735
        %737 = vmatmul.f32.gmra.mxu0 %v626
        %v738 = vpop.f32.mrf.mxu0
        %v739 = vadd.f32 0.0, %v738
        %740 = vmatmul.f32.gmra.mxu0 %v629
        %v741 = vpop.f32.mrf.mxu0
        %v742 = vadd.f32 0.0, %v741
        %743 = vmatmul.f32.gmra.mxu0 %v632
        %v744 = vpop.f32.mrf.mxu0
        %v745 = vadd.f32 0.0, %v744
        %746 = vmatmul.f32.gmra.mxu0 %v635
        %v747 = vpop.f32.mrf.mxu0
        %v748 = vadd.f32 0.0, %v747
        %749 = vmatmul.f32.gmra.mxu0 %v638
        %v750 = vpop.f32.mrf.mxu0
        %v751 = vadd.f32 0.0, %v750
        %752 = vmatmul.f32.gmra.mxu0 %v641
        %v753 = vpop.f32.mrf.mxu0
        %v754 = vadd.f32 0.0, %v753
        %755 = vmatmul.f32.gmra.mxu0 %v644
        %v756 = vpop.f32.mrf.mxu0
        %v757 = vadd.f32 0.0, %v756
        %758 = vmatmul.f32.gmra.mxu0 %v647
        %v759 = vpop.f32.mrf.mxu0
        %v760 = vadd.f32 0.0, %v759
        %761 = vmatmul.f32.gmra.mxu0 %v650
        %v762 = vpop.f32.mrf.mxu0
        %v763 = vadd.f32 0.0, %v762
        %764 = vdwg.mxu0
        %v766 = vsel %vm420, %v487, 0
        %v769 = vsel %vm420, %v488, 0
        %v772 = vsel %vm420, %v489, 0
        %v775 = vsel %vm420, %v490, 0
        %v778 = vsel %vm420, %v491, 0
        %v781 = vsel %vm420, %v492, 0
        %v784 = vsel %vm420, %v493, 0
        %v787 = vsel %vm420, %v494, 0
        %v790 = vsel %vm420, %v495, 0
        %v793 = vsel %vm420, %v496, 0
        %v796 = vsel %vm420, %v497, 0
        %v799 = vsel %vm420, %v498, 0
        %v802 = vsel %vm420, %v499, 0
        %v805 = vsel %vm420, %v500, 0
        %v808 = vsel %vm420, %v501, 0
        %v811 = vsel %vm420, %v502, 0
        %v814 = vsel %vm420, %v503, 0
        %v817 = vsel %vm420, %v504, 0
        %v820 = vsel %vm420, %v505, 0
        %v823 = vsel %vm420, %v506, 0
        %v826 = vsel %vm420, %v507, 0
        %v829 = vsel %vm420, %v508, 0
        %v832 = vsel %vm420, %v509, 0
        %v835 = vsel %vm420, %v510, 0
        %v838 = vsel %vm420, %v511, 0
        %v841 = vsel %vm420, %v512, 0
        %v844 = vsel %vm420, %v513, 0
        %v847 = vsel %vm420, %v514, 0
        %v850 = vsel %vm420, %v515, 0
        %v853 = vsel %vm420, %v516, 0
        %v856 = vsel %vm420, %v517, 0
        %v859 = vsel %vm420, %v518, 0
        %861 = vmatpush.msra.mxu0 0.0
        %862 = vmatpush.msra.mxu0 0.0
        %863 = vmatpush.msra.mxu0 0.0
        %864 = vmatpush.msra.mxu0 0.0
        %865 = vmatpush.msra.mxu0 0.0
        %866 = vmatpush.msra.mxu0 0.0
        %867 = vmatpush.msra.mxu0 0.0
        %868 = vmatpush.msra.mxu0 0.0
        %869 = vmatpush.msra.mxu0 0.0
        %870 = vmatpush.msra.mxu0 0.0
        %871 = vmatpush.msra.mxu0 0.0
        %872 = vmatpush.msra.mxu0 0.0
        %873 = vmatpush.msra.mxu0 0.0
        %874 = vmatpush.msra.mxu0 0.0
        %875 = vmatpush.msra.mxu0 %v520
        %876 = vmatpush.msra.mxu0 %v519
        %877 = vmatmul.f32.gmra.mxu0 %v766
        %v878 = vpop.f32.mrf.mxu0
        %v879 = vadd.f32 %v670, %v878
        %880 = vmatmul.f32.gmra.mxu0 %v769
        %v881 = vpop.f32.mrf.mxu0
        %v882 = vadd.f32 %v673, %v881
        %883 = vmatmul.f32.gmra.mxu0 %v772
        %v884 = vpop.f32.mrf.mxu0
        %v885 = vadd.f32 %v676, %v884
        %886 = vmatmul.f32.gmra.mxu0 %v775
        %v887 = vpop.f32.mrf.mxu0
        %v888 = vadd.f32 %v679, %v887
        %889 = vmatmul.f32.gmra.mxu0 %v778
        %v890 = vpop.f32.mrf.mxu0
        %v891 = vadd.f32 %v682, %v890
        %892 = vmatmul.f32.gmra.mxu0 %v781
        %v893 = vpop.f32.mrf.mxu0
        %v894 = vadd.f32 %v685, %v893
        %895 = vmatmul.f32.gmra.mxu0 %v784
        %v896 = vpop.f32.mrf.mxu0
        %v897 = vadd.f32 %v688, %v896
        %898 = vmatmul.f32.gmra.mxu0 %v787
        %v899 = vpop.f32.mrf.mxu0
        %v900 = vadd.f32 %v691, %v899
        %901 = vmatmul.f32.gmra.mxu0 %v790
        %v902 = vpop.f32.mrf.mxu0
        %v903 = vadd.f32 %v694, %v902
        %904 = vmatmul.f32.gmra.mxu0 %v793
        %v905 = vpop.f32.mrf.mxu0
        %v906 = vadd.f32 %v697, %v905
        %907 = vmatmul.f32.gmra.mxu0 %v796
        %v908 = vpop.f32.mrf.mxu0
        %v909 = vadd.f32 %v700, %v908
        %910 = vmatmul.f32.gmra.mxu0 %v799
        %v911 = vpop.f32.mrf.mxu0
        %v912 = vadd.f32 %v703, %v911
        %913 = vmatmul.f32.gmra.mxu0 %v802
        %v914 = vpop.f32.mrf.mxu0
        %v915 = vadd.f32 %v706, %v914
        %916 = vmatmul.f32.gmra.mxu0 %v805
        %v917 = vpop.f32.mrf.mxu0
        %v918 = vadd.f32 %v709, %v917
        %919 = vmatmul.f32.gmra.mxu0 %v808
        %v920 = vpop.f32.mrf.mxu0
        %v921 = vadd.f32 %v712, %v920
        %922 = vmatmul.f32.gmra.mxu0 %v811
        %v923 = vpop.f32.mrf.mxu0
        %v924 = vadd.f32 %v715, %v923
        %925 = vmatmul.f32.gmra.mxu0 %v814
        %v926 = vpop.f32.mrf.mxu0
        %v927 = vadd.f32 %v718, %v926
        %928 = vmatmul.f32.gmra.mxu0 %v817
        %v929 = vpop.f32.mrf.mxu0
        %v930 = vadd.f32 %v721, %v929
        %931 = vmatmul.f32.gmra.mxu0 %v820
        %v932 = vpop.f32.mrf.mxu0
        %v933 = vadd.f32 %v724, %v932
        %934 = vmatmul.f32.gmra.mxu0 %v823
        %v935 = vpop.f32.mrf.mxu0
        %v936 = vadd.f32 %v727, %v935
        %937 = vmatmul.f32.gmra.mxu0 %v826
        %v938 = vpop.f32.mrf.mxu0
        %v939 = vadd.f32 %v730, %v938
        %940 = vmatmul.f32.gmra.mxu0 %v829
        %v941 = vpop.f32.mrf.mxu0
        %v942 = vadd.f32 %v733, %v941
        %943 = vmatmul.f32.gmra.mxu0 %v832
        %v944 = vpop.f32.mrf.mxu0
        %v945 = vadd.f32 %v736, %v944
        %946 = vmatmul.f32.gmra.mxu0 %v835
        %v947 = vpop.f32.mrf.mxu0
        %v948 = vadd.f32 %v739, %v947
        %949 = vmatmul.f32.gmra.mxu0 %v838
        %v950 = vpop.f32.mrf.mxu0
        %v951 = vadd.f32 %v742, %v950
        %952 = vmatmul.f32.gmra.mxu0 %v841
        %v953 = vpop.f32.mrf.mxu0
        %v954 = vadd.f32 %v745, %v953
        %955 = vmatmul.f32.gmra.mxu0 %v844
        %v956 = vpop.f32.mrf.mxu0
        %v957 = vadd.f32 %v748, %v956
        %958 = vmatmul.f32.gmra.mxu0 %v847
        %v959 = vpop.f32.mrf.mxu0
        %v960 = vadd.f32 %v751, %v959
        %961 = vmatmul.f32.gmra.mxu0 %v850
        %v962 = vpop.f32.mrf.mxu0
        %v963 = vadd.f32 %v754, %v962
        %964 = vmatmul.f32.gmra.mxu0 %v853
        %v965 = vpop.f32.mrf.mxu0
        %v966 = vadd.f32 %v757, %v965
        %967 = vmatmul.f32.gmra.mxu0 %v856
        %v968 = vpop.f32.mrf.mxu0
        %v969 = vadd.f32 %v760, %v968
        %970 = vmatmul.f32.gmra.mxu0 %v859
        %v971 = vpop.f32.mrf.mxu0
        %v972 = vadd.f32 %v763, %v971
        %973 = vdwg.mxu0
        %s974 = scalar_lea.vmem [#allocation2], 24
        %v975 = vld [vmem:[%s974] sm:$0xff]
        %v976 = vld [vmem:[%s974 + $0x8] sm:$0xff]
        %v977 = vld [vmem:[%s974 + $0x18] sm:$0xff]
        %v978 = vld [vmem:[%s974 + $0x20] sm:$0xff]
        %v979 = vld [vmem:[%s974 + $0x30] sm:$0xff]
        %v980 = vld [vmem:[%s974 + $0x38] sm:$0xff]
        %v981 = vld [vmem:[%s974 + $0x48] sm:$0xff]
        %v982 = vld [vmem:[%s974 + $0x50] sm:$0xff]
        %v983 = vld [vmem:[%s974 + $0x60] sm:$0xff]
        %v984 = vld [vmem:[%s974 + $0x68] sm:$0xff]
        %v985 = vld [vmem:[%s974 + $0x78] sm:$0xff]
        %v986 = vld [vmem:[%s974 + $0x80] sm:$0xff]
        %v987 = vld [vmem:[%s974 + $0x90] sm:$0xff]
        %v988 = vld [vmem:[%s974 + $0x98] sm:$0xff]
        %v989 = vld [vmem:[%s974 + $0xa8] sm:$0xff]
        %v990 = vld [vmem:[%s974 + $0xb0] sm:$0xff]
        %v991 = vld [vmem:[%s974 + $0xc0] sm:$0xff]
        %v992 = vld [vmem:[%s974 + $0xc8] sm:$0xff]
        %v993 = vld [vmem:[%s974 + $0xd8] sm:$0xff]
        %v994 = vld [vmem:[%s974 + $0xe0] sm:$0xff]
        %v995 = vld [vmem:[%s974 + $0xf0] sm:$0xff]
        %v996 = vld [vmem:[%s974 + $0xf8] sm:$0xff]
        %v997 = vld [vmem:[%s974 + $0x108] sm:$0xff]
        %v998 = vld [vmem:[%s974 + $0x110] sm:$0xff]
        %v999 = vld [vmem:[%s974 + $0x120] sm:$0xff]
        %v1000 = vld [vmem:[%s974 + $0x128] sm:$0xff]
        %v1001 = vld [vmem:[%s974 + $0x138] sm:$0xff]
        %v1002 = vld [vmem:[%s974 + $0x140] sm:$0xff]
        %v1003 = vld [vmem:[%s974 + $0x150] sm:$0xff]
        %v1004 = vld [vmem:[%s974 + $0x158] sm:$0xff]
        %v1005 = vld [vmem:[%s974 + $0x168] sm:$0xff]
        %v1006 = vld [vmem:[%s974 + $0x170] sm:$0xff]
        %s1007 = scalar_lea.vmem [#allocation3], 32
        %v1008 = vld [vmem:[%s1007] sm:$0xff]
        %v1009 = vld [vmem:[%s1007 + $0x8] sm:$0xff]
        %v1011 = vsel %vm420, %v975, 0
        %v1014 = vsel %vm420, %v976, 0
        %v1017 = vsel %vm420, %v977, 0
        %v1020 = vsel %vm420, %v978, 0
        %v1023 = vsel %vm420, %v979, 0
        %v1026 = vsel %vm420, %v980, 0
        %v1029 = vsel %vm420, %v981, 0
        %v1032 = vsel %vm420, %v982, 0
        %v1035 = vsel %vm420, %v983, 0
        %v1038 = vsel %vm420, %v984, 0
        %v1041 = vsel %vm420, %v985, 0
        %v1044 = vsel %vm420, %v986, 0
        %v1047 = vsel %vm420, %v987, 0
        %v1050 = vsel %vm420, %v988, 0
        %v1053 = vsel %vm420, %v989, 0
        %v1056 = vsel %vm420, %v990, 0
        %v1059 = vsel %vm420, %v991, 0
        %v1062 = vsel %vm420, %v992, 0
        %v1065 = vsel %vm420, %v993, 0
        %v1068 = vsel %vm420, %v994, 0
        %v1071 = vsel %vm420, %v995, 0
        %v1074 = vsel %vm420, %v996, 0
        %v1077 = vsel %vm420, %v997, 0
        %v1080 = vsel %vm420, %v998, 0
        %v1083 = vsel %vm420, %v999, 0
        %v1086 = vsel %vm420, %v1000, 0
        %v1089 = vsel %vm420, %v1001, 0
        %v1092 = vsel %vm420, %v1002, 0
        %v1095 = vsel %vm420, %v1003, 0
        %v1098 = vsel %vm420, %v1004, 0
        %v1101 = vsel %vm420, %v1005, 0
        %v1104 = vsel %vm420, %v1006, 0
        %1106 = vmatpush.msra.mxu0 0.0
        %1107 = vmatpush.msra.mxu0 0.0
        %1108 = vmatpush.msra.mxu0 0.0
        %1109 = vmatpush.msra.mxu0 0.0
        %1110 = vmatpush.msra.mxu0 0.0
        %1111 = vmatpush.msra.mxu0 0.0
        %1112 = vmatpush.msra.mxu0 0.0
        %1113 = vmatpush.msra.mxu0 0.0
        %1114 = vmatpush.msra.mxu0 0.0
        %1115 = vmatpush.msra.mxu0 0.0
        %1116 = vmatpush.msra.mxu0 0.0
        %1117 = vmatpush.msra.mxu0 0.0
        %1118 = vmatpush.msra.mxu0 0.0
        %1119 = vmatpush.msra.mxu0 0.0
        %1120 = vmatpush.msra.mxu0 %v1009
        %1121 = vmatpush.msra.mxu0 %v1008
        %1122 = vmatmul.f32.gmra.mxu0 %v1011
        %v1123 = vpop.f32.mrf.mxu0
        %v1124 = vadd.f32 0.0, %v1123
        %1125 = vmatmul.f32.gmra.mxu0 %v1014
        %v1126 = vpop.f32.mrf.mxu0
        %v1127 = vadd.f32 0.0, %v1126
        %1128 = vmatmul.f32.gmra.mxu0 %v1017
        %v1129 = vpop.f32.mrf.mxu0
        %v1130 = vadd.f32 0.0, %v1129
        %1131 = vmatmul.f32.gmra.mxu0 %v1020
        %v1132 = vpop.f32.mrf.mxu0
        %v1133 = vadd.f32 0.0, %v1132
        %1134 = vmatmul.f32.gmra.mxu0 %v1023
        %v1135 = vpop.f32.mrf.mxu0
        %v1136 = vadd.f32 0.0, %v1135
        %1137 = vmatmul.f32.gmra.mxu0 %v1026
        %v1138 = vpop.f32.mrf.mxu0
        %v1139 = vadd.f32 0.0, %v1138
        %1140 = vmatmul.f32.gmra.mxu0 %v1029
        %v1141 = vpop.f32.mrf.mxu0
        %v1142 = vadd.f32 0.0, %v1141
        %1143 = vmatmul.f32.gmra.mxu0 %v1032
        %v1144 = vpop.f32.mrf.mxu0
        %v1145 = vadd.f32 0.0, %v1144
        %1146 = vmatmul.f32.gmra.mxu0 %v1035
        %v1147 = vpop.f32.mrf.mxu0
        %v1148 = vadd.f32 0.0, %v1147
        %1149 = vmatmul.f32.gmra.mxu0 %v1038
        %v1150 = vpop.f32.mrf.mxu0
        %v1151 = vadd.f32 0.0, %v1150
        %1152 = vmatmul.f32.gmra.mxu0 %v1041
        %v1153 = vpop.f32.mrf.mxu0
        %v1154 = vadd.f32 0.0, %v1153
        %1155 = vmatmul.f32.gmra.mxu0 %v1044
        %v1156 = vpop.f32.mrf.mxu0
        %v1157 = vadd.f32 0.0, %v1156
        %1158 = vmatmul.f32.gmra.mxu0 %v1047
        %v1159 = vpop.f32.mrf.mxu0
        %v1160 = vadd.f32 0.0, %v1159
        %1161 = vmatmul.f32.gmra.mxu0 %v1050
        %v1162 = vpop.f32.mrf.mxu0
        %v1163 = vadd.f32 0.0, %v1162
        %1164 = vmatmul.f32.gmra.mxu0 %v1053
        %v1165 = vpop.f32.mrf.mxu0
        %v1166 = vadd.f32 0.0, %v1165
        %1167 = vmatmul.f32.gmra.mxu0 %v1056
        %v1168 = vpop.f32.mrf.mxu0
        %v1169 = vadd.f32 0.0, %v1168
        %1170 = vmatmul.f32.gmra.mxu0 %v1059
        %v1171 = vpop.f32.mrf.mxu0
        %v1172 = vadd.f32 0.0, %v1171
        %1173 = vmatmul.f32.gmra.mxu0 %v1062
        %v1174 = vpop.f32.mrf.mxu0
        %v1175 = vadd.f32 0.0, %v1174
        %1176 = vmatmul.f32.gmra.mxu0 %v1065
        %v1177 = vpop.f32.mrf.mxu0
        %v1178 = vadd.f32 0.0, %v1177
        %1179 = vmatmul.f32.gmra.mxu0 %v1068
        %v1180 = vpop.f32.mrf.mxu0
        %v1181 = vadd.f32 0.0, %v1180
        %1182 = vmatmul.f32.gmra.mxu0 %v1071
        %v1183 = vpop.f32.mrf.mxu0
        %v1184 = vadd.f32 0.0, %v1183
        %1185 = vmatmul.f32.gmra.mxu0 %v1074
        %v1186 = vpop.f32.mrf.mxu0
        %v1187 = vadd.f32 0.0, %v1186
        %1188 = vmatmul.f32.gmra.mxu0 %v1077
        %v1189 = vpop.f32.mrf.mxu0
        %v1190 = vadd.f32 0.0, %v1189
        %1191 = vmatmul.f32.gmra.mxu0 %v1080
        %v1192 = vpop.f32.mrf.mxu0
        %v1193 = vadd.f32 0.0, %v1192
        %1194 = vmatmul.f32.gmra.mxu0 %v1083
        %v1195 = vpop.f32.mrf.mxu0
        %v1196 = vadd.f32 0.0, %v1195
        %1197 = vmatmul.f32.gmra.mxu0 %v1086
        %v1198 = vpop.f32.mrf.mxu0
        %v1199 = vadd.f32 0.0, %v1198
        %1200 = vmatmul.f32.gmra.mxu0 %v1089
        %v1201 = vpop.f32.mrf.mxu0
        %v1202 = vadd.f32 0.0, %v1201
        %1203 = vmatmul.f32.gmra.mxu0 %v1092
        %v1204 = vpop.f32.mrf.mxu0
        %v1205 = vadd.f32 0.0, %v1204
        %1206 = vmatmul.f32.gmra.mxu0 %v1095
        %v1207 = vpop.f32.mrf.mxu0
        %v1208 = vadd.f32 0.0, %v1207
        %1209 = vmatmul.f32.gmra.mxu0 %v1098
        %v1210 = vpop.f32.mrf.mxu0
        %v1211 = vadd.f32 0.0, %v1210
        %1212 = vmatmul.f32.gmra.mxu0 %v1101
        %v1213 = vpop.f32.mrf.mxu0
        %v1214 = vadd.f32 0.0, %v1213
        %1215 = vmatmul.f32.gmra.mxu0 %v1104
        %v1216 = vpop.f32.mrf.mxu0
        %v1217 = vadd.f32 0.0, %v1216
        %1218 = vdwg.mxu0
        %v1219 = vadd.f32 %v879, %v1124
        %v1220 = vadd.f32 %v882, %v1127
        %v1221 = vadd.f32 %v885, %v1130
        %v1222 = vadd.f32 %v888, %v1133
        %v1223 = vadd.f32 %v891, %v1136
        %v1224 = vadd.f32 %v894, %v1139
        %v1225 = vadd.f32 %v897, %v1142
        %v1226 = vadd.f32 %v900, %v1145
        %v1227 = vadd.f32 %v903, %v1148
        %v1228 = vadd.f32 %v906, %v1151
        %v1229 = vadd.f32 %v909, %v1154
        %v1230 = vadd.f32 %v912, %v1157
        %v1231 = vadd.f32 %v915, %v1160
        %v1232 = vadd.f32 %v918, %v1163
        %v1233 = vadd.f32 %v921, %v1166
        %v1234 = vadd.f32 %v924, %v1169
        %v1235 = vadd.f32 %v927, %v1172
        %v1236 = vadd.f32 %v930, %v1175
        %v1237 = vadd.f32 %v933, %v1178
        %v1238 = vadd.f32 %v936, %v1181
        %v1239 = vadd.f32 %v939, %v1184
        %v1240 = vadd.f32 %v942, %v1187
        %v1241 = vadd.f32 %v945, %v1190
        %v1242 = vadd.f32 %v948, %v1193
        %v1243 = vadd.f32 %v951, %v1196
        %v1244 = vadd.f32 %v954, %v1199
        %v1245 = vadd.f32 %v957, %v1202
        %v1246 = vadd.f32 %v960, %v1205
        %v1247 = vadd.f32 %v963, %v1208
        %v1248 = vadd.f32 %v966, %v1211
        %v1249 = vadd.f32 %v969, %v1214
        %v1250 = vadd.f32 %v972, %v1217
        %v1251 = vld [vmem:[%s974 + $0x1] sm:$0xff]
        %v1252 = vld [vmem:[%s974 + $0x9] sm:$0xff]
        %v1253 = vld [vmem:[%s974 + $0x19] sm:$0xff]
        %v1254 = vld [vmem:[%s974 + $0x21] sm:$0xff]
        %v1255 = vld [vmem:[%s974 + $0x31] sm:$0xff]
        %v1256 = vld [vmem:[%s974 + $0x39] sm:$0xff]
        %v1257 = vld [vmem:[%s974 + $0x49] sm:$0xff]
        %v1258 = vld [vmem:[%s974 + $0x51] sm:$0xff]
        %v1259 = vld [vmem:[%s974 + $0x61] sm:$0xff]
        %v1260 = vld [vmem:[%s974 + $0x69] sm:$0xff]
        %v1261 = vld [vmem:[%s974 + $0x79] sm:$0xff]
        %v1262 = vld [vmem:[%s974 + $0x81] sm:$0xff]
        %v1263 = vld [vmem:[%s974 + $0x91] sm:$0xff]
        %v1264 = vld [vmem:[%s974 + $0x99] sm:$0xff]
        %v1265 = vld [vmem:[%s974 + $0xa9] sm:$0xff]
        %v1266 = vld [vmem:[%s974 + $0xb1] sm:$0xff]
        %v1267 = vld [vmem:[%s974 + $0xc1] sm:$0xff]
        %v1268 = vld [vmem:[%s974 + $0xc9] sm:$0xff]
        %v1269 = vld [vmem:[%s974 + $0xd9] sm:$0xff]
        %v1270 = vld [vmem:[%s974 + $0xe1] sm:$0xff]
        %v1271 = vld [vmem:[%s974 + $0xf1] sm:$0xff]
        %v1272 = vld [vmem:[%s974 + $0xf9] sm:$0xff]
        %v1273 = vld [vmem:[%s974 + $0x109] sm:$0xff]
        %v1274 = vld [vmem:[%s974 + $0x111] sm:$0xff]
        %v1275 = vld [vmem:[%s974 + $0x121] sm:$0xff]
        %v1276 = vld [vmem:[%s974 + $0x129] sm:$0xff]
        %v1277 = vld [vmem:[%s974 + $0x139] sm:$0xff]
        %v1278 = vld [vmem:[%s974 + $0x141] sm:$0xff]
        %v1279 = vld [vmem:[%s974 + $0x151] sm:$0xff]
        %v1280 = vld [vmem:[%s974 + $0x159] sm:$0xff]
        %v1281 = vld [vmem:[%s974 + $0x169] sm:$0xff]
        %v1282 = vld [vmem:[%s974 + $0x171] sm:$0xff]
        %s1283 = scalar_lea.vmem [#allocation3], 48
        %v1284 = vld [vmem:[%s1283] sm:$0xff]
        %v1285 = vld [vmem:[%s1283 + $0x8] sm:$0xff]
        %v1287 = vsel %vm420, %v1251, 0
        %v1290 = vsel %vm420, %v1252, 0
        %v1293 = vsel %vm420, %v1253, 0
        %v1296 = vsel %vm420, %v1254, 0
        %v1299 = vsel %vm420, %v1255, 0
        %v1302 = vsel %vm420, %v1256, 0
        %v1305 = vsel %vm420, %v1257, 0
        %v1308 = vsel %vm420, %v1258, 0
        %v1311 = vsel %vm420, %v1259, 0
        %v1314 = vsel %vm420, %v1260, 0
        %v1317 = vsel %vm420, %v1261, 0
        %v1320 = vsel %vm420, %v1262, 0
        %v1323 = vsel %vm420, %v1263, 0
        %v1326 = vsel %vm420, %v1264, 0
        %v1329 = vsel %vm420, %v1265, 0
        %v1332 = vsel %vm420, %v1266, 0
        %v1335 = vsel %vm420, %v1267, 0
        %v1338 = vsel %vm420, %v1268, 0
        %v1341 = vsel %vm420, %v1269, 0
        %v1344 = vsel %vm420, %v1270, 0
        %v1347 = vsel %vm420, %v1271, 0
        %v1350 = vsel %vm420, %v1272, 0
        %v1353 = vsel %vm420, %v1273, 0
        %v1356 = vsel %vm420, %v1274, 0
        %v1359 = vsel %vm420, %v1275, 0
        %v1362 = vsel %vm420, %v1276, 0
        %v1365 = vsel %vm420, %v1277, 0
        %v1368 = vsel %vm420, %v1278, 0
        %v1371 = vsel %vm420, %v1279, 0
        %v1374 = vsel %vm420, %v1280, 0
        %v1377 = vsel %vm420, %v1281, 0
        %v1380 = vsel %vm420, %v1282, 0
        %1382 = vmatpush.msra.mxu0 0.0
        %1383 = vmatpush.msra.mxu0 0.0
        %1384 = vmatpush.msra.mxu0 0.0
        %1385 = vmatpush.msra.mxu0 0.0
        %1386 = vmatpush.msra.mxu0 0.0
        %1387 = vmatpush.msra.mxu0 0.0
        %1388 = vmatpush.msra.mxu0 0.0
        %1389 = vmatpush.msra.mxu0 0.0
        %1390 = vmatpush.msra.mxu0 0.0
        %1391 = vmatpush.msra.mxu0 0.0
        %1392 = vmatpush.msra.mxu0 0.0
        %1393 = vmatpush.msra.mxu0 0.0
        %1394 = vmatpush.msra.mxu0 0.0
        %1395 = vmatpush.msra.mxu0 0.0
        %1396 = vmatpush.msra.mxu0 %v1285
        %1397 = vmatpush.msra.mxu0 %v1284
        %1398 = vmatmul.f32.gmra.mxu0 %v1287
        %v1399 = vpop.f32.mrf.mxu0
        %v1400 = vadd.f32 0.0, %v1399
        %1401 = vmatmul.f32.gmra.mxu0 %v1290
        %v1402 = vpop.f32.mrf.mxu0
        %v1403 = vadd.f32 0.0, %v1402
        %1404 = vmatmul.f32.gmra.mxu0 %v1293
        %v1405 = vpop.f32.mrf.mxu0
        %v1406 = vadd.f32 0.0, %v1405
        %1407 = vmatmul.f32.gmra.mxu0 %v1296
        %v1408 = vpop.f32.mrf.mxu0
        %v1409 = vadd.f32 0.0, %v1408
        %1410 = vmatmul.f32.gmra.mxu0 %v1299
        %v1411 = vpop.f32.mrf.mxu0
        %v1412 = vadd.f32 0.0, %v1411
        %1413 = vmatmul.f32.gmra.mxu0 %v1302
        %v1414 = vpop.f32.mrf.mxu0
        %v1415 = vadd.f32 0.0, %v1414
        %1416 = vmatmul.f32.gmra.mxu0 %v1305
        %v1417 = vpop.f32.mrf.mxu0
        %v1418 = vadd.f32 0.0, %v1417
        %1419 = vmatmul.f32.gmra.mxu0 %v1308
        %v1420 = vpop.f32.mrf.mxu0
        %v1421 = vadd.f32 0.0, %v1420
        %1422 = vmatmul.f32.gmra.mxu0 %v1311
        %v1423 = vpop.f32.mrf.mxu0
        %v1424 = vadd.f32 0.0, %v1423
        %1425 = vmatmul.f32.gmra.mxu0 %v1314
        %v1426 = vpop.f32.mrf.mxu0
        %v1427 = vadd.f32 0.0, %v1426
        %1428 = vmatmul.f32.gmra.mxu0 %v1317
        %v1429 = vpop.f32.mrf.mxu0
        %v1430 = vadd.f32 0.0, %v1429
        %1431 = vmatmul.f32.gmra.mxu0 %v1320
        %v1432 = vpop.f32.mrf.mxu0
        %v1433 = vadd.f32 0.0, %v1432
        %1434 = vmatmul.f32.gmra.mxu0 %v1323
        %v1435 = vpop.f32.mrf.mxu0
        %v1436 = vadd.f32 0.0, %v1435
        %1437 = vmatmul.f32.gmra.mxu0 %v1326
        %v1438 = vpop.f32.mrf.mxu0
        %v1439 = vadd.f32 0.0, %v1438
        %1440 = vmatmul.f32.gmra.mxu0 %v1329
        %v1441 = vpop.f32.mrf.mxu0
        %v1442 = vadd.f32 0.0, %v1441
        %1443 = vmatmul.f32.gmra.mxu0 %v1332
        %v1444 = vpop.f32.mrf.mxu0
        %v1445 = vadd.f32 0.0, %v1444
        %1446 = vmatmul.f32.gmra.mxu0 %v1335
        %v1447 = vpop.f32.mrf.mxu0
        %v1448 = vadd.f32 0.0, %v1447
        %1449 = vmatmul.f32.gmra.mxu0 %v1338
        %v1450 = vpop.f32.mrf.mxu0
        %v1451 = vadd.f32 0.0, %v1450
        %1452 = vmatmul.f32.gmra.mxu0 %v1341
        %v1453 = vpop.f32.mrf.mxu0
        %v1454 = vadd.f32 0.0, %v1453
        %1455 = vmatmul.f32.gmra.mxu0 %v1344
        %v1456 = vpop.f32.mrf.mxu0
        %v1457 = vadd.f32 0.0, %v1456
        %1458 = vmatmul.f32.gmra.mxu0 %v1347
        %v1459 = vpop.f32.mrf.mxu0
        %v1460 = vadd.f32 0.0, %v1459
        %1461 = vmatmul.f32.gmra.mxu0 %v1350
        %v1462 = vpop.f32.mrf.mxu0
        %v1463 = vadd.f32 0.0, %v1462
        %1464 = vmatmul.f32.gmra.mxu0 %v1353
        %v1465 = vpop.f32.mrf.mxu0
        %v1466 = vadd.f32 0.0, %v1465
        %1467 = vmatmul.f32.gmra.mxu0 %v1356
        %v1468 = vpop.f32.mrf.mxu0
        %v1469 = vadd.f32 0.0, %v1468
        %1470 = vmatmul.f32.gmra.mxu0 %v1359
        %v1471 = vpop.f32.mrf.mxu0
        %v1472 = vadd.f32 0.0, %v1471
        %1473 = vmatmul.f32.gmra.mxu0 %v1362
        %v1474 = vpop.f32.mrf.mxu0
        %v1475 = vadd.f32 0.0, %v1474
        %1476 = vmatmul.f32.gmra.mxu0 %v1365
        %v1477 = vpop.f32.mrf.mxu0
        %v1478 = vadd.f32 0.0, %v1477
        %1479 = vmatmul.f32.gmra.mxu0 %v1368
        %v1480 = vpop.f32.mrf.mxu0
        %v1481 = vadd.f32 0.0, %v1480
        %1482 = vmatmul.f32.gmra.mxu0 %v1371
        %v1483 = vpop.f32.mrf.mxu0
        %v1484 = vadd.f32 0.0, %v1483
        %1485 = vmatmul.f32.gmra.mxu0 %v1374
        %v1486 = vpop.f32.mrf.mxu0
        %v1487 = vadd.f32 0.0, %v1486
        %1488 = vmatmul.f32.gmra.mxu0 %v1377
        %v1489 = vpop.f32.mrf.mxu0
        %v1490 = vadd.f32 0.0, %v1489
        %1491 = vmatmul.f32.gmra.mxu0 %v1380
        %v1492 = vpop.f32.mrf.mxu0
        %v1493 = vadd.f32 0.0, %v1492
        %1494 = vdwg.mxu0
        %v1495 = vadd.f32 %v1219, %v1400
        %v1496 = vadd.f32 %v1220, %v1403
        %v1497 = vadd.f32 %v1221, %v1406
        %v1498 = vadd.f32 %v1222, %v1409
        %v1499 = vadd.f32 %v1223, %v1412
        %v1500 = vadd.f32 %v1224, %v1415
        %v1501 = vadd.f32 %v1225, %v1418
        %v1502 = vadd.f32 %v1226, %v1421
        %v1503 = vadd.f32 %v1227, %v1424
        %v1504 = vadd.f32 %v1228, %v1427
        %v1505 = vadd.f32 %v1229, %v1430
        %v1506 = vadd.f32 %v1230, %v1433
        %v1507 = vadd.f32 %v1231, %v1436
        %v1508 = vadd.f32 %v1232, %v1439
        %v1509 = vadd.f32 %v1233, %v1442
        %v1510 = vadd.f32 %v1234, %v1445
        %v1511 = vadd.f32 %v1235, %v1448
        %v1512 = vadd.f32 %v1236, %v1451
        %v1513 = vadd.f32 %v1237, %v1454
        %v1514 = vadd.f32 %v1238, %v1457
        %v1515 = vadd.f32 %v1239, %v1460
        %v1516 = vadd.f32 %v1240, %v1463
        %v1517 = vadd.f32 %v1241, %v1466
        %v1518 = vadd.f32 %v1242, %v1469
        %v1519 = vadd.f32 %v1243, %v1472
        %v1520 = vadd.f32 %v1244, %v1475
        %v1521 = vadd.f32 %v1245, %v1478
        %v1522 = vadd.f32 %v1246, %v1481
        %v1523 = vadd.f32 %v1247, %v1484
        %v1524 = vadd.f32 %v1248, %v1487
        %v1525 = vadd.f32 %v1249, %v1490
        %v1526 = vadd.f32 %v1250, %v1493
        %v1527 = vld [vmem:[%s3] sm:$0x1]
        %v1529 = vperm.slane %v1527, 0
        %v1531 = vadd.f32 %v1495, %v1529
        %v1532 = vadd.f32 %v1496, %v1529
        %v1533 = vadd.f32 %v1497, %v1529
        %v1534 = vadd.f32 %v1498, %v1529
        %v1535 = vadd.f32 %v1499, %v1529
        %v1536 = vadd.f32 %v1500, %v1529
        %v1537 = vadd.f32 %v1501, %v1529
        %v1538 = vadd.f32 %v1502, %v1529
        %v1539 = vadd.f32 %v1503, %v1529
        %v1540 = vadd.f32 %v1504, %v1529
        %v1541 = vadd.f32 %v1505, %v1529
        %v1542 = vadd.f32 %v1506, %v1529
        %v1543 = vadd.f32 %v1507, %v1529
        %v1544 = vadd.f32 %v1508, %v1529
        %v1545 = vadd.f32 %v1509, %v1529
        %v1546 = vadd.f32 %v1510, %v1529
        %v1547 = vadd.f32 %v1511, %v1529
        %v1548 = vadd.f32 %v1512, %v1529
        %v1549 = vadd.f32 %v1513, %v1529
        %v1550 = vadd.f32 %v1514, %v1529
        %v1551 = vadd.f32 %v1515, %v1529
        %v1552 = vadd.f32 %v1516, %v1529
        %v1553 = vadd.f32 %v1517, %v1529
        %v1554 = vadd.f32 %v1518, %v1529
        %v1555 = vadd.f32 %v1519, %v1529
        %v1556 = vadd.f32 %v1520, %v1529
        %v1557 = vadd.f32 %v1521, %v1529
        %v1558 = vadd.f32 %v1522, %v1529
        %v1559 = vadd.f32 %v1523, %v1529
        %v1560 = vadd.f32 %v1524, %v1529
        %v1561 = vadd.f32 %v1525, %v1529
        %v1562 = vadd.f32 %v1526, %v1529
        %v1563 = vmul.f32 %v1531, %v1531
        %v1564 = vmul.f32 %v1532, %v1532
        %v1565 = vmul.f32 %v1533, %v1533
        %v1566 = vmul.f32 %v1534, %v1534
        %v1567 = vmul.f32 %v1535, %v1535
        %v1568 = vmul.f32 %v1536, %v1536
        %v1569 = vmul.f32 %v1537, %v1537
        %v1570 = vmul.f32 %v1538, %v1538
        %v1571 = vmul.f32 %v1539, %v1539
        %v1572 = vmul.f32 %v1540, %v1540
        %v1573 = vmul.f32 %v1541, %v1541
        %v1574 = vmul.f32 %v1542, %v1542
        %v1575 = vmul.f32 %v1543, %v1543
        %v1576 = vmul.f32 %v1544, %v1544
        %v1577 = vmul.f32 %v1545, %v1545
        %v1578 = vmul.f32 %v1546, %v1546
        %v1579 = vmul.f32 %v1547, %v1547
        %v1580 = vmul.f32 %v1548, %v1548
        %v1581 = vmul.f32 %v1549, %v1549
        %v1582 = vmul.f32 %v1550, %v1550
        %v1583 = vmul.f32 %v1551, %v1551
        %v1584 = vmul.f32 %v1552, %v1552
        %v1585 = vmul.f32 %v1553, %v1553
        %v1586 = vmul.f32 %v1554, %v1554
        %v1587 = vmul.f32 %v1555, %v1555
        %v1588 = vmul.f32 %v1556, %v1556
        %v1589 = vmul.f32 %v1557, %v1557
        %v1590 = vmul.f32 %v1558, %v1558
        %v1591 = vmul.f32 %v1559, %v1559
        %v1592 = vmul.f32 %v1560, %v1560
        %v1593 = vmul.f32 %v1561, %v1561
        %v1594 = vmul.f32 %v1562, %v1562
        %v1595 = vld [vmem:[#allocation5] sm:$0xff]
        %v1596 = vld [vmem:[#allocation5 + $0x8] sm:$0xff]
        %v1597 = vld [vmem:[#allocation5 + $0x10] sm:$0xff]
        %v1598 = vld [vmem:[#allocation5 + $0x18] sm:$0xff]
        %v1599 = vld [vmem:[#allocation5 + $0x20] sm:$0xff]
        %v1600 = vld [vmem:[#allocation5 + $0x28] sm:$0xff]
        %v1601 = vld [vmem:[#allocation5 + $0x30] sm:$0xff]
        %v1602 = vld [vmem:[#allocation5 + $0x38] sm:$0xff]
        %v1603 = vld [vmem:[%s5] sm:$0x1]
        %v1605 = vperm.slane %v1603, 0
        %vm1607 = vcmask 523264
        %v1609 = vsel %vm1607, %v1563, 0
        %v1612 = vsel %vm1607, %v1564, 0
        %v1615 = vsel %vm1607, %v1565, 0
        %v1618 = vsel %vm1607, %v1566, 0
        %v1621 = vsel %vm1607, %v1567, 0
        %v1624 = vsel %vm1607, %v1568, 0
        %v1627 = vsel %vm1607, %v1569, 0
        %v1630 = vsel %vm1607, %v1570, 0
        %v1633 = vsel %vm1607, %v1571, 0
        %v1636 = vsel %vm1607, %v1572, 0
        %v1639 = vsel %vm1607, %v1573, 0
        %v1642 = vsel %vm1607, %v1574, 0
        %v1645 = vsel %vm1607, %v1575, 0
        %v1648 = vsel %vm1607, %v1576, 0
        %v1651 = vsel %vm1607, %v1577, 0
        %v1654 = vsel %vm1607, %v1578, 0
        %v1657 = vsel %vm1607, %v1579, 0
        %v1660 = vsel %vm1607, %v1580, 0
        %v1663 = vsel %vm1607, %v1581, 0
        %v1666 = vsel %vm1607, %v1582, 0
        %v1669 = vsel %vm1607, %v1583, 0
        %v1672 = vsel %vm1607, %v1584, 0
        %v1675 = vsel %vm1607, %v1585, 0
        %v1678 = vsel %vm1607, %v1586, 0
        %v1681 = vsel %vm1607, %v1587, 0
        %v1684 = vsel %vm1607, %v1588, 0
        %v1687 = vsel %vm1607, %v1589, 0
        %v1690 = vsel %vm1607, %v1590, 0
        %v1693 = vsel %vm1607, %v1591, 0
        %v1696 = vsel %vm1607, %v1592, 0
        %v1699 = vsel %vm1607, %v1593, 0
        %v1702 = vsel %vm1607, %v1594, 0
        %1704 = vmatpush.msra.mxu0 0.0
        %1705 = vmatpush.msra.mxu0 0.0
        %1706 = vmatpush.msra.mxu0 0.0
        %1707 = vmatpush.msra.mxu0 0.0
        %1708 = vmatpush.msra.mxu0 0.0
        %1709 = vmatpush.msra.mxu0 0.0
        %1710 = vmatpush.msra.mxu0 0.0
        %1711 = vmatpush.msra.mxu0 0.0
        %1712 = vmatpush.msra.mxu0 %v1602
        %1713 = vmatpush.msra.mxu0 %v1601
        %1714 = vmatpush.msra.mxu0 %v1600
        %1715 = vmatpush.msra.mxu0 %v1599
        %1716 = vmatpush.msra.mxu0 %v1598
        %1717 = vmatpush.msra.mxu0 %v1597
        %1718 = vmatpush.msra.mxu0 %v1596
        %1719 = vmatpush.msra.mxu0 %v1595
        %1720 = vmatmul.f32.gmra.mxu0 %v1609
        %v1721 = vpop.f32.mrf.mxu0
        %v1722 = vadd.f32 %v1605, %v1721
        %1723 = vmatmul.f32.gmra.mxu0 %v1612
        %v1724 = vpop.f32.mrf.mxu0
        %v1725 = vadd.f32 %v1605, %v1724
        %1726 = vmatmul.f32.gmra.mxu0 %v1615
        %v1727 = vpop.f32.mrf.mxu0
        %v1728 = vadd.f32 %v1605, %v1727
        %1729 = vmatmul.f32.gmra.mxu0 %v1618
        %v1730 = vpop.f32.mrf.mxu0
        %v1731 = vadd.f32 %v1605, %v1730
        %1732 = vmatmul.f32.gmra.mxu0 %v1621
        %v1733 = vpop.f32.mrf.mxu0
        %v1734 = vadd.f32 %v1605, %v1733
        %1735 = vmatmul.f32.gmra.mxu0 %v1624
        %v1736 = vpop.f32.mrf.mxu0
        %v1737 = vadd.f32 %v1605, %v1736
        %1738 = vmatmul.f32.gmra.mxu0 %v1627
        %v1739 = vpop.f32.mrf.mxu0
        %v1740 = vadd.f32 %v1605, %v1739
        %1741 = vmatmul.f32.gmra.mxu0 %v1630
        %v1742 = vpop.f32.mrf.mxu0
        %v1743 = vadd.f32 %v1605, %v1742
        %1744 = vmatmul.f32.gmra.mxu0 %v1633
        %v1745 = vpop.f32.mrf.mxu0
        %v1746 = vadd.f32 %v1605, %v1745
        %1747 = vmatmul.f32.gmra.mxu0 %v1636
        %v1748 = vpop.f32.mrf.mxu0
        %v1749 = vadd.f32 %v1605, %v1748
        %1750 = vmatmul.f32.gmra.mxu0 %v1639
        %v1751 = vpop.f32.mrf.mxu0
        %v1752 = vadd.f32 %v1605, %v1751
        %1753 = vmatmul.f32.gmra.mxu0 %v1642
        %v1754 = vpop.f32.mrf.mxu0
        %v1755 = vadd.f32 %v1605, %v1754
        %1756 = vmatmul.f32.gmra.mxu0 %v1645
        %v1757 = vpop.f32.mrf.mxu0
        %v1758 = vadd.f32 %v1605, %v1757
        %1759 = vmatmul.f32.gmra.mxu0 %v1648
        %v1760 = vpop.f32.mrf.mxu0
        %v1761 = vadd.f32 %v1605, %v1760
        %1762 = vmatmul.f32.gmra.mxu0 %v1651
        %v1763 = vpop.f32.mrf.mxu0
        %v1764 = vadd.f32 %v1605, %v1763
        %1765 = vmatmul.f32.gmra.mxu0 %v1654
        %v1766 = vpop.f32.mrf.mxu0
        %v1767 = vadd.f32 %v1605, %v1766
        %1768 = vmatmul.f32.gmra.mxu0 %v1657
        %v1769 = vpop.f32.mrf.mxu0
        %v1770 = vadd.f32 %v1605, %v1769
        %1771 = vmatmul.f32.gmra.mxu0 %v1660
        %v1772 = vpop.f32.mrf.mxu0
        %v1773 = vadd.f32 %v1605, %v1772
        %1774 = vmatmul.f32.gmra.mxu0 %v1663
        %v1775 = vpop.f32.mrf.mxu0
        %v1776 = vadd.f32 %v1605, %v1775
        %1777 = vmatmul.f32.gmra.mxu0 %v1666
        %v1778 = vpop.f32.mrf.mxu0
        %v1779 = vadd.f32 %v1605, %v1778
        %1780 = vmatmul.f32.gmra.mxu0 %v1669
        %v1781 = vpop.f32.mrf.mxu0
        %v1782 = vadd.f32 %v1605, %v1781
        %1783 = vmatmul.f32.gmra.mxu0 %v1672
        %v1784 = vpop.f32.mrf.mxu0
        %v1785 = vadd.f32 %v1605, %v1784
        %1786 = vmatmul.f32.gmra.mxu0 %v1675
        %v1787 = vpop.f32.mrf.mxu0
        %v1788 = vadd.f32 %v1605, %v1787
        %1789 = vmatmul.f32.gmra.mxu0 %v1678
        %v1790 = vpop.f32.mrf.mxu0
        %v1791 = vadd.f32 %v1605, %v1790
        %1792 = vmatmul.f32.gmra.mxu0 %v1681
        %v1793 = vpop.f32.mrf.mxu0
        %v1794 = vadd.f32 %v1605, %v1793
        %1795 = vmatmul.f32.gmra.mxu0 %v1684
        %v1796 = vpop.f32.mrf.mxu0
        %v1797 = vadd.f32 %v1605, %v1796
        %1798 = vmatmul.f32.gmra.mxu0 %v1687
        %v1799 = vpop.f32.mrf.mxu0
        %v1800 = vadd.f32 %v1605, %v1799
        %1801 = vmatmul.f32.gmra.mxu0 %v1690
        %v1802 = vpop.f32.mrf.mxu0
        %v1803 = vadd.f32 %v1605, %v1802
        %1804 = vmatmul.f32.gmra.mxu0 %v1693
        %v1805 = vpop.f32.mrf.mxu0
        %v1806 = vadd.f32 %v1605, %v1805
        %1807 = vmatmul.f32.gmra.mxu0 %v1696
        %v1808 = vpop.f32.mrf.mxu0
        %v1809 = vadd.f32 %v1605, %v1808
        %1810 = vmatmul.f32.gmra.mxu0 %v1699
        %v1811 = vpop.f32.mrf.mxu0
        %v1812 = vadd.f32 %v1605, %v1811
        %1813 = vmatmul.f32.gmra.mxu0 %v1702
        %v1814 = vpop.f32.mrf.mxu0
        %v1815 = vadd.f32 %v1605, %v1814
        %1816 = vdwg.mxu0
        %v1817 = vrsqrt.pop %v1722
        %v1818 = vmul.f32 %v1817, %v1722
        %v1819 = vmul.f32 %v1818, %v1817
        %v1820 = vmul.f32 0.5, %v1819
        %v1821 = vsub.f32 1.5, %v1820
        %v1822 = vmul.f32 %v1817, %v1821
        %v1823 = vmul.f32 %v1722, %v1822
        %vm1824 = vcmp.eq.f32.partialorder %v1722, inf
        %v1825 = vsel %vm1824, %v1722, %v1823
        %vm1826 = vcmp.eq.f32.partialorder %v1722, 0.0
        %v1827 = vand.u32 %v1722, 2147483648
        %v1828 = vsel %vm1826, %v1827, %v1825
        %v1829 = vrsqrt.pop %v1725
        %v1830 = vmul.f32 %v1829, %v1725
        %v1831 = vmul.f32 %v1830, %v1829
        %v1832 = vmul.f32 0.5, %v1831
        %v1833 = vsub.f32 1.5, %v1832
        %v1834 = vmul.f32 %v1829, %v1833
        %v1835 = vmul.f32 %v1725, %v1834
        %vm1836 = vcmp.eq.f32.partialorder %v1725, inf
        %v1837 = vsel %vm1836, %v1725, %v1835
        %vm1838 = vcmp.eq.f32.partialorder %v1725, 0.0
        %v1839 = vand.u32 %v1725, 2147483648
        %v1840 = vsel %vm1838, %v1839, %v1837
        %v1841 = vrsqrt.pop %v1728
        %v1842 = vmul.f32 %v1841, %v1728
        %v1843 = vmul.f32 %v1842, %v1841
        %v1844 = vmul.f32 0.5, %v1843
        %v1845 = vsub.f32 1.5, %v1844
        %v1846 = vmul.f32 %v1841, %v1845
        %v1847 = vmul.f32 %v1728, %v1846
        %vm1848 = vcmp.eq.f32.partialorder %v1728, inf
        %v1849 = vsel %vm1848, %v1728, %v1847
        %vm1850 = vcmp.eq.f32.partialorder %v1728, 0.0
        %v1851 = vand.u32 %v1728, 2147483648
        %v1852 = vsel %vm1850, %v1851, %v1849
        %v1853 = vrsqrt.pop %v1731
        %v1854 = vmul.f32 %v1853, %v1731
        %v1855 = vmul.f32 %v1854, %v1853
        %v1856 = vmul.f32 0.5, %v1855
        %v1857 = vsub.f32 1.5, %v1856
        %v1858 = vmul.f32 %v1853, %v1857
        %v1859 = vmul.f32 %v1731, %v1858
        %vm1860 = vcmp.eq.f32.partialorder %v1731, inf
        %v1861 = vsel %vm1860, %v1731, %v1859
        %vm1862 = vcmp.eq.f32.partialorder %v1731, 0.0
        %v1863 = vand.u32 %v1731, 2147483648
        %v1864 = vsel %vm1862, %v1863, %v1861
        %v1865 = vrsqrt.pop %v1734
        %v1866 = vmul.f32 %v1865, %v1734
        %v1867 = vmul.f32 %v1866, %v1865
        %v1868 = vmul.f32 0.5, %v1867
        %v1869 = vsub.f32 1.5, %v1868
        %v1870 = vmul.f32 %v1865, %v1869
        %v1871 = vmul.f32 %v1734, %v1870
        %vm1872 = vcmp.eq.f32.partialorder %v1734, inf
        %v1873 = vsel %vm1872, %v1734, %v1871
        %vm1874 = vcmp.eq.f32.partialorder %v1734, 0.0
        %v1875 = vand.u32 %v1734, 2147483648
        %v1876 = vsel %vm1874, %v1875, %v1873
        %v1877 = vrsqrt.pop %v1737
        %v1878 = vmul.f32 %v1877, %v1737
        %v1879 = vmul.f32 %v1878, %v1877
        %v1880 = vmul.f32 0.5, %v1879
        %v1881 = vsub.f32 1.5, %v1880
        %v1882 = vmul.f32 %v1877, %v1881
        %v1883 = vmul.f32 %v1737, %v1882
        %vm1884 = vcmp.eq.f32.partialorder %v1737, inf
        %v1885 = vsel %vm1884, %v1737, %v1883
        %vm1886 = vcmp.eq.f32.partialorder %v1737, 0.0
        %v1887 = vand.u32 %v1737, 2147483648
        %v1888 = vsel %vm1886, %v1887, %v1885
        %v1889 = vrsqrt.pop %v1740
        %v1890 = vmul.f32 %v1889, %v1740
        %v1891 = vmul.f32 %v1890, %v1889
        %v1892 = vmul.f32 0.5, %v1891
        %v1893 = vsub.f32 1.5, %v1892
        %v1894 = vmul.f32 %v1889, %v1893
        %v1895 = vmul.f32 %v1740, %v1894
        %vm1896 = vcmp.eq.f32.partialorder %v1740, inf
        %v1897 = vsel %vm1896, %v1740, %v1895
        %vm1898 = vcmp.eq.f32.partialorder %v1740, 0.0
        %v1899 = vand.u32 %v1740, 2147483648
        %v1900 = vsel %vm1898, %v1899, %v1897
        %v1901 = vrsqrt.pop %v1743
        %v1902 = vmul.f32 %v1901, %v1743
        %v1903 = vmul.f32 %v1902, %v1901
        %v1904 = vmul.f32 0.5, %v1903
        %v1905 = vsub.f32 1.5, %v1904
        %v1906 = vmul.f32 %v1901, %v1905
        %v1907 = vmul.f32 %v1743, %v1906
        %vm1908 = vcmp.eq.f32.partialorder %v1743, inf
        %v1909 = vsel %vm1908, %v1743, %v1907
        %vm1910 = vcmp.eq.f32.partialorder %v1743, 0.0
        %v1911 = vand.u32 %v1743, 2147483648
        %v1912 = vsel %vm1910, %v1911, %v1909
        %v1913 = vrsqrt.pop %v1746
        %v1914 = vmul.f32 %v1913, %v1746
        %v1915 = vmul.f32 %v1914, %v1913
        %v1916 = vmul.f32 0.5, %v1915
        %v1917 = vsub.f32 1.5, %v1916
        %v1918 = vmul.f32 %v1913, %v1917
        %v1919 = vmul.f32 %v1746, %v1918
        %vm1920 = vcmp.eq.f32.partialorder %v1746, inf
        %v1921 = vsel %vm1920, %v1746, %v1919
        %vm1922 = vcmp.eq.f32.partialorder %v1746, 0.0
        %v1923 = vand.u32 %v1746, 2147483648
        %v1924 = vsel %vm1922, %v1923, %v1921
        %v1925 = vrsqrt.pop %v1749
        %v1926 = vmul.f32 %v1925, %v1749
        %v1927 = vmul.f32 %v1926, %v1925
        %v1928 = vmul.f32 0.5, %v1927
        %v1929 = vsub.f32 1.5, %v1928
        %v1930 = vmul.f32 %v1925, %v1929
        %v1931 = vmul.f32 %v1749, %v1930
        %vm1932 = vcmp.eq.f32.partialorder %v1749, inf
        %v1933 = vsel %vm1932, %v1749, %v1931
        %vm1934 = vcmp.eq.f32.partialorder %v1749, 0.0
        %v1935 = vand.u32 %v1749, 2147483648
        %v1936 = vsel %vm1934, %v1935, %v1933
        %v1937 = vrsqrt.pop %v1752
        %v1938 = vmul.f32 %v1937, %v1752
        %v1939 = vmul.f32 %v1938, %v1937
        %v1940 = vmul.f32 0.5, %v1939
        %v1941 = vsub.f32 1.5, %v1940
        %v1942 = vmul.f32 %v1937, %v1941
        %v1943 = vmul.f32 %v1752, %v1942
        %vm1944 = vcmp.eq.f32.partialorder %v1752, inf
        %v1945 = vsel %vm1944, %v1752, %v1943
        %vm1946 = vcmp.eq.f32.partialorder %v1752, 0.0
        %v1947 = vand.u32 %v1752, 2147483648
        %v1948 = vsel %vm1946, %v1947, %v1945
        %v1949 = vrsqrt.pop %v1755
        %v1950 = vmul.f32 %v1949, %v1755
        %v1951 = vmul.f32 %v1950, %v1949
        %v1952 = vmul.f32 0.5, %v1951
        %v1953 = vsub.f32 1.5, %v1952
        %v1954 = vmul.f32 %v1949, %v1953
        %v1955 = vmul.f32 %v1755, %v1954
        %vm1956 = vcmp.eq.f32.partialorder %v1755, inf
        %v1957 = vsel %vm1956, %v1755, %v1955
        %vm1958 = vcmp.eq.f32.partialorder %v1755, 0.0
        %v1959 = vand.u32 %v1755, 2147483648
        %v1960 = vsel %vm1958, %v1959, %v1957
        %v1961 = vrsqrt.pop %v1758
        %v1962 = vmul.f32 %v1961, %v1758
        %v1963 = vmul.f32 %v1962, %v1961
        %v1964 = vmul.f32 0.5, %v1963
        %v1965 = vsub.f32 1.5, %v1964
        %v1966 = vmul.f32 %v1961, %v1965
        %v1967 = vmul.f32 %v1758, %v1966
        %vm1968 = vcmp.eq.f32.partialorder %v1758, inf
        %v1969 = vsel %vm1968, %v1758, %v1967
        %vm1970 = vcmp.eq.f32.partialorder %v1758, 0.0
        %v1971 = vand.u32 %v1758, 2147483648
        %v1972 = vsel %vm1970, %v1971, %v1969
        %v1973 = vrsqrt.pop %v1761
        %v1974 = vmul.f32 %v1973, %v1761
        %v1975 = vmul.f32 %v1974, %v1973
        %v1976 = vmul.f32 0.5, %v1975
        %v1977 = vsub.f32 1.5, %v1976
        %v1978 = vmul.f32 %v1973, %v1977
        %v1979 = vmul.f32 %v1761, %v1978
        %vm1980 = vcmp.eq.f32.partialorder %v1761, inf
        %v1981 = vsel %vm1980, %v1761, %v1979
        %vm1982 = vcmp.eq.f32.partialorder %v1761, 0.0
        %v1983 = vand.u32 %v1761, 2147483648
        %v1984 = vsel %vm1982, %v1983, %v1981
        %v1985 = vrsqrt.pop %v1764
        %v1986 = vmul.f32 %v1985, %v1764
        %v1987 = vmul.f32 %v1986, %v1985
        %v1988 = vmul.f32 0.5, %v1987
        %v1989 = vsub.f32 1.5, %v1988
        %v1990 = vmul.f32 %v1985, %v1989
        %v1991 = vmul.f32 %v1764, %v1990
        %vm1992 = vcmp.eq.f32.partialorder %v1764, inf
        %v1993 = vsel %vm1992, %v1764, %v1991
        %vm1994 = vcmp.eq.f32.partialorder %v1764, 0.0
        %v1995 = vand.u32 %v1764, 2147483648
        %v1996 = vsel %vm1994, %v1995, %v1993
        %v1997 = vrsqrt.pop %v1767
        %v1998 = vmul.f32 %v1997, %v1767
        %v1999 = vmul.f32 %v1998, %v1997
        %v2000 = vmul.f32 0.5, %v1999
        %v2001 = vsub.f32 1.5, %v2000
        %v2002 = vmul.f32 %v1997, %v2001
        %v2003 = vmul.f32 %v1767, %v2002
        %vm2004 = vcmp.eq.f32.partialorder %v1767, inf
        %v2005 = vsel %vm2004, %v1767, %v2003
        %vm2006 = vcmp.eq.f32.partialorder %v1767, 0.0
        %v2007 = vand.u32 %v1767, 2147483648
        %v2008 = vsel %vm2006, %v2007, %v2005
        %v2009 = vrsqrt.pop %v1770
        %v2010 = vmul.f32 %v2009, %v1770
        %v2011 = vmul.f32 %v2010, %v2009
        %v2012 = vmul.f32 0.5, %v2011
        %v2013 = vsub.f32 1.5, %v2012
        %v2014 = vmul.f32 %v2009, %v2013
        %v2015 = vmul.f32 %v1770, %v2014
        %vm2016 = vcmp.eq.f32.partialorder %v1770, inf
        %v2017 = vsel %vm2016, %v1770, %v2015
        %vm2018 = vcmp.eq.f32.partialorder %v1770, 0.0
        %v2019 = vand.u32 %v1770, 2147483648
        %v2020 = vsel %vm2018, %v2019, %v2017
        %v2021 = vrsqrt.pop %v1773
        %v2022 = vmul.f32 %v2021, %v1773
        %v2023 = vmul.f32 %v2022, %v2021
        %v2024 = vmul.f32 0.5, %v2023
        %v2025 = vsub.f32 1.5, %v2024
        %v2026 = vmul.f32 %v2021, %v2025
        %v2027 = vmul.f32 %v1773, %v2026
        %vm2028 = vcmp.eq.f32.partialorder %v1773, inf
        %v2029 = vsel %vm2028, %v1773, %v2027
        %vm2030 = vcmp.eq.f32.partialorder %v1773, 0.0
        %v2031 = vand.u32 %v1773, 2147483648
        %v2032 = vsel %vm2030, %v2031, %v2029
        %v2033 = vrsqrt.pop %v1776
        %v2034 = vmul.f32 %v2033, %v1776
        %v2035 = vmul.f32 %v2034, %v2033
        %v2036 = vmul.f32 0.5, %v2035
        %v2037 = vsub.f32 1.5, %v2036
        %v2038 = vmul.f32 %v2033, %v2037
        %v2039 = vmul.f32 %v1776, %v2038
        %vm2040 = vcmp.eq.f32.partialorder %v1776, inf
        %v2041 = vsel %vm2040, %v1776, %v2039
        %vm2042 = vcmp.eq.f32.partialorder %v1776, 0.0
        %v2043 = vand.u32 %v1776, 2147483648
        %v2044 = vsel %vm2042, %v2043, %v2041
        %v2045 = vrsqrt.pop %v1779
        %v2046 = vmul.f32 %v2045, %v1779
        %v2047 = vmul.f32 %v2046, %v2045
        %v2048 = vmul.f32 0.5, %v2047
        %v2049 = vsub.f32 1.5, %v2048
        %v2050 = vmul.f32 %v2045, %v2049
        %v2051 = vmul.f32 %v1779, %v2050
        %vm2052 = vcmp.eq.f32.partialorder %v1779, inf
        %v2053 = vsel %vm2052, %v1779, %v2051
        %vm2054 = vcmp.eq.f32.partialorder %v1779, 0.0
        %v2055 = vand.u32 %v1779, 2147483648
        %v2056 = vsel %vm2054, %v2055, %v2053
        %v2057 = vrsqrt.pop %v1782
        %v2058 = vmul.f32 %v2057, %v1782
        %v2059 = vmul.f32 %v2058, %v2057
        %v2060 = vmul.f32 0.5, %v2059
        %v2061 = vsub.f32 1.5, %v2060
        %v2062 = vmul.f32 %v2057, %v2061
        %v2063 = vmul.f32 %v1782, %v2062
        %vm2064 = vcmp.eq.f32.partialorder %v1782, inf
        %v2065 = vsel %vm2064, %v1782, %v2063
        %vm2066 = vcmp.eq.f32.partialorder %v1782, 0.0
        %v2067 = vand.u32 %v1782, 2147483648
        %v2068 = vsel %vm2066, %v2067, %v2065
        %v2069 = vrsqrt.pop %v1785
        %v2070 = vmul.f32 %v2069, %v1785
        %v2071 = vmul.f32 %v2070, %v2069
        %v2072 = vmul.f32 0.5, %v2071
        %v2073 = vsub.f32 1.5, %v2072
        %v2074 = vmul.f32 %v2069, %v2073
        %v2075 = vmul.f32 %v1785, %v2074
        %vm2076 = vcmp.eq.f32.partialorder %v1785, inf
        %v2077 = vsel %vm2076, %v1785, %v2075
        %vm2078 = vcmp.eq.f32.partialorder %v1785, 0.0
        %v2079 = vand.u32 %v1785, 2147483648
        %v2080 = vsel %vm2078, %v2079, %v2077
        %v2081 = vrsqrt.pop %v1788
        %v2082 = vmul.f32 %v2081, %v1788
        %v2083 = vmul.f32 %v2082, %v2081
        %v2084 = vmul.f32 0.5, %v2083
        %v2085 = vsub.f32 1.5, %v2084
        %v2086 = vmul.f32 %v2081, %v2085
        %v2087 = vmul.f32 %v1788, %v2086
        %vm2088 = vcmp.eq.f32.partialorder %v1788, inf
        %v2089 = vsel %vm2088, %v1788, %v2087
        %vm2090 = vcmp.eq.f32.partialorder %v1788, 0.0
        %v2091 = vand.u32 %v1788, 2147483648
        %v2092 = vsel %vm2090, %v2091, %v2089
        %v2093 = vrsqrt.pop %v1791
        %v2094 = vmul.f32 %v2093, %v1791
        %v2095 = vmul.f32 %v2094, %v2093
        %v2096 = vmul.f32 0.5, %v2095
        %v2097 = vsub.f32 1.5, %v2096
        %v2098 = vmul.f32 %v2093, %v2097
        %v2099 = vmul.f32 %v1791, %v2098
        %vm2100 = vcmp.eq.f32.partialorder %v1791, inf
        %v2101 = vsel %vm2100, %v1791, %v2099
        %vm2102 = vcmp.eq.f32.partialorder %v1791, 0.0
        %v2103 = vand.u32 %v1791, 2147483648
        %v2104 = vsel %vm2102, %v2103, %v2101
        %v2105 = vrsqrt.pop %v1794
        %v2106 = vmul.f32 %v2105, %v1794
        %v2107 = vmul.f32 %v2106, %v2105
        %v2108 = vmul.f32 0.5, %v2107
        %v2109 = vsub.f32 1.5, %v2108
        %v2110 = vmul.f32 %v2105, %v2109
        %v2111 = vmul.f32 %v1794, %v2110
        %vm2112 = vcmp.eq.f32.partialorder %v1794, inf
        %v2113 = vsel %vm2112, %v1794, %v2111
        %vm2114 = vcmp.eq.f32.partialorder %v1794, 0.0
        %v2115 = vand.u32 %v1794, 2147483648
        %v2116 = vsel %vm2114, %v2115, %v2113
        %v2117 = vrsqrt.pop %v1797
        %v2118 = vmul.f32 %v2117, %v1797
        %v2119 = vmul.f32 %v2118, %v2117
        %v2120 = vmul.f32 0.5, %v2119
        %v2121 = vsub.f32 1.5, %v2120
        %v2122 = vmul.f32 %v2117, %v2121
        %v2123 = vmul.f32 %v1797, %v2122
        %vm2124 = vcmp.eq.f32.partialorder %v1797, inf
        %v2125 = vsel %vm2124, %v1797, %v2123
        %vm2126 = vcmp.eq.f32.partialorder %v1797, 0.0
        %v2127 = vand.u32 %v1797, 2147483648
        %v2128 = vsel %vm2126, %v2127, %v2125
        %v2129 = vrsqrt.pop %v1800
        %v2130 = vmul.f32 %v2129, %v1800
        %v2131 = vmul.f32 %v2130, %v2129
        %v2132 = vmul.f32 0.5, %v2131
        %v2133 = vsub.f32 1.5, %v2132
        %v2134 = vmul.f32 %v2129, %v2133
        %v2135 = vmul.f32 %v1800, %v2134
        %vm2136 = vcmp.eq.f32.partialorder %v1800, inf
        %v2137 = vsel %vm2136, %v1800, %v2135
        %vm2138 = vcmp.eq.f32.partialorder %v1800, 0.0
        %v2139 = vand.u32 %v1800, 2147483648
        %v2140 = vsel %vm2138, %v2139, %v2137
        %v2141 = vrsqrt.pop %v1803
        %v2142 = vmul.f32 %v2141, %v1803
        %v2143 = vmul.f32 %v2142, %v2141
        %v2144 = vmul.f32 0.5, %v2143
        %v2145 = vsub.f32 1.5, %v2144
        %v2146 = vmul.f32 %v2141, %v2145
        %v2147 = vmul.f32 %v1803, %v2146
        %vm2148 = vcmp.eq.f32.partialorder %v1803, inf
        %v2149 = vsel %vm2148, %v1803, %v2147
        %vm2150 = vcmp.eq.f32.partialorder %v1803, 0.0
        %v2151 = vand.u32 %v1803, 2147483648
        %v2152 = vsel %vm2150, %v2151, %v2149
        %v2153 = vrsqrt.pop %v1806
        %v2154 = vmul.f32 %v2153, %v1806
        %v2155 = vmul.f32 %v2154, %v2153
        %v2156 = vmul.f32 0.5, %v2155
        %v2157 = vsub.f32 1.5, %v2156
        %v2158 = vmul.f32 %v2153, %v2157
        %v2159 = vmul.f32 %v1806, %v2158
        %vm2160 = vcmp.eq.f32.partialorder %v1806, inf
        %v2161 = vsel %vm2160, %v1806, %v2159
        %vm2162 = vcmp.eq.f32.partialorder %v1806, 0.0
        %v2163 = vand.u32 %v1806, 2147483648
        %v2164 = vsel %vm2162, %v2163, %v2161
        %v2165 = vrsqrt.pop %v1809
        %v2166 = vmul.f32 %v2165, %v1809
        %v2167 = vmul.f32 %v2166, %v2165
        %v2168 = vmul.f32 0.5, %v2167
        %v2169 = vsub.f32 1.5, %v2168
        %v2170 = vmul.f32 %v2165, %v2169
        %v2171 = vmul.f32 %v1809, %v2170
        %vm2172 = vcmp.eq.f32.partialorder %v1809, inf
        %v2173 = vsel %vm2172, %v1809, %v2171
        %vm2174 = vcmp.eq.f32.partialorder %v1809, 0.0
        %v2175 = vand.u32 %v1809, 2147483648
        %v2176 = vsel %vm2174, %v2175, %v2173
        %v2177 = vrsqrt.pop %v1812
        %v2178 = vmul.f32 %v2177, %v1812
        %v2179 = vmul.f32 %v2178, %v2177
        %v2180 = vmul.f32 0.5, %v2179
        %v2181 = vsub.f32 1.5, %v2180
        %v2182 = vmul.f32 %v2177, %v2181
        %v2183 = vmul.f32 %v1812, %v2182
        %vm2184 = vcmp.eq.f32.partialorder %v1812, inf
        %v2185 = vsel %vm2184, %v1812, %v2183
        %vm2186 = vcmp.eq.f32.partialorder %v1812, 0.0
        %v2187 = vand.u32 %v1812, 2147483648
        %v2188 = vsel %vm2186, %v2187, %v2185
        %v2189 = vrsqrt.pop %v1815
        %v2190 = vmul.f32 %v2189, %v1815
        %v2191 = vmul.f32 %v2190, %v2189
        %v2192 = vmul.f32 0.5, %v2191
        %v2193 = vsub.f32 1.5, %v2192
        %v2194 = vmul.f32 %v2189, %v2193
        %v2195 = vmul.f32 %v1815, %v2194
        %vm2196 = vcmp.eq.f32.partialorder %v1815, inf
        %v2197 = vsel %vm2196, %v1815, %v2195
        %vm2198 = vcmp.eq.f32.partialorder %v1815, 0.0
        %v2199 = vand.u32 %v1815, 2147483648
        %v2200 = vsel %vm2198, %v2199, %v2197
        %v2201 = vmul.f32 %v1531, %v1828
        %v2202 = vmul.f32 %v1532, %v1840
        %v2203 = vmul.f32 %v1533, %v1852
        %v2204 = vmul.f32 %v1534, %v1864
        %v2205 = vmul.f32 %v1535, %v1876
        %v2206 = vmul.f32 %v1536, %v1888
        %v2207 = vmul.f32 %v1537, %v1900
        %v2208 = vmul.f32 %v1538, %v1912
        %v2209 = vmul.f32 %v1539, %v1924
        %v2210 = vmul.f32 %v1540, %v1936
        %v2211 = vmul.f32 %v1541, %v1948
        %v2212 = vmul.f32 %v1542, %v1960
        %v2213 = vmul.f32 %v1543, %v1972
        %v2214 = vmul.f32 %v1544, %v1984
        %v2215 = vmul.f32 %v1545, %v1996
        %v2216 = vmul.f32 %v1546, %v2008
        %v2217 = vmul.f32 %v1547, %v2020
        %v2218 = vmul.f32 %v1548, %v2032
        %v2219 = vmul.f32 %v1549, %v2044
        %v2220 = vmul.f32 %v1550, %v2056
        %v2221 = vmul.f32 %v1551, %v2068
        %v2222 = vmul.f32 %v1552, %v2080
        %v2223 = vmul.f32 %v1553, %v2092
        %v2224 = vmul.f32 %v1554, %v2104
        %v2225 = vmul.f32 %v1555, %v2116
        %v2226 = vmul.f32 %v1556, %v2128
        %v2227 = vmul.f32 %v1557, %v2140
        %v2228 = vmul.f32 %v1558, %v2152
        %v2229 = vmul.f32 %v1559, %v2164
        %v2230 = vmul.f32 %v1560, %v2176
        %v2231 = vmul.f32 %v1561, %v2188
        %v2232 = vmul.f32 %v1562, %v2200
        %2233 = vst.msk [vmem:[%s390] sm:$0xff] %vm1607, %v2201
        %2234 = vst.msk [vmem:[%s390 + $0x8] sm:$0xff] %vm1607, %v2202
        %2235 = vst.msk [vmem:[%s390 + $0x10] sm:$0xff] %vm1607, %v2203
        %2236 = vst.msk [vmem:[%s390 + $0x18] sm:$0xff] %vm1607, %v2204
        %2237 = vst.msk [vmem:[%s390 + $0x20] sm:$0xff] %vm1607, %v2205
        %2238 = vst.msk [vmem:[%s390 + $0x28] sm:$0xff] %vm1607, %v2206
        %2239 = vst.msk [vmem:[%s390 + $0x30] sm:$0xff] %vm1607, %v2207
        %2240 = vst.msk [vmem:[%s390 + $0x38] sm:$0xff] %vm1607, %v2208
        %2241 = vst.msk [vmem:[%s390 + $0x40] sm:$0xff] %vm1607, %v2209
        %2242 = vst.msk [vmem:[%s390 + $0x48] sm:$0xff] %vm1607, %v2210
        %2243 = vst.msk [vmem:[%s390 + $0x50] sm:$0xff] %vm1607, %v2211
        %2244 = vst.msk [vmem:[%s390 + $0x58] sm:$0xff] %vm1607, %v2212
        %2245 = vst.msk [vmem:[%s390 + $0x60] sm:$0xff] %vm1607, %v2213
        %2246 = vst.msk [vmem:[%s390 + $0x68] sm:$0xff] %vm1607, %v2214
        %2247 = vst.msk [vmem:[%s390 + $0x70] sm:$0xff] %vm1607, %v2215
        %2248 = vst.msk [vmem:[%s390 + $0x78] sm:$0xff] %vm1607, %v2216
        %2249 = vst.msk [vmem:[%s390 + $0x80] sm:$0xff] %vm1607, %v2217
        %2250 = vst.msk [vmem:[%s390 + $0x88] sm:$0xff] %vm1607, %v2218
        %2251 = vst.msk [vmem:[%s390 + $0x90] sm:$0xff] %vm1607, %v2219
        %2252 = vst.msk [vmem:[%s390 + $0x98] sm:$0xff] %vm1607, %v2220
        %2253 = vst.msk [vmem:[%s390 + $0xa0] sm:$0xff] %vm1607, %v2221
        %2254 = vst.msk [vmem:[%s390 + $0xa8] sm:$0xff] %vm1607, %v2222
        %2255 = vst.msk [vmem:[%s390 + $0xb0] sm:$0xff] %vm1607, %v2223
        %2256 = vst.msk [vmem:[%s390 + $0xb8] sm:$0xff] %vm1607, %v2224
        %2257 = vst.msk [vmem:[%s390 + $0xc0] sm:$0xff] %vm1607, %v2225
        %2258 = vst.msk [vmem:[%s390 + $0xc8] sm:$0xff] %vm1607, %v2226
        %2259 = vst.msk [vmem:[%s390 + $0xd0] sm:$0xff] %vm1607, %v2227
        %2260 = vst.msk [vmem:[%s390 + $0xd8] sm:$0xff] %vm1607, %v2228
        %2261 = vst.msk [vmem:[%s390 + $0xe0] sm:$0xff] %vm1607, %v2229
        %2262 = vst.msk [vmem:[%s390 + $0xe8] sm:$0xff] %vm1607, %v2230
        %2263 = vst.msk [vmem:[%s390 + $0xf0] sm:$0xff] %vm1607, %v2231
        %2264 = vst.msk [vmem:[%s390 + $0xf8] sm:$0xff] %vm1607, %v2232
        %s2265 = smul.u32 16, %s24
        %p2266 = scmp.lt.s32.totalorder %s23, 1
        %s2267 = scalar_select %p2266, %s23, 1
        %p2268 = scmp.lt.s32.totalorder %s2265, 15
        %s2269 = scalar_select %p2268, %s2265, 15
        %s2270 = smul.addr %s2269, 2
        %s2271 = smul.addr %s2267, 32
        %s2272 = sadd.s32 %s2270, %s2271
        %s2273 = smul.addr %s2272, 8
        %s2274 = scalar_lea.vmem %s6, %s2273
        // Predicated region
        $region53: #{_lambda_.6} parent=43 // pred_check
          %p2275 = pneg %p199
        $region54: #{_lambda_.6} parent=43 // pred_check_branch
          %2277 = sbr.rel (%p2275) target = $region56
        $region55: #{_lambda_.6} parent=43 // pred_region
          %s2278 = smul.u32 16, %s24
        $region56: #{_lambda_.6} parent=43 // pred_fallthru
          _
      $region44: #{_lambda_.6} parent=5 // pred_fallthru
        _
      %p2279 = scmp.le.s32.totalorder 2, %s14
      // Predicated region
      $region57: #{_lambda_.6} parent=5 // pred_check
        %p2280 = pneg %p2279
      $region58: #{_lambda_.6} parent=5 // pred_check_branch
        %2282 = sbr.rel (%p2280) target = $region60
      $region59: #{_lambda_.6} parent=5 // pred_region
        %s2283 = ssub.s32 %s14, 2
        // Predicated region
        $region61: #{_lambda_.6} parent=59 // pred_check
          %p2284 = pneg %p205
        $region62: #{_lambda_.6} parent=59 // pred_check_branch
          %2286 = sbr.rel (%p2284) target = $region64
        $region63: #{_lambda_.6} parent=59 // pred_region
          %s2287 = smul.u32 16, %s26
          %p2288 = scmp.lt.s32.totalorder %s25, 1
          %s2289 = scalar_select %p2288, %s25, 1
          %p2290 = scmp.lt.s32.totalorder %s2287, 15
          %s2291 = scalar_select %p2290, %s2287, 15
          %s2292 = smul.addr %s2291, 2
          %s2293 = smul.addr %s2289, 32
          %s2294 = sadd.s32 %s2292, %s2293
          %s2295 = smul.addr %s2294, 8
          %s2296 = scalar_lea.vmem %s6, %s2295
        $region64: #{_lambda_.6} parent=59 // pred_fallthru
          _
      $region60: #{_lambda_.6} parent=5 // pred_fallthru
        _
    $region6: #{_lambda_.6} parent=1 // loop_footer
      %s18 = sadd.s32 1, %s14
    $region7: #{_lambda_.6} parent=1 // loop_footer_branch
      %13 = sbr.rel target = $region3
    $region8: #{_lambda_.6} parent=1 // loop_exit
      _
    %2297 = vsyncpa [#allocation4], 1
    %s2298 = scalar_lea.sflag [#allocation4], 1
    %2299 = vsyncpa %s2298, 1
    %2300 = vsyncpa [#allocation6], 1

// kernel: _lambda_.7
$region0: #{_lambda_.7}
  #allocation0 [shape = 'u32[]', space=smem, size = 0x4, offset = 0x4, fixed_abs, tag = 'smem constant byte address 0x4 - core index']
  #allocation1 [shape = 'u32[72,128]{1,0:T(1,128)}', space=vmem, size = 0x9000, scoped, tag = 'internal scratch']
  #allocation2 [shape = 'f32[33,33,16]{2,1,0:T(8,128)}', space=vmem, size = 0xa5000, scoped, tag = 'scratch operand']
  %s0 = inlined_call_operand.vmem [shape: f32[2,32,32,16], index: 0, kind: input, shape index: {}, may-alias: {0,1}]
  %s1 = inlined_call_operand.vmem [shape: f32[2,32,32,16], index: 1, kind: input, shape index: {}, may-alias: {0,1}]
  %s2 = inlined_call_operand.vmem [shape: f32[2,2,16,20], index: 2, kind: input, shape index: {}]
  %s3 = inlined_call_operand.vmem [shape: f32[1,20], index: 3, kind: input, shape index: {}]
  %s4 = inlined_call_operand.vmem [shape: f32[2,32,32,20], index: 4, kind: output, shape index: {}]
  %s5 = sld [smem:[#allocation0]]
  $region49: #{_lambda_.7} parent=0
    _
  %s7 = ssub.s32 1, %s5
  %s8 = scalar_select 0, %s7, %s5
  loop: start=0, step=1, limit=4
  $region2: #{_lambda_.7} parent=0 // loop_pre_header
    _
  $region3: #{_lambda_.7} parent=0 // loop_header
    %s10 = sphi 0, %s14
    %p11 = scmp.ge.s32.totalorder %s10, 4
    %s17 = sphi 0, %s29
    %s18 = sphi 0, %s25
    %s19 = sphi 0, %s17
    %s20 = sphi 0, %s18
    %s21 = sphi 0, %s19
    %s22 = sphi 0, %s20
    %s34 = sphi 0, %s36
    %s37 = sphi 0, %s34
    %s38 = sphi 0, %s37
    %s54 = sphi 0, %s38
    %s70 = sphi 0, %s72
    %s73 = sphi 0, %s70
    %s74 = sphi 0, %s73
    %s90 = sphi 0, %s74
    %s94 = sphi 0, %s94
    %s96 = sphi 0, %s94
    %s97 = sphi 0, %s96
    %s111 = sphi 0, %s97
    %s115 = sphi 0, %s115
    %s117 = sphi 0, %s115
    %s118 = sphi 0, %s117
    %s132 = sphi 0, %s118
    %s140 = sphi 0, %s142
    %s143 = sphi 0, %s140
    %s144 = sphi 0, %s143
    %s160 = sphi 0, %s144
  $region4: #{_lambda_.7} parent=0 // loop_header_branch
    %13 = sbr.rel (%p11) target = $region8
  $region5: #{_lambda_.7} parent=0 // loop_body
    %s15 = ssub.s32 %s10, 1
    %s16 = ssub.s32 %s10, 2
    %s23 = sadd.s32 1, %s18
    %p24 = scmp.ge.s32.totalorder %s23, 1
    %s25 = scalar_select %p24, 0, %s23
    %s26 = sadd.s32 1, %s17
    %s27 = scalar_select %p24, %s26, %s17
    %p28 = scmp.ge.s32.totalorder %s27, 2
    %s29 = scalar_select %p28, 0, %s27
    %s30 = ssub.s32 %s17, %s29
    %s31 = ssub.s32 %s18, %s25
    %s32 = sor.u32 %s30, %s31
    %p33 = scmp.eq.s32.totalorder %s32, 0
    %s35 = sadd.s32 %s34, 1
    %s36 = scalar_select %p33, %s34, %s35
    %p39 = pneg %p33
    %p40 = scmp.eq.s32.totalorder %s10, 1
    %p41 = por %p39, %p40
    %p42 = scmp.ne.s32.totalorder %s34, %s37
    %p43 = scmp.eq.s32.totalorder %s10, 0
    %p44 = por %p42, %p43
    %p45 = scmp.ne.s32.totalorder %s34, %s37
    %p46 = scmp.eq.s32.totalorder %s15, 1
    %p47 = por %p45, %p46
    %p48 = scmp.ne.s32.totalorder %s37, %s38
    %p49 = scmp.eq.s32.totalorder %s15, 0
    %p50 = por %p48, %p49
    %p51 = scmp.ne.s32.totalorder %s37, %s38
    %p52 = scmp.eq.s32.totalorder %s16, 1
    %p53 = por %p51, %p52
    %p55 = scmp.ne.s32.totalorder %s38, %s54
    %p56 = scmp.eq.s32.totalorder %s16, 0
    %p57 = por %p55, %p56
    %s58 = sadd.s32 %s18, 1
    %s59 = smul.u32 %s58, 32
    %p60 = scmp.lt.s32.totalorder %s59, 31
    %s61 = scalar_select %p60, %s59, 31
    %s62 = sadd.s32 %s25, 1
    %s63 = smul.u32 %s62, 32
    %p64 = scmp.lt.s32.totalorder %s63, 31
    %s65 = scalar_select %p64, %s63, 31
    %s66 = ssub.s32 %s17, %s29
    %s67 = ssub.s32 %s61, %s65
    %s68 = sor.u32 %s66, %s67
    %p69 = scmp.eq.s32.totalorder %s68, 0
    %s71 = sadd.s32 %s70, 1
    %s72 = scalar_select %p69, %s70, %s71
    %p75 = pneg %p69
    %p76 = scmp.eq.s32.totalorder %s10, 1
    %p77 = por %p75, %p76
    %p78 = scmp.ne.s32.totalorder %s70, %s73
    %p79 = scmp.eq.s32.totalorder %s10, 0
    %p80 = por %p78, %p79
    %p81 = scmp.ne.s32.totalorder %s70, %s73
    %p82 = scmp.eq.s32.totalorder %s15, 1
    %p83 = por %p81, %p82
    %p84 = scmp.ne.s32.totalorder %s73, %s74
    %p85 = scmp.eq.s32.totalorder %s15, 0
    %p86 = por %p84, %p85
    %p87 = scmp.ne.s32.totalorder %s73, %s74
    %p88 = scmp.eq.s32.totalorder %s16, 1
    %p89 = por %p87, %p88
    %p91 = scmp.ne.s32.totalorder %s74, %s90
    %p92 = scmp.eq.s32.totalorder %s16, 0
    %p93 = por %p91, %p92
    %s95 = sadd.s32 %s94, 1
    %p98 = scmp.eq.s32.totalorder %s10, 1
    %p99 = scmp.ne.s32.totalorder %s94, %s96
    %p100 = scmp.eq.s32.totalorder %s10, 0
    %p101 = por %p99, %p100
    %p102 = scmp.ne.s32.totalorder %s94, %s96
    %p103 = scmp.eq.s32.totalorder %s15, 1
    %p104 = por %p102, %p103
    %p105 = scmp.ne.s32.totalorder %s96, %s97
    %p106 = scmp.eq.s32.totalorder %s15, 0
    %p107 = por %p105, %p106
    %p108 = scmp.ne.s32.totalorder %s96, %s97
    %p109 = scmp.eq.s32.totalorder %s16, 1
    %p110 = por %p108, %p109
    %p112 = scmp.ne.s32.totalorder %s97, %s111
    %p113 = scmp.eq.s32.totalorder %s16, 0
    %p114 = por %p112, %p113
    %s116 = sadd.s32 %s115, 1
    %p119 = scmp.eq.s32.totalorder %s10, 1
    %p120 = scmp.ne.s32.totalorder %s115, %s117
    %p121 = scmp.eq.s32.totalorder %s10, 0
    %p122 = por %p120, %p121
    %p123 = scmp.ne.s32.totalorder %s115, %s117
    %p124 = scmp.eq.s32.totalorder %s15, 1
    %p125 = por %p123, %p124
    %p126 = scmp.ne.s32.totalorder %s117, %s118
    %p127 = scmp.eq.s32.totalorder %s15, 0
    %p128 = por %p126, %p127
    %p129 = scmp.ne.s32.totalorder %s117, %s118
    %p130 = scmp.eq.s32.totalorder %s16, 1
    %p131 = por %p129, %p130
    %p133 = scmp.ne.s32.totalorder %s118, %s132
    %p134 = scmp.eq.s32.totalorder %s16, 0
    %p135 = por %p133, %p134
    %s136 = ssub.s32 %s17, %s29
    %s137 = ssub.s32 %s18, %s25
    %s138 = sor.u32 %s136, %s137
    %p139 = scmp.eq.s32.totalorder %s138, 0
    %s141 = sadd.s32 %s140, 1
    %s142 = scalar_select %p139, %s140, %s141
    %p145 = pneg %p139
    %p146 = scmp.eq.s32.totalorder %s10, 1
    %p147 = por %p145, %p146
    %p148 = scmp.ne.s32.totalorder %s140, %s143
    %p149 = scmp.eq.s32.totalorder %s10, 0
    %p150 = por %p148, %p149
    %p151 = scmp.ne.s32.totalorder %s140, %s143
    %p152 = scmp.eq.s32.totalorder %s15, 1
    %p153 = por %p151, %p152
    %p154 = scmp.ne.s32.totalorder %s143, %s144
    %p155 = scmp.eq.s32.totalorder %s15, 0
    %p156 = por %p154, %p155
    %p157 = scmp.ne.s32.totalorder %s143, %s144
    %p158 = scmp.eq.s32.totalorder %s16, 1
    %p159 = por %p157, %p158
    %p161 = scmp.ne.s32.totalorder %s144, %s160
    %p162 = scmp.eq.s32.totalorder %s16, 0
    %p163 = por %p161, %p162
    %p164 = scmp.le.s32.totalorder 1, %s10
    %p165 = scmp.lt.s32.totalorder %s10, 3
    %p166 = pnand %p164, %p165
    %p167 = pneg %p166
    // Predicated region
    $region9: #{_lambda_.7} parent=5 // pred_check
      _
    $region10: #{_lambda_.7} parent=5 // pred_check_branch
      %169 = sbr.rel (%p166) target = $region12
    $region11: #{_lambda_.7} parent=5 // pred_region
      %s170 = ssub.s32 %s10, 1
      // Predicated region
      $region13: #{_lambda_.7} parent=11 // pred_check
        %p171 = pneg %p107
      $region14: #{_lambda_.7} parent=11 // pred_check_branch
        %173 = sbr.rel (%p171) target = $region16
      $region15: #{_lambda_.7} parent=11 // pred_region
        _
      $region16: #{_lambda_.7} parent=11 // pred_fallthru
        _
      // Predicated region
      $region17: #{_lambda_.7} parent=11 // pred_check
        %p174 = pneg %p128
      $region18: #{_lambda_.7} parent=11 // pred_check_branch
        %176 = sbr.rel (%p174) target = $region20
      $region19: #{_lambda_.7} parent=11 // pred_region
        _
      $region20: #{_lambda_.7} parent=11 // pred_fallthru
        _
    $region12: #{_lambda_.7} parent=5 // pred_fallthru
      _
    %p177 = scmp.lt.s32.totalorder %s10, 2
    // Predicated region
    $region21: #{_lambda_.7} parent=5 // pred_check
      %p178 = pneg %p177
    $region22: #{_lambda_.7} parent=5 // pred_check_branch
      %180 = sbr.rel (%p178) target = $region24
    $region23: #{_lambda_.7} parent=5 // pred_region
      // Predicated region
      $region25: #{_lambda_.7} parent=23 // pred_check
        %p181 = pneg %p44
      $region26: #{_lambda_.7} parent=23 // pred_check_branch
        %183 = sbr.rel (%p181) target = $region28
      $region27: #{_lambda_.7} parent=23 // pred_region
        %s184 = smul.u32 32, %s18
        %p185 = scmp.lt.s32.totalorder %s17, 1
        %s186 = scalar_select %p185, %s17, 1
        %p187 = scmp.lt.s32.totalorder %s184, 31
        %s188 = scalar_select %p187, %s184, 31
        %s189 = smul.addr %s188, 4
        %s190 = smul.addr %s186, 128
        %s191 = sadd.s32 %s189, %s190
        %s192 = smul.addr %s191, 8
        %s193 = scalar_lea.vmem %s0, %s192
        %s194 = smul.u32 32, %s18
      $region28: #{_lambda_.7} parent=23 // pred_fallthru
        _
      // Predicated region
      $region29: #{_lambda_.7} parent=23 // pred_check
        %p195 = pneg %p80
      $region30: #{_lambda_.7} parent=23 // pred_check_branch
        %197 = sbr.rel (%p195) target = $region32
      $region31: #{_lambda_.7} parent=23 // pred_region
        %s198 = sadd.s32 %s18, 1
        %s199 = smul.u32 %s198, 32
        %p200 = scmp.lt.s32.totalorder %s199, 31
        %s201 = scalar_select %p200, %s199, 31
        %p202 = scmp.lt.s32.totalorder %s17, 1
        %s203 = scalar_select %p202, %s17, 1
        %p204 = scmp.lt.s32.totalorder %s201, 31
        %s205 = scalar_select %p204, %s201, 31
        %s206 = smul.addr %s205, 4
        %s207 = smul.addr %s203, 128
        %s208 = sadd.s32 %s206, %s207
        %s209 = smul.addr %s208, 8
        %s210 = scalar_lea.vmem %s1, %s209
        %s211 = sadd.s32 %s18, 1
        %s212 = smul.u32 %s211, 32
        %p213 = scmp.lt.s32.totalorder %s212, 31
        %s214 = scalar_select %p213, %s212, 31
      $region32: #{_lambda_.7} parent=23 // pred_fallthru
        _
    $region24: #{_lambda_.7} parent=5 // pred_fallthru
      _
    %p215 = scmp.le.s32.totalorder 1, %s10
    %p216 = scmp.lt.s32.totalorder %s10, 3
    %p217 = pnand %p215, %p216
    %p218 = pneg %p217
    // Predicated region
    $region33: #{_lambda_.7} parent=5 // pred_check
      _
    $region34: #{_lambda_.7} parent=5 // pred_check_branch
      %220 = sbr.rel (%p217) target = $region36
    $region35: #{_lambda_.7} parent=5 // pred_region
      %s221 = ssub.s32 %s10, 1
      %s222 = smul.u32 32, %s20
      %p223 = scmp.lt.s32.totalorder %s19, 1
      %s224 = scalar_select %p223, %s19, 1
      %p225 = scmp.lt.s32.totalorder %s222, 31
      %s226 = scalar_select %p225, %s222, 31
      %s227 = smul.addr %s226, 4
      %s228 = smul.addr %s224, 128
      %s229 = sadd.s32 %s227, %s228
      %s230 = smul.addr %s229, 8
      %s231 = scalar_lea.vmem %s0, %s230
      %p232 = pneg %p50
      %p233 = pneg %p47
      %s234 = sadd.s32 %s20, 1
      %s235 = smul.u32 %s234, 32
      %p236 = scmp.lt.s32.totalorder %s235, 31
      %s237 = scalar_select %p236, %s235, 31
      %p238 = scmp.lt.s32.totalorder %s19, 1
      %s239 = scalar_select %p238, %s19, 1
      %p240 = scmp.lt.s32.totalorder %s237, 31
      %s241 = scalar_select %p240, %s237, 31
      %s242 = smul.addr %s241, 4
      %s243 = smul.addr %s239, 128
      %s244 = sadd.s32 %s242, %s243
      %s245 = smul.addr %s244, 8
      %s246 = scalar_lea.vmem %s1, %s245
      %p247 = pneg %p86
      %p248 = pneg %p83
      %p249 = pneg %p107
      %p250 = pneg %p104
      %p251 = pneg %p128
      %p252 = pneg %p125
      %p253 = pneg %p156
      %p254 = pneg %p153
      %s255 = smul.u32 32, %s20
      %p256 = scmp.lt.s32.totalorder %s19, 1
      %s257 = scalar_select %p256, %s19, 1
      %p258 = scmp.lt.s32.totalorder %s255, 31
      %s259 = scalar_select %p258, %s255, 31
      %s260 = smul.addr %s259, 4
      %s261 = smul.addr %s257, 128
      %s262 = sadd.s32 %s260, %s261
      %s263 = smul.addr %s262, 8
      %s264 = scalar_lea.vmem %s4, %s263
      %s265 = smul.u32 32, %s20
      %p266 = scmp.lt.s32.totalorder %s19, 1
      %s267 = scalar_select %p266, %s19, 1
      %p268 = scmp.lt.s32.totalorder %s265, 31
      %s269 = scalar_select %p268, %s265, 31
      %s270 = smul.addr %s269, 4
      %s271 = smul.addr %s267, 128
      %s272 = sadd.s32 %s270, %s271
      %s273 = smul.addr %s272, 8
      %s274 = scalar_lea.vmem %s0, %s273
      %s275 = smul.u32 32, %s20
      %s276 = sadd.s32 %s20, 1
      %s277 = smul.u32 %s276, 32
      %p278 = scmp.lt.s32.totalorder %s277, 31
      %s279 = scalar_select %p278, %s277, 31
      %p280 = scmp.lt.s32.totalorder %s19, 1
      %s281 = scalar_select %p280, %s19, 1
      %p282 = scmp.lt.s32.totalorder %s279, 31
      %s283 = scalar_select %p282, %s279, 31
      %s284 = smul.addr %s283, 4
      %s285 = smul.addr %s281, 128
      %s286 = sadd.s32 %s284, %s285
      %s287 = smul.addr %s286, 8
      %s288 = scalar_lea.vmem %s1, %s287
      %s289 = sadd.s32 %s20, 1
      %s290 = smul.u32 %s289, 32
      %p291 = scmp.lt.s32.totalorder %s290, 31
      %s292 = scalar_select %p291, %s290, 31
      %s293 = smul.u32 32, %s20
      %p294 = scmp.lt.s32.totalorder %s19, 1
      %s295 = scalar_select %p294, %s19, 1
      %p296 = scmp.lt.s32.totalorder %s293, 31
      %s297 = scalar_select %p296, %s293, 31
      %s298 = smul.addr %s297, 4
      %s299 = smul.addr %s295, 128
      %s300 = sadd.s32 %s298, %s299
      %s301 = smul.addr %s300, 8
      %s302 = scalar_lea.vmem %s4, %s301
      %s303 = smul.u32 32, %s20
      %vm304 = vcmask 122880
      %305 = vst.msk [vmem:[#allocation2 + $0x20] sm:$0x1] %vm304, 0.0
      %306 = vst.msk [vmem:[#allocation2 + $0x48] sm:$0x1] %vm304, 0.0
      %307 = vst.msk [vmem:[#allocation2 + $0x70] sm:$0x1] %vm304, 0.0
      %308 = vst.msk [vmem:[#allocation2 + $0x98] sm:$0x1] %vm304, 0.0
      %309 = vst.msk [vmem:[#allocation2 + $0xc0] sm:$0x1] %vm304, 0.0
      %310 = vst.msk [vmem:[#allocation2 + $0xe8] sm:$0x1] %vm304, 0.0
      %311 = vst.msk [vmem:[#allocation2 + $0x110] sm:$0x1] %vm304, 0.0
      %312 = vst.msk [vmem:[#allocation2 + $0x138] sm:$0x1] %vm304, 0.0
      %313 = vst.msk [vmem:[#allocation2 + $0x160] sm:$0x1] %vm304, 0.0
      %314 = vst.msk [vmem:[#allocation2 + $0x188] sm:$0x1] %vm304, 0.0
      %315 = vst.msk [vmem:[#allocation2 + $0x1b0] sm:$0x1] %vm304, 0.0
      %316 = vst.msk [vmem:[#allocation2 + $0x1d8] sm:$0x1] %vm304, 0.0
      %317 = vst.msk [vmem:[#allocation2 + $0x200] sm:$0x1] %vm304, 0.0
      %318 = vst.msk [vmem:[#allocation2 + $0x228] sm:$0x1] %vm304, 0.0
      %319 = vst.msk [vmem:[#allocation2 + $0x250] sm:$0x1] %vm304, 0.0
      %320 = vst.msk [vmem:[#allocation2 + $0x278] sm:$0x1] %vm304, 0.0
      %321 = vst.msk [vmem:[#allocation2 + $0x2a0] sm:$0x1] %vm304, 0.0
      %322 = vst.msk [vmem:[#allocation2 + $0x2c8] sm:$0x1] %vm304, 0.0
      %323 = vst.msk [vmem:[#allocation2 + $0x2f0] sm:$0x1] %vm304, 0.0
      %324 = vst.msk [vmem:[#allocation2 + $0x318] sm:$0x1] %vm304, 0.0
      %325 = vst.msk [vmem:[#allocation2 + $0x340] sm:$0x1] %vm304, 0.0
      %326 = vst.msk [vmem:[#allocation2 + $0x368] sm:$0x1] %vm304, 0.0
      %327 = vst.msk [vmem:[#allocation2 + $0x390] sm:$0x1] %vm304, 0.0
      %328 = vst.msk [vmem:[#allocation2 + $0x3b8] sm:$0x1] %vm304, 0.0
      %329 = vst.msk [vmem:[#allocation2 + $0x3e0] sm:$0x1] %vm304, 0.0
      %330 = vst.msk [vmem:[#allocation2 + $0x408] sm:$0x1] %vm304, 0.0
      %331 = vst.msk [vmem:[#allocation2 + $0x430] sm:$0x1] %vm304, 0.0
      %332 = vst.msk [vmem:[#allocation2 + $0x458] sm:$0x1] %vm304, 0.0
      %333 = vst.msk [vmem:[#allocation2 + $0x480] sm:$0x1] %vm304, 0.0
      %334 = vst.msk [vmem:[#allocation2 + $0x4a8] sm:$0x1] %vm304, 0.0
      %335 = vst.msk [vmem:[#allocation2 + $0x4d0] sm:$0x1] %vm304, 0.0
      %336 = vst.msk [vmem:[#allocation2 + $0x4f8] sm:$0x1] %vm304, 0.0
      %337 = vst.msk [vmem:[#allocation2 + $0x520] sm:$0x1] %vm304, 0.0
      %s338 = sadd.s32 %s20, 1
      %p339 = scmp.lt.s32.totalorder %s338, 1
      %v340 = vld [vmem:[%s288] sm:$0xff]
      %v341 = vld [vmem:[%s288 + $0x8] sm:$0xff]
      %v342 = vld [vmem:[%s288 + $0x10] sm:$0xff]
      %v343 = vld [vmem:[%s288 + $0x18] sm:$0xff]
      %s344 = scalar_select %p339, 1, 0
      %v345 = vstv %s344
      %vm346 = vcmp.eq.s32.totalorder %v345, 1
      %v347 = vsel %vm346, %v340, 0.0
      %v348 = vsel %vm346, %v341, 0.0
      %v349 = vsel %vm346, %v342, 0.0
      %v350 = vsel %vm346, %v343, 0.0
      %s351 = scalar_lea.vmem [#allocation2], 1280
      %vm352 = vcmask 130048
      %353 = vst.msk [vmem:[%s351] sm:$0xff] %vm352, %v347
      %354 = vst.msk [vmem:[%s351 + $0x8] sm:$0xff] %vm352, %v348
      %355 = vst.msk [vmem:[%s351 + $0x10] sm:$0xff] %vm352, %v349
      %356 = vst.msk [vmem:[%s351 + $0x18] sm:$0xff] %vm352, %v350
      %v357 = vld [vmem:[%s274] sm:$0xff]
      %v358 = vld [vmem:[%s274 + $0x8] sm:$0xff]
      %v359 = vld [vmem:[%s274 + $0x10] sm:$0xff]
      %v360 = vld [vmem:[%s274 + $0x18] sm:$0xff]
      %v361 = vld [vmem:[%s274 + $0x20] sm:$0xff]
      %v362 = vld [vmem:[%s274 + $0x28] sm:$0xff]
      %v363 = vld [vmem:[%s274 + $0x30] sm:$0xff]
      %v364 = vld [vmem:[%s274 + $0x38] sm:$0xff]
      %v365 = vld [vmem:[%s274 + $0x40] sm:$0xff]
      %v366 = vld [vmem:[%s274 + $0x48] sm:$0xff]
      %v367 = vld [vmem:[%s274 + $0x50] sm:$0xff]
      %v368 = vld [vmem:[%s274 + $0x58] sm:$0xff]
      %v369 = vld [vmem:[%s274 + $0x60] sm:$0xff]
      %v370 = vld [vmem:[%s274 + $0x68] sm:$0xff]
      %v371 = vld [vmem:[%s274 + $0x70] sm:$0xff]
      %v372 = vld [vmem:[%s274 + $0x78] sm:$0xff]
      %v373 = vld [vmem:[%s274 + $0x80] sm:$0xff]
      %v374 = vld [vmem:[%s274 + $0x88] sm:$0xff]
      %v375 = vld [vmem:[%s274 + $0x90] sm:$0xff]
      %v376 = vld [vmem:[%s274 + $0x98] sm:$0xff]
      %v377 = vld [vmem:[%s274 + $0xa0] sm:$0xff]
      %v378 = vld [vmem:[%s274 + $0xa8] sm:$0xff]
      %v379 = vld [vmem:[%s274 + $0xb0] sm:$0xff]
      %v380 = vld [vmem:[%s274 + $0xb8] sm:$0xff]
      %v381 = vld [vmem:[%s274 + $0xc0] sm:$0xff]
      %v382 = vld [vmem:[%s274 + $0xc8] sm:$0xff]
      %v383 = vld [vmem:[%s274 + $0xd0] sm:$0xff]
      %v384 = vld [vmem:[%s274 + $0xd8] sm:$0xff]
      %v385 = vld [vmem:[%s274 + $0xe0] sm:$0xff]
      %v386 = vld [vmem:[%s274 + $0xe8] sm:$0xff]
      %v387 = vld [vmem:[%s274 + $0xf0] sm:$0xff]
      %v388 = vld [vmem:[%s274 + $0xf8] sm:$0xff]
      %v389 = vld [vmem:[%s274 + $0x100] sm:$0xff]
      %v390 = vld [vmem:[%s274 + $0x108] sm:$0xff]
      %v391 = vld [vmem:[%s274 + $0x110] sm:$0xff]
      %v392 = vld [vmem:[%s274 + $0x118] sm:$0xff]
      %v393 = vld [vmem:[%s274 + $0x120] sm:$0xff]
      %v394 = vld [vmem:[%s274 + $0x128] sm:$0xff]
      %v395 = vld [vmem:[%s274 + $0x130] sm:$0xff]
      %v396 = vld [vmem:[%s274 + $0x138] sm:$0xff]
      %v397 = vld [vmem:[%s274 + $0x140] sm:$0xff]
      %v398 = vld [vmem:[%s274 + $0x148] sm:$0xff]
      %v399 = vld [vmem:[%s274 + $0x150] sm:$0xff]
      %v400 = vld [vmem:[%s274 + $0x158] sm:$0xff]
      %v401 = vld [vmem:[%s274 + $0x160] sm:$0xff]
      %v402 = vld [vmem:[%s274 + $0x168] sm:$0xff]
      %v403 = vld [vmem:[%s274 + $0x170] sm:$0xff]
      %v404 = vld [vmem:[%s274 + $0x178] sm:$0xff]
      %v405 = vld [vmem:[%s274 + $0x180] sm:$0xff]
      %v406 = vld [vmem:[%s274 + $0x188] sm:$0xff]
      %v407 = vld [vmem:[%s274 + $0x190] sm:$0xff]
      %v408 = vld [vmem:[%s274 + $0x198] sm:$0xff]
      %v409 = vld [vmem:[%s274 + $0x1a0] sm:$0xff]
      %v410 = vld [vmem:[%s274 + $0x1a8] sm:$0xff]
      %v411 = vld [vmem:[%s274 + $0x1b0] sm:$0xff]
      %v412 = vld [vmem:[%s274 + $0x1b8] sm:$0xff]
      %v413 = vld [vmem:[%s274 + $0x1c0] sm:$0xff]
      %v414 = vld [vmem:[%s274 + $0x1c8] sm:$0xff]
      %v415 = vld [vmem:[%s274 + $0x1d0] sm:$0xff]
      %v416 = vld [vmem:[%s274 + $0x1d8] sm:$0xff]
      %v417 = vld [vmem:[%s274 + $0x1e0] sm:$0xff]
      %v418 = vld [vmem:[%s274 + $0x1e8] sm:$0xff]
      %v419 = vld [vmem:[%s274 + $0x1f0] sm:$0xff]
      %v420 = vld [vmem:[%s274 + $0x1f8] sm:$0xff]
      %v421 = vld [vmem:[%s274 + $0x200] sm:$0xff]
      %v422 = vld [vmem:[%s274 + $0x208] sm:$0xff]
      %v423 = vld [vmem:[%s274 + $0x210] sm:$0xff]
      %v424 = vld [vmem:[%s274 + $0x218] sm:$0xff]
      %v425 = vld [vmem:[%s274 + $0x220] sm:$0xff]
      %v426 = vld [vmem:[%s274 + $0x228] sm:$0xff]
      %v427 = vld [vmem:[%s274 + $0x230] sm:$0xff]
      %v428 = vld [vmem:[%s274 + $0x238] sm:$0xff]
      %v429 = vld [vmem:[%s274 + $0x240] sm:$0xff]
      %v430 = vld [vmem:[%s274 + $0x248] sm:$0xff]
      %v431 = vld [vmem:[%s274 + $0x250] sm:$0xff]
      %v432 = vld [vmem:[%s274 + $0x258] sm:$0xff]
      %v433 = vld [vmem:[%s274 + $0x260] sm:$0xff]
      %v434 = vld [vmem:[%s274 + $0x268] sm:$0xff]
      %v435 = vld [vmem:[%s274 + $0x270] sm:$0xff]
      %v436 = vld [vmem:[%s274 + $0x278] sm:$0xff]
      %v437 = vld [vmem:[%s274 + $0x280] sm:$0xff]
      %v438 = vld [vmem:[%s274 + $0x288] sm:$0xff]
      %v439 = vld [vmem:[%s274 + $0x290] sm:$0xff]
      %v440 = vld [vmem:[%s274 + $0x298] sm:$0xff]
      %v441 = vld [vmem:[%s274 + $0x2a0] sm:$0xff]
      %v442 = vld [vmem:[%s274 + $0x2a8] sm:$0xff]
      %v443 = vld [vmem:[%s274 + $0x2b0] sm:$0xff]
      %v444 = vld [vmem:[%s274 + $0x2b8] sm:$0xff]
      %v445 = vld [vmem:[%s274 + $0x2c0] sm:$0xff]
      %v446 = vld [vmem:[%s274 + $0x2c8] sm:$0xff]
      %v447 = vld [vmem:[%s274 + $0x2d0] sm:$0xff]
      %v448 = vld [vmem:[%s274 + $0x2d8] sm:$0xff]
      %v449 = vld [vmem:[%s274 + $0x2e0] sm:$0xff]
      %v450 = vld [vmem:[%s274 + $0x2e8] sm:$0xff]
      %v451 = vld [vmem:[%s274 + $0x2f0] sm:$0xff]
      %v452 = vld [vmem:[%s274 + $0x2f8] sm:$0xff]
      %v453 = vld [vmem:[%s274 + $0x300] sm:$0xff]
      %v454 = vld [vmem:[%s274 + $0x308] sm:$0xff]
      %v455 = vld [vmem:[%s274 + $0x310] sm:$0xff]
      %v456 = vld [vmem:[%s274 + $0x318] sm:$0xff]
      %v457 = vld [vmem:[%s274 + $0x320] sm:$0xff]
      %v458 = vld [vmem:[%s274 + $0x328] sm:$0xff]
      %v459 = vld [vmem:[%s274 + $0x330] sm:$0xff]
      %v460 = vld [vmem:[%s274 + $0x338] sm:$0xff]
      %v461 = vld [vmem:[%s274 + $0x340] sm:$0xff]
      %v462 = vld [vmem:[%s274 + $0x348] sm:$0xff]
      %v463 = vld [vmem:[%s274 + $0x350] sm:$0xff]
      %v464 = vld [vmem:[%s274 + $0x358] sm:$0xff]
      %v465 = vld [vmem:[%s274 + $0x360] sm:$0xff]
      %v466 = vld [vmem:[%s274 + $0x368] sm:$0xff]
      %v467 = vld [vmem:[%s274 + $0x370] sm:$0xff]
      %v468 = vld [vmem:[%s274 + $0x378] sm:$0xff]
      %v469 = vld [vmem:[%s274 + $0x380] sm:$0xff]
      %v470 = vld [vmem:[%s274 + $0x388] sm:$0xff]
      %v471 = vld [vmem:[%s274 + $0x390] sm:$0xff]
      %v472 = vld [vmem:[%s274 + $0x398] sm:$0xff]
      %v473 = vld [vmem:[%s274 + $0x3a0] sm:$0xff]
      %v474 = vld [vmem:[%s274 + $0x3a8] sm:$0xff]
      %v475 = vld [vmem:[%s274 + $0x3b0] sm:$0xff]
      %v476 = vld [vmem:[%s274 + $0x3b8] sm:$0xff]
      %v477 = vld [vmem:[%s274 + $0x3c0] sm:$0xff]
      %v478 = vld [vmem:[%s274 + $0x3c8] sm:$0xff]
      %v479 = vld [vmem:[%s274 + $0x3d0] sm:$0xff]
      %v480 = vld [vmem:[%s274 + $0x3d8] sm:$0xff]
      %v481 = vld [vmem:[%s274 + $0x3e0] sm:$0xff]
      %v482 = vld [vmem:[%s274 + $0x3e8] sm:$0xff]
      %v483 = vld [vmem:[%s274 + $0x3f0] sm:$0xff]
      %v484 = vld [vmem:[%s274 + $0x3f8] sm:$0xff]
      %485 = vst.msk [vmem:[#allocation2] sm:$0xff] %vm352, %v357
      %486 = vst.msk [vmem:[#allocation2 + $0x8] sm:$0xff] %vm352, %v358
      %487 = vst.msk [vmem:[#allocation2 + $0x10] sm:$0xff] %vm352, %v359
      %488 = vst.msk [vmem:[#allocation2 + $0x18] sm:$0xff] %vm352, %v360
      %489 = vst.msk [vmem:[#allocation2 + $0x28] sm:$0xff] %vm352, %v361
      %490 = vst.msk [vmem:[#allocation2 + $0x30] sm:$0xff] %vm352, %v362
      %491 = vst.msk [vmem:[#allocation2 + $0x38] sm:$0xff] %vm352, %v363
      %492 = vst.msk [vmem:[#allocation2 + $0x40] sm:$0xff] %vm352, %v364
      %493 = vst.msk [vmem:[#allocation2 + $0x50] sm:$0xff] %vm352, %v365
      %494 = vst.msk [vmem:[#allocation2 + $0x58] sm:$0xff] %vm352, %v366
      %495 = vst.msk [vmem:[#allocation2 + $0x60] sm:$0xff] %vm352, %v367
      %496 = vst.msk [vmem:[#allocation2 + $0x68] sm:$0xff] %vm352, %v368
      %497 = vst.msk [vmem:[#allocation2 + $0x78] sm:$0xff] %vm352, %v369
      %498 = vst.msk [vmem:[#allocation2 + $0x80] sm:$0xff] %vm352, %v370
      %499 = vst.msk [vmem:[#allocation2 + $0x88] sm:$0xff] %vm352, %v371
      %500 = vst.msk [vmem:[#allocation2 + $0x90] sm:$0xff] %vm352, %v372
      %501 = vst.msk [vmem:[#allocation2 + $0xa0] sm:$0xff] %vm352, %v373
      %502 = vst.msk [vmem:[#allocation2 + $0xa8] sm:$0xff] %vm352, %v374
      %503 = vst.msk [vmem:[#allocation2 + $0xb0] sm:$0xff] %vm352, %v375
      %504 = vst.msk [vmem:[#allocation2 + $0xb8] sm:$0xff] %vm352, %v376
      %505 = vst.msk [vmem:[#allocation2 + $0xc8] sm:$0xff] %vm352, %v377
      %506 = vst.msk [vmem:[#allocation2 + $0xd0] sm:$0xff] %vm352, %v378
      %507 = vst.msk [vmem:[#allocation2 + $0xd8] sm:$0xff] %vm352, %v379
      %508 = vst.msk [vmem:[#allocation2 + $0xe0] sm:$0xff] %vm352, %v380
      %509 = vst.msk [vmem:[#allocation2 + $0xf0] sm:$0xff] %vm352, %v381
      %510 = vst.msk [vmem:[#allocation2 + $0xf8] sm:$0xff] %vm352, %v382
      %511 = vst.msk [vmem:[#allocation2 + $0x100] sm:$0xff] %vm352, %v383
      %512 = vst.msk [vmem:[#allocation2 + $0x108] sm:$0xff] %vm352, %v384
      %513 = vst.msk [vmem:[#allocation2 + $0x118] sm:$0xff] %vm352, %v385
      %514 = vst.msk [vmem:[#allocation2 + $0x120] sm:$0xff] %vm352, %v386
      %515 = vst.msk [vmem:[#allocation2 + $0x128] sm:$0xff] %vm352, %v387
      %516 = vst.msk [vmem:[#allocation2 + $0x130] sm:$0xff] %vm352, %v388
      %517 = vst.msk [vmem:[#allocation2 + $0x140] sm:$0xff] %vm352, %v389
      %518 = vst.msk [vmem:[#allocation2 + $0x148] sm:$0xff] %vm352, %v390
      %519 = vst.msk [vmem:[#allocation2 + $0x150] sm:$0xff] %vm352, %v391
      %520 = vst.msk [vmem:[#allocation2 + $0x158] sm:$0xff] %vm352, %v392
      %521 = vst.msk [vmem:[#allocation2 + $0x168] sm:$0xff] %vm352, %v393
      %522 = vst.msk [vmem:[#allocation2 + $0x170] sm:$0xff] %vm352, %v394
      %523 = vst.msk [vmem:[#allocation2 + $0x178] sm:$0xff] %vm352, %v395
      %524 = vst.msk [vmem:[#allocation2 + $0x180] sm:$0xff] %vm352, %v396
      %525 = vst.msk [vmem:[#allocation2 + $0x190] sm:$0xff] %vm352, %v397
      %526 = vst.msk [vmem:[#allocation2 + $0x198] sm:$0xff] %vm352, %v398
      %527 = vst.msk [vmem:[#allocation2 + $0x1a0] sm:$0xff] %vm352, %v399
      %528 = vst.msk [vmem:[#allocation2 + $0x1a8] sm:$0xff] %vm352, %v400
      %529 = vst.msk [vmem:[#allocation2 + $0x1b8] sm:$0xff] %vm352, %v401
      %530 = vst.msk [vmem:[#allocation2 + $0x1c0] sm:$0xff] %vm352, %v402
      %531 = vst.msk [vmem:[#allocation2 + $0x1c8] sm:$0xff] %vm352, %v403
      %532 = vst.msk [vmem:[#allocation2 + $0x1d0] sm:$0xff] %vm352, %v404
      %533 = vst.msk [vmem:[#allocation2 + $0x1e0] sm:$0xff] %vm352, %v405
      %534 = vst.msk [vmem:[#allocation2 + $0x1e8] sm:$0xff] %vm352, %v406
      %535 = vst.msk [vmem:[#allocation2 + $0x1f0] sm:$0xff] %vm352, %v407
      %536 = vst.msk [vmem:[#allocation2 + $0x1f8] sm:$0xff] %vm352, %v408
      %537 = vst.msk [vmem:[#allocation2 + $0x208] sm:$0xff] %vm352, %v409
      %538 = vst.msk [vmem:[#allocation2 + $0x210] sm:$0xff] %vm352, %v410
      %539 = vst.msk [vmem:[#allocation2 + $0x218] sm:$0xff] %vm352, %v411
      %540 = vst.msk [vmem:[#allocation2 + $0x220] sm:$0xff] %vm352, %v412
      %541 = vst.msk [vmem:[#allocation2 + $0x230] sm:$0xff] %vm352, %v413
      %542 = vst.msk [vmem:[#allocation2 + $0x238] sm:$0xff] %vm352, %v414
      %543 = vst.msk [vmem:[#allocation2 + $0x240] sm:$0xff] %vm352, %v415
      %544 = vst.msk [vmem:[#allocation2 + $0x248] sm:$0xff] %vm352, %v416
      %545 = vst.msk [vmem:[#allocation2 + $0x258] sm:$0xff] %vm352, %v417
      %546 = vst.msk [vmem:[#allocation2 + $0x260] sm:$0xff] %vm352, %v418
      %547 = vst.msk [vmem:[#allocation2 + $0x268] sm:$0xff] %vm352, %v419
      %548 = vst.msk [vmem:[#allocation2 + $0x270] sm:$0xff] %vm352, %v420
      %549 = vst.msk [vmem:[#allocation2 + $0x280] sm:$0xff] %vm352, %v421
      %550 = vst.msk [vmem:[#allocation2 + $0x288] sm:$0xff] %vm352, %v422
      %551 = vst.msk [vmem:[#allocation2 + $0x290] sm:$0xff] %vm352, %v423
      %552 = vst.msk [vmem:[#allocation2 + $0x298] sm:$0xff] %vm352, %v424
      %553 = vst.msk [vmem:[#allocation2 + $0x2a8] sm:$0xff] %vm352, %v425
      %554 = vst.msk [vmem:[#allocation2 + $0x2b0] sm:$0xff] %vm352, %v426
      %555 = vst.msk [vmem:[#allocation2 + $0x2b8] sm:$0xff] %vm352, %v427
      %556 = vst.msk [vmem:[#allocation2 + $0x2c0] sm:$0xff] %vm352, %v428
      %557 = vst.msk [vmem:[#allocation2 + $0x2d0] sm:$0xff] %vm352, %v429
      %558 = vst.msk [vmem:[#allocation2 + $0x2d8] sm:$0xff] %vm352, %v430
      %559 = vst.msk [vmem:[#allocation2 + $0x2e0] sm:$0xff] %vm352, %v431
      %560 = vst.msk [vmem:[#allocation2 + $0x2e8] sm:$0xff] %vm352, %v432
      %561 = vst.msk [vmem:[#allocation2 + $0x2f8] sm:$0xff] %vm352, %v433
      %562 = vst.msk [vmem:[#allocation2 + $0x300] sm:$0xff] %vm352, %v434
      %563 = vst.msk [vmem:[#allocation2 + $0x308] sm:$0xff] %vm352, %v435
      %564 = vst.msk [vmem:[#allocation2 + $0x310] sm:$0xff] %vm352, %v436
      %565 = vst.msk [vmem:[#allocation2 + $0x320] sm:$0xff] %vm352, %v437
      %566 = vst.msk [vmem:[#allocation2 + $0x328] sm:$0xff] %vm352, %v438
      %567 = vst.msk [vmem:[#allocation2 + $0x330] sm:$0xff] %vm352, %v439
      %568 = vst.msk [vmem:[#allocation2 + $0x338] sm:$0xff] %vm352, %v440
      %569 = vst.msk [vmem:[#allocation2 + $0x348] sm:$0xff] %vm352, %v441
      %570 = vst.msk [vmem:[#allocation2 + $0x350] sm:$0xff] %vm352, %v442
      %571 = vst.msk [vmem:[#allocation2 + $0x358] sm:$0xff] %vm352, %v443
      %572 = vst.msk [vmem:[#allocation2 + $0x360] sm:$0xff] %vm352, %v444
      %573 = vst.msk [vmem:[#allocation2 + $0x370] sm:$0xff] %vm352, %v445
      %574 = vst.msk [vmem:[#allocation2 + $0x378] sm:$0xff] %vm352, %v446
      %575 = vst.msk [vmem:[#allocation2 + $0x380] sm:$0xff] %vm352, %v447
      %576 = vst.msk [vmem:[#allocation2 + $0x388] sm:$0xff] %vm352, %v448
      %577 = vst.msk [vmem:[#allocation2 + $0x398] sm:$0xff] %vm352, %v449
      %578 = vst.msk [vmem:[#allocation2 + $0x3a0] sm:$0xff] %vm352, %v450
      %579 = vst.msk [vmem:[#allocation2 + $0x3a8] sm:$0xff] %vm352, %v451
      %580 = vst.msk [vmem:[#allocation2 + $0x3b0] sm:$0xff] %vm352, %v452
      %581 = vst.msk [vmem:[#allocation2 + $0x3c0] sm:$0xff] %vm352, %v453
      %582 = vst.msk [vmem:[#allocation2 + $0x3c8] sm:$0xff] %vm352, %v454
      %583 = vst.msk [vmem:[#allocation2 + $0x3d0] sm:$0xff] %vm352, %v455
      %584 = vst.msk [vmem:[#allocation2 + $0x3d8] sm:$0xff] %vm352, %v456
      %585 = vst.msk [vmem:[#allocation2 + $0x3e8] sm:$0xff] %vm352, %v457
      %586 = vst.msk [vmem:[#allocation2 + $0x3f0] sm:$0xff] %vm352, %v458
      %587 = vst.msk [vmem:[#allocation2 + $0x3f8] sm:$0xff] %vm352, %v459
      %588 = vst.msk [vmem:[#allocation2 + $0x400] sm:$0xff] %vm352, %v460
      %589 = vst.msk [vmem:[#allocation2 + $0x410] sm:$0xff] %vm352, %v461
      %590 = vst.msk [vmem:[#allocation2 + $0x418] sm:$0xff] %vm352, %v462
      %591 = vst.msk [vmem:[#allocation2 + $0x420] sm:$0xff] %vm352, %v463
      %592 = vst.msk [vmem:[#allocation2 + $0x428] sm:$0xff] %vm352, %v464
      %593 = vst.msk [vmem:[#allocation2 + $0x438] sm:$0xff] %vm352, %v465
      %594 = vst.msk [vmem:[#allocation2 + $0x440] sm:$0xff] %vm352, %v466
      %595 = vst.msk [vmem:[#allocation2 + $0x448] sm:$0xff] %vm352, %v467
      %596 = vst.msk [vmem:[#allocation2 + $0x450] sm:$0xff] %vm352, %v468
      %597 = vst.msk [vmem:[#allocation2 + $0x460] sm:$0xff] %vm352, %v469
      %598 = vst.msk [vmem:[#allocation2 + $0x468] sm:$0xff] %vm352, %v470
      %599 = vst.msk [vmem:[#allocation2 + $0x470] sm:$0xff] %vm352, %v471
      %600 = vst.msk [vmem:[#allocation2 + $0x478] sm:$0xff] %vm352, %v472
      %601 = vst.msk [vmem:[#allocation2 + $0x488] sm:$0xff] %vm352, %v473
      %602 = vst.msk [vmem:[#allocation2 + $0x490] sm:$0xff] %vm352, %v474
      %603 = vst.msk [vmem:[#allocation2 + $0x498] sm:$0xff] %vm352, %v475
      %604 = vst.msk [vmem:[#allocation2 + $0x4a0] sm:$0xff] %vm352, %v476
      %605 = vst.msk [vmem:[#allocation2 + $0x4b0] sm:$0xff] %vm352, %v477
      %606 = vst.msk [vmem:[#allocation2 + $0x4b8] sm:$0xff] %vm352, %v478
      %607 = vst.msk [vmem:[#allocation2 + $0x4c0] sm:$0xff] %vm352, %v479
      %608 = vst.msk [vmem:[#allocation2 + $0x4c8] sm:$0xff] %vm352, %v480
      %609 = vst.msk [vmem:[#allocation2 + $0x4d8] sm:$0xff] %vm352, %v481
      %610 = vst.msk [vmem:[#allocation2 + $0x4e0] sm:$0xff] %vm352, %v482
      %611 = vst.msk [vmem:[#allocation2 + $0x4e8] sm:$0xff] %vm352, %v483
      %612 = vst.msk [vmem:[#allocation2 + $0x4f0] sm:$0xff] %vm352, %v484
      %v613 = vld [vmem:[#allocation2] sm:$0xff]
      %v614 = vld [vmem:[#allocation2 + $0x8] sm:$0xff]
      %v615 = vld [vmem:[#allocation2 + $0x10] sm:$0xff]
      %v616 = vld [vmem:[#allocation2 + $0x18] sm:$0xff]
      %v617 = vld [vmem:[#allocation2 + $0x28] sm:$0xff]
      %v618 = vld [vmem:[#allocation2 + $0x30] sm:$0xff]
      %v619 = vld [vmem:[#allocation2 + $0x38] sm:$0xff]
      %v620 = vld [vmem:[#allocation2 + $0x40] sm:$0xff]
      %v621 = vld [vmem:[#allocation2 + $0x50] sm:$0xff]
      %v622 = vld [vmem:[#allocation2 + $0x58] sm:$0xff]
      %v623 = vld [vmem:[#allocation2 + $0x60] sm:$0xff]
      %v624 = vld [vmem:[#allocation2 + $0x68] sm:$0xff]
      %v625 = vld [vmem:[#allocation2 + $0x78] sm:$0xff]
      %v626 = vld [vmem:[#allocation2 + $0x80] sm:$0xff]
      %v627 = vld [vmem:[#allocation2 + $0x88] sm:$0xff]
      %v628 = vld [vmem:[#allocation2 + $0x90] sm:$0xff]
      %v629 = vld [vmem:[#allocation2 + $0xa0] sm:$0xff]
      %v630 = vld [vmem:[#allocation2 + $0xa8] sm:$0xff]
      %v631 = vld [vmem:[#allocation2 + $0xb0] sm:$0xff]
      %v632 = vld [vmem:[#allocation2 + $0xb8] sm:$0xff]
      %v633 = vld [vmem:[#allocation2 + $0xc8] sm:$0xff]
      %v634 = vld [vmem:[#allocation2 + $0xd0] sm:$0xff]
      %v635 = vld [vmem:[#allocation2 + $0xd8] sm:$0xff]
      %v636 = vld [vmem:[#allocation2 + $0xe0] sm:$0xff]
      %v637 = vld [vmem:[#allocation2 + $0xf0] sm:$0xff]
      %v638 = vld [vmem:[#allocation2 + $0xf8] sm:$0xff]
      %v639 = vld [vmem:[#allocation2 + $0x100] sm:$0xff]
      %v640 = vld [vmem:[#allocation2 + $0x108] sm:$0xff]
      %v641 = vld [vmem:[#allocation2 + $0x118] sm:$0xff]
      %v642 = vld [vmem:[#allocation2 + $0x120] sm:$0xff]
      %v643 = vld [vmem:[#allocation2 + $0x128] sm:$0xff]
      %v644 = vld [vmem:[#allocation2 + $0x130] sm:$0xff]
      %v645 = vld [vmem:[#allocation2 + $0x140] sm:$0xff]
      %v646 = vld [vmem:[#allocation2 + $0x148] sm:$0xff]
      %v647 = vld [vmem:[#allocation2 + $0x150] sm:$0xff]
      %v648 = vld [vmem:[#allocation2 + $0x158] sm:$0xff]
      %v649 = vld [vmem:[#allocation2 + $0x168] sm:$0xff]
      %v650 = vld [vmem:[#allocation2 + $0x170] sm:$0xff]
      %v651 = vld [vmem:[#allocation2 + $0x178] sm:$0xff]
      %v652 = vld [vmem:[#allocation2 + $0x180] sm:$0xff]
      %v653 = vld [vmem:[#allocation2 + $0x190] sm:$0xff]
      %v654 = vld [vmem:[#allocation2 + $0x198] sm:$0xff]
      %v655 = vld [vmem:[#allocation2 + $0x1a0] sm:$0xff]
      %v656 = vld [vmem:[#allocation2 + $0x1a8] sm:$0xff]
      %v657 = vld [vmem:[#allocation2 + $0x1b8] sm:$0xff]
      %v658 = vld [vmem:[#allocation2 + $0x1c0] sm:$0xff]
      %v659 = vld [vmem:[#allocation2 + $0x1c8] sm:$0xff]
      %v660 = vld [vmem:[#allocation2 + $0x1d0] sm:$0xff]
      %v661 = vld [vmem:[#allocation2 + $0x1e0] sm:$0xff]
      %v662 = vld [vmem:[#allocation2 + $0x1e8] sm:$0xff]
      %v663 = vld [vmem:[#allocation2 + $0x1f0] sm:$0xff]
      %v664 = vld [vmem:[#allocation2 + $0x1f8] sm:$0xff]
      %v665 = vld [vmem:[#allocation2 + $0x208] sm:$0xff]
      %v666 = vld [vmem:[#allocation2 + $0x210] sm:$0xff]
      %v667 = vld [vmem:[#allocation2 + $0x218] sm:$0xff]
      %v668 = vld [vmem:[#allocation2 + $0x220] sm:$0xff]
      %v669 = vld [vmem:[#allocation2 + $0x230] sm:$0xff]
      %v670 = vld [vmem:[#allocation2 + $0x238] sm:$0xff]
      %v671 = vld [vmem:[#allocation2 + $0x240] sm:$0xff]
      %v672 = vld [vmem:[#allocation2 + $0x248] sm:$0xff]
      %v673 = vld [vmem:[#allocation2 + $0x258] sm:$0xff]
      %v674 = vld [vmem:[#allocation2 + $0x260] sm:$0xff]
      %v675 = vld [vmem:[#allocation2 + $0x268] sm:$0xff]
      %v676 = vld [vmem:[#allocation2 + $0x270] sm:$0xff]
      %v677 = vld [vmem:[#allocation2 + $0x280] sm:$0xff]
      %v678 = vld [vmem:[#allocation2 + $0x288] sm:$0xff]
      %v679 = vld [vmem:[#allocation2 + $0x290] sm:$0xff]
      %v680 = vld [vmem:[#allocation2 + $0x298] sm:$0xff]
      %v681 = vld [vmem:[#allocation2 + $0x2a8] sm:$0xff]
      %v682 = vld [vmem:[#allocation2 + $0x2b0] sm:$0xff]
      %v683 = vld [vmem:[#allocation2 + $0x2b8] sm:$0xff]
      %v684 = vld [vmem:[#allocation2 + $0x2c0] sm:$0xff]
      %v685 = vld [vmem:[#allocation2 + $0x2d0] sm:$0xff]
      %v686 = vld [vmem:[#allocation2 + $0x2d8] sm:$0xff]
      %v687 = vld [vmem:[#allocation2 + $0x2e0] sm:$0xff]
      %v688 = vld [vmem:[#allocation2 + $0x2e8] sm:$0xff]
      %v689 = vld [vmem:[#allocation2 + $0x2f8] sm:$0xff]
      %v690 = vld [vmem:[#allocation2 + $0x300] sm:$0xff]
      %v691 = vld [vmem:[#allocation2 + $0x308] sm:$0xff]
      %v692 = vld [vmem:[#allocation2 + $0x310] sm:$0xff]
      %v693 = vld [vmem:[#allocation2 + $0x320] sm:$0xff]
      %v694 = vld [vmem:[#allocation2 + $0x328] sm:$0xff]
      %v695 = vld [vmem:[#allocation2 + $0x330] sm:$0xff]
      %v696 = vld [vmem:[#allocation2 + $0x338] sm:$0xff]
      %v697 = vld [vmem:[#allocation2 + $0x348] sm:$0xff]
      %v698 = vld [vmem:[#allocation2 + $0x350] sm:$0xff]
      %v699 = vld [vmem:[#allocation2 + $0x358] sm:$0xff]
      %v700 = vld [vmem:[#allocation2 + $0x360] sm:$0xff]
      %v701 = vld [vmem:[#allocation2 + $0x370] sm:$0xff]
      %v702 = vld [vmem:[#allocation2 + $0x378] sm:$0xff]
      %v703 = vld [vmem:[#allocation2 + $0x380] sm:$0xff]
      %v704 = vld [vmem:[#allocation2 + $0x388] sm:$0xff]
      %v705 = vld [vmem:[#allocation2 + $0x398] sm:$0xff]
      %v706 = vld [vmem:[#allocation2 + $0x3a0] sm:$0xff]
      %v707 = vld [vmem:[#allocation2 + $0x3a8] sm:$0xff]
      %v708 = vld [vmem:[#allocation2 + $0x3b0] sm:$0xff]
      %v709 = vld [vmem:[#allocation2 + $0x3c0] sm:$0xff]
      %v710 = vld [vmem:[#allocation2 + $0x3c8] sm:$0xff]
      %v711 = vld [vmem:[#allocation2 + $0x3d0] sm:$0xff]
      %v712 = vld [vmem:[#allocation2 + $0x3d8] sm:$0xff]
      %v713 = vld [vmem:[#allocation2 + $0x3e8] sm:$0xff]
      %v714 = vld [vmem:[#allocation2 + $0x3f0] sm:$0xff]
      %v715 = vld [vmem:[#allocation2 + $0x3f8] sm:$0xff]
      %v716 = vld [vmem:[#allocation2 + $0x400] sm:$0xff]
      %v717 = vld [vmem:[#allocation2 + $0x410] sm:$0xff]
      %v718 = vld [vmem:[#allocation2 + $0x418] sm:$0xff]
      %v719 = vld [vmem:[#allocation2 + $0x420] sm:$0xff]
      %v720 = vld [vmem:[#allocation2 + $0x428] sm:$0xff]
      %v721 = vld [vmem:[#allocation2 + $0x438] sm:$0xff]
      %v722 = vld [vmem:[#allocation2 + $0x440] sm:$0xff]
      %v723 = vld [vmem:[#allocation2 + $0x448] sm:$0xff]
      %v724 = vld [vmem:[#allocation2 + $0x450] sm:$0xff]
      %v725 = vld [vmem:[#allocation2 + $0x460] sm:$0xff]
      %v726 = vld [vmem:[#allocation2 + $0x468] sm:$0xff]
      %v727 = vld [vmem:[#allocation2 + $0x470] sm:$0xff]
      %v728 = vld [vmem:[#allocation2 + $0x478] sm:$0xff]
      %v729 = vld [vmem:[#allocation2 + $0x488] sm:$0xff]
      %v730 = vld [vmem:[#allocation2 + $0x490] sm:$0xff]
      %v731 = vld [vmem:[#allocation2 + $0x498] sm:$0xff]
      %v732 = vld [vmem:[#allocation2 + $0x4a0] sm:$0xff]
      %v733 = vld [vmem:[#allocation2 + $0x4b0] sm:$0xff]
      %v734 = vld [vmem:[#allocation2 + $0x4b8] sm:$0xff]
      %v735 = vld [vmem:[#allocation2 + $0x4c0] sm:$0xff]
      %v736 = vld [vmem:[#allocation2 + $0x4c8] sm:$0xff]
      %v737 = vld [vmem:[#allocation2 + $0x4d8] sm:$0xff]
      %v738 = vld [vmem:[#allocation2 + $0x4e0] sm:$0xff]
      %v739 = vld [vmem:[#allocation2 + $0x4e8] sm:$0xff]
      %v740 = vld [vmem:[#allocation2 + $0x4f0] sm:$0xff]
      %v741 = vld [vmem:[%s2] sm:$0xff]
      %v742 = vld [vmem:[%s2 + $0x8] sm:$0xff]
      %v743 = vld [vmem:[#allocation2 + $0x1] sm:$0xff]
      %v744 = vld [vmem:[#allocation2 + $0x9] sm:$0xff]
      %v745 = vld [vmem:[#allocation2 + $0x11] sm:$0xff]
      %v746 = vld [vmem:[#allocation2 + $0x19] sm:$0xff]
      %v747 = vld [vmem:[#allocation2 + $0x29] sm:$0xff]
      %v748 = vld [vmem:[#allocation2 + $0x31] sm:$0xff]
      %v749 = vld [vmem:[#allocation2 + $0x39] sm:$0xff]
      %v750 = vld [vmem:[#allocation2 + $0x41] sm:$0xff]
      %v751 = vld [vmem:[#allocation2 + $0x51] sm:$0xff]
      %v752 = vld [vmem:[#allocation2 + $0x59] sm:$0xff]
      %v753 = vld [vmem:[#allocation2 + $0x61] sm:$0xff]
      %v754 = vld [vmem:[#allocation2 + $0x69] sm:$0xff]
      %v755 = vld [vmem:[#allocation2 + $0x79] sm:$0xff]
      %v756 = vld [vmem:[#allocation2 + $0x81] sm:$0xff]
      %v757 = vld [vmem:[#allocation2 + $0x89] sm:$0xff]
      %v758 = vld [vmem:[#allocation2 + $0x91] sm:$0xff]
      %v759 = vld [vmem:[#allocation2 + $0xa1] sm:$0xff]
      %v760 = vld [vmem:[#allocation2 + $0xa9] sm:$0xff]
      %v761 = vld [vmem:[#allocation2 + $0xb1] sm:$0xff]
      %v762 = vld [vmem:[#allocation2 + $0xb9] sm:$0xff]
      %v763 = vld [vmem:[#allocation2 + $0xc9] sm:$0xff]
      %v764 = vld [vmem:[#allocation2 + $0xd1] sm:$0xff]
      %v765 = vld [vmem:[#allocation2 + $0xd9] sm:$0xff]
      %v766 = vld [vmem:[#allocation2 + $0xe1] sm:$0xff]
      %v767 = vld [vmem:[#allocation2 + $0xf1] sm:$0xff]
      %v768 = vld [vmem:[#allocation2 + $0xf9] sm:$0xff]
      %v769 = vld [vmem:[#allocation2 + $0x101] sm:$0xff]
      %v770 = vld [vmem:[#allocation2 + $0x109] sm:$0xff]
      %v771 = vld [vmem:[#allocation2 + $0x119] sm:$0xff]
      %v772 = vld [vmem:[#allocation2 + $0x121] sm:$0xff]
      %v773 = vld [vmem:[#allocation2 + $0x129] sm:$0xff]
      %v774 = vld [vmem:[#allocation2 + $0x131] sm:$0xff]
      %v775 = vld [vmem:[#allocation2 + $0x141] sm:$0xff]
      %v776 = vld [vmem:[#allocation2 + $0x149] sm:$0xff]
      %v777 = vld [vmem:[#allocation2 + $0x151] sm:$0xff]
      %v778 = vld [vmem:[#allocation2 + $0x159] sm:$0xff]
      %v779 = vld [vmem:[#allocation2 + $0x169] sm:$0xff]
      %v780 = vld [vmem:[#allocation2 + $0x171] sm:$0xff]
      %v781 = vld [vmem:[#allocation2 + $0x179] sm:$0xff]
      %v782 = vld [vmem:[#allocation2 + $0x181] sm:$0xff]
      %v783 = vld [vmem:[#allocation2 + $0x191] sm:$0xff]
      %v784 = vld [vmem:[#allocation2 + $0x199] sm:$0xff]
      %v785 = vld [vmem:[#allocation2 + $0x1a1] sm:$0xff]
      %v786 = vld [vmem:[#allocation2 + $0x1a9] sm:$0xff]
      %v787 = vld [vmem:[#allocation2 + $0x1b9] sm:$0xff]
      %v788 = vld [vmem:[#allocation2 + $0x1c1] sm:$0xff]
      %v789 = vld [vmem:[#allocation2 + $0x1c9] sm:$0xff]
      %v790 = vld [vmem:[#allocation2 + $0x1d1] sm:$0xff]
      %v791 = vld [vmem:[#allocation2 + $0x1e1] sm:$0xff]
      %v792 = vld [vmem:[#allocation2 + $0x1e9] sm:$0xff]
      %v793 = vld [vmem:[#allocation2 + $0x1f1] sm:$0xff]
      %v794 = vld [vmem:[#allocation2 + $0x1f9] sm:$0xff]
      %v795 = vld [vmem:[#allocation2 + $0x209] sm:$0xff]
      %v796 = vld [vmem:[#allocation2 + $0x211] sm:$0xff]
      %v797 = vld [vmem:[#allocation2 + $0x219] sm:$0xff]
      %v798 = vld [vmem:[#allocation2 + $0x221] sm:$0xff]
      %v799 = vld [vmem:[#allocation2 + $0x231] sm:$0xff]
      %v800 = vld [vmem:[#allocation2 + $0x239] sm:$0xff]
      %v801 = vld [vmem:[#allocation2 + $0x241] sm:$0xff]
      %v802 = vld [vmem:[#allocation2 + $0x249] sm:$0xff]
      %v803 = vld [vmem:[#allocation2 + $0x259] sm:$0xff]
      %v804 = vld [vmem:[#allocation2 + $0x261] sm:$0xff]
      %v805 = vld [vmem:[#allocation2 + $0x269] sm:$0xff]
      %v806 = vld [vmem:[#allocation2 + $0x271] sm:$0xff]
      %v807 = vld [vmem:[#allocation2 + $0x281] sm:$0xff]
      %v808 = vld [vmem:[#allocation2 + $0x289] sm:$0xff]
      %v809 = vld [vmem:[#allocation2 + $0x291] sm:$0xff]
      %v810 = vld [vmem:[#allocation2 + $0x299] sm:$0xff]
      %v811 = vld [vmem:[#allocation2 + $0x2a9] sm:$0xff]
      %v812 = vld [vmem:[#allocation2 + $0x2b1] sm:$0xff]
      %v813 = vld [vmem:[#allocation2 + $0x2b9] sm:$0xff]
      %v814 = vld [vmem:[#allocation2 + $0x2c1] sm:$0xff]
      %v815 = vld [vmem:[#allocation2 + $0x2d1] sm:$0xff]
      %v816 = vld [vmem:[#allocation2 + $0x2d9] sm:$0xff]
      %v817 = vld [vmem:[#allocation2 + $0x2e1] sm:$0xff]
      %v818 = vld [vmem:[#allocation2 + $0x2e9] sm:$0xff]
      %v819 = vld [vmem:[#allocation2 + $0x2f9] sm:$0xff]
      %v820 = vld [vmem:[#allocation2 + $0x301] sm:$0xff]
      %v821 = vld [vmem:[#allocation2 + $0x309] sm:$0xff]
      %v822 = vld [vmem:[#allocation2 + $0x311] sm:$0xff]
      %v823 = vld [vmem:[#allocation2 + $0x321] sm:$0xff]
      %v824 = vld [vmem:[#allocation2 + $0x329] sm:$0xff]
      %v825 = vld [vmem:[#allocation2 + $0x331] sm:$0xff]
      %v826 = vld [vmem:[#allocation2 + $0x339] sm:$0xff]
      %v827 = vld [vmem:[#allocation2 + $0x349] sm:$0xff]
      %v828 = vld [vmem:[#allocation2 + $0x351] sm:$0xff]
      %v829 = vld [vmem:[#allocation2 + $0x359] sm:$0xff]
      %v830 = vld [vmem:[#allocation2 + $0x361] sm:$0xff]
      %v831 = vld [vmem:[#allocation2 + $0x371] sm:$0xff]
      %v832 = vld [vmem:[#allocation2 + $0x379] sm:$0xff]
      %v833 = vld [vmem:[#allocation2 + $0x381] sm:$0xff]
      %v834 = vld [vmem:[#allocation2 + $0x389] sm:$0xff]
      %v835 = vld [vmem:[#allocation2 + $0x399] sm:$0xff]
      %v836 = vld [vmem:[#allocation2 + $0x3a1] sm:$0xff]
      %v837 = vld [vmem:[#allocation2 + $0x3a9] sm:$0xff]
      %v838 = vld [vmem:[#allocation2 + $0x3b1] sm:$0xff]
      %v839 = vld [vmem:[#allocation2 + $0x3c1] sm:$0xff]
      %v840 = vld [vmem:[#allocation2 + $0x3c9] sm:$0xff]
      %v841 = vld [vmem:[#allocation2 + $0x3d1] sm:$0xff]
      %v842 = vld [vmem:[#allocation2 + $0x3d9] sm:$0xff]
      %v843 = vld [vmem:[#allocation2 + $0x3e9] sm:$0xff]
      %v844 = vld [vmem:[#allocation2 + $0x3f1] sm:$0xff]
      %v845 = vld [vmem:[#allocation2 + $0x3f9] sm:$0xff]
      %v846 = vld [vmem:[#allocation2 + $0x401] sm:$0xff]
      %v847 = vld [vmem:[#allocation2 + $0x411] sm:$0xff]
      %v848 = vld [vmem:[#allocation2 + $0x419] sm:$0xff]
      %v849 = vld [vmem:[#allocation2 + $0x421] sm:$0xff]
      %v850 = vld [vmem:[#allocation2 + $0x429] sm:$0xff]
      %v851 = vld [vmem:[#allocation2 + $0x439] sm:$0xff]
      %v852 = vld [vmem:[#allocation2 + $0x441] sm:$0xff]
      %v853 = vld [vmem:[#allocation2 + $0x449] sm:$0xff]
      %v854 = vld [vmem:[#allocation2 + $0x451] sm:$0xff]
      %v855 = vld [vmem:[#allocation2 + $0x461] sm:$0xff]
      %v856 = vld [vmem:[#allocation2 + $0x469] sm:$0xff]
      %v857 = vld [vmem:[#allocation2 + $0x471] sm:$0xff]
      %v858 = vld [vmem:[#allocation2 + $0x479] sm:$0xff]
      %v859 = vld [vmem:[#allocation2 + $0x489] sm:$0xff]
      %v860 = vld [vmem:[#allocation2 + $0x491] sm:$0xff]
      %v861 = vld [vmem:[#allocation2 + $0x499] sm:$0xff]
      %v862 = vld [vmem:[#allocation2 + $0x4a1] sm:$0xff]
      %v863 = vld [vmem:[#allocation2 + $0x4b1] sm:$0xff]
      %v864 = vld [vmem:[#allocation2 + $0x4b9] sm:$0xff]
      %v865 = vld [vmem:[#allocation2 + $0x4c1] sm:$0xff]
      %v866 = vld [vmem:[#allocation2 + $0x4c9] sm:$0xff]
      %v867 = vld [vmem:[#allocation2 + $0x4d9] sm:$0xff]
      %v868 = vld [vmem:[#allocation2 + $0x4e1] sm:$0xff]
      %v869 = vld [vmem:[#allocation2 + $0x4e9] sm:$0xff]
      %v870 = vld [vmem:[#allocation2 + $0x4f1] sm:$0xff]
      %s871 = scalar_lea.vmem %s2, 16
      %v872 = vld [vmem:[%s871] sm:$0xff]
      %v873 = vld [vmem:[%s871 + $0x8] sm:$0xff]
      %v875 = vsel %vm352, %v743, 0
      %v878 = vsel %vm352, %v744, 0
      %v881 = vsel %vm352, %v745, 0
      %v884 = vsel %vm352, %v746, 0
      %v887 = vsel %vm352, %v747, 0
      %v890 = vsel %vm352, %v748, 0
      %v893 = vsel %vm352, %v749, 0
      %v896 = vsel %vm352, %v750, 0
      %v899 = vsel %vm352, %v751, 0
      %v902 = vsel %vm352, %v752, 0
      %v905 = vsel %vm352, %v753, 0
      %v908 = vsel %vm352, %v754, 0
      %v911 = vsel %vm352, %v755, 0
      %v914 = vsel %vm352, %v756, 0
      %v917 = vsel %vm352, %v757, 0
      %v920 = vsel %vm352, %v758, 0
      %v923 = vsel %vm352, %v759, 0
      %v926 = vsel %vm352, %v760, 0
      %v929 = vsel %vm352, %v761, 0
      %v932 = vsel %vm352, %v762, 0
      %v935 = vsel %vm352, %v763, 0
      %v938 = vsel %vm352, %v764, 0
      %v941 = vsel %vm352, %v765, 0
      %v944 = vsel %vm352, %v766, 0
      %v947 = vsel %vm352, %v767, 0
      %v950 = vsel %vm352, %v768, 0
      %v953 = vsel %vm352, %v769, 0
      %v956 = vsel %vm352, %v770, 0
      %v959 = vsel %vm352, %v771, 0
      %v962 = vsel %vm352, %v772, 0
      %v965 = vsel %vm352, %v773, 0
      %v968 = vsel %vm352, %v774, 0
      %v971 = vsel %vm352, %v775, 0
      %v974 = vsel %vm352, %v776, 0
      %v977 = vsel %vm352, %v777, 0
      %v980 = vsel %vm352, %v778, 0
      %v983 = vsel %vm352, %v779, 0
      %v986 = vsel %vm352, %v780, 0
      %v989 = vsel %vm352, %v781, 0
      %v992 = vsel %vm352, %v782, 0
      %v995 = vsel %vm352, %v783, 0
      %v998 = vsel %vm352, %v784, 0
      %v1001 = vsel %vm352, %v785, 0
      %v1004 = vsel %vm352, %v786, 0
      %v1007 = vsel %vm352, %v787, 0
      %v1010 = vsel %vm352, %v788, 0
      %v1013 = vsel %vm352, %v789, 0
      %v1016 = vsel %vm352, %v790, 0
      %v1019 = vsel %vm352, %v791, 0
      %v1022 = vsel %vm352, %v792, 0
      %v1025 = vsel %vm352, %v793, 0
      %v1028 = vsel %vm352, %v794, 0
      %v1031 = vsel %vm352, %v795, 0
      %v1034 = vsel %vm352, %v796, 0
      %v1037 = vsel %vm352, %v797, 0
      %v1040 = vsel %vm352, %v798, 0
      %v1043 = vsel %vm352, %v799, 0
      %v1046 = vsel %vm352, %v800, 0
      %v1049 = vsel %vm352, %v801, 0
      %v1052 = vsel %vm352, %v802, 0
      %v1055 = vsel %vm352, %v803, 0
      %v1058 = vsel %vm352, %v804, 0
      %v1061 = vsel %vm352, %v805, 0
      %v1064 = vsel %vm352, %v806, 0
      %v1067 = vsel %vm352, %v807, 0
      %v1070 = vsel %vm352, %v808, 0
      %v1073 = vsel %vm352, %v809, 0
      %v1076 = vsel %vm352, %v810, 0
      %v1079 = vsel %vm352, %v811, 0
      %v1082 = vsel %vm352, %v812, 0
      %v1085 = vsel %vm352, %v813, 0
      %v1088 = vsel %vm352, %v814, 0
      %v1091 = vsel %vm352, %v815, 0
      %v1094 = vsel %vm352, %v816, 0
      %v1097 = vsel %vm352, %v817, 0
      %v1100 = vsel %vm352, %v818, 0
      %v1103 = vsel %vm352, %v819, 0
      %v1106 = vsel %vm352, %v820, 0
      %v1109 = vsel %vm352, %v821, 0
      %v1112 = vsel %vm352, %v822, 0
      %v1115 = vsel %vm352, %v823, 0
      %v1118 = vsel %vm352, %v824, 0
      %v1121 = vsel %vm352, %v825, 0
      %v1124 = vsel %vm352, %v826, 0
      %v1127 = vsel %vm352, %v827, 0
      %v1130 = vsel %vm352, %v828, 0
      %v1133 = vsel %vm352, %v829, 0
      %v1136 = vsel %vm352, %v830, 0
      %v1139 = vsel %vm352, %v831, 0
      %v1142 = vsel %vm352, %v832, 0
      %v1145 = vsel %vm352, %v833, 0
      %v1148 = vsel %vm352, %v834, 0
      %v1151 = vsel %vm352, %v835, 0
      %v1154 = vsel %vm352, %v836, 0
      %v1157 = vsel %vm352, %v837, 0
      %v1160 = vsel %vm352, %v838, 0
      %v1163 = vsel %vm352, %v839, 0
      %v1166 = vsel %vm352, %v840, 0
      %v1169 = vsel %vm352, %v841, 0
      %v1172 = vsel %vm352, %v842, 0
      %v1175 = vsel %vm352, %v843, 0
      %v1178 = vsel %vm352, %v844, 0
      %v1181 = vsel %vm352, %v845, 0
      %v1184 = vsel %vm352, %v846, 0
      %v1187 = vsel %vm352, %v847, 0
      %v1190 = vsel %vm352, %v848, 0
      %v1193 = vsel %vm352, %v849, 0
      %v1196 = vsel %vm352, %v850, 0
      %v1199 = vsel %vm352, %v851, 0
      %v1202 = vsel %vm352, %v852, 0
      %v1205 = vsel %vm352, %v853, 0
      %v1208 = vsel %vm352, %v854, 0
      %v1211 = vsel %vm352, %v855, 0
      %v1214 = vsel %vm352, %v856, 0
      %v1217 = vsel %vm352, %v857, 0
      %v1220 = vsel %vm352, %v858, 0
      %v1223 = vsel %vm352, %v859, 0
      %v1226 = vsel %vm352, %v860, 0
      %v1229 = vsel %vm352, %v861, 0
      %v1232 = vsel %vm352, %v862, 0
      %v1235 = vsel %vm352, %v863, 0
      %v1238 = vsel %vm352, %v864, 0
      %v1241 = vsel %vm352, %v865, 0
      %v1244 = vsel %vm352, %v866, 0
      %v1247 = vsel %vm352, %v867, 0
      %v1250 = vsel %vm352, %v868, 0
      %v1253 = vsel %vm352, %v869, 0
      %v1256 = vsel %vm352, %v870, 0
      %1258 = vmatpush.msra.mxu0 0.0
      %1259 = vmatpush.msra.mxu0 0.0
      %1260 = vmatpush.msra.mxu0 0.0
      %1261 = vmatpush.msra.mxu0 0.0
      %1262 = vmatpush.msra.mxu0 0.0
      %1263 = vmatpush.msra.mxu0 0.0
      %1264 = vmatpush.msra.mxu0 0.0
      %1265 = vmatpush.msra.mxu0 0.0
      %1266 = vmatpush.msra.mxu0 0.0
      %1267 = vmatpush.msra.mxu0 0.0
      %1268 = vmatpush.msra.mxu0 0.0
      %1269 = vmatpush.msra.mxu0 0.0
      %1270 = vmatpush.msra.mxu0 0.0
      %1271 = vmatpush.msra.mxu0 0.0
      %1272 = vmatpush.msra.mxu0 %v873
      %1273 = vmatpush.msra.mxu0 %v872
      %1274 = vmatmul.f32.gmra.mxu0 %v875
      %v1275 = vpop.f32.mrf.mxu0
      %v1276 = vadd.f32 0.0, %v1275
      %1277 = vmatmul.f32.gmra.mxu0 %v878
      %v1278 = vpop.f32.mrf.mxu0
      %v1279 = vadd.f32 0.0, %v1278
      %1280 = vmatmul.f32.gmra.mxu0 %v881
      %v1281 = vpop.f32.mrf.mxu0
      %v1282 = vadd.f32 0.0, %v1281
      %1283 = vmatmul.f32.gmra.mxu0 %v884
      %v1284 = vpop.f32.mrf.mxu0
      %v1285 = vadd.f32 0.0, %v1284
      %1286 = vmatmul.f32.gmra.mxu0 %v887
      %v1287 = vpop.f32.mrf.mxu0
      %v1288 = vadd.f32 0.0, %v1287
      %1289 = vmatmul.f32.gmra.mxu0 %v890
      %v1290 = vpop.f32.mrf.mxu0
      %v1291 = vadd.f32 0.0, %v1290
      %1292 = vmatmul.f32.gmra.mxu0 %v893
      %v1293 = vpop.f32.mrf.mxu0
      %v1294 = vadd.f32 0.0, %v1293
      %1295 = vmatmul.f32.gmra.mxu0 %v896
      %v1296 = vpop.f32.mrf.mxu0
      %v1297 = vadd.f32 0.0, %v1296
      %1298 = vmatmul.f32.gmra.mxu0 %v899
      %v1299 = vpop.f32.mrf.mxu0
      %v1300 = vadd.f32 0.0, %v1299
      %1301 = vmatmul.f32.gmra.mxu0 %v902
      %v1302 = vpop.f32.mrf.mxu0
      %v1303 = vadd.f32 0.0, %v1302
      %1304 = vmatmul.f32.gmra.mxu0 %v905
      %v1305 = vpop.f32.mrf.mxu0
      %v1306 = vadd.f32 0.0, %v1305
      %1307 = vmatmul.f32.gmra.mxu0 %v908
      %v1308 = vpop.f32.mrf.mxu0
      %v1309 = vadd.f32 0.0, %v1308
      %1310 = vmatmul.f32.gmra.mxu0 %v911
      %v1311 = vpop.f32.mrf.mxu0
      %v1312 = vadd.f32 0.0, %v1311
      %1313 = vmatmul.f32.gmra.mxu0 %v914
      %v1314 = vpop.f32.mrf.mxu0
      %v1315 = vadd.f32 0.0, %v1314
      %1316 = vmatmul.f32.gmra.mxu0 %v917
      %v1317 = vpop.f32.mrf.mxu0
      %v1318 = vadd.f32 0.0, %v1317
      %1319 = vmatmul.f32.gmra.mxu0 %v920
      %v1320 = vpop.f32.mrf.mxu0
      %v1321 = vadd.f32 0.0, %v1320
      %1322 = vmatmul.f32.gmra.mxu0 %v923
      %v1323 = vpop.f32.mrf.mxu0
      %v1324 = vadd.f32 0.0, %v1323
      %1325 = vmatmul.f32.gmra.mxu0 %v926
      %v1326 = vpop.f32.mrf.mxu0
      %v1327 = vadd.f32 0.0, %v1326
      %1328 = vmatmul.f32.gmra.mxu0 %v929
      %v1329 = vpop.f32.mrf.mxu0
      %v1330 = vadd.f32 0.0, %v1329
      %1331 = vmatmul.f32.gmra.mxu0 %v932
      %v1332 = vpop.f32.mrf.mxu0
      %v1333 = vadd.f32 0.0, %v1332
      %1334 = vmatmul.f32.gmra.mxu0 %v935
      %v1335 = vpop.f32.mrf.mxu0
      %v1336 = vadd.f32 0.0, %v1335
      %1337 = vmatmul.f32.gmra.mxu0 %v938
      %v1338 = vpop.f32.mrf.mxu0
      %v1339 = vadd.f32 0.0, %v1338
      %1340 = vmatmul.f32.gmra.mxu0 %v941
      %v1341 = vpop.f32.mrf.mxu0
      %v1342 = vadd.f32 0.0, %v1341
      %1343 = vmatmul.f32.gmra.mxu0 %v944
      %v1344 = vpop.f32.mrf.mxu0
      %v1345 = vadd.f32 0.0, %v1344
      %1346 = vmatmul.f32.gmra.mxu0 %v947
      %v1347 = vpop.f32.mrf.mxu0
      %v1348 = vadd.f32 0.0, %v1347
      %1349 = vmatmul.f32.gmra.mxu0 %v950
      %v1350 = vpop.f32.mrf.mxu0
      %v1351 = vadd.f32 0.0, %v1350
      %1352 = vmatmul.f32.gmra.mxu0 %v953
      %v1353 = vpop.f32.mrf.mxu0
      %v1354 = vadd.f32 0.0, %v1353
      %1355 = vmatmul.f32.gmra.mxu0 %v956
      %v1356 = vpop.f32.mrf.mxu0
      %v1357 = vadd.f32 0.0, %v1356
      %1358 = vmatmul.f32.gmra.mxu0 %v959
      %v1359 = vpop.f32.mrf.mxu0
      %v1360 = vadd.f32 0.0, %v1359
      %1361 = vmatmul.f32.gmra.mxu0 %v962
      %v1362 = vpop.f32.mrf.mxu0
      %v1363 = vadd.f32 0.0, %v1362
      %1364 = vmatmul.f32.gmra.mxu0 %v965
      %v1365 = vpop.f32.mrf.mxu0
      %v1366 = vadd.f32 0.0, %v1365
      %1367 = vmatmul.f32.gmra.mxu0 %v968
      %v1368 = vpop.f32.mrf.mxu0
      %v1369 = vadd.f32 0.0, %v1368
      %1370 = vmatmul.f32.gmra.mxu0 %v971
      %v1371 = vpop.f32.mrf.mxu0
      %v1372 = vadd.f32 0.0, %v1371
      %1373 = vmatmul.f32.gmra.mxu0 %v974
      %v1374 = vpop.f32.mrf.mxu0
      %v1375 = vadd.f32 0.0, %v1374
      %1376 = vmatmul.f32.gmra.mxu0 %v977
      %v1377 = vpop.f32.mrf.mxu0
      %v1378 = vadd.f32 0.0, %v1377
      %1379 = vmatmul.f32.gmra.mxu0 %v980
      %v1380 = vpop.f32.mrf.mxu0
      %v1381 = vadd.f32 0.0, %v1380
      %1382 = vmatmul.f32.gmra.mxu0 %v983
      %v1383 = vpop.f32.mrf.mxu0
      %v1384 = vadd.f32 0.0, %v1383
      %1385 = vmatmul.f32.gmra.mxu0 %v986
      %v1386 = vpop.f32.mrf.mxu0
      %v1387 = vadd.f32 0.0, %v1386
      %1388 = vmatmul.f32.gmra.mxu0 %v989
      %v1389 = vpop.f32.mrf.mxu0
      %v1390 = vadd.f32 0.0, %v1389
      %1391 = vmatmul.f32.gmra.mxu0 %v992
      %v1392 = vpop.f32.mrf.mxu0
      %v1393 = vadd.f32 0.0, %v1392
      %1394 = vmatmul.f32.gmra.mxu0 %v995
      %v1395 = vpop.f32.mrf.mxu0
      %v1396 = vadd.f32 0.0, %v1395
      %1397 = vmatmul.f32.gmra.mxu0 %v998
      %v1398 = vpop.f32.mrf.mxu0
      %v1399 = vadd.f32 0.0, %v1398
      %1400 = vmatmul.f32.gmra.mxu0 %v1001
      %v1401 = vpop.f32.mrf.mxu0
      %v1402 = vadd.f32 0.0, %v1401
      %1403 = vmatmul.f32.gmra.mxu0 %v1004
      %v1404 = vpop.f32.mrf.mxu0
      %v1405 = vadd.f32 0.0, %v1404
      %1406 = vmatmul.f32.gmra.mxu0 %v1007
      %v1407 = vpop.f32.mrf.mxu0
      %v1408 = vadd.f32 0.0, %v1407
      %1409 = vmatmul.f32.gmra.mxu0 %v1010
      %v1410 = vpop.f32.mrf.mxu0
      %v1411 = vadd.f32 0.0, %v1410
      %1412 = vmatmul.f32.gmra.mxu0 %v1013
      %v1413 = vpop.f32.mrf.mxu0
      %v1414 = vadd.f32 0.0, %v1413
      %1415 = vmatmul.f32.gmra.mxu0 %v1016
      %v1416 = vpop.f32.mrf.mxu0
      %v1417 = vadd.f32 0.0, %v1416
      %1418 = vmatmul.f32.gmra.mxu0 %v1019
      %v1419 = vpop.f32.mrf.mxu0
      %v1420 = vadd.f32 0.0, %v1419
      %1421 = vmatmul.f32.gmra.mxu0 %v1022
      %v1422 = vpop.f32.mrf.mxu0
      %v1423 = vadd.f32 0.0, %v1422
      %1424 = vmatmul.f32.gmra.mxu0 %v1025
      %v1425 = vpop.f32.mrf.mxu0
      %v1426 = vadd.f32 0.0, %v1425
      %1427 = vmatmul.f32.gmra.mxu0 %v1028
      %v1428 = vpop.f32.mrf.mxu0
      %v1429 = vadd.f32 0.0, %v1428
      %1430 = vmatmul.f32.gmra.mxu0 %v1031
      %v1431 = vpop.f32.mrf.mxu0
      %v1432 = vadd.f32 0.0, %v1431
      %1433 = vmatmul.f32.gmra.mxu0 %v1034
      %v1434 = vpop.f32.mrf.mxu0
      %v1435 = vadd.f32 0.0, %v1434
      %1436 = vmatmul.f32.gmra.mxu0 %v1037
      %v1437 = vpop.f32.mrf.mxu0
      %v1438 = vadd.f32 0.0, %v1437
      %1439 = vmatmul.f32.gmra.mxu0 %v1040
      %v1440 = vpop.f32.mrf.mxu0
      %v1441 = vadd.f32 0.0, %v1440
      %1442 = vmatmul.f32.gmra.mxu0 %v1043
      %v1443 = vpop.f32.mrf.mxu0
      %v1444 = vadd.f32 0.0, %v1443
      %1445 = vmatmul.f32.gmra.mxu0 %v1046
      %v1446 = vpop.f32.mrf.mxu0
      %v1447 = vadd.f32 0.0, %v1446
      %1448 = vmatmul.f32.gmra.mxu0 %v1049
      %v1449 = vpop.f32.mrf.mxu0
      %v1450 = vadd.f32 0.0, %v1449
      %1451 = vmatmul.f32.gmra.mxu0 %v1052
      %v1452 = vpop.f32.mrf.mxu0
      %v1453 = vadd.f32 0.0, %v1452
      %1454 = vmatmul.f32.gmra.mxu0 %v1055
      %v1455 = vpop.f32.mrf.mxu0
      %v1456 = vadd.f32 0.0, %v1455
      %1457 = vmatmul.f32.gmra.mxu0 %v1058
      %v1458 = vpop.f32.mrf.mxu0
      %v1459 = vadd.f32 0.0, %v1458
      %1460 = vmatmul.f32.gmra.mxu0 %v1061
      %v1461 = vpop.f32.mrf.mxu0
      %v1462 = vadd.f32 0.0, %v1461
      %1463 = vmatmul.f32.gmra.mxu0 %v1064
      %v1464 = vpop.f32.mrf.mxu0
      %v1465 = vadd.f32 0.0, %v1464
      %1466 = vmatmul.f32.gmra.mxu0 %v1067
      %v1467 = vpop.f32.mrf.mxu0
      %v1468 = vadd.f32 0.0, %v1467
      %1469 = vmatmul.f32.gmra.mxu0 %v1070
      %v1470 = vpop.f32.mrf.mxu0
      %v1471 = vadd.f32 0.0, %v1470
      %1472 = vmatmul.f32.gmra.mxu0 %v1073
      %v1473 = vpop.f32.mrf.mxu0
      %v1474 = vadd.f32 0.0, %v1473
      %1475 = vmatmul.f32.gmra.mxu0 %v1076
      %v1476 = vpop.f32.mrf.mxu0
      %v1477 = vadd.f32 0.0, %v1476
      %1478 = vmatmul.f32.gmra.mxu0 %v1079
      %v1479 = vpop.f32.mrf.mxu0
      %v1480 = vadd.f32 0.0, %v1479
      %1481 = vmatmul.f32.gmra.mxu0 %v1082
      %v1482 = vpop.f32.mrf.mxu0
      %v1483 = vadd.f32 0.0, %v1482
      %1484 = vmatmul.f32.gmra.mxu0 %v1085
      %v1485 = vpop.f32.mrf.mxu0
      %v1486 = vadd.f32 0.0, %v1485
      %1487 = vmatmul.f32.gmra.mxu0 %v1088
      %v1488 = vpop.f32.mrf.mxu0
      %v1489 = vadd.f32 0.0, %v1488
      %1490 = vmatmul.f32.gmra.mxu0 %v1091
      %v1491 = vpop.f32.mrf.mxu0
      %v1492 = vadd.f32 0.0, %v1491
      %1493 = vmatmul.f32.gmra.mxu0 %v1094
      %v1494 = vpop.f32.mrf.mxu0
      %v1495 = vadd.f32 0.0, %v1494
      %1496 = vmatmul.f32.gmra.mxu0 %v1097
      %v1497 = vpop.f32.mrf.mxu0
      %v1498 = vadd.f32 0.0, %v1497
      %1499 = vmatmul.f32.gmra.mxu0 %v1100
      %v1500 = vpop.f32.mrf.mxu0
      %v1501 = vadd.f32 0.0, %v1500
      %1502 = vmatmul.f32.gmra.mxu0 %v1103
      %v1503 = vpop.f32.mrf.mxu0
      %v1504 = vadd.f32 0.0, %v1503
      %1505 = vmatmul.f32.gmra.mxu0 %v1106
      %v1506 = vpop.f32.mrf.mxu0
      %v1507 = vadd.f32 0.0, %v1506
      %1508 = vmatmul.f32.gmra.mxu0 %v1109
      %v1509 = vpop.f32.mrf.mxu0
      %v1510 = vadd.f32 0.0, %v1509
      %1511 = vmatmul.f32.gmra.mxu0 %v1112
      %v1512 = vpop.f32.mrf.mxu0
      %v1513 = vadd.f32 0.0, %v1512
      %1514 = vmatmul.f32.gmra.mxu0 %v1115
      %v1515 = vpop.f32.mrf.mxu0
      %v1516 = vadd.f32 0.0, %v1515
      %1517 = vmatmul.f32.gmra.mxu0 %v1118
      %v1518 = vpop.f32.mrf.mxu0
      %v1519 = vadd.f32 0.0, %v1518
      %1520 = vmatmul.f32.gmra.mxu0 %v1121
      %v1521 = vpop.f32.mrf.mxu0
      %v1522 = vadd.f32 0.0, %v1521
      %1523 = vmatmul.f32.gmra.mxu0 %v1124
      %v1524 = vpop.f32.mrf.mxu0
      %v1525 = vadd.f32 0.0, %v1524
      %1526 = vmatmul.f32.gmra.mxu0 %v1127
      %v1527 = vpop.f32.mrf.mxu0
      %v1528 = vadd.f32 0.0, %v1527
      %1529 = vmatmul.f32.gmra.mxu0 %v1130
      %v1530 = vpop.f32.mrf.mxu0
      %v1531 = vadd.f32 0.0, %v1530
      %1532 = vmatmul.f32.gmra.mxu0 %v1133
      %v1533 = vpop.f32.mrf.mxu0
      %v1534 = vadd.f32 0.0, %v1533
      %1535 = vmatmul.f32.gmra.mxu0 %v1136
      %v1536 = vpop.f32.mrf.mxu0
      %v1537 = vadd.f32 0.0, %v1536
      %1538 = vmatmul.f32.gmra.mxu0 %v1139
      %v1539 = vpop.f32.mrf.mxu0
      %v1540 = vadd.f32 0.0, %v1539
      %1541 = vmatmul.f32.gmra.mxu0 %v1142
      %v1542 = vpop.f32.mrf.mxu0
      %v1543 = vadd.f32 0.0, %v1542
      %1544 = vmatmul.f32.gmra.mxu0 %v1145
      %v1545 = vpop.f32.mrf.mxu0
      %v1546 = vadd.f32 0.0, %v1545
      %1547 = vmatmul.f32.gmra.mxu0 %v1148
      %v1548 = vpop.f32.mrf.mxu0
      %v1549 = vadd.f32 0.0, %v1548
      %1550 = vmatmul.f32.gmra.mxu0 %v1151
      %v1551 = vpop.f32.mrf.mxu0
      %v1552 = vadd.f32 0.0, %v1551
      %1553 = vmatmul.f32.gmra.mxu0 %v1154
      %v1554 = vpop.f32.mrf.mxu0
      %v1555 = vadd.f32 0.0, %v1554
      %1556 = vmatmul.f32.gmra.mxu0 %v1157
      %v1557 = vpop.f32.mrf.mxu0
      %v1558 = vadd.f32 0.0, %v1557
      %1559 = vmatmul.f32.gmra.mxu0 %v1160
      %v1560 = vpop.f32.mrf.mxu0
      %v1561 = vadd.f32 0.0, %v1560
      %1562 = vmatmul.f32.gmra.mxu0 %v1163
      %v1563 = vpop.f32.mrf.mxu0
      %v1564 = vadd.f32 0.0, %v1563
      %1565 = vmatmul.f32.gmra.mxu0 %v1166
      %v1566 = vpop.f32.mrf.mxu0
      %v1567 = vadd.f32 0.0, %v1566
      %1568 = vmatmul.f32.gmra.mxu0 %v1169
      %v1569 = vpop.f32.mrf.mxu0
      %v1570 = vadd.f32 0.0, %v1569
      %1571 = vmatmul.f32.gmra.mxu0 %v1172
      %v1572 = vpop.f32.mrf.mxu0
      %v1573 = vadd.f32 0.0, %v1572
      %1574 = vmatmul.f32.gmra.mxu0 %v1175
      %v1575 = vpop.f32.mrf.mxu0
      %v1576 = vadd.f32 0.0, %v1575
      %1577 = vmatmul.f32.gmra.mxu0 %v1178
      %v1578 = vpop.f32.mrf.mxu0
      %v1579 = vadd.f32 0.0, %v1578
      %1580 = vmatmul.f32.gmra.mxu0 %v1181
      %v1581 = vpop.f32.mrf.mxu0
      %v1582 = vadd.f32 0.0, %v1581
      %1583 = vmatmul.f32.gmra.mxu0 %v1184
      %v1584 = vpop.f32.mrf.mxu0
      %v1585 = vadd.f32 0.0, %v1584
      %1586 = vmatmul.f32.gmra.mxu0 %v1187
      %v1587 = vpop.f32.mrf.mxu0
      %v1588 = vadd.f32 0.0, %v1587
      %1589 = vmatmul.f32.gmra.mxu0 %v1190
      %v1590 = vpop.f32.mrf.mxu0
      %v1591 = vadd.f32 0.0, %v1590
      %1592 = vmatmul.f32.gmra.mxu0 %v1193
      %v1593 = vpop.f32.mrf.mxu0
      %v1594 = vadd.f32 0.0, %v1593
      %1595 = vmatmul.f32.gmra.mxu0 %v1196
      %v1596 = vpop.f32.mrf.mxu0
      %v1597 = vadd.f32 0.0, %v1596
      %1598 = vmatmul.f32.gmra.mxu0 %v1199
      %v1599 = vpop.f32.mrf.mxu0
      %v1600 = vadd.f32 0.0, %v1599
      %1601 = vmatmul.f32.gmra.mxu0 %v1202
      %v1602 = vpop.f32.mrf.mxu0
      %v1603 = vadd.f32 0.0, %v1602
      %1604 = vmatmul.f32.gmra.mxu0 %v1205
      %v1605 = vpop.f32.mrf.mxu0
      %v1606 = vadd.f32 0.0, %v1605
      %1607 = vmatmul.f32.gmra.mxu0 %v1208
      %v1608 = vpop.f32.mrf.mxu0
      %v1609 = vadd.f32 0.0, %v1608
      %1610 = vmatmul.f32.gmra.mxu0 %v1211
      %v1611 = vpop.f32.mrf.mxu0
      %v1612 = vadd.f32 0.0, %v1611
      %1613 = vmatmul.f32.gmra.mxu0 %v1214
      %v1614 = vpop.f32.mrf.mxu0
      %v1615 = vadd.f32 0.0, %v1614
      %1616 = vmatmul.f32.gmra.mxu0 %v1217
      %v1617 = vpop.f32.mrf.mxu0
      %v1618 = vadd.f32 0.0, %v1617
      %1619 = vmatmul.f32.gmra.mxu0 %v1220
      %v1620 = vpop.f32.mrf.mxu0
      %v1621 = vadd.f32 0.0, %v1620
      %1622 = vmatmul.f32.gmra.mxu0 %v1223
      %v1623 = vpop.f32.mrf.mxu0
      %v1624 = vadd.f32 0.0, %v1623
      %1625 = vmatmul.f32.gmra.mxu0 %v1226
      %v1626 = vpop.f32.mrf.mxu0
      %v1627 = vadd.f32 0.0, %v1626
      %1628 = vmatmul.f32.gmra.mxu0 %v1229
      %v1629 = vpop.f32.mrf.mxu0
      %v1630 = vadd.f32 0.0, %v1629
      %1631 = vmatmul.f32.gmra.mxu0 %v1232
      %v1632 = vpop.f32.mrf.mxu0
      %v1633 = vadd.f32 0.0, %v1632
      %1634 = vmatmul.f32.gmra.mxu0 %v1235
      %v1635 = vpop.f32.mrf.mxu0
      %v1636 = vadd.f32 0.0, %v1635
      %1637 = vmatmul.f32.gmra.mxu0 %v1238
      %v1638 = vpop.f32.mrf.mxu0
      %v1639 = vadd.f32 0.0, %v1638
      %1640 = vmatmul.f32.gmra.mxu0 %v1241
      %v1641 = vpop.f32.mrf.mxu0
      %v1642 = vadd.f32 0.0, %v1641
      %1643 = vmatmul.f32.gmra.mxu0 %v1244
      %v1644 = vpop.f32.mrf.mxu0
      %v1645 = vadd.f32 0.0, %v1644
      %1646 = vmatmul.f32.gmra.mxu0 %v1247
      %v1647 = vpop.f32.mrf.mxu0
      %v1648 = vadd.f32 0.0, %v1647
      %1649 = vmatmul.f32.gmra.mxu0 %v1250
      %v1650 = vpop.f32.mrf.mxu0
      %v1651 = vadd.f32 0.0, %v1650
      %1652 = vmatmul.f32.gmra.mxu0 %v1253
      %v1653 = vpop.f32.mrf.mxu0
      %v1654 = vadd.f32 0.0, %v1653
      %1655 = vmatmul.f32.gmra.mxu0 %v1256
      %v1656 = vpop.f32.mrf.mxu0
      %v1657 = vadd.f32 0.0, %v1656
      %1658 = vdwg.mxu0
      %v1660 = vsel %vm352, %v613, 0
      %v1663 = vsel %vm352, %v614, 0
      %v1666 = vsel %vm352, %v615, 0
      %v1669 = vsel %vm352, %v616, 0
      %v1672 = vsel %vm352, %v617, 0
      %v1675 = vsel %vm352, %v618, 0
      %v1678 = vsel %vm352, %v619, 0
      %v1681 = vsel %vm352, %v620, 0
      %v1684 = vsel %vm352, %v621, 0
      %v1687 = vsel %vm352, %v622, 0
      %v1690 = vsel %vm352, %v623, 0
      %v1693 = vsel %vm352, %v624, 0
      %v1696 = vsel %vm352, %v625, 0
      %v1699 = vsel %vm352, %v626, 0
      %v1702 = vsel %vm352, %v627, 0
      %v1705 = vsel %vm352, %v628, 0
      %v1708 = vsel %vm352, %v629, 0
      %v1711 = vsel %vm352, %v630, 0
      %v1714 = vsel %vm352, %v631, 0
      %v1717 = vsel %vm352, %v632, 0
      %v1720 = vsel %vm352, %v633, 0
      %v1723 = vsel %vm352, %v634, 0
      %v1726 = vsel %vm352, %v635, 0
      %v1729 = vsel %vm352, %v636, 0
      %v1732 = vsel %vm352, %v637, 0
      %v1735 = vsel %vm352, %v638, 0
      %v1738 = vsel %vm352, %v639, 0
      %v1741 = vsel %vm352, %v640, 0
      %v1744 = vsel %vm352, %v641, 0
      %v1747 = vsel %vm352, %v642, 0
      %v1750 = vsel %vm352, %v643, 0
      %v1753 = vsel %vm352, %v644, 0
      %v1756 = vsel %vm352, %v645, 0
      %v1759 = vsel %vm352, %v646, 0
      %v1762 = vsel %vm352, %v647, 0
      %v1765 = vsel %vm352, %v648, 0
      %v1768 = vsel %vm352, %v649, 0
      %v1771 = vsel %vm352, %v650, 0
      %v1774 = vsel %vm352, %v651, 0
      %v1777 = vsel %vm352, %v652, 0
      %v1780 = vsel %vm352, %v653, 0
      %v1783 = vsel %vm352, %v654, 0
      %v1786 = vsel %vm352, %v655, 0
      %v1789 = vsel %vm352, %v656, 0
      %v1792 = vsel %vm352, %v657, 0
      %v1795 = vsel %vm352, %v658, 0
      %v1798 = vsel %vm352, %v659, 0
      %v1801 = vsel %vm352, %v660, 0
      %v1804 = vsel %vm352, %v661, 0
      %v1807 = vsel %vm352, %v662, 0
      %v1810 = vsel %vm352, %v663, 0
      %v1813 = vsel %vm352, %v664, 0
      %v1816 = vsel %vm352, %v665, 0
      %v1819 = vsel %vm352, %v666, 0
      %v1822 = vsel %vm352, %v667, 0
      %v1825 = vsel %vm352, %v668, 0
      %v1828 = vsel %vm352, %v669, 0
      %v1831 = vsel %vm352, %v670, 0
      %v1834 = vsel %vm352, %v671, 0
      %v1837 = vsel %vm352, %v672, 0
      %v1840 = vsel %vm352, %v673, 0
      %v1843 = vsel %vm352, %v674, 0
      %v1846 = vsel %vm352, %v675, 0
      %v1849 = vsel %vm352, %v676, 0
      %v1852 = vsel %vm352, %v677, 0
      %v1855 = vsel %vm352, %v678, 0
      %v1858 = vsel %vm352, %v679, 0
      %v1861 = vsel %vm352, %v680, 0
      %v1864 = vsel %vm352, %v681, 0
      %v1867 = vsel %vm352, %v682, 0
      %v1870 = vsel %vm352, %v683, 0
      %v1873 = vsel %vm352, %v684, 0
      %v1876 = vsel %vm352, %v685, 0
      %v1879 = vsel %vm352, %v686, 0
      %v1882 = vsel %vm352, %v687, 0
      %v1885 = vsel %vm352, %v688, 0
      %v1888 = vsel %vm352, %v689, 0
      %v1891 = vsel %vm352, %v690, 0
      %v1894 = vsel %vm352, %v691, 0
      %v1897 = vsel %vm352, %v692, 0
      %v1900 = vsel %vm352, %v693, 0
      %v1903 = vsel %vm352, %v694, 0
      %v1906 = vsel %vm352, %v695, 0
      %v1909 = vsel %vm352, %v696, 0
      %v1912 = vsel %vm352, %v697, 0
      %v1915 = vsel %vm352, %v698, 0
      %v1918 = vsel %vm352, %v699, 0
      %v1921 = vsel %vm352, %v700, 0
      %v1924 = vsel %vm352, %v701, 0
      %v1927 = vsel %vm352, %v702, 0
      %v1930 = vsel %vm352, %v703, 0
      %v1933 = vsel %vm352, %v704, 0
      %v1936 = vsel %vm352, %v705, 0
      %v1939 = vsel %vm352, %v706, 0
      %v1942 = vsel %vm352, %v707, 0
      %v1945 = vsel %vm352, %v708, 0
      %v1948 = vsel %vm352, %v709, 0
      %v1951 = vsel %vm352, %v710, 0
      %v1954 = vsel %vm352, %v711, 0
      %v1957 = vsel %vm352, %v712, 0
      %v1960 = vsel %vm352, %v713, 0
      %v1963 = vsel %vm352, %v714, 0
      %v1966 = vsel %vm352, %v715, 0
      %v1969 = vsel %vm352, %v716, 0
      %v1972 = vsel %vm352, %v717, 0
      %v1975 = vsel %vm352, %v718, 0
      %v1978 = vsel %vm352, %v719, 0
      %v1981 = vsel %vm352, %v720, 0
      %v1984 = vsel %vm352, %v721, 0
      %v1987 = vsel %vm352, %v722, 0
      %v1990 = vsel %vm352, %v723, 0
      %v1993 = vsel %vm352, %v724, 0
      %v1996 = vsel %vm352, %v725, 0
      %v1999 = vsel %vm352, %v726, 0
      %v2002 = vsel %vm352, %v727, 0
      %v2005 = vsel %vm352, %v728, 0
      %v2008 = vsel %vm352, %v729, 0
      %v2011 = vsel %vm352, %v730, 0
      %v2014 = vsel %vm352, %v731, 0
      %v2017 = vsel %vm352, %v732, 0
      %v2020 = vsel %vm352, %v733, 0
      %v2023 = vsel %vm352, %v734, 0
      %v2026 = vsel %vm352, %v735, 0
      %v2029 = vsel %vm352, %v736, 0
      %v2032 = vsel %vm352, %v737, 0
      %v2035 = vsel %vm352, %v738, 0
      %v2038 = vsel %vm352, %v739, 0
      %v2041 = vsel %vm352, %v740, 0
      %2043 = vmatpush.msra.mxu0 0.0
      %2044 = vmatpush.msra.mxu0 0.0
      %2045 = vmatpush.msra.mxu0 0.0
      %2046 = vmatpush.msra.mxu0 0.0
      %2047 = vmatpush.msra.mxu0 0.0
      %2048 = vmatpush.msra.mxu0 0.0
      %2049 = vmatpush.msra.mxu0 0.0
      %2050 = vmatpush.msra.mxu0 0.0
      %2051 = vmatpush.msra.mxu0 0.0
      %2052 = vmatpush.msra.mxu0 0.0
      %2053 = vmatpush.msra.mxu0 0.0
      %2054 = vmatpush.msra.mxu0 0.0
      %2055 = vmatpush.msra.mxu0 0.0
      %2056 = vmatpush.msra.mxu0 0.0
      %2057 = vmatpush.msra.mxu0 %v742
      %2058 = vmatpush.msra.mxu0 %v741
      %2059 = vmatmul.f32.gmra.mxu0 %v1660
      %v2060 = vpop.f32.mrf.mxu0
      %v2061 = vadd.f32 %v1276, %v2060
      %2062 = vmatmul.f32.gmra.mxu0 %v1663
      %v2063 = vpop.f32.mrf.mxu0
      %v2064 = vadd.f32 %v1279, %v2063
      %2065 = vmatmul.f32.gmra.mxu0 %v1666
      %v2066 = vpop.f32.mrf.mxu0
      %v2067 = vadd.f32 %v1282, %v2066
      %2068 = vmatmul.f32.gmra.mxu0 %v1669
      %v2069 = vpop.f32.mrf.mxu0
      %v2070 = vadd.f32 %v1285, %v2069
      %2071 = vmatmul.f32.gmra.mxu0 %v1672
      %v2072 = vpop.f32.mrf.mxu0
      %v2073 = vadd.f32 %v1288, %v2072
      %2074 = vmatmul.f32.gmra.mxu0 %v1675
      %v2075 = vpop.f32.mrf.mxu0
      %v2076 = vadd.f32 %v1291, %v2075
      %2077 = vmatmul.f32.gmra.mxu0 %v1678
      %v2078 = vpop.f32.mrf.mxu0
      %v2079 = vadd.f32 %v1294, %v2078
      %2080 = vmatmul.f32.gmra.mxu0 %v1681
      %v2081 = vpop.f32.mrf.mxu0
      %v2082 = vadd.f32 %v1297, %v2081
      %2083 = vmatmul.f32.gmra.mxu0 %v1684
      %v2084 = vpop.f32.mrf.mxu0
      %v2085 = vadd.f32 %v1300, %v2084
      %2086 = vmatmul.f32.gmra.mxu0 %v1687
      %v2087 = vpop.f32.mrf.mxu0
      %v2088 = vadd.f32 %v1303, %v2087
      %2089 = vmatmul.f32.gmra.mxu0 %v1690
      %v2090 = vpop.f32.mrf.mxu0
      %v2091 = vadd.f32 %v1306, %v2090
      %2092 = vmatmul.f32.gmra.mxu0 %v1693
      %v2093 = vpop.f32.mrf.mxu0
      %v2094 = vadd.f32 %v1309, %v2093
      %2095 = vmatmul.f32.gmra.mxu0 %v1696
      %v2096 = vpop.f32.mrf.mxu0
      %v2097 = vadd.f32 %v1312, %v2096
      %2098 = vmatmul.f32.gmra.mxu0 %v1699
      %v2099 = vpop.f32.mrf.mxu0
      %v2100 = vadd.f32 %v1315, %v2099
      %2101 = vmatmul.f32.gmra.mxu0 %v1702
      %v2102 = vpop.f32.mrf.mxu0
      %v2103 = vadd.f32 %v1318, %v2102
      %2104 = vmatmul.f32.gmra.mxu0 %v1705
      %v2105 = vpop.f32.mrf.mxu0
      %v2106 = vadd.f32 %v1321, %v2105
      %2107 = vmatmul.f32.gmra.mxu0 %v1708
      %v2108 = vpop.f32.mrf.mxu0
      %v2109 = vadd.f32 %v1324, %v2108
      %2110 = vmatmul.f32.gmra.mxu0 %v1711
      %v2111 = vpop.f32.mrf.mxu0
      %v2112 = vadd.f32 %v1327, %v2111
      %2113 = vmatmul.f32.gmra.mxu0 %v1714
      %v2114 = vpop.f32.mrf.mxu0
      %v2115 = vadd.f32 %v1330, %v2114
      %2116 = vmatmul.f32.gmra.mxu0 %v1717
      %v2117 = vpop.f32.mrf.mxu0
      %v2118 = vadd.f32 %v1333, %v2117
      %2119 = vmatmul.f32.gmra.mxu0 %v1720
      %v2120 = vpop.f32.mrf.mxu0
      %v2121 = vadd.f32 %v1336, %v2120
      %2122 = vmatmul.f32.gmra.mxu0 %v1723
      %v2123 = vpop.f32.mrf.mxu0
      %v2124 = vadd.f32 %v1339, %v2123
      %2125 = vmatmul.f32.gmra.mxu0 %v1726
      %v2126 = vpop.f32.mrf.mxu0
      %v2127 = vadd.f32 %v1342, %v2126
      %2128 = vmatmul.f32.gmra.mxu0 %v1729
      %v2129 = vpop.f32.mrf.mxu0
      %v2130 = vadd.f32 %v1345, %v2129
      %2131 = vmatmul.f32.gmra.mxu0 %v1732
      %v2132 = vpop.f32.mrf.mxu0
      %v2133 = vadd.f32 %v1348, %v2132
      %2134 = vmatmul.f32.gmra.mxu0 %v1735
      %v2135 = vpop.f32.mrf.mxu0
      %v2136 = vadd.f32 %v1351, %v2135
      %2137 = vmatmul.f32.gmra.mxu0 %v1738
      %v2138 = vpop.f32.mrf.mxu0
      %v2139 = vadd.f32 %v1354, %v2138
      %2140 = vmatmul.f32.gmra.mxu0 %v1741
      %v2141 = vpop.f32.mrf.mxu0
      %v2142 = vadd.f32 %v1357, %v2141
      %2143 = vmatmul.f32.gmra.mxu0 %v1744
      %v2144 = vpop.f32.mrf.mxu0
      %v2145 = vadd.f32 %v1360, %v2144
      %2146 = vmatmul.f32.gmra.mxu0 %v1747
      %v2147 = vpop.f32.mrf.mxu0
      %v2148 = vadd.f32 %v1363, %v2147
      %2149 = vmatmul.f32.gmra.mxu0 %v1750
      %v2150 = vpop.f32.mrf.mxu0
      %v2151 = vadd.f32 %v1366, %v2150
      %2152 = vmatmul.f32.gmra.mxu0 %v1753
      %v2153 = vpop.f32.mrf.mxu0
      %v2154 = vadd.f32 %v1369, %v2153
      %2155 = vmatmul.f32.gmra.mxu0 %v1756
      %v2156 = vpop.f32.mrf.mxu0
      %v2157 = vadd.f32 %v1372, %v2156
      %2158 = vmatmul.f32.gmra.mxu0 %v1759
      %v2159 = vpop.f32.mrf.mxu0
      %v2160 = vadd.f32 %v1375, %v2159
      %2161 = vmatmul.f32.gmra.mxu0 %v1762
      %v2162 = vpop.f32.mrf.mxu0
      %v2163 = vadd.f32 %v1378, %v2162
      %2164 = vmatmul.f32.gmra.mxu0 %v1765
      %v2165 = vpop.f32.mrf.mxu0
      %v2166 = vadd.f32 %v1381, %v2165
      %2167 = vmatmul.f32.gmra.mxu0 %v1768
      %v2168 = vpop.f32.mrf.mxu0
      %v2169 = vadd.f32 %v1384, %v2168
      %2170 = vmatmul.f32.gmra.mxu0 %v1771
      %v2171 = vpop.f32.mrf.mxu0
      %v2172 = vadd.f32 %v1387, %v2171
      %2173 = vmatmul.f32.gmra.mxu0 %v1774
      %v2174 = vpop.f32.mrf.mxu0
      %v2175 = vadd.f32 %v1390, %v2174
      %2176 = vmatmul.f32.gmra.mxu0 %v1777
      %v2177 = vpop.f32.mrf.mxu0
      %v2178 = vadd.f32 %v1393, %v2177
      %2179 = vmatmul.f32.gmra.mxu0 %v1780
      %v2180 = vpop.f32.mrf.mxu0
      %v2181 = vadd.f32 %v1396, %v2180
      %2182 = vmatmul.f32.gmra.mxu0 %v1783
      %v2183 = vpop.f32.mrf.mxu0
      %v2184 = vadd.f32 %v1399, %v2183
      %2185 = vmatmul.f32.gmra.mxu0 %v1786
      %v2186 = vpop.f32.mrf.mxu0
      %v2187 = vadd.f32 %v1402, %v2186
      %2188 = vmatmul.f32.gmra.mxu0 %v1789
      %v2189 = vpop.f32.mrf.mxu0
      %v2190 = vadd.f32 %v1405, %v2189
      %2191 = vmatmul.f32.gmra.mxu0 %v1792
      %v2192 = vpop.f32.mrf.mxu0
      %v2193 = vadd.f32 %v1408, %v2192
      %2194 = vmatmul.f32.gmra.mxu0 %v1795
      %v2195 = vpop.f32.mrf.mxu0
      %v2196 = vadd.f32 %v1411, %v2195
      %2197 = vmatmul.f32.gmra.mxu0 %v1798
      %v2198 = vpop.f32.mrf.mxu0
      %v2199 = vadd.f32 %v1414, %v2198
      %2200 = vmatmul.f32.gmra.mxu0 %v1801
      %v2201 = vpop.f32.mrf.mxu0
      %v2202 = vadd.f32 %v1417, %v2201
      %2203 = vmatmul.f32.gmra.mxu0 %v1804
      %v2204 = vpop.f32.mrf.mxu0
      %v2205 = vadd.f32 %v1420, %v2204
      %2206 = vmatmul.f32.gmra.mxu0 %v1807
      %v2207 = vpop.f32.mrf.mxu0
      %v2208 = vadd.f32 %v1423, %v2207
      %2209 = vmatmul.f32.gmra.mxu0 %v1810
      %v2210 = vpop.f32.mrf.mxu0
      %v2211 = vadd.f32 %v1426, %v2210
      %2212 = vmatmul.f32.gmra.mxu0 %v1813
      %v2213 = vpop.f32.mrf.mxu0
      %v2214 = vadd.f32 %v1429, %v2213
      %2215 = vmatmul.f32.gmra.mxu0 %v1816
      %v2216 = vpop.f32.mrf.mxu0
      %v2217 = vadd.f32 %v1432, %v2216
      %2218 = vmatmul.f32.gmra.mxu0 %v1819
      %v2219 = vpop.f32.mrf.mxu0
      %v2220 = vadd.f32 %v1435, %v2219
      %2221 = vmatmul.f32.gmra.mxu0 %v1822
      %v2222 = vpop.f32.mrf.mxu0
      %v2223 = vadd.f32 %v1438, %v2222
      %2224 = vmatmul.f32.gmra.mxu0 %v1825
      %v2225 = vpop.f32.mrf.mxu0
      %v2226 = vadd.f32 %v1441, %v2225
      %2227 = vmatmul.f32.gmra.mxu0 %v1828
      %v2228 = vpop.f32.mrf.mxu0
      %v2229 = vadd.f32 %v1444, %v2228
      %2230 = vmatmul.f32.gmra.mxu0 %v1831
      %v2231 = vpop.f32.mrf.mxu0
      %v2232 = vadd.f32 %v1447, %v2231
      %2233 = vmatmul.f32.gmra.mxu0 %v1834
      %v2234 = vpop.f32.mrf.mxu0
      %v2235 = vadd.f32 %v1450, %v2234
      %2236 = vmatmul.f32.gmra.mxu0 %v1837
      %v2237 = vpop.f32.mrf.mxu0
      %v2238 = vadd.f32 %v1453, %v2237
      %2239 = vmatmul.f32.gmra.mxu0 %v1840
      %v2240 = vpop.f32.mrf.mxu0
      %v2241 = vadd.f32 %v1456, %v2240
      %2242 = vmatmul.f32.gmra.mxu0 %v1843
      %v2243 = vpop.f32.mrf.mxu0
      %v2244 = vadd.f32 %v1459, %v2243
      %2245 = vmatmul.f32.gmra.mxu0 %v1846
      %v2246 = vpop.f32.mrf.mxu0
      %v2247 = vadd.f32 %v1462, %v2246
      %2248 = vmatmul.f32.gmra.mxu0 %v1849
      %v2249 = vpop.f32.mrf.mxu0
      %v2250 = vadd.f32 %v1465, %v2249
      %2251 = vmatmul.f32.gmra.mxu0 %v1852
      %v2252 = vpop.f32.mrf.mxu0
      %v2253 = vadd.f32 %v1468, %v2252
      %2254 = vmatmul.f32.gmra.mxu0 %v1855
      %v2255 = vpop.f32.mrf.mxu0
      %v2256 = vadd.f32 %v1471, %v2255
      %2257 = vmatmul.f32.gmra.mxu0 %v1858
      %v2258 = vpop.f32.mrf.mxu0
      %v2259 = vadd.f32 %v1474, %v2258
      %2260 = vmatmul.f32.gmra.mxu0 %v1861
      %v2261 = vpop.f32.mrf.mxu0
      %v2262 = vadd.f32 %v1477, %v2261
      %2263 = vmatmul.f32.gmra.mxu0 %v1864
      %v2264 = vpop.f32.mrf.mxu0
      %v2265 = vadd.f32 %v1480, %v2264
      %2266 = vmatmul.f32.gmra.mxu0 %v1867
      %v2267 = vpop.f32.mrf.mxu0
      %v2268 = vadd.f32 %v1483, %v2267
      %2269 = vmatmul.f32.gmra.mxu0 %v1870
      %v2270 = vpop.f32.mrf.mxu0
      %v2271 = vadd.f32 %v1486, %v2270
      %2272 = vmatmul.f32.gmra.mxu0 %v1873
      %v2273 = vpop.f32.mrf.mxu0
      %v2274 = vadd.f32 %v1489, %v2273
      %2275 = vmatmul.f32.gmra.mxu0 %v1876
      %v2276 = vpop.f32.mrf.mxu0
      %v2277 = vadd.f32 %v1492, %v2276
      %2278 = vmatmul.f32.gmra.mxu0 %v1879
      %v2279 = vpop.f32.mrf.mxu0
      %v2280 = vadd.f32 %v1495, %v2279
      %2281 = vmatmul.f32.gmra.mxu0 %v1882
      %v2282 = vpop.f32.mrf.mxu0
      %v2283 = vadd.f32 %v1498, %v2282
      %2284 = vmatmul.f32.gmra.mxu0 %v1885
      %v2285 = vpop.f32.mrf.mxu0
      %v2286 = vadd.f32 %v1501, %v2285
      %2287 = vmatmul.f32.gmra.mxu0 %v1888
      %v2288 = vpop.f32.mrf.mxu0
      %v2289 = vadd.f32 %v1504, %v2288
      %2290 = vmatmul.f32.gmra.mxu0 %v1891
      %v2291 = vpop.f32.mrf.mxu0
      %v2292 = vadd.f32 %v1507, %v2291
      %2293 = vmatmul.f32.gmra.mxu0 %v1894
      %v2294 = vpop.f32.mrf.mxu0
      %v2295 = vadd.f32 %v1510, %v2294
      %2296 = vmatmul.f32.gmra.mxu0 %v1897
      %v2297 = vpop.f32.mrf.mxu0
      %v2298 = vadd.f32 %v1513, %v2297
      %2299 = vmatmul.f32.gmra.mxu0 %v1900
      %v2300 = vpop.f32.mrf.mxu0
      %v2301 = vadd.f32 %v1516, %v2300
      %2302 = vmatmul.f32.gmra.mxu0 %v1903
      %v2303 = vpop.f32.mrf.mxu0
      %v2304 = vadd.f32 %v1519, %v2303
      %2305 = vmatmul.f32.gmra.mxu0 %v1906
      %v2306 = vpop.f32.mrf.mxu0
      %v2307 = vadd.f32 %v1522, %v2306
      %2308 = vmatmul.f32.gmra.mxu0 %v1909
      %v2309 = vpop.f32.mrf.mxu0
      %v2310 = vadd.f32 %v1525, %v2309
      %2311 = vmatmul.f32.gmra.mxu0 %v1912
      %v2312 = vpop.f32.mrf.mxu0
      %v2313 = vadd.f32 %v1528, %v2312
      %2314 = vmatmul.f32.gmra.mxu0 %v1915
      %v2315 = vpop.f32.mrf.mxu0
      %v2316 = vadd.f32 %v1531, %v2315
      %2317 = vmatmul.f32.gmra.mxu0 %v1918
      %v2318 = vpop.f32.mrf.mxu0
      %v2319 = vadd.f32 %v1534, %v2318
      %2320 = vmatmul.f32.gmra.mxu0 %v1921
      %v2321 = vpop.f32.mrf.mxu0
      %v2322 = vadd.f32 %v1537, %v2321
      %2323 = vmatmul.f32.gmra.mxu0 %v1924
      %v2324 = vpop.f32.mrf.mxu0
      %v2325 = vadd.f32 %v1540, %v2324
      %2326 = vmatmul.f32.gmra.mxu0 %v1927
      %v2327 = vpop.f32.mrf.mxu0
      %v2328 = vadd.f32 %v1543, %v2327
      %2329 = vmatmul.f32.gmra.mxu0 %v1930
      %v2330 = vpop.f32.mrf.mxu0
      %v2331 = vadd.f32 %v1546, %v2330
      %2332 = vmatmul.f32.gmra.mxu0 %v1933
      %v2333 = vpop.f32.mrf.mxu0
      %v2334 = vadd.f32 %v1549, %v2333
      %2335 = vmatmul.f32.gmra.mxu0 %v1936
      %v2336 = vpop.f32.mrf.mxu0
      %v2337 = vadd.f32 %v1552, %v2336
      %2338 = vmatmul.f32.gmra.mxu0 %v1939
      %v2339 = vpop.f32.mrf.mxu0
      %v2340 = vadd.f32 %v1555, %v2339
      %2341 = vmatmul.f32.gmra.mxu0 %v1942
      %v2342 = vpop.f32.mrf.mxu0
      %v2343 = vadd.f32 %v1558, %v2342
      %2344 = vmatmul.f32.gmra.mxu0 %v1945
      %v2345 = vpop.f32.mrf.mxu0
      %v2346 = vadd.f32 %v1561, %v2345
      %2347 = vmatmul.f32.gmra.mxu0 %v1948
      %v2348 = vpop.f32.mrf.mxu0
      %v2349 = vadd.f32 %v1564, %v2348
      %2350 = vmatmul.f32.gmra.mxu0 %v1951
      %v2351 = vpop.f32.mrf.mxu0
      %v2352 = vadd.f32 %v1567, %v2351
      %2353 = vmatmul.f32.gmra.mxu0 %v1954
      %v2354 = vpop.f32.mrf.mxu0
      %v2355 = vadd.f32 %v1570, %v2354
      %2356 = vmatmul.f32.gmra.mxu0 %v1957
      %v2357 = vpop.f32.mrf.mxu0
      %v2358 = vadd.f32 %v1573, %v2357
      %2359 = vmatmul.f32.gmra.mxu0 %v1960
      %v2360 = vpop.f32.mrf.mxu0
      %v2361 = vadd.f32 %v1576, %v2360
      %2362 = vmatmul.f32.gmra.mxu0 %v1963
      %v2363 = vpop.f32.mrf.mxu0
      %v2364 = vadd.f32 %v1579, %v2363
      %2365 = vmatmul.f32.gmra.mxu0 %v1966
      %v2366 = vpop.f32.mrf.mxu0
      %v2367 = vadd.f32 %v1582, %v2366
      %2368 = vmatmul.f32.gmra.mxu0 %v1969
      %v2369 = vpop.f32.mrf.mxu0
      %v2370 = vadd.f32 %v1585, %v2369
      %2371 = vmatmul.f32.gmra.mxu0 %v1972
      %v2372 = vpop.f32.mrf.mxu0
      %v2373 = vadd.f32 %v1588, %v2372
      %2374 = vmatmul.f32.gmra.mxu0 %v1975
      %v2375 = vpop.f32.mrf.mxu0
      %v2376 = vadd.f32 %v1591, %v2375
      %2377 = vmatmul.f32.gmra.mxu0 %v1978
      %v2378 = vpop.f32.mrf.mxu0
      %v2379 = vadd.f32 %v1594, %v2378
      %2380 = vmatmul.f32.gmra.mxu0 %v1981
      %v2381 = vpop.f32.mrf.mxu0
      %v2382 = vadd.f32 %v1597, %v2381
      %2383 = vmatmul.f32.gmra.mxu0 %v1984
      %v2384 = vpop.f32.mrf.mxu0
      %v2385 = vadd.f32 %v1600, %v2384
      %2386 = vmatmul.f32.gmra.mxu0 %v1987
      %v2387 = vpop.f32.mrf.mxu0
      %v2388 = vadd.f32 %v1603, %v2387
      %2389 = vmatmul.f32.gmra.mxu0 %v1990
      %v2390 = vpop.f32.mrf.mxu0
      %v2391 = vadd.f32 %v1606, %v2390
      %2392 = vmatmul.f32.gmra.mxu0 %v1993
      %v2393 = vpop.f32.mrf.mxu0
      %v2394 = vadd.f32 %v1609, %v2393
      %2395 = vmatmul.f32.gmra.mxu0 %v1996
      %v2396 = vpop.f32.mrf.mxu0
      %v2397 = vadd.f32 %v1612, %v2396
      %2398 = vmatmul.f32.gmra.mxu0 %v1999
      %v2399 = vpop.f32.mrf.mxu0
      %v2400 = vadd.f32 %v1615, %v2399
      %2401 = vmatmul.f32.gmra.mxu0 %v2002
      %v2402 = vpop.f32.mrf.mxu0
      %v2403 = vadd.f32 %v1618, %v2402
      %2404 = vmatmul.f32.gmra.mxu0 %v2005
      %v2405 = vpop.f32.mrf.mxu0
      %v2406 = vadd.f32 %v1621, %v2405
      %2407 = vmatmul.f32.gmra.mxu0 %v2008
      %v2408 = vpop.f32.mrf.mxu0
      %v2409 = vadd.f32 %v1624, %v2408
      %2410 = vmatmul.f32.gmra.mxu0 %v2011
      %v2411 = vpop.f32.mrf.mxu0
      %v2412 = vadd.f32 %v1627, %v2411
      %2413 = vmatmul.f32.gmra.mxu0 %v2014
      %v2414 = vpop.f32.mrf.mxu0
      %v2415 = vadd.f32 %v1630, %v2414
      %2416 = vmatmul.f32.gmra.mxu0 %v2017
      %v2417 = vpop.f32.mrf.mxu0
      %v2418 = vadd.f32 %v1633, %v2417
      %2419 = vmatmul.f32.gmra.mxu0 %v2020
      %v2420 = vpop.f32.mrf.mxu0
      %v2421 = vadd.f32 %v1636, %v2420
      %2422 = vmatmul.f32.gmra.mxu0 %v2023
      %v2423 = vpop.f32.mrf.mxu0
      %v2424 = vadd.f32 %v1639, %v2423
      %2425 = vmatmul.f32.gmra.mxu0 %v2026
      %v2426 = vpop.f32.mrf.mxu0
      %v2427 = vadd.f32 %v1642, %v2426
      %2428 = vmatmul.f32.gmra.mxu0 %v2029
      %v2429 = vpop.f32.mrf.mxu0
      %v2430 = vadd.f32 %v1645, %v2429
      %2431 = vmatmul.f32.gmra.mxu0 %v2032
      %v2432 = vpop.f32.mrf.mxu0
      %v2433 = vadd.f32 %v1648, %v2432
      %2434 = vmatmul.f32.gmra.mxu0 %v2035
      %v2435 = vpop.f32.mrf.mxu0
      %v2436 = vadd.f32 %v1651, %v2435
      %2437 = vmatmul.f32.gmra.mxu0 %v2038
      %v2438 = vpop.f32.mrf.mxu0
      %v2439 = vadd.f32 %v1654, %v2438
      %2440 = vmatmul.f32.gmra.mxu0 %v2041
      %v2441 = vpop.f32.mrf.mxu0
      %v2442 = vadd.f32 %v1657, %v2441
      %2443 = vdwg.mxu0
      %s2444 = scalar_lea.vmem [#allocation2], 40
      %v2445 = vld [vmem:[%s2444] sm:$0xff]
      %v2446 = vld [vmem:[%s2444 + $0x8] sm:$0xff]
      %v2447 = vld [vmem:[%s2444 + $0x10] sm:$0xff]
      %v2448 = vld [vmem:[%s2444 + $0x18] sm:$0xff]
      %v2449 = vld [vmem:[%s2444 + $0x28] sm:$0xff]
      %v2450 = vld [vmem:[%s2444 + $0x30] sm:$0xff]
      %v2451 = vld [vmem:[%s2444 + $0x38] sm:$0xff]
      %v2452 = vld [vmem:[%s2444 + $0x40] sm:$0xff]
      %v2453 = vld [vmem:[%s2444 + $0x50] sm:$0xff]
      %v2454 = vld [vmem:[%s2444 + $0x58] sm:$0xff]
      %v2455 = vld [vmem:[%s2444 + $0x60] sm:$0xff]
      %v2456 = vld [vmem:[%s2444 + $0x68] sm:$0xff]
      %v2457 = vld [vmem:[%s2444 + $0x78] sm:$0xff]
      %v2458 = vld [vmem:[%s2444 + $0x80] sm:$0xff]
      %v2459 = vld [vmem:[%s2444 + $0x88] sm:$0xff]
      %v2460 = vld [vmem:[%s2444 + $0x90] sm:$0xff]
      %v2461 = vld [vmem:[%s2444 + $0xa0] sm:$0xff]
      %v2462 = vld [vmem:[%s2444 + $0xa8] sm:$0xff]
      %v2463 = vld [vmem:[%s2444 + $0xb0] sm:$0xff]
      %v2464 = vld [vmem:[%s2444 + $0xb8] sm:$0xff]
      %v2465 = vld [vmem:[%s2444 + $0xc8] sm:$0xff]
      %v2466 = vld [vmem:[%s2444 + $0xd0] sm:$0xff]
      %v2467 = vld [vmem:[%s2444 + $0xd8] sm:$0xff]
      %v2468 = vld [vmem:[%s2444 + $0xe0] sm:$0xff]
      %v2469 = vld [vmem:[%s2444 + $0xf0] sm:$0xff]
      %v2470 = vld [vmem:[%s2444 + $0xf8] sm:$0xff]
      %v2471 = vld [vmem:[%s2444 + $0x100] sm:$0xff]
      %v2472 = vld [vmem:[%s2444 + $0x108] sm:$0xff]
      %v2473 = vld [vmem:[%s2444 + $0x118] sm:$0xff]
      %v2474 = vld [vmem:[%s2444 + $0x120] sm:$0xff]
      %v2475 = vld [vmem:[%s2444 + $0x128] sm:$0xff]
      %v2476 = vld [vmem:[%s2444 + $0x130] sm:$0xff]
      %v2477 = vld [vmem:[%s2444 + $0x140] sm:$0xff]
      %v2478 = vld [vmem:[%s2444 + $0x148] sm:$0xff]
      %v2479 = vld [vmem:[%s2444 + $0x150] sm:$0xff]
      %v2480 = vld [vmem:[%s2444 + $0x158] sm:$0xff]
      %v2481 = vld [vmem:[%s2444 + $0x168] sm:$0xff]
      %v2482 = vld [vmem:[%s2444 + $0x170] sm:$0xff]
      %v2483 = vld [vmem:[%s2444 + $0x178] sm:$0xff]
      %v2484 = vld [vmem:[%s2444 + $0x180] sm:$0xff]
      %v2485 = vld [vmem:[%s2444 + $0x190] sm:$0xff]
      %v2486 = vld [vmem:[%s2444 + $0x198] sm:$0xff]
      %v2487 = vld [vmem:[%s2444 + $0x1a0] sm:$0xff]
      %v2488 = vld [vmem:[%s2444 + $0x1a8] sm:$0xff]
      %v2489 = vld [vmem:[%s2444 + $0x1b8] sm:$0xff]
      %v2490 = vld [vmem:[%s2444 + $0x1c0] sm:$0xff]
      %v2491 = vld [vmem:[%s2444 + $0x1c8] sm:$0xff]
      %v2492 = vld [vmem:[%s2444 + $0x1d0] sm:$0xff]
      %v2493 = vld [vmem:[%s2444 + $0x1e0] sm:$0xff]
      %v2494 = vld [vmem:[%s2444 + $0x1e8] sm:$0xff]
      %v2495 = vld [vmem:[%s2444 + $0x1f0] sm:$0xff]
      %v2496 = vld [vmem:[%s2444 + $0x1f8] sm:$0xff]
      %v2497 = vld [vmem:[%s2444 + $0x208] sm:$0xff]
      %v2498 = vld [vmem:[%s2444 + $0x210] sm:$0xff]
      %v2499 = vld [vmem:[%s2444 + $0x218] sm:$0xff]
      %v2500 = vld [vmem:[%s2444 + $0x220] sm:$0xff]
      %v2501 = vld [vmem:[%s2444 + $0x230] sm:$0xff]
      %v2502 = vld [vmem:[%s2444 + $0x238] sm:$0xff]
      %v2503 = vld [vmem:[%s2444 + $0x240] sm:$0xff]
      %v2504 = vld [vmem:[%s2444 + $0x248] sm:$0xff]
      %v2505 = vld [vmem:[%s2444 + $0x258] sm:$0xff]
      %v2506 = vld [vmem:[%s2444 + $0x260] sm:$0xff]
      %v2507 = vld [vmem:[%s2444 + $0x268] sm:$0xff]
      %v2508 = vld [vmem:[%s2444 + $0x270] sm:$0xff]
      %v2509 = vld [vmem:[%s2444 + $0x280] sm:$0xff]
      %v2510 = vld [vmem:[%s2444 + $0x288] sm:$0xff]
      %v2511 = vld [vmem:[%s2444 + $0x290] sm:$0xff]
      %v2512 = vld [vmem:[%s2444 + $0x298] sm:$0xff]
      %v2513 = vld [vmem:[%s2444 + $0x2a8] sm:$0xff]
      %v2514 = vld [vmem:[%s2444 + $0x2b0] sm:$0xff]
      %v2515 = vld [vmem:[%s2444 + $0x2b8] sm:$0xff]
      %v2516 = vld [vmem:[%s2444 + $0x2c0] sm:$0xff]
      %v2517 = vld [vmem:[%s2444 + $0x2d0] sm:$0xff]
      %v2518 = vld [vmem:[%s2444 + $0x2d8] sm:$0xff]
      %v2519 = vld [vmem:[%s2444 + $0x2e0] sm:$0xff]
      %v2520 = vld [vmem:[%s2444 + $0x2e8] sm:$0xff]
      %v2521 = vld [vmem:[%s2444 + $0x2f8] sm:$0xff]
      %v2522 = vld [vmem:[%s2444 + $0x300] sm:$0xff]
      %v2523 = vld [vmem:[%s2444 + $0x308] sm:$0xff]
      %v2524 = vld [vmem:[%s2444 + $0x310] sm:$0xff]
      %v2525 = vld [vmem:[%s2444 + $0x320] sm:$0xff]
      %v2526 = vld [vmem:[%s2444 + $0x328] sm:$0xff]
      %v2527 = vld [vmem:[%s2444 + $0x330] sm:$0xff]
      %v2528 = vld [vmem:[%s2444 + $0x338] sm:$0xff]
      %v2529 = vld [vmem:[%s2444 + $0x348] sm:$0xff]
      %v2530 = vld [vmem:[%s2444 + $0x350] sm:$0xff]
      %v2531 = vld [vmem:[%s2444 + $0x358] sm:$0xff]
      %v2532 = vld [vmem:[%s2444 + $0x360] sm:$0xff]
      %v2533 = vld [vmem:[%s2444 + $0x370] sm:$0xff]
      %v2534 = vld [vmem:[%s2444 + $0x378] sm:$0xff]
      %v2535 = vld [vmem:[%s2444 + $0x380] sm:$0xff]
      %v2536 = vld [vmem:[%s2444 + $0x388] sm:$0xff]
      %v2537 = vld [vmem:[%s2444 + $0x398] sm:$0xff]
      %v2538 = vld [vmem:[%s2444 + $0x3a0] sm:$0xff]
      %v2539 = vld [vmem:[%s2444 + $0x3a8] sm:$0xff]
      %v2540 = vld [vmem:[%s2444 + $0x3b0] sm:$0xff]
      %v2541 = vld [vmem:[%s2444 + $0x3c0] sm:$0xff]
      %v2542 = vld [vmem:[%s2444 + $0x3c8] sm:$0xff]
      %v2543 = vld [vmem:[%s2444 + $0x3d0] sm:$0xff]
      %v2544 = vld [vmem:[%s2444 + $0x3d8] sm:$0xff]
      %v2545 = vld [vmem:[%s2444 + $0x3e8] sm:$0xff]
      %v2546 = vld [vmem:[%s2444 + $0x3f0] sm:$0xff]
      %v2547 = vld [vmem:[%s2444 + $0x3f8] sm:$0xff]
      %v2548 = vld [vmem:[%s2444 + $0x400] sm:$0xff]
      %v2549 = vld [vmem:[%s2444 + $0x410] sm:$0xff]
      %v2550 = vld [vmem:[%s2444 + $0x418] sm:$0xff]
      %v2551 = vld [vmem:[%s2444 + $0x420] sm:$0xff]
      %v2552 = vld [vmem:[%s2444 + $0x428] sm:$0xff]
      %v2553 = vld [vmem:[%s2444 + $0x438] sm:$0xff]
      %v2554 = vld [vmem:[%s2444 + $0x440] sm:$0xff]
      %v2555 = vld [vmem:[%s2444 + $0x448] sm:$0xff]
      %v2556 = vld [vmem:[%s2444 + $0x450] sm:$0xff]
      %v2557 = vld [vmem:[%s2444 + $0x460] sm:$0xff]
      %v2558 = vld [vmem:[%s2444 + $0x468] sm:$0xff]
      %v2559 = vld [vmem:[%s2444 + $0x470] sm:$0xff]
      %v2560 = vld [vmem:[%s2444 + $0x478] sm:$0xff]
      %v2561 = vld [vmem:[%s2444 + $0x488] sm:$0xff]
      %v2562 = vld [vmem:[%s2444 + $0x490] sm:$0xff]
      %v2563 = vld [vmem:[%s2444 + $0x498] sm:$0xff]
      %v2564 = vld [vmem:[%s2444 + $0x4a0] sm:$0xff]
      %v2565 = vld [vmem:[%s2444 + $0x4b0] sm:$0xff]
      %v2566 = vld [vmem:[%s2444 + $0x4b8] sm:$0xff]
      %v2567 = vld [vmem:[%s2444 + $0x4c0] sm:$0xff]
      %v2568 = vld [vmem:[%s2444 + $0x4c8] sm:$0xff]
      %v2569 = vld [vmem:[%s2444 + $0x4d8] sm:$0xff]
      %v2570 = vld [vmem:[%s2444 + $0x4e0] sm:$0xff]
      %v2571 = vld [vmem:[%s2444 + $0x4e8] sm:$0xff]
      %v2572 = vld [vmem:[%s2444 + $0x4f0] sm:$0xff]
      %s2573 = scalar_lea.vmem %s2, 32
      %v2574 = vld [vmem:[%s2573] sm:$0xff]
      %v2575 = vld [vmem:[%s2573 + $0x8] sm:$0xff]
      %v2577 = vsel %vm352, %v2445, 0
      %v2580 = vsel %vm352, %v2446, 0
      %v2583 = vsel %vm352, %v2447, 0
      %v2586 = vsel %vm352, %v2448, 0
      %v2589 = vsel %vm352, %v2449, 0
      %v2592 = vsel %vm352, %v2450, 0
      %v2595 = vsel %vm352, %v2451, 0
      %v2598 = vsel %vm352, %v2452, 0
      %v2601 = vsel %vm352, %v2453, 0
      %v2604 = vsel %vm352, %v2454, 0
      %v2607 = vsel %vm352, %v2455, 0
      %v2610 = vsel %vm352, %v2456, 0
      %v2613 = vsel %vm352, %v2457, 0
      %v2616 = vsel %vm352, %v2458, 0
      %v2619 = vsel %vm352, %v2459, 0
      %v2622 = vsel %vm352, %v2460, 0
      %v2625 = vsel %vm352, %v2461, 0
      %v2628 = vsel %vm352, %v2462, 0
      %v2631 = vsel %vm352, %v2463, 0
      %v2634 = vsel %vm352, %v2464, 0
      %v2637 = vsel %vm352, %v2465, 0
      %v2640 = vsel %vm352, %v2466, 0
      %v2643 = vsel %vm352, %v2467, 0
      %v2646 = vsel %vm352, %v2468, 0
      %v2649 = vsel %vm352, %v2469, 0
      %v2652 = vsel %vm352, %v2470, 0
      %v2655 = vsel %vm352, %v2471, 0
      %v2658 = vsel %vm352, %v2472, 0
      %v2661 = vsel %vm352, %v2473, 0
      %v2664 = vsel %vm352, %v2474, 0
      %v2667 = vsel %vm352, %v2475, 0
      %v2670 = vsel %vm352, %v2476, 0
      %v2673 = vsel %vm352, %v2477, 0
      %v2676 = vsel %vm352, %v2478, 0
      %v2679 = vsel %vm352, %v2479, 0
      %v2682 = vsel %vm352, %v2480, 0
      %v2685 = vsel %vm352, %v2481, 0
      %v2688 = vsel %vm352, %v2482, 0
      %v2691 = vsel %vm352, %v2483, 0
      %v2694 = vsel %vm352, %v2484, 0
      %v2697 = vsel %vm352, %v2485, 0
      %v2700 = vsel %vm352, %v2486, 0
      %v2703 = vsel %vm352, %v2487, 0
      %v2706 = vsel %vm352, %v2488, 0
      %v2709 = vsel %vm352, %v2489, 0
      %v2712 = vsel %vm352, %v2490, 0
      %v2715 = vsel %vm352, %v2491, 0
      %v2718 = vsel %vm352, %v2492, 0
      %v2721 = vsel %vm352, %v2493, 0
      %v2724 = vsel %vm352, %v2494, 0
      %v2727 = vsel %vm352, %v2495, 0
      %v2730 = vsel %vm352, %v2496, 0
      %v2733 = vsel %vm352, %v2497, 0
      %v2736 = vsel %vm352, %v2498, 0
      %v2739 = vsel %vm352, %v2499, 0
      %v2742 = vsel %vm352, %v2500, 0
      %v2745 = vsel %vm352, %v2501, 0
      %v2748 = vsel %vm352, %v2502, 0
      %v2751 = vsel %vm352, %v2503, 0
      %v2754 = vsel %vm352, %v2504, 0
      %v2757 = vsel %vm352, %v2505, 0
      %v2760 = vsel %vm352, %v2506, 0
      %v2763 = vsel %vm352, %v2507, 0
      %v2766 = vsel %vm352, %v2508, 0
      %v2769 = vsel %vm352, %v2509, 0
      %v2772 = vsel %vm352, %v2510, 0
      %v2775 = vsel %vm352, %v2511, 0
      %v2778 = vsel %vm352, %v2512, 0
      %v2781 = vsel %vm352, %v2513, 0
      %v2784 = vsel %vm352, %v2514, 0
      %v2787 = vsel %vm352, %v2515, 0
      %v2790 = vsel %vm352, %v2516, 0
      %v2793 = vsel %vm352, %v2517, 0
      %v2796 = vsel %vm352, %v2518, 0
      %v2799 = vsel %vm352, %v2519, 0
      %v2802 = vsel %vm352, %v2520, 0
      %v2805 = vsel %vm352, %v2521, 0
      %v2808 = vsel %vm352, %v2522, 0
      %v2811 = vsel %vm352, %v2523, 0
      %v2814 = vsel %vm352, %v2524, 0
      %v2817 = vsel %vm352, %v2525, 0
      %v2820 = vsel %vm352, %v2526, 0
      %v2823 = vsel %vm352, %v2527, 0
      %v2826 = vsel %vm352, %v2528, 0
      %v2829 = vsel %vm352, %v2529, 0
      %v2832 = vsel %vm352, %v2530, 0
      %v2835 = vsel %vm352, %v2531, 0
      %v2838 = vsel %vm352, %v2532, 0
      %v2841 = vsel %vm352, %v2533, 0
      %v2844 = vsel %vm352, %v2534, 0
      %v2847 = vsel %vm352, %v2535, 0
      %v2850 = vsel %vm352, %v2536, 0
      %v2853 = vsel %vm352, %v2537, 0
      %v2856 = vsel %vm352, %v2538, 0
      %v2859 = vsel %vm352, %v2539, 0
      %v2862 = vsel %vm352, %v2540, 0
      %v2865 = vsel %vm352, %v2541, 0
      %v2868 = vsel %vm352, %v2542, 0
      %v2871 = vsel %vm352, %v2543, 0
      %v2874 = vsel %vm352, %v2544, 0
      %v2877 = vsel %vm352, %v2545, 0
      %v2880 = vsel %vm352, %v2546, 0
      %v2883 = vsel %vm352, %v2547, 0
      %v2886 = vsel %vm352, %v2548, 0
      %v2889 = vsel %vm352, %v2549, 0
      %v2892 = vsel %vm352, %v2550, 0
      %v2895 = vsel %vm352, %v2551, 0
      %v2898 = vsel %vm352, %v2552, 0
      %v2901 = vsel %vm352, %v2553, 0
      %v2904 = vsel %vm352, %v2554, 0
      %v2907 = vsel %vm352, %v2555, 0
      %v2910 = vsel %vm352, %v2556, 0
      %v2913 = vsel %vm352, %v2557, 0
      %v2916 = vsel %vm352, %v2558, 0
      %v2919 = vsel %vm352, %v2559, 0
      %v2922 = vsel %vm352, %v2560, 0
      %v2925 = vsel %vm352, %v2561, 0
      %v2928 = vsel %vm352, %v2562, 0
      %v2931 = vsel %vm352, %v2563, 0
      %v2934 = vsel %vm352, %v2564, 0
      %v2937 = vsel %vm352, %v2565, 0
      %v2940 = vsel %vm352, %v2566, 0
      %v2943 = vsel %vm352, %v2567, 0
      %v2946 = vsel %vm352, %v2568, 0
      %v2949 = vsel %vm352, %v2569, 0
      %v2952 = vsel %vm352, %v2570, 0
      %v2955 = vsel %vm352, %v2571, 0
      %v2958 = vsel %vm352, %v2572, 0
      %2960 = vmatpush.msra.mxu0 0.0
      %2961 = vmatpush.msra.mxu0 0.0
      %2962 = vmatpush.msra.mxu0 0.0
      %2963 = vmatpush.msra.mxu0 0.0
      %2964 = vmatpush.msra.mxu0 0.0
      %2965 = vmatpush.msra.mxu0 0.0
      %2966 = vmatpush.msra.mxu0 0.0
      %2967 = vmatpush.msra.mxu0 0.0
      %2968 = vmatpush.msra.mxu0 0.0
      %2969 = vmatpush.msra.mxu0 0.0
      %2970 = vmatpush.msra.mxu0 0.0
      %2971 = vmatpush.msra.mxu0 0.0
      %2972 = vmatpush.msra.mxu0 0.0
      %2973 = vmatpush.msra.mxu0 0.0
      %2974 = vmatpush.msra.mxu0 %v2575
      %2975 = vmatpush.msra.mxu0 %v2574
      %2976 = vmatmul.f32.gmra.mxu0 %v2577
      %v2977 = vpop.f32.mrf.mxu0
      %v2978 = vadd.f32 0.0, %v2977
      %2979 = vmatmul.f32.gmra.mxu0 %v2580
      %v2980 = vpop.f32.mrf.mxu0
      %v2981 = vadd.f32 0.0, %v2980
      %2982 = vmatmul.f32.gmra.mxu0 %v2583
      %v2983 = vpop.f32.mrf.mxu0
      %v2984 = vadd.f32 0.0, %v2983
      %2985 = vmatmul.f32.gmra.mxu0 %v2586
      %v2986 = vpop.f32.mrf.mxu0
      %v2987 = vadd.f32 0.0, %v2986
      %2988 = vmatmul.f32.gmra.mxu0 %v2589
      %v2989 = vpop.f32.mrf.mxu0
      %v2990 = vadd.f32 0.0, %v2989
      %2991 = vmatmul.f32.gmra.mxu0 %v2592
      %v2992 = vpop.f32.mrf.mxu0
      %v2993 = vadd.f32 0.0, %v2992
      %2994 = vmatmul.f32.gmra.mxu0 %v2595
      %v2995 = vpop.f32.mrf.mxu0
      %v2996 = vadd.f32 0.0, %v2995
      %2997 = vmatmul.f32.gmra.mxu0 %v2598
      %v2998 = vpop.f32.mrf.mxu0
      %v2999 = vadd.f32 0.0, %v2998
      %3000 = vmatmul.f32.gmra.mxu0 %v2601
      %v3001 = vpop.f32.mrf.mxu0
      %v3002 = vadd.f32 0.0, %v3001
      %3003 = vmatmul.f32.gmra.mxu0 %v2604
      %v3004 = vpop.f32.mrf.mxu0
      %v3005 = vadd.f32 0.0, %v3004
      %3006 = vmatmul.f32.gmra.mxu0 %v2607
      %v3007 = vpop.f32.mrf.mxu0
      %v3008 = vadd.f32 0.0, %v3007
      %3009 = vmatmul.f32.gmra.mxu0 %v2610
      %v3010 = vpop.f32.mrf.mxu0
      %v3011 = vadd.f32 0.0, %v3010
      %3012 = vmatmul.f32.gmra.mxu0 %v2613
      %v3013 = vpop.f32.mrf.mxu0
      %v3014 = vadd.f32 0.0, %v3013
      %3015 = vmatmul.f32.gmra.mxu0 %v2616
      %v3016 = vpop.f32.mrf.mxu0
      %v3017 = vadd.f32 0.0, %v3016
      %3018 = vmatmul.f32.gmra.mxu0 %v2619
      %v3019 = vpop.f32.mrf.mxu0
      %v3020 = vadd.f32 0.0, %v3019
      %3021 = vmatmul.f32.gmra.mxu0 %v2622
      %v3022 = vpop.f32.mrf.mxu0
      %v3023 = vadd.f32 0.0, %v3022
      %3024 = vmatmul.f32.gmra.mxu0 %v2625
      %v3025 = vpop.f32.mrf.mxu0
      %v3026 = vadd.f32 0.0, %v3025
      %3027 = vmatmul.f32.gmra.mxu0 %v2628
      %v3028 = vpop.f32.mrf.mxu0
      %v3029 = vadd.f32 0.0, %v3028
      %3030 = vmatmul.f32.gmra.mxu0 %v2631
      %v3031 = vpop.f32.mrf.mxu0
      %v3032 = vadd.f32 0.0, %v3031
      %3033 = vmatmul.f32.gmra.mxu0 %v2634
      %v3034 = vpop.f32.mrf.mxu0
      %v3035 = vadd.f32 0.0, %v3034
      %3036 = vmatmul.f32.gmra.mxu0 %v2637
      %v3037 = vpop.f32.mrf.mxu0
      %v3038 = vadd.f32 0.0, %v3037
      %3039 = vmatmul.f32.gmra.mxu0 %v2640
      %v3040 = vpop.f32.mrf.mxu0
      %v3041 = vadd.f32 0.0, %v3040
      %3042 = vmatmul.f32.gmra.mxu0 %v2643
      %v3043 = vpop.f32.mrf.mxu0
      %v3044 = vadd.f32 0.0, %v3043
      %3045 = vmatmul.f32.gmra.mxu0 %v2646
      %v3046 = vpop.f32.mrf.mxu0
      %v3047 = vadd.f32 0.0, %v3046
      %3048 = vmatmul.f32.gmra.mxu0 %v2649
      %v3049 = vpop.f32.mrf.mxu0
      %v3050 = vadd.f32 0.0, %v3049
      %3051 = vmatmul.f32.gmra.mxu0 %v2652
      %v3052 = vpop.f32.mrf.mxu0
      %v3053 = vadd.f32 0.0, %v3052
      %3054 = vmatmul.f32.gmra.mxu0 %v2655
      %v3055 = vpop.f32.mrf.mxu0
      %v3056 = vadd.f32 0.0, %v3055
      %3057 = vmatmul.f32.gmra.mxu0 %v2658
      %v3058 = vpop.f32.mrf.mxu0
      %v3059 = vadd.f32 0.0, %v3058
      %3060 = vmatmul.f32.gmra.mxu0 %v2661
      %v3061 = vpop.f32.mrf.mxu0
      %v3062 = vadd.f32 0.0, %v3061
      %3063 = vmatmul.f32.gmra.mxu0 %v2664
      %v3064 = vpop.f32.mrf.mxu0
      %v3065 = vadd.f32 0.0, %v3064
      %3066 = vmatmul.f32.gmra.mxu0 %v2667
      %v3067 = vpop.f32.mrf.mxu0
      %v3068 = vadd.f32 0.0, %v3067
      %3069 = vmatmul.f32.gmra.mxu0 %v2670
      %v3070 = vpop.f32.mrf.mxu0
      %v3071 = vadd.f32 0.0, %v3070
      %3072 = vmatmul.f32.gmra.mxu0 %v2673
      %v3073 = vpop.f32.mrf.mxu0
      %v3074 = vadd.f32 0.0, %v3073
      %3075 = vmatmul.f32.gmra.mxu0 %v2676
      %v3076 = vpop.f32.mrf.mxu0
      %v3077 = vadd.f32 0.0, %v3076
      %3078 = vmatmul.f32.gmra.mxu0 %v2679
      %v3079 = vpop.f32.mrf.mxu0
      %v3080 = vadd.f32 0.0, %v3079
      %3081 = vmatmul.f32.gmra.mxu0 %v2682
      %v3082 = vpop.f32.mrf.mxu0
      %v3083 = vadd.f32 0.0, %v3082
      %3084 = vmatmul.f32.gmra.mxu0 %v2685
      %v3085 = vpop.f32.mrf.mxu0
      %v3086 = vadd.f32 0.0, %v3085
      %3087 = vmatmul.f32.gmra.mxu0 %v2688
      %v3088 = vpop.f32.mrf.mxu0
      %v3089 = vadd.f32 0.0, %v3088
      %3090 = vmatmul.f32.gmra.mxu0 %v2691
      %v3091 = vpop.f32.mrf.mxu0
      %v3092 = vadd.f32 0.0, %v3091
      %3093 = vmatmul.f32.gmra.mxu0 %v2694
      %v3094 = vpop.f32.mrf.mxu0
      %v3095 = vadd.f32 0.0, %v3094
      %3096 = vmatmul.f32.gmra.mxu0 %v2697
      %v3097 = vpop.f32.mrf.mxu0
      %v3098 = vadd.f32 0.0, %v3097
      %3099 = vmatmul.f32.gmra.mxu0 %v2700
      %v3100 = vpop.f32.mrf.mxu0
      %v3101 = vadd.f32 0.0, %v3100
      %3102 = vmatmul.f32.gmra.mxu0 %v2703
      %v3103 = vpop.f32.mrf.mxu0
      %v3104 = vadd.f32 0.0, %v3103
      %3105 = vmatmul.f32.gmra.mxu0 %v2706
      %v3106 = vpop.f32.mrf.mxu0
      %v3107 = vadd.f32 0.0, %v3106
      %3108 = vmatmul.f32.gmra.mxu0 %v2709
      %v3109 = vpop.f32.mrf.mxu0
      %v3110 = vadd.f32 0.0, %v3109
      %3111 = vmatmul.f32.gmra.mxu0 %v2712
      %v3112 = vpop.f32.mrf.mxu0
      %v3113 = vadd.f32 0.0, %v3112
      %3114 = vmatmul.f32.gmra.mxu0 %v2715
      %v3115 = vpop.f32.mrf.mxu0
      %v3116 = vadd.f32 0.0, %v3115
      %3117 = vmatmul.f32.gmra.mxu0 %v2718
      %v3118 = vpop.f32.mrf.mxu0
      %v3119 = vadd.f32 0.0, %v3118
      %3120 = vmatmul.f32.gmra.mxu0 %v2721
      %v3121 = vpop.f32.mrf.mxu0
      %v3122 = vadd.f32 0.0, %v3121
      %3123 = vmatmul.f32.gmra.mxu0 %v2724
      %v3124 = vpop.f32.mrf.mxu0
      %v3125 = vadd.f32 0.0, %v3124
      %3126 = vmatmul.f32.gmra.mxu0 %v2727
      %v3127 = vpop.f32.mrf.mxu0
      %v3128 = vadd.f32 0.0, %v3127
      %3129 = vmatmul.f32.gmra.mxu0 %v2730
      %v3130 = vpop.f32.mrf.mxu0
      %v3131 = vadd.f32 0.0, %v3130
      %3132 = vmatmul.f32.gmra.mxu0 %v2733
      %v3133 = vpop.f32.mrf.mxu0
      %v3134 = vadd.f32 0.0, %v3133
      %3135 = vmatmul.f32.gmra.mxu0 %v2736
      %v3136 = vpop.f32.mrf.mxu0
      %v3137 = vadd.f32 0.0, %v3136
      %3138 = vmatmul.f32.gmra.mxu0 %v2739
      %v3139 = vpop.f32.mrf.mxu0
      %v3140 = vadd.f32 0.0, %v3139
      %3141 = vmatmul.f32.gmra.mxu0 %v2742
      %v3142 = vpop.f32.mrf.mxu0
      %v3143 = vadd.f32 0.0, %v3142
      %3144 = vmatmul.f32.gmra.mxu0 %v2745
      %v3145 = vpop.f32.mrf.mxu0
      %v3146 = vadd.f32 0.0, %v3145
      %3147 = vmatmul.f32.gmra.mxu0 %v2748
      %v3148 = vpop.f32.mrf.mxu0
      %v3149 = vadd.f32 0.0, %v3148
      %3150 = vmatmul.f32.gmra.mxu0 %v2751
      %v3151 = vpop.f32.mrf.mxu0
      %v3152 = vadd.f32 0.0, %v3151
      %3153 = vmatmul.f32.gmra.mxu0 %v2754
      %v3154 = vpop.f32.mrf.mxu0
      %v3155 = vadd.f32 0.0, %v3154
      %3156 = vmatmul.f32.gmra.mxu0 %v2757
      %v3157 = vpop.f32.mrf.mxu0
      %v3158 = vadd.f32 0.0, %v3157
      %3159 = vmatmul.f32.gmra.mxu0 %v2760
      %v3160 = vpop.f32.mrf.mxu0
      %v3161 = vadd.f32 0.0, %v3160
      %3162 = vmatmul.f32.gmra.mxu0 %v2763
      %v3163 = vpop.f32.mrf.mxu0
      %v3164 = vadd.f32 0.0, %v3163
      %3165 = vmatmul.f32.gmra.mxu0 %v2766
      %v3166 = vpop.f32.mrf.mxu0
      %v3167 = vadd.f32 0.0, %v3166
      %3168 = vmatmul.f32.gmra.mxu0 %v2769
      %v3169 = vpop.f32.mrf.mxu0
      %v3170 = vadd.f32 0.0, %v3169
      %3171 = vmatmul.f32.gmra.mxu0 %v2772
      %v3172 = vpop.f32.mrf.mxu0
      %v3173 = vadd.f32 0.0, %v3172
      %3174 = vmatmul.f32.gmra.mxu0 %v2775
      %v3175 = vpop.f32.mrf.mxu0
      %v3176 = vadd.f32 0.0, %v3175
      %3177 = vmatmul.f32.gmra.mxu0 %v2778
      %v3178 = vpop.f32.mrf.mxu0
      %v3179 = vadd.f32 0.0, %v3178
      %3180 = vmatmul.f32.gmra.mxu0 %v2781
      %v3181 = vpop.f32.mrf.mxu0
      %v3182 = vadd.f32 0.0, %v3181
      %3183 = vmatmul.f32.gmra.mxu0 %v2784
      %v3184 = vpop.f32.mrf.mxu0
      %v3185 = vadd.f32 0.0, %v3184
      %3186 = vmatmul.f32.gmra.mxu0 %v2787
      %v3187 = vpop.f32.mrf.mxu0
      %v3188 = vadd.f32 0.0, %v3187
      %3189 = vmatmul.f32.gmra.mxu0 %v2790
      %v3190 = vpop.f32.mrf.mxu0
      %v3191 = vadd.f32 0.0, %v3190
      %3192 = vmatmul.f32.gmra.mxu0 %v2793
      %v3193 = vpop.f32.mrf.mxu0
      %v3194 = vadd.f32 0.0, %v3193
      %3195 = vmatmul.f32.gmra.mxu0 %v2796
      %v3196 = vpop.f32.mrf.mxu0
      %v3197 = vadd.f32 0.0, %v3196
      %3198 = vmatmul.f32.gmra.mxu0 %v2799
      %v3199 = vpop.f32.mrf.mxu0
      %v3200 = vadd.f32 0.0, %v3199
      %3201 = vmatmul.f32.gmra.mxu0 %v2802
      %v3202 = vpop.f32.mrf.mxu0
      %v3203 = vadd.f32 0.0, %v3202
      %3204 = vmatmul.f32.gmra.mxu0 %v2805
      %v3205 = vpop.f32.mrf.mxu0
      %v3206 = vadd.f32 0.0, %v3205
      %3207 = vmatmul.f32.gmra.mxu0 %v2808
      %v3208 = vpop.f32.mrf.mxu0
      %v3209 = vadd.f32 0.0, %v3208
      %3210 = vmatmul.f32.gmra.mxu0 %v2811
      %v3211 = vpop.f32.mrf.mxu0
      %v3212 = vadd.f32 0.0, %v3211
      %3213 = vmatmul.f32.gmra.mxu0 %v2814
      %v3214 = vpop.f32.mrf.mxu0
      %v3215 = vadd.f32 0.0, %v3214
      %3216 = vmatmul.f32.gmra.mxu0 %v2817
      %v3217 = vpop.f32.mrf.mxu0
      %v3218 = vadd.f32 0.0, %v3217
      %3219 = vmatmul.f32.gmra.mxu0 %v2820
      %v3220 = vpop.f32.mrf.mxu0
      %v3221 = vadd.f32 0.0, %v3220
      %3222 = vmatmul.f32.gmra.mxu0 %v2823
      %v3223 = vpop.f32.mrf.mxu0
      %v3224 = vadd.f32 0.0, %v3223
      %3225 = vmatmul.f32.gmra.mxu0 %v2826
      %v3226 = vpop.f32.mrf.mxu0
      %v3227 = vadd.f32 0.0, %v3226
      %3228 = vmatmul.f32.gmra.mxu0 %v2829
      %v3229 = vpop.f32.mrf.mxu0
      %v3230 = vadd.f32 0.0, %v3229
      %3231 = vmatmul.f32.gmra.mxu0 %v2832
      %v3232 = vpop.f32.mrf.mxu0
      %v3233 = vadd.f32 0.0, %v3232
      %3234 = vmatmul.f32.gmra.mxu0 %v2835
      %v3235 = vpop.f32.mrf.mxu0
      %v3236 = vadd.f32 0.0, %v3235
      %3237 = vmatmul.f32.gmra.mxu0 %v2838
      %v3238 = vpop.f32.mrf.mxu0
      %v3239 = vadd.f32 0.0, %v3238
      %3240 = vmatmul.f32.gmra.mxu0 %v2841
      %v3241 = vpop.f32.mrf.mxu0
      %v3242 = vadd.f32 0.0, %v3241
      %3243 = vmatmul.f32.gmra.mxu0 %v2844
      %v3244 = vpop.f32.mrf.mxu0
      %v3245 = vadd.f32 0.0, %v3244
      %3246 = vmatmul.f32.gmra.mxu0 %v2847
      %v3247 = vpop.f32.mrf.mxu0
      %v3248 = vadd.f32 0.0, %v3247
      %3249 = vmatmul.f32.gmra.mxu0 %v2850
      %v3250 = vpop.f32.mrf.mxu0
      %v3251 = vadd.f32 0.0, %v3250
      %3252 = vmatmul.f32.gmra.mxu0 %v2853
      %v3253 = vpop.f32.mrf.mxu0
      %v3254 = vadd.f32 0.0, %v3253
      %3255 = vmatmul.f32.gmra.mxu0 %v2856
      %v3256 = vpop.f32.mrf.mxu0
      %v3257 = vadd.f32 0.0, %v3256
      %3258 = vmatmul.f32.gmra.mxu0 %v2859
      %v3259 = vpop.f32.mrf.mxu0
      %v3260 = vadd.f32 0.0, %v3259
      %3261 = vmatmul.f32.gmra.mxu0 %v2862
      %v3262 = vpop.f32.mrf.mxu0
      %v3263 = vadd.f32 0.0, %v3262
      %3264 = vmatmul.f32.gmra.mxu0 %v2865
      %v3265 = vpop.f32.mrf.mxu0
      %v3266 = vadd.f32 0.0, %v3265
      %3267 = vmatmul.f32.gmra.mxu0 %v2868
      %v3268 = vpop.f32.mrf.mxu0
      %v3269 = vadd.f32 0.0, %v3268
      %3270 = vmatmul.f32.gmra.mxu0 %v2871
      %v3271 = vpop.f32.mrf.mxu0
      %v3272 = vadd.f32 0.0, %v3271
      %3273 = vmatmul.f32.gmra.mxu0 %v2874
      %v3274 = vpop.f32.mrf.mxu0
      %v3275 = vadd.f32 0.0, %v3274
      %3276 = vmatmul.f32.gmra.mxu0 %v2877
      %v3277 = vpop.f32.mrf.mxu0
      %v3278 = vadd.f32 0.0, %v3277
      %3279 = vmatmul.f32.gmra.mxu0 %v2880
      %v3280 = vpop.f32.mrf.mxu0
      %v3281 = vadd.f32 0.0, %v3280
      %3282 = vmatmul.f32.gmra.mxu0 %v2883
      %v3283 = vpop.f32.mrf.mxu0
      %v3284 = vadd.f32 0.0, %v3283
      %3285 = vmatmul.f32.gmra.mxu0 %v2886
      %v3286 = vpop.f32.mrf.mxu0
      %v3287 = vadd.f32 0.0, %v3286
      %3288 = vmatmul.f32.gmra.mxu0 %v2889
      %v3289 = vpop.f32.mrf.mxu0
      %v3290 = vadd.f32 0.0, %v3289
      %3291 = vmatmul.f32.gmra.mxu0 %v2892
      %v3292 = vpop.f32.mrf.mxu0
      %v3293 = vadd.f32 0.0, %v3292
      %3294 = vmatmul.f32.gmra.mxu0 %v2895
      %v3295 = vpop.f32.mrf.mxu0
      %v3296 = vadd.f32 0.0, %v3295
      %3297 = vmatmul.f32.gmra.mxu0 %v2898
      %v3298 = vpop.f32.mrf.mxu0
      %v3299 = vadd.f32 0.0, %v3298
      %3300 = vmatmul.f32.gmra.mxu0 %v2901
      %v3301 = vpop.f32.mrf.mxu0
      %v3302 = vadd.f32 0.0, %v3301
      %3303 = vmatmul.f32.gmra.mxu0 %v2904
      %v3304 = vpop.f32.mrf.mxu0
      %v3305 = vadd.f32 0.0, %v3304
      %3306 = vmatmul.f32.gmra.mxu0 %v2907
      %v3307 = vpop.f32.mrf.mxu0
      %v3308 = vadd.f32 0.0, %v3307
      %3309 = vmatmul.f32.gmra.mxu0 %v2910
      %v3310 = vpop.f32.mrf.mxu0
      %v3311 = vadd.f32 0.0, %v3310
      %3312 = vmatmul.f32.gmra.mxu0 %v2913
      %v3313 = vpop.f32.mrf.mxu0
      %v3314 = vadd.f32 0.0, %v3313
      %3315 = vmatmul.f32.gmra.mxu0 %v2916
      %v3316 = vpop.f32.mrf.mxu0
      %v3317 = vadd.f32 0.0, %v3316
      %3318 = vmatmul.f32.gmra.mxu0 %v2919
      %v3319 = vpop.f32.mrf.mxu0
      %v3320 = vadd.f32 0.0, %v3319
      %3321 = vmatmul.f32.gmra.mxu0 %v2922
      %v3322 = vpop.f32.mrf.mxu0
      %v3323 = vadd.f32 0.0, %v3322
      %3324 = vmatmul.f32.gmra.mxu0 %v2925
      %v3325 = vpop.f32.mrf.mxu0
      %v3326 = vadd.f32 0.0, %v3325
      %3327 = vmatmul.f32.gmra.mxu0 %v2928
      %v3328 = vpop.f32.mrf.mxu0
      %v3329 = vadd.f32 0.0, %v3328
      %3330 = vmatmul.f32.gmra.mxu0 %v2931
      %v3331 = vpop.f32.mrf.mxu0
      %v3332 = vadd.f32 0.0, %v3331
      %3333 = vmatmul.f32.gmra.mxu0 %v2934
      %v3334 = vpop.f32.mrf.mxu0
      %v3335 = vadd.f32 0.0, %v3334
      %3336 = vmatmul.f32.gmra.mxu0 %v2937
      %v3337 = vpop.f32.mrf.mxu0
      %v3338 = vadd.f32 0.0, %v3337
      %3339 = vmatmul.f32.gmra.mxu0 %v2940
      %v3340 = vpop.f32.mrf.mxu0
      %v3341 = vadd.f32 0.0, %v3340
      %3342 = vmatmul.f32.gmra.mxu0 %v2943
      %v3343 = vpop.f32.mrf.mxu0
      %v3344 = vadd.f32 0.0, %v3343
      %3345 = vmatmul.f32.gmra.mxu0 %v2946
      %v3346 = vpop.f32.mrf.mxu0
      %v3347 = vadd.f32 0.0, %v3346
      %3348 = vmatmul.f32.gmra.mxu0 %v2949
      %v3349 = vpop.f32.mrf.mxu0
      %v3350 = vadd.f32 0.0, %v3349
      %3351 = vmatmul.f32.gmra.mxu0 %v2952
      %v3352 = vpop.f32.mrf.mxu0
      %v3353 = vadd.f32 0.0, %v3352
      %3354 = vmatmul.f32.gmra.mxu0 %v2955
      %v3355 = vpop.f32.mrf.mxu0
      %v3356 = vadd.f32 0.0, %v3355
      %3357 = vmatmul.f32.gmra.mxu0 %v2958
      %v3358 = vpop.f32.mrf.mxu0
      %v3359 = vadd.f32 0.0, %v3358
      %3360 = vdwg.mxu0
      %v3361 = vadd.f32 %v2061, %v2978
      %v3362 = vadd.f32 %v2064, %v2981
      %v3363 = vadd.f32 %v2067, %v2984
      %v3364 = vadd.f32 %v2070, %v2987
      %v3365 = vadd.f32 %v2073, %v2990
      %v3366 = vadd.f32 %v2076, %v2993
      %v3367 = vadd.f32 %v2079, %v2996
      %v3368 = vadd.f32 %v2082, %v2999
      %v3369 = vadd.f32 %v2085, %v3002
      %v3370 = vadd.f32 %v2088, %v3005
      %v3371 = vadd.f32 %v2091, %v3008
      %v3372 = vadd.f32 %v2094, %v3011
      %v3373 = vadd.f32 %v2097, %v3014
      %v3374 = vadd.f32 %v2100, %v3017
      %v3375 = vadd.f32 %v2103, %v3020
      %v3376 = vadd.f32 %v2106, %v3023
      %v3377 = vadd.f32 %v2109, %v3026
      %v3378 = vadd.f32 %v2112, %v3029
      %v3379 = vadd.f32 %v2115, %v3032
      %v3380 = vadd.f32 %v2118, %v3035
      %v3381 = vadd.f32 %v2121, %v3038
      %v3382 = vadd.f32 %v2124, %v3041
      %v3383 = vadd.f32 %v2127, %v3044
      %v3384 = vadd.f32 %v2130, %v3047
      %v3385 = vadd.f32 %v2133, %v3050
      %v3386 = vadd.f32 %v2136, %v3053
      %v3387 = vadd.f32 %v2139, %v3056
      %v3388 = vadd.f32 %v2142, %v3059
      %v3389 = vadd.f32 %v2145, %v3062
      %v3390 = vadd.f32 %v2148, %v3065
      %v3391 = vadd.f32 %v2151, %v3068
      %v3392 = vadd.f32 %v2154, %v3071
      %v3393 = vadd.f32 %v2157, %v3074
      %v3394 = vadd.f32 %v2160, %v3077
      %v3395 = vadd.f32 %v2163, %v3080
      %v3396 = vadd.f32 %v2166, %v3083
      %v3397 = vadd.f32 %v2169, %v3086
      %v3398 = vadd.f32 %v2172, %v3089
      %v3399 = vadd.f32 %v2175, %v3092
      %v3400 = vadd.f32 %v2178, %v3095
      %v3401 = vadd.f32 %v2181, %v3098
      %v3402 = vadd.f32 %v2184, %v3101
      %v3403 = vadd.f32 %v2187, %v3104
      %v3404 = vadd.f32 %v2190, %v3107
      %v3405 = vadd.f32 %v2193, %v3110
      %v3406 = vadd.f32 %v2196, %v3113
      %v3407 = vadd.f32 %v2199, %v3116
      %v3408 = vadd.f32 %v2202, %v3119
      %v3409 = vadd.f32 %v2205, %v3122
      %v3410 = vadd.f32 %v2208, %v3125
      %v3411 = vadd.f32 %v2211, %v3128
      %v3412 = vadd.f32 %v2214, %v3131
      %v3413 = vadd.f32 %v2217, %v3134
      %v3414 = vadd.f32 %v2220, %v3137
      %v3415 = vadd.f32 %v2223, %v3140
      %v3416 = vadd.f32 %v2226, %v3143
      %v3417 = vadd.f32 %v2229, %v3146
      %v3418 = vadd.f32 %v2232, %v3149
      %v3419 = vadd.f32 %v2235, %v3152
      %v3420 = vadd.f32 %v2238, %v3155
      %v3421 = vadd.f32 %v2241, %v3158
      %v3422 = vadd.f32 %v2244, %v3161
      %v3423 = vadd.f32 %v2247, %v3164
      %v3424 = vadd.f32 %v2250, %v3167
      %v3425 = vadd.f32 %v2253, %v3170
      %v3426 = vadd.f32 %v2256, %v3173
      %v3427 = vadd.f32 %v2259, %v3176
      %v3428 = vadd.f32 %v2262, %v3179
      %v3429 = vadd.f32 %v2265, %v3182
      %v3430 = vadd.f32 %v2268, %v3185
      %v3431 = vadd.f32 %v2271, %v3188
      %v3432 = vadd.f32 %v2274, %v3191
      %v3433 = vadd.f32 %v2277, %v3194
      %v3434 = vadd.f32 %v2280, %v3197
      %v3435 = vadd.f32 %v2283, %v3200
      %v3436 = vadd.f32 %v2286, %v3203
      %v3437 = vadd.f32 %v2289, %v3206
      %v3438 = vadd.f32 %v2292, %v3209
      %v3439 = vadd.f32 %v2295, %v3212
      %v3440 = vadd.f32 %v2298, %v3215
      %v3441 = vadd.f32 %v2301, %v3218
      %v3442 = vadd.f32 %v2304, %v3221
      %v3443 = vadd.f32 %v2307, %v3224
      %v3444 = vadd.f32 %v2310, %v3227
      %v3445 = vadd.f32 %v2313, %v3230
      %v3446 = vadd.f32 %v2316, %v3233
      %v3447 = vadd.f32 %v2319, %v3236
      %v3448 = vadd.f32 %v2322, %v3239
      %v3449 = vadd.f32 %v2325, %v3242
      %v3450 = vadd.f32 %v2328, %v3245
      %v3451 = vadd.f32 %v2331, %v3248
      %v3452 = vadd.f32 %v2334, %v3251
      %v3453 = vadd.f32 %v2337, %v3254
      %v3454 = vadd.f32 %v2340, %v3257
      %v3455 = vadd.f32 %v2343, %v3260
      %v3456 = vadd.f32 %v2346, %v3263
      %v3457 = vadd.f32 %v2349, %v3266
      %v3458 = vadd.f32 %v2352, %v3269
      %v3459 = vadd.f32 %v2355, %v3272
      %v3460 = vadd.f32 %v2358, %v3275
      %v3461 = vadd.f32 %v2361, %v3278
      %v3462 = vadd.f32 %v2364, %v3281
      %v3463 = vadd.f32 %v2367, %v3284
      %v3464 = vadd.f32 %v2370, %v3287
      %v3465 = vadd.f32 %v2373, %v3290
      %v3466 = vadd.f32 %v2376, %v3293
      %v3467 = vadd.f32 %v2379, %v3296
      %v3468 = vadd.f32 %v2382, %v3299
      %v3469 = vadd.f32 %v2385, %v3302
      %v3470 = vadd.f32 %v2388, %v3305
      %v3471 = vadd.f32 %v2391, %v3308
      %v3472 = vadd.f32 %v2394, %v3311
      %v3473 = vadd.f32 %v2397, %v3314
      %v3474 = vadd.f32 %v2400, %v3317
      %v3475 = vadd.f32 %v2403, %v3320
      %v3476 = vadd.f32 %v2406, %v3323
      %v3477 = vadd.f32 %v2409, %v3326
      %v3478 = vadd.f32 %v2412, %v3329
      %v3479 = vadd.f32 %v2415, %v3332
      %v3480 = vadd.f32 %v2418, %v3335
      %v3481 = vadd.f32 %v2421, %v3338
      %v3482 = vadd.f32 %v2424, %v3341
      %v3483 = vadd.f32 %v2427, %v3344
      %v3484 = vadd.f32 %v2430, %v3347
      %v3485 = vadd.f32 %v2433, %v3350
      %v3486 = vadd.f32 %v2436, %v3353
      %v3487 = vadd.f32 %v2439, %v3356
      %v3488 = vadd.f32 %v2442, %v3359
      %v3489 = vld [vmem:[%s2444 + $0x1] sm:$0xff]
      %v3490 = vld [vmem:[%s2444 + $0x9] sm:$0xff]
      %v3491 = vld [vmem:[%s2444 + $0x11] sm:$0xff]
      %v3492 = vld [vmem:[%s2444 + $0x19] sm:$0xff]
      %v3493 = vld [vmem:[%s2444 + $0x29] sm:$0xff]
      %v3494 = vld [vmem:[%s2444 + $0x31] sm:$0xff]
      %v3495 = vld [vmem:[%s2444 + $0x39] sm:$0xff]
      %v3496 = vld [vmem:[%s2444 + $0x41] sm:$0xff]
      %v3497 = vld [vmem:[%s2444 + $0x51] sm:$0xff]
      %v3498 = vld [vmem:[%s2444 + $0x59] sm:$0xff]
      %v3499 = vld [vmem:[%s2444 + $0x61] sm:$0xff]
      %v3500 = vld [vmem:[%s2444 + $0x69] sm:$0xff]
      %v3501 = vld [vmem:[%s2444 + $0x79] sm:$0xff]
      %v3502 = vld [vmem:[%s2444 + $0x81] sm:$0xff]
      %v3503 = vld [vmem:[%s2444 + $0x89] sm:$0xff]
      %v3504 = vld [vmem:[%s2444 + $0x91] sm:$0xff]
      %v3505 = vld [vmem:[%s2444 + $0xa1] sm:$0xff]
      %v3506 = vld [vmem:[%s2444 + $0xa9] sm:$0xff]
      %v3507 = vld [vmem:[%s2444 + $0xb1] sm:$0xff]
      %v3508 = vld [vmem:[%s2444 + $0xb9] sm:$0xff]
      %v3509 = vld [vmem:[%s2444 + $0xc9] sm:$0xff]
      %v3510 = vld [vmem:[%s2444 + $0xd1] sm:$0xff]
      %v3511 = vld [vmem:[%s2444 + $0xd9] sm:$0xff]
      %v3512 = vld [vmem:[%s2444 + $0xe1] sm:$0xff]
      %v3513 = vld [vmem:[%s2444 + $0xf1] sm:$0xff]
      %v3514 = vld [vmem:[%s2444 + $0xf9] sm:$0xff]
      %v3515 = vld [vmem:[%s2444 + $0x101] sm:$0xff]
      %v3516 = vld [vmem:[%s2444 + $0x109] sm:$0xff]
      %v3517 = vld [vmem:[%s2444 + $0x119] sm:$0xff]
      %v3518 = vld [vmem:[%s2444 + $0x121] sm:$0xff]
      %v3519 = vld [vmem:[%s2444 + $0x129] sm:$0xff]
      %v3520 = vld [vmem:[%s2444 + $0x131] sm:$0xff]
      %v3521 = vld [vmem:[%s2444 + $0x141] sm:$0xff]
      %v3522 = vld [vmem:[%s2444 + $0x149] sm:$0xff]
      %v3523 = vld [vmem:[%s2444 + $0x151] sm:$0xff]
      %v3524 = vld [vmem:[%s2444 + $0x159] sm:$0xff]
      %v3525 = vld [vmem:[%s2444 + $0x169] sm:$0xff]
      %v3526 = vld [vmem:[%s2444 + $0x171] sm:$0xff]
      %v3527 = vld [vmem:[%s2444 + $0x179] sm:$0xff]
      %v3528 = vld [vmem:[%s2444 + $0x181] sm:$0xff]
      %v3529 = vld [vmem:[%s2444 + $0x191] sm:$0xff]
      %v3530 = vld [vmem:[%s2444 + $0x199] sm:$0xff]
      %v3531 = vld [vmem:[%s2444 + $0x1a1] sm:$0xff]
      %v3532 = vld [vmem:[%s2444 + $0x1a9] sm:$0xff]
      %v3533 = vld [vmem:[%s2444 + $0x1b9] sm:$0xff]
      %v3534 = vld [vmem:[%s2444 + $0x1c1] sm:$0xff]
      %v3535 = vld [vmem:[%s2444 + $0x1c9] sm:$0xff]
      %v3536 = vld [vmem:[%s2444 + $0x1d1] sm:$0xff]
      %v3537 = vld [vmem:[%s2444 + $0x1e1] sm:$0xff]
      %v3538 = vld [vmem:[%s2444 + $0x1e9] sm:$0xff]
      %v3539 = vld [vmem:[%s2444 + $0x1f1] sm:$0xff]
      %v3540 = vld [vmem:[%s2444 + $0x1f9] sm:$0xff]
      %v3541 = vld [vmem:[%s2444 + $0x209] sm:$0xff]
      %v3542 = vld [vmem:[%s2444 + $0x211] sm:$0xff]
      %v3543 = vld [vmem:[%s2444 + $0x219] sm:$0xff]
      %v3544 = vld [vmem:[%s2444 + $0x221] sm:$0xff]
      %v3545 = vld [vmem:[%s2444 + $0x231] sm:$0xff]
      %v3546 = vld [vmem:[%s2444 + $0x239] sm:$0xff]
      %v3547 = vld [vmem:[%s2444 + $0x241] sm:$0xff]
      %v3548 = vld [vmem:[%s2444 + $0x249] sm:$0xff]
      %v3549 = vld [vmem:[%s2444 + $0x259] sm:$0xff]
      %v3550 = vld [vmem:[%s2444 + $0x261] sm:$0xff]
      %v3551 = vld [vmem:[%s2444 + $0x269] sm:$0xff]
      %v3552 = vld [vmem:[%s2444 + $0x271] sm:$0xff]
      %v3553 = vld [vmem:[%s2444 + $0x281] sm:$0xff]
      %v3554 = vld [vmem:[%s2444 + $0x289] sm:$0xff]
      %v3555 = vld [vmem:[%s2444 + $0x291] sm:$0xff]
      %v3556 = vld [vmem:[%s2444 + $0x299] sm:$0xff]
      %v3557 = vld [vmem:[%s2444 + $0x2a9] sm:$0xff]
      %v3558 = vld [vmem:[%s2444 + $0x2b1] sm:$0xff]
      %v3559 = vld [vmem:[%s2444 + $0x2b9] sm:$0xff]
      %v3560 = vld [vmem:[%s2444 + $0x2c1] sm:$0xff]
      %v3561 = vld [vmem:[%s2444 + $0x2d1] sm:$0xff]
      %v3562 = vld [vmem:[%s2444 + $0x2d9] sm:$0xff]
      %v3563 = vld [vmem:[%s2444 + $0x2e1] sm:$0xff]
      %v3564 = vld [vmem:[%s2444 + $0x2e9] sm:$0xff]
      %v3565 = vld [vmem:[%s2444 + $0x2f9] sm:$0xff]
      %v3566 = vld [vmem:[%s2444 + $0x301] sm:$0xff]
      %v3567 = vld [vmem:[%s2444 + $0x309] sm:$0xff]
      %v3568 = vld [vmem:[%s2444 + $0x311] sm:$0xff]
      %v3569 = vld [vmem:[%s2444 + $0x321] sm:$0xff]
      %v3570 = vld [vmem:[%s2444 + $0x329] sm:$0xff]
      %v3571 = vld [vmem:[%s2444 + $0x331] sm:$0xff]
      %v3572 = vld [vmem:[%s2444 + $0x339] sm:$0xff]
      %v3573 = vld [vmem:[%s2444 + $0x349] sm:$0xff]
      %v3574 = vld [vmem:[%s2444 + $0x351] sm:$0xff]
      %v3575 = vld [vmem:[%s2444 + $0x359] sm:$0xff]
      %v3576 = vld [vmem:[%s2444 + $0x361] sm:$0xff]
      %v3577 = vld [vmem:[%s2444 + $0x371] sm:$0xff]
      %v3578 = vld [vmem:[%s2444 + $0x379] sm:$0xff]
      %v3579 = vld [vmem:[%s2444 + $0x381] sm:$0xff]
      %v3580 = vld [vmem:[%s2444 + $0x389] sm:$0xff]
      %v3581 = vld [vmem:[%s2444 + $0x399] sm:$0xff]
      %v3582 = vld [vmem:[%s2444 + $0x3a1] sm:$0xff]
      %v3583 = vld [vmem:[%s2444 + $0x3a9] sm:$0xff]
      %v3584 = vld [vmem:[%s2444 + $0x3b1] sm:$0xff]
      %v3585 = vld [vmem:[%s2444 + $0x3c1] sm:$0xff]
      %v3586 = vld [vmem:[%s2444 + $0x3c9] sm:$0xff]
      %v3587 = vld [vmem:[%s2444 + $0x3d1] sm:$0xff]
      %v3588 = vld [vmem:[%s2444 + $0x3d9] sm:$0xff]
      %v3589 = vld [vmem:[%s2444 + $0x3e9] sm:$0xff]
      %v3590 = vld [vmem:[%s2444 + $0x3f1] sm:$0xff]
      %v3591 = vld [vmem:[%s2444 + $0x3f9] sm:$0xff]
      %v3592 = vld [vmem:[%s2444 + $0x401] sm:$0xff]
      %v3593 = vld [vmem:[%s2444 + $0x411] sm:$0xff]
      %v3594 = vld [vmem:[%s2444 + $0x419] sm:$0xff]
      %v3595 = vld [vmem:[%s2444 + $0x421] sm:$0xff]
      %v3596 = vld [vmem:[%s2444 + $0x429] sm:$0xff]
      %v3597 = vld [vmem:[%s2444 + $0x439] sm:$0xff]
      %v3598 = vld [vmem:[%s2444 + $0x441] sm:$0xff]
      %v3599 = vld [vmem:[%s2444 + $0x449] sm:$0xff]
      %v3600 = vld [vmem:[%s2444 + $0x451] sm:$0xff]
      %v3601 = vld [vmem:[%s2444 + $0x461] sm:$0xff]
      %v3602 = vld [vmem:[%s2444 + $0x469] sm:$0xff]
      %v3603 = vld [vmem:[%s2444 + $0x471] sm:$0xff]
      %v3604 = vld [vmem:[%s2444 + $0x479] sm:$0xff]
      %v3605 = vld [vmem:[%s2444 + $0x489] sm:$0xff]
      %v3606 = vld [vmem:[%s2444 + $0x491] sm:$0xff]
      %v3607 = vld [vmem:[%s2444 + $0x499] sm:$0xff]
      %v3608 = vld [vmem:[%s2444 + $0x4a1] sm:$0xff]
      %v3609 = vld [vmem:[%s2444 + $0x4b1] sm:$0xff]
      %v3610 = vld [vmem:[%s2444 + $0x4b9] sm:$0xff]
      %v3611 = vld [vmem:[%s2444 + $0x4c1] sm:$0xff]
      %v3612 = vld [vmem:[%s2444 + $0x4c9] sm:$0xff]
      %v3613 = vld [vmem:[%s2444 + $0x4d9] sm:$0xff]
      %v3614 = vld [vmem:[%s2444 + $0x4e1] sm:$0xff]
      %v3615 = vld [vmem:[%s2444 + $0x4e9] sm:$0xff]
      %v3616 = vld [vmem:[%s2444 + $0x4f1] sm:$0xff]
      %s3617 = scalar_lea.vmem %s2, 48
      %v3618 = vld [vmem:[%s3617] sm:$0xff]
      %v3619 = vld [vmem:[%s3617 + $0x8] sm:$0xff]
      %v3621 = vsel %vm352, %v3489, 0
      %v3624 = vsel %vm352, %v3490, 0
      %v3627 = vsel %vm352, %v3491, 0
      %v3630 = vsel %vm352, %v3492, 0
      %v3633 = vsel %vm352, %v3493, 0
      %v3636 = vsel %vm352, %v3494, 0
      %v3639 = vsel %vm352, %v3495, 0
      %v3642 = vsel %vm352, %v3496, 0
      %v3645 = vsel %vm352, %v3497, 0
      %v3648 = vsel %vm352, %v3498, 0
      %v3651 = vsel %vm352, %v3499, 0
      %v3654 = vsel %vm352, %v3500, 0
      %v3657 = vsel %vm352, %v3501, 0
      %v3660 = vsel %vm352, %v3502, 0
      %v3663 = vsel %vm352, %v3503, 0
      %v3666 = vsel %vm352, %v3504, 0
      %v3669 = vsel %vm352, %v3505, 0
      %v3672 = vsel %vm352, %v3506, 0
      %v3675 = vsel %vm352, %v3507, 0
      %v3678 = vsel %vm352, %v3508, 0
      %v3681 = vsel %vm352, %v3509, 0
      %v3684 = vsel %vm352, %v3510, 0
      %v3687 = vsel %vm352, %v3511, 0
      %v3690 = vsel %vm352, %v3512, 0
      %v3693 = vsel %vm352, %v3513, 0
      %v3696 = vsel %vm352, %v3514, 0
      %v3699 = vsel %vm352, %v3515, 0
      %v3702 = vsel %vm352, %v3516, 0
      %v3705 = vsel %vm352, %v3517, 0
      %v3708 = vsel %vm352, %v3518, 0
      %v3711 = vsel %vm352, %v3519, 0
      %v3714 = vsel %vm352, %v3520, 0
      %v3717 = vsel %vm352, %v3521, 0
      %v3720 = vsel %vm352, %v3522, 0
      %v3723 = vsel %vm352, %v3523, 0
      %v3726 = vsel %vm352, %v3524, 0
      %v3729 = vsel %vm352, %v3525, 0
      %v3732 = vsel %vm352, %v3526, 0
      %v3735 = vsel %vm352, %v3527, 0
      %v3738 = vsel %vm352, %v3528, 0
      %v3741 = vsel %vm352, %v3529, 0
      %v3744 = vsel %vm352, %v3530, 0
      %v3747 = vsel %vm352, %v3531, 0
      %v3750 = vsel %vm352, %v3532, 0
      %v3753 = vsel %vm352, %v3533, 0
      %v3756 = vsel %vm352, %v3534, 0
      %v3759 = vsel %vm352, %v3535, 0
      %v3762 = vsel %vm352, %v3536, 0
      %v3765 = vsel %vm352, %v3537, 0
      %v3768 = vsel %vm352, %v3538, 0
      %v3771 = vsel %vm352, %v3539, 0
      %v3774 = vsel %vm352, %v3540, 0
      %v3777 = vsel %vm352, %v3541, 0
      %v3780 = vsel %vm352, %v3542, 0
      %v3783 = vsel %vm352, %v3543, 0
      %v3786 = vsel %vm352, %v3544, 0
      %v3789 = vsel %vm352, %v3545, 0
      %v3792 = vsel %vm352, %v3546, 0
      %v3795 = vsel %vm352, %v3547, 0
      %v3798 = vsel %vm352, %v3548, 0
      %v3801 = vsel %vm352, %v3549, 0
      %v3804 = vsel %vm352, %v3550, 0
      %v3807 = vsel %vm352, %v3551, 0
      %v3810 = vsel %vm352, %v3552, 0
      %v3813 = vsel %vm352, %v3553, 0
      %v3816 = vsel %vm352, %v3554, 0
      %v3819 = vsel %vm352, %v3555, 0
      %v3822 = vsel %vm352, %v3556, 0
      %v3825 = vsel %vm352, %v3557, 0
      %v3828 = vsel %vm352, %v3558, 0
      %v3831 = vsel %vm352, %v3559, 0
      %v3834 = vsel %vm352, %v3560, 0
      %v3837 = vsel %vm352, %v3561, 0
      %v3840 = vsel %vm352, %v3562, 0
      %v3843 = vsel %vm352, %v3563, 0
      %v3846 = vsel %vm352, %v3564, 0
      %v3849 = vsel %vm352, %v3565, 0
      %v3852 = vsel %vm352, %v3566, 0
      %v3855 = vsel %vm352, %v3567, 0
      %v3858 = vsel %vm352, %v3568, 0
      %v3861 = vsel %vm352, %v3569, 0
      %v3864 = vsel %vm352, %v3570, 0
      %v3867 = vsel %vm352, %v3571, 0
      %v3870 = vsel %vm352, %v3572, 0
      %v3873 = vsel %vm352, %v3573, 0
      %v3876 = vsel %vm352, %v3574, 0
      %v3879 = vsel %vm352, %v3575, 0
      %v3882 = vsel %vm352, %v3576, 0
      %v3885 = vsel %vm352, %v3577, 0
      %v3888 = vsel %vm352, %v3578, 0
      %v3891 = vsel %vm352, %v3579, 0
      %v3894 = vsel %vm352, %v3580, 0
      %v3897 = vsel %vm352, %v3581, 0
      %v3900 = vsel %vm352, %v3582, 0
      %v3903 = vsel %vm352, %v3583, 0
      %v3906 = vsel %vm352, %v3584, 0
      %v3909 = vsel %vm352, %v3585, 0
      %v3912 = vsel %vm352, %v3586, 0
      %v3915 = vsel %vm352, %v3587, 0
      %v3918 = vsel %vm352, %v3588, 0
      %v3921 = vsel %vm352, %v3589, 0
      %v3924 = vsel %vm352, %v3590, 0
      %v3927 = vsel %vm352, %v3591, 0
      %v3930 = vsel %vm352, %v3592, 0
      %v3933 = vsel %vm352, %v3593, 0
      %v3936 = vsel %vm352, %v3594, 0
      %v3939 = vsel %vm352, %v3595, 0
      %v3942 = vsel %vm352, %v3596, 0
      %v3945 = vsel %vm352, %v3597, 0
      %v3948 = vsel %vm352, %v3598, 0
      %v3951 = vsel %vm352, %v3599, 0
      %v3954 = vsel %vm352, %v3600, 0
      %v3957 = vsel %vm352, %v3601, 0
      %v3960 = vsel %vm352, %v3602, 0
      %v3963 = vsel %vm352, %v3603, 0
      %v3966 = vsel %vm352, %v3604, 0
      %v3969 = vsel %vm352, %v3605, 0
      %v3972 = vsel %vm352, %v3606, 0
      %v3975 = vsel %vm352, %v3607, 0
      %v3978 = vsel %vm352, %v3608, 0
      %v3981 = vsel %vm352, %v3609, 0
      %v3984 = vsel %vm352, %v3610, 0
      %v3987 = vsel %vm352, %v3611, 0
      %v3990 = vsel %vm352, %v3612, 0
      %v3993 = vsel %vm352, %v3613, 0
      %v3996 = vsel %vm352, %v3614, 0
      %v3999 = vsel %vm352, %v3615, 0
      %v4002 = vsel %vm352, %v3616, 0
      %4004 = vmatpush.msra.mxu0 0.0
      %4005 = vmatpush.msra.mxu0 0.0
      %4006 = vmatpush.msra.mxu0 0.0
      %4007 = vmatpush.msra.mxu0 0.0
      %4008 = vmatpush.msra.mxu0 0.0
      %4009 = vmatpush.msra.mxu0 0.0
      %4010 = vmatpush.msra.mxu0 0.0
      %4011 = vmatpush.msra.mxu0 0.0
      %4012 = vmatpush.msra.mxu0 0.0
      %4013 = vmatpush.msra.mxu0 0.0
      %4014 = vmatpush.msra.mxu0 0.0
      %4015 = vmatpush.msra.mxu0 0.0
      %4016 = vmatpush.msra.mxu0 0.0
      %4017 = vmatpush.msra.mxu0 0.0
      %4018 = vmatpush.msra.mxu0 %v3619
      %4019 = vmatpush.msra.mxu0 %v3618
      %4020 = vmatmul.f32.gmra.mxu0 %v3621
      %v4021 = vpop.f32.mrf.mxu0
      %v4022 = vadd.f32 0.0, %v4021
      %4023 = vmatmul.f32.gmra.mxu0 %v3624
      %v4024 = vpop.f32.mrf.mxu0
      %v4025 = vadd.f32 0.0, %v4024
      %4026 = vmatmul.f32.gmra.mxu0 %v3627
      %v4027 = vpop.f32.mrf.mxu0
      %v4028 = vadd.f32 0.0, %v4027
      %4029 = vmatmul.f32.gmra.mxu0 %v3630
      %v4030 = vpop.f32.mrf.mxu0
      %v4031 = vadd.f32 0.0, %v4030
      %4032 = vmatmul.f32.gmra.mxu0 %v3633
      %v4033 = vpop.f32.mrf.mxu0
      %v4034 = vadd.f32 0.0, %v4033
      %4035 = vmatmul.f32.gmra.mxu0 %v3636
      %v4036 = vpop.f32.mrf.mxu0
      %v4037 = vadd.f32 0.0, %v4036
      %4038 = vmatmul.f32.gmra.mxu0 %v3639
      %v4039 = vpop.f32.mrf.mxu0
      %v4040 = vadd.f32 0.0, %v4039
      %4041 = vmatmul.f32.gmra.mxu0 %v3642
      %v4042 = vpop.f32.mrf.mxu0
      %v4043 = vadd.f32 0.0, %v4042
      %4044 = vmatmul.f32.gmra.mxu0 %v3645
      %v4045 = vpop.f32.mrf.mxu0
      %v4046 = vadd.f32 0.0, %v4045
      %4047 = vmatmul.f32.gmra.mxu0 %v3648
      %v4048 = vpop.f32.mrf.mxu0
      %v4049 = vadd.f32 0.0, %v4048
      %4050 = vmatmul.f32.gmra.mxu0 %v3651
      %v4051 = vpop.f32.mrf.mxu0
      %v4052 = vadd.f32 0.0, %v4051
      %4053 = vmatmul.f32.gmra.mxu0 %v3654
      %v4054 = vpop.f32.mrf.mxu0
      %v4055 = vadd.f32 0.0, %v4054
      %4056 = vmatmul.f32.gmra.mxu0 %v3657
      %v4057 = vpop.f32.mrf.mxu0
      %v4058 = vadd.f32 0.0, %v4057
      %4059 = vmatmul.f32.gmra.mxu0 %v3660
      %v4060 = vpop.f32.mrf.mxu0
      %v4061 = vadd.f32 0.0, %v4060
      %4062 = vmatmul.f32.gmra.mxu0 %v3663
      %v4063 = vpop.f32.mrf.mxu0
      %v4064 = vadd.f32 0.0, %v4063
      %4065 = vmatmul.f32.gmra.mxu0 %v3666
      %v4066 = vpop.f32.mrf.mxu0
      %v4067 = vadd.f32 0.0, %v4066
      %4068 = vmatmul.f32.gmra.mxu0 %v3669
      %v4069 = vpop.f32.mrf.mxu0
      %v4070 = vadd.f32 0.0, %v4069
      %4071 = vmatmul.f32.gmra.mxu0 %v3672
      %v4072 = vpop.f32.mrf.mxu0
      %v4073 = vadd.f32 0.0, %v4072
      %4074 = vmatmul.f32.gmra.mxu0 %v3675
      %v4075 = vpop.f32.mrf.mxu0
      %v4076 = vadd.f32 0.0, %v4075
      %4077 = vmatmul.f32.gmra.mxu0 %v3678
      %v4078 = vpop.f32.mrf.mxu0
      %v4079 = vadd.f32 0.0, %v4078
      %4080 = vmatmul.f32.gmra.mxu0 %v3681
      %v4081 = vpop.f32.mrf.mxu0
      %v4082 = vadd.f32 0.0, %v4081
      %4083 = vmatmul.f32.gmra.mxu0 %v3684
      %v4084 = vpop.f32.mrf.mxu0
      %v4085 = vadd.f32 0.0, %v4084
      %4086 = vmatmul.f32.gmra.mxu0 %v3687
      %v4087 = vpop.f32.mrf.mxu0
      %v4088 = vadd.f32 0.0, %v4087
      %4089 = vmatmul.f32.gmra.mxu0 %v3690
      %v4090 = vpop.f32.mrf.mxu0
      %v4091 = vadd.f32 0.0, %v4090
      %4092 = vmatmul.f32.gmra.mxu0 %v3693
      %v4093 = vpop.f32.mrf.mxu0
      %v4094 = vadd.f32 0.0, %v4093
      %4095 = vmatmul.f32.gmra.mxu0 %v3696
      %v4096 = vpop.f32.mrf.mxu0
      %v4097 = vadd.f32 0.0, %v4096
      %4098 = vmatmul.f32.gmra.mxu0 %v3699
      %v4099 = vpop.f32.mrf.mxu0
      %v4100 = vadd.f32 0.0, %v4099
      %4101 = vmatmul.f32.gmra.mxu0 %v3702
      %v4102 = vpop.f32.mrf.mxu0
      %v4103 = vadd.f32 0.0, %v4102
      %4104 = vmatmul.f32.gmra.mxu0 %v3705
      %v4105 = vpop.f32.mrf.mxu0
      %v4106 = vadd.f32 0.0, %v4105
      %4107 = vmatmul.f32.gmra.mxu0 %v3708
      %v4108 = vpop.f32.mrf.mxu0
      %v4109 = vadd.f32 0.0, %v4108
      %4110 = vmatmul.f32.gmra.mxu0 %v3711
      %v4111 = vpop.f32.mrf.mxu0
      %v4112 = vadd.f32 0.0, %v4111
      %4113 = vmatmul.f32.gmra.mxu0 %v3714
      %v4114 = vpop.f32.mrf.mxu0
      %v4115 = vadd.f32 0.0, %v4114
      %4116 = vmatmul.f32.gmra.mxu0 %v3717
      %v4117 = vpop.f32.mrf.mxu0
      %v4118 = vadd.f32 0.0, %v4117
      %4119 = vmatmul.f32.gmra.mxu0 %v3720
      %v4120 = vpop.f32.mrf.mxu0
      %v4121 = vadd.f32 0.0, %v4120
      %4122 = vmatmul.f32.gmra.mxu0 %v3723
      %v4123 = vpop.f32.mrf.mxu0
      %v4124 = vadd.f32 0.0, %v4123
      %4125 = vmatmul.f32.gmra.mxu0 %v3726
      %v4126 = vpop.f32.mrf.mxu0
      %v4127 = vadd.f32 0.0, %v4126
      %4128 = vmatmul.f32.gmra.mxu0 %v3729
      %v4129 = vpop.f32.mrf.mxu0
      %v4130 = vadd.f32 0.0, %v4129
      %4131 = vmatmul.f32.gmra.mxu0 %v3732
      %v4132 = vpop.f32.mrf.mxu0
      %v4133 = vadd.f32 0.0, %v4132
      %4134 = vmatmul.f32.gmra.mxu0 %v3735
      %v4135 = vpop.f32.mrf.mxu0
      %v4136 = vadd.f32 0.0, %v4135
      %4137 = vmatmul.f32.gmra.mxu0 %v3738
      %v4138 = vpop.f32.mrf.mxu0
      %v4139 = vadd.f32 0.0, %v4138
      %4140 = vmatmul.f32.gmra.mxu0 %v3741
      %v4141 = vpop.f32.mrf.mxu0
      %v4142 = vadd.f32 0.0, %v4141
      %4143 = vmatmul.f32.gmra.mxu0 %v3744
      %v4144 = vpop.f32.mrf.mxu0
      %v4145 = vadd.f32 0.0, %v4144
      %4146 = vmatmul.f32.gmra.mxu0 %v3747
      %v4147 = vpop.f32.mrf.mxu0
      %v4148 = vadd.f32 0.0, %v4147
      %4149 = vmatmul.f32.gmra.mxu0 %v3750
      %v4150 = vpop.f32.mrf.mxu0
      %v4151 = vadd.f32 0.0, %v4150
      %4152 = vmatmul.f32.gmra.mxu0 %v3753
      %v4153 = vpop.f32.mrf.mxu0
      %v4154 = vadd.f32 0.0, %v4153
      %4155 = vmatmul.f32.gmra.mxu0 %v3756
      %v4156 = vpop.f32.mrf.mxu0
      %v4157 = vadd.f32 0.0, %v4156
      %4158 = vmatmul.f32.gmra.mxu0 %v3759
      %v4159 = vpop.f32.mrf.mxu0
      %v4160 = vadd.f32 0.0, %v4159
      %4161 = vmatmul.f32.gmra.mxu0 %v3762
      %v4162 = vpop.f32.mrf.mxu0
      %v4163 = vadd.f32 0.0, %v4162
      %4164 = vmatmul.f32.gmra.mxu0 %v3765
      %v4165 = vpop.f32.mrf.mxu0
      %v4166 = vadd.f32 0.0, %v4165
      %4167 = vmatmul.f32.gmra.mxu0 %v3768
      %v4168 = vpop.f32.mrf.mxu0
      %v4169 = vadd.f32 0.0, %v4168
      %4170 = vmatmul.f32.gmra.mxu0 %v3771
      %v4171 = vpop.f32.mrf.mxu0
      %v4172 = vadd.f32 0.0, %v4171
      %4173 = vmatmul.f32.gmra.mxu0 %v3774
      %v4174 = vpop.f32.mrf.mxu0
      %v4175 = vadd.f32 0.0, %v4174
      %4176 = vmatmul.f32.gmra.mxu0 %v3777
      %v4177 = vpop.f32.mrf.mxu0
      %v4178 = vadd.f32 0.0, %v4177
      %4179 = vmatmul.f32.gmra.mxu0 %v3780
      %v4180 = vpop.f32.mrf.mxu0
      %v4181 = vadd.f32 0.0, %v4180
      %4182 = vmatmul.f32.gmra.mxu0 %v3783
      %v4183 = vpop.f32.mrf.mxu0
      %v4184 = vadd.f32 0.0, %v4183
      %4185 = vmatmul.f32.gmra.mxu0 %v3786
      %v4186 = vpop.f32.mrf.mxu0
      %v4187 = vadd.f32 0.0, %v4186
      %4188 = vmatmul.f32.gmra.mxu0 %v3789
      %v4189 = vpop.f32.mrf.mxu0
      %v4190 = vadd.f32 0.0, %v4189
      %4191 = vmatmul.f32.gmra.mxu0 %v3792
      %v4192 = vpop.f32.mrf.mxu0
      %v4193 = vadd.f32 0.0, %v4192
      %4194 = vmatmul.f32.gmra.mxu0 %v3795
      %v4195 = vpop.f32.mrf.mxu0
      %v4196 = vadd.f32 0.0, %v4195
      %4197 = vmatmul.f32.gmra.mxu0 %v3798
      %v4198 = vpop.f32.mrf.mxu0
      %v4199 = vadd.f32 0.0, %v4198
      %4200 = vmatmul.f32.gmra.mxu0 %v3801
      %v4201 = vpop.f32.mrf.mxu0
      %v4202 = vadd.f32 0.0, %v4201
      %4203 = vmatmul.f32.gmra.mxu0 %v3804
      %v4204 = vpop.f32.mrf.mxu0
      %v4205 = vadd.f32 0.0, %v4204
      %4206 = vmatmul.f32.gmra.mxu0 %v3807
      %v4207 = vpop.f32.mrf.mxu0
      %v4208 = vadd.f32 0.0, %v4207
      %4209 = vmatmul.f32.gmra.mxu0 %v3810
      %v4210 = vpop.f32.mrf.mxu0
      %v4211 = vadd.f32 0.0, %v4210
      %4212 = vmatmul.f32.gmra.mxu0 %v3813
      %v4213 = vpop.f32.mrf.mxu0
      %v4214 = vadd.f32 0.0, %v4213
      %4215 = vmatmul.f32.gmra.mxu0 %v3816
      %v4216 = vpop.f32.mrf.mxu0
      %v4217 = vadd.f32 0.0, %v4216
      %4218 = vmatmul.f32.gmra.mxu0 %v3819
      %v4219 = vpop.f32.mrf.mxu0
      %v4220 = vadd.f32 0.0, %v4219
      %4221 = vmatmul.f32.gmra.mxu0 %v3822
      %v4222 = vpop.f32.mrf.mxu0
      %v4223 = vadd.f32 0.0, %v4222
      %4224 = vmatmul.f32.gmra.mxu0 %v3825
      %v4225 = vpop.f32.mrf.mxu0
      %v4226 = vadd.f32 0.0, %v4225
      %4227 = vmatmul.f32.gmra.mxu0 %v3828
      %v4228 = vpop.f32.mrf.mxu0
      %v4229 = vadd.f32 0.0, %v4228
      %4230 = vmatmul.f32.gmra.mxu0 %v3831
      %v4231 = vpop.f32.mrf.mxu0
      %v4232 = vadd.f32 0.0, %v4231
      %4233 = vmatmul.f32.gmra.mxu0 %v3834
      %v4234 = vpop.f32.mrf.mxu0
      %v4235 = vadd.f32 0.0, %v4234
      %4236 = vmatmul.f32.gmra.mxu0 %v3837
      %v4237 = vpop.f32.mrf.mxu0
      %v4238 = vadd.f32 0.0, %v4237
      %4239 = vmatmul.f32.gmra.mxu0 %v3840
      %v4240 = vpop.f32.mrf.mxu0
      %v4241 = vadd.f32 0.0, %v4240
      %4242 = vmatmul.f32.gmra.mxu0 %v3843
      %v4243 = vpop.f32.mrf.mxu0
      %v4244 = vadd.f32 0.0, %v4243
      %4245 = vmatmul.f32.gmra.mxu0 %v3846
      %v4246 = vpop.f32.mrf.mxu0
      %v4247 = vadd.f32 0.0, %v4246
      %4248 = vmatmul.f32.gmra.mxu0 %v3849
      %v4249 = vpop.f32.mrf.mxu0
      %v4250 = vadd.f32 0.0, %v4249
      %4251 = vmatmul.f32.gmra.mxu0 %v3852
      %v4252 = vpop.f32.mrf.mxu0
      %v4253 = vadd.f32 0.0, %v4252
      %4254 = vmatmul.f32.gmra.mxu0 %v3855
      %v4255 = vpop.f32.mrf.mxu0
      %v4256 = vadd.f32 0.0, %v4255
      %4257 = vmatmul.f32.gmra.mxu0 %v3858
      %v4258 = vpop.f32.mrf.mxu0
      %v4259 = vadd.f32 0.0, %v4258
      %4260 = vmatmul.f32.gmra.mxu0 %v3861
      %v4261 = vpop.f32.mrf.mxu0
      %v4262 = vadd.f32 0.0, %v4261
      %4263 = vmatmul.f32.gmra.mxu0 %v3864
      %v4264 = vpop.f32.mrf.mxu0
      %v4265 = vadd.f32 0.0, %v4264
      %4266 = vmatmul.f32.gmra.mxu0 %v3867
      %v4267 = vpop.f32.mrf.mxu0
      %v4268 = vadd.f32 0.0, %v4267
      %4269 = vmatmul.f32.gmra.mxu0 %v3870
      %v4270 = vpop.f32.mrf.mxu0
      %v4271 = vadd.f32 0.0, %v4270
      %4272 = vmatmul.f32.gmra.mxu0 %v3873
      %v4273 = vpop.f32.mrf.mxu0
      %v4274 = vadd.f32 0.0, %v4273
      %4275 = vmatmul.f32.gmra.mxu0 %v3876
      %v4276 = vpop.f32.mrf.mxu0
      %v4277 = vadd.f32 0.0, %v4276
      %4278 = vmatmul.f32.gmra.mxu0 %v3879
      %v4279 = vpop.f32.mrf.mxu0
      %v4280 = vadd.f32 0.0, %v4279
      %4281 = vmatmul.f32.gmra.mxu0 %v3882
      %v4282 = vpop.f32.mrf.mxu0
      %v4283 = vadd.f32 0.0, %v4282
      %4284 = vmatmul.f32.gmra.mxu0 %v3885
      %v4285 = vpop.f32.mrf.mxu0
      %v4286 = vadd.f32 0.0, %v4285
      %4287 = vmatmul.f32.gmra.mxu0 %v3888
      %v4288 = vpop.f32.mrf.mxu0
      %v4289 = vadd.f32 0.0, %v4288
      %4290 = vmatmul.f32.gmra.mxu0 %v3891
      %v4291 = vpop.f32.mrf.mxu0
      %v4292 = vadd.f32 0.0, %v4291
      %4293 = vmatmul.f32.gmra.mxu0 %v3894
      %v4294 = vpop.f32.mrf.mxu0
      %v4295 = vadd.f32 0.0, %v4294
      %4296 = vmatmul.f32.gmra.mxu0 %v3897
      %v4297 = vpop.f32.mrf.mxu0
      %v4298 = vadd.f32 0.0, %v4297
      %4299 = vmatmul.f32.gmra.mxu0 %v3900
      %v4300 = vpop.f32.mrf.mxu0
      %v4301 = vadd.f32 0.0, %v4300
      %4302 = vmatmul.f32.gmra.mxu0 %v3903
      %v4303 = vpop.f32.mrf.mxu0
      %v4304 = vadd.f32 0.0, %v4303
      %4305 = vmatmul.f32.gmra.mxu0 %v3906
      %v4306 = vpop.f32.mrf.mxu0
      %v4307 = vadd.f32 0.0, %v4306
      %4308 = vmatmul.f32.gmra.mxu0 %v3909
      %v4309 = vpop.f32.mrf.mxu0
      %v4310 = vadd.f32 0.0, %v4309
      %4311 = vmatmul.f32.gmra.mxu0 %v3912
      %v4312 = vpop.f32.mrf.mxu0
      %v4313 = vadd.f32 0.0, %v4312
      %4314 = vmatmul.f32.gmra.mxu0 %v3915
      %v4315 = vpop.f32.mrf.mxu0
      %v4316 = vadd.f32 0.0, %v4315
      %4317 = vmatmul.f32.gmra.mxu0 %v3918
      %v4318 = vpop.f32.mrf.mxu0
      %v4319 = vadd.f32 0.0, %v4318
      %4320 = vmatmul.f32.gmra.mxu0 %v3921
      %v4321 = vpop.f32.mrf.mxu0
      %v4322 = vadd.f32 0.0, %v4321
      %4323 = vmatmul.f32.gmra.mxu0 %v3924
      %v4324 = vpop.f32.mrf.mxu0
      %v4325 = vadd.f32 0.0, %v4324
      %4326 = vmatmul.f32.gmra.mxu0 %v3927
      %v4327 = vpop.f32.mrf.mxu0
      %v4328 = vadd.f32 0.0, %v4327
      %4329 = vmatmul.f32.gmra.mxu0 %v3930
      %v4330 = vpop.f32.mrf.mxu0
      %v4331 = vadd.f32 0.0, %v4330
      %4332 = vmatmul.f32.gmra.mxu0 %v3933
      %v4333 = vpop.f32.mrf.mxu0
      %v4334 = vadd.f32 0.0, %v4333
      %4335 = vmatmul.f32.gmra.mxu0 %v3936
      %v4336 = vpop.f32.mrf.mxu0
      %v4337 = vadd.f32 0.0, %v4336
      %4338 = vmatmul.f32.gmra.mxu0 %v3939
      %v4339 = vpop.f32.mrf.mxu0
      %v4340 = vadd.f32 0.0, %v4339
      %4341 = vmatmul.f32.gmra.mxu0 %v3942
      %v4342 = vpop.f32.mrf.mxu0
      %v4343 = vadd.f32 0.0, %v4342
      %4344 = vmatmul.f32.gmra.mxu0 %v3945
      %v4345 = vpop.f32.mrf.mxu0
      %v4346 = vadd.f32 0.0, %v4345
      %4347 = vmatmul.f32.gmra.mxu0 %v3948
      %v4348 = vpop.f32.mrf.mxu0
      %v4349 = vadd.f32 0.0, %v4348
      %4350 = vmatmul.f32.gmra.mxu0 %v3951
      %v4351 = vpop.f32.mrf.mxu0
      %v4352 = vadd.f32 0.0, %v4351
      %4353 = vmatmul.f32.gmra.mxu0 %v3954
      %v4354 = vpop.f32.mrf.mxu0
      %v4355 = vadd.f32 0.0, %v4354
      %4356 = vmatmul.f32.gmra.mxu0 %v3957
      %v4357 = vpop.f32.mrf.mxu0
      %v4358 = vadd.f32 0.0, %v4357
      %4359 = vmatmul.f32.gmra.mxu0 %v3960
      %v4360 = vpop.f32.mrf.mxu0
      %v4361 = vadd.f32 0.0, %v4360
      %4362 = vmatmul.f32.gmra.mxu0 %v3963
      %v4363 = vpop.f32.mrf.mxu0
      %v4364 = vadd.f32 0.0, %v4363
      %4365 = vmatmul.f32.gmra.mxu0 %v3966
      %v4366 = vpop.f32.mrf.mxu0
      %v4367 = vadd.f32 0.0, %v4366
      %4368 = vmatmul.f32.gmra.mxu0 %v3969
      %v4369 = vpop.f32.mrf.mxu0
      %v4370 = vadd.f32 0.0, %v4369
      %4371 = vmatmul.f32.gmra.mxu0 %v3972
      %v4372 = vpop.f32.mrf.mxu0
      %v4373 = vadd.f32 0.0, %v4372
      %4374 = vmatmul.f32.gmra.mxu0 %v3975
      %v4375 = vpop.f32.mrf.mxu0
      %v4376 = vadd.f32 0.0, %v4375
      %4377 = vmatmul.f32.gmra.mxu0 %v3978
      %v4378 = vpop.f32.mrf.mxu0
      %v4379 = vadd.f32 0.0, %v4378
      %4380 = vmatmul.f32.gmra.mxu0 %v3981
      %v4381 = vpop.f32.mrf.mxu0
      %v4382 = vadd.f32 0.0, %v4381
      %4383 = vmatmul.f32.gmra.mxu0 %v3984
      %v4384 = vpop.f32.mrf.mxu0
      %v4385 = vadd.f32 0.0, %v4384
      %4386 = vmatmul.f32.gmra.mxu0 %v3987
      %v4387 = vpop.f32.mrf.mxu0
      %v4388 = vadd.f32 0.0, %v4387
      %4389 = vmatmul.f32.gmra.mxu0 %v3990
      %v4390 = vpop.f32.mrf.mxu0
      %v4391 = vadd.f32 0.0, %v4390
      %4392 = vmatmul.f32.gmra.mxu0 %v3993
      %v4393 = vpop.f32.mrf.mxu0
      %v4394 = vadd.f32 0.0, %v4393
      %4395 = vmatmul.f32.gmra.mxu0 %v3996
      %v4396 = vpop.f32.mrf.mxu0
      %v4397 = vadd.f32 0.0, %v4396
      %4398 = vmatmul.f32.gmra.mxu0 %v3999
      %v4399 = vpop.f32.mrf.mxu0
      %v4400 = vadd.f32 0.0, %v4399
      %4401 = vmatmul.f32.gmra.mxu0 %v4002
      %v4402 = vpop.f32.mrf.mxu0
      %v4403 = vadd.f32 0.0, %v4402
      %4404 = vdwg.mxu0
      %v4405 = vadd.f32 %v3361, %v4022
      %v4406 = vadd.f32 %v3362, %v4025
      %v4407 = vadd.f32 %v3363, %v4028
      %v4408 = vadd.f32 %v3364, %v4031
      %v4409 = vadd.f32 %v3365, %v4034
      %v4410 = vadd.f32 %v3366, %v4037
      %v4411 = vadd.f32 %v3367, %v4040
      %v4412 = vadd.f32 %v3368, %v4043
      %v4413 = vadd.f32 %v3369, %v4046
      %v4414 = vadd.f32 %v3370, %v4049
      %v4415 = vadd.f32 %v3371, %v4052
      %v4416 = vadd.f32 %v3372, %v4055
      %v4417 = vadd.f32 %v3373, %v4058
      %v4418 = vadd.f32 %v3374, %v4061
      %v4419 = vadd.f32 %v3375, %v4064
      %v4420 = vadd.f32 %v3376, %v4067
      %v4421 = vadd.f32 %v3377, %v4070
      %v4422 = vadd.f32 %v3378, %v4073
      %v4423 = vadd.f32 %v3379, %v4076
      %v4424 = vadd.f32 %v3380, %v4079
      %v4425 = vadd.f32 %v3381, %v4082
      %v4426 = vadd.f32 %v3382, %v4085
      %v4427 = vadd.f32 %v3383, %v4088
      %v4428 = vadd.f32 %v3384, %v4091
      %v4429 = vadd.f32 %v3385, %v4094
      %v4430 = vadd.f32 %v3386, %v4097
      %v4431 = vadd.f32 %v3387, %v4100
      %v4432 = vadd.f32 %v3388, %v4103
      %v4433 = vadd.f32 %v3389, %v4106
      %v4434 = vadd.f32 %v3390, %v4109
      %v4435 = vadd.f32 %v3391, %v4112
      %v4436 = vadd.f32 %v3392, %v4115
      %v4437 = vadd.f32 %v3393, %v4118
      %v4438 = vadd.f32 %v3394, %v4121
      %v4439 = vadd.f32 %v3395, %v4124
      %v4440 = vadd.f32 %v3396, %v4127
      %v4441 = vadd.f32 %v3397, %v4130
      %v4442 = vadd.f32 %v3398, %v4133
      %v4443 = vadd.f32 %v3399, %v4136
      %v4444 = vadd.f32 %v3400, %v4139
      %v4445 = vadd.f32 %v3401, %v4142
      %v4446 = vadd.f32 %v3402, %v4145
      %v4447 = vadd.f32 %v3403, %v4148
      %v4448 = vadd.f32 %v3404, %v4151
      %v4449 = vadd.f32 %v3405, %v4154
      %v4450 = vadd.f32 %v3406, %v4157
      %v4451 = vadd.f32 %v3407, %v4160
      %v4452 = vadd.f32 %v3408, %v4163
      %v4453 = vadd.f32 %v3409, %v4166
      %v4454 = vadd.f32 %v3410, %v4169
      %v4455 = vadd.f32 %v3411, %v4172
      %v4456 = vadd.f32 %v3412, %v4175
      %v4457 = vadd.f32 %v3413, %v4178
      %v4458 = vadd.f32 %v3414, %v4181
      %v4459 = vadd.f32 %v3415, %v4184
      %v4460 = vadd.f32 %v3416, %v4187
      %v4461 = vadd.f32 %v3417, %v4190
      %v4462 = vadd.f32 %v3418, %v4193
      %v4463 = vadd.f32 %v3419, %v4196
      %v4464 = vadd.f32 %v3420, %v4199
      %v4465 = vadd.f32 %v3421, %v4202
      %v4466 = vadd.f32 %v3422, %v4205
      %v4467 = vadd.f32 %v3423, %v4208
      %v4468 = vadd.f32 %v3424, %v4211
      %v4469 = vadd.f32 %v3425, %v4214
      %v4470 = vadd.f32 %v3426, %v4217
      %v4471 = vadd.f32 %v3427, %v4220
      %v4472 = vadd.f32 %v3428, %v4223
      %v4473 = vadd.f32 %v3429, %v4226
      %v4474 = vadd.f32 %v3430, %v4229
      %v4475 = vadd.f32 %v3431, %v4232
      %v4476 = vadd.f32 %v3432, %v4235
      %v4477 = vadd.f32 %v3433, %v4238
      %v4478 = vadd.f32 %v3434, %v4241
      %v4479 = vadd.f32 %v3435, %v4244
      %v4480 = vadd.f32 %v3436, %v4247
      %v4481 = vadd.f32 %v3437, %v4250
      %v4482 = vadd.f32 %v3438, %v4253
      %v4483 = vadd.f32 %v3439, %v4256
      %v4484 = vadd.f32 %v3440, %v4259
      %v4485 = vadd.f32 %v3441, %v4262
      %v4486 = vadd.f32 %v3442, %v4265
      %v4487 = vadd.f32 %v3443, %v4268
      %v4488 = vadd.f32 %v3444, %v4271
      %v4489 = vadd.f32 %v3445, %v4274
      %v4490 = vadd.f32 %v3446, %v4277
      %v4491 = vadd.f32 %v3447, %v4280
      %v4492 = vadd.f32 %v3448, %v4283
      %v4493 = vadd.f32 %v3449, %v4286
      %v4494 = vadd.f32 %v3450, %v4289
      %v4495 = vadd.f32 %v3451, %v4292
      %v4496 = vadd.f32 %v3452, %v4295
      %v4497 = vadd.f32 %v3453, %v4298
      %v4498 = vadd.f32 %v3454, %v4301
      %v4499 = vadd.f32 %v3455, %v4304
      %v4500 = vadd.f32 %v3456, %v4307
      %v4501 = vadd.f32 %v3457, %v4310
      %v4502 = vadd.f32 %v3458, %v4313
      %v4503 = vadd.f32 %v3459, %v4316
      %v4504 = vadd.f32 %v3460, %v4319
      %v4505 = vadd.f32 %v3461, %v4322
      %v4506 = vadd.f32 %v3462, %v4325
      %v4507 = vadd.f32 %v3463, %v4328
      %v4508 = vadd.f32 %v3464, %v4331
      %v4509 = vadd.f32 %v3465, %v4334
      %v4510 = vadd.f32 %v3466, %v4337
      %v4511 = vadd.f32 %v3467, %v4340
      %v4512 = vadd.f32 %v3468, %v4343
      %v4513 = vadd.f32 %v3469, %v4346
      %v4514 = vadd.f32 %v3470, %v4349
      %v4515 = vadd.f32 %v3471, %v4352
      %v4516 = vadd.f32 %v3472, %v4355
      %v4517 = vadd.f32 %v3473, %v4358
      %v4518 = vadd.f32 %v3474, %v4361
      %v4519 = vadd.f32 %v3475, %v4364
      %v4520 = vadd.f32 %v3476, %v4367
      %v4521 = vadd.f32 %v3477, %v4370
      %v4522 = vadd.f32 %v3478, %v4373
      %v4523 = vadd.f32 %v3479, %v4376
      %v4524 = vadd.f32 %v3480, %v4379
      %v4525 = vadd.f32 %v3481, %v4382
      %v4526 = vadd.f32 %v3482, %v4385
      %v4527 = vadd.f32 %v3483, %v4388
      %v4528 = vadd.f32 %v3484, %v4391
      %v4529 = vadd.f32 %v3485, %v4394
      %v4530 = vadd.f32 %v3486, %v4397
      %v4531 = vadd.f32 %v3487, %v4400
      %v4532 = vadd.f32 %v3488, %v4403
      %v4533 = vld [vmem:[%s3] sm:$0x1]
      %v4535 = vperm.slane %v4533, 0
      %v4537 = vadd.f32 %v4405, %v4535
      %v4538 = vadd.f32 %v4406, %v4535
      %v4539 = vadd.f32 %v4407, %v4535
      %v4540 = vadd.f32 %v4408, %v4535
      %v4541 = vadd.f32 %v4409, %v4535
      %v4542 = vadd.f32 %v4410, %v4535
      %v4543 = vadd.f32 %v4411, %v4535
      %v4544 = vadd.f32 %v4412, %v4535
      %v4545 = vadd.f32 %v4413, %v4535
      %v4546 = vadd.f32 %v4414, %v4535
      %v4547 = vadd.f32 %v4415, %v4535
      %v4548 = vadd.f32 %v4416, %v4535
      %v4549 = vadd.f32 %v4417, %v4535
      %v4550 = vadd.f32 %v4418, %v4535
      %v4551 = vadd.f32 %v4419, %v4535
      %v4552 = vadd.f32 %v4420, %v4535
      %v4553 = vadd.f32 %v4421, %v4535
      %v4554 = vadd.f32 %v4422, %v4535
      %v4555 = vadd.f32 %v4423, %v4535
      %v4556 = vadd.f32 %v4424, %v4535
      %v4557 = vadd.f32 %v4425, %v4535
      %v4558 = vadd.f32 %v4426, %v4535
      %v4559 = vadd.f32 %v4427, %v4535
      %v4560 = vadd.f32 %v4428, %v4535
      %v4561 = vadd.f32 %v4429, %v4535
      %v4562 = vadd.f32 %v4430, %v4535
      %v4563 = vadd.f32 %v4431, %v4535
      %v4564 = vadd.f32 %v4432, %v4535
      %v4565 = vadd.f32 %v4433, %v4535
      %v4566 = vadd.f32 %v4434, %v4535
      %v4567 = vadd.f32 %v4435, %v4535
      %v4568 = vadd.f32 %v4436, %v4535
      %v4569 = vadd.f32 %v4437, %v4535
      %v4570 = vadd.f32 %v4438, %v4535
      %v4571 = vadd.f32 %v4439, %v4535
      %v4572 = vadd.f32 %v4440, %v4535
      %v4573 = vadd.f32 %v4441, %v4535
      %v4574 = vadd.f32 %v4442, %v4535
      %v4575 = vadd.f32 %v4443, %v4535
      %v4576 = vadd.f32 %v4444, %v4535
      %v4577 = vadd.f32 %v4445, %v4535
      %v4578 = vadd.f32 %v4446, %v4535
      %v4579 = vadd.f32 %v4447, %v4535
      %v4580 = vadd.f32 %v4448, %v4535
      %v4581 = vadd.f32 %v4449, %v4535
      %v4582 = vadd.f32 %v4450, %v4535
      %v4583 = vadd.f32 %v4451, %v4535
      %v4584 = vadd.f32 %v4452, %v4535
      %v4585 = vadd.f32 %v4453, %v4535
      %v4586 = vadd.f32 %v4454, %v4535
      %v4587 = vadd.f32 %v4455, %v4535
      %v4588 = vadd.f32 %v4456, %v4535
      %v4589 = vadd.f32 %v4457, %v4535
      %v4590 = vadd.f32 %v4458, %v4535
      %v4591 = vadd.f32 %v4459, %v4535
      %v4592 = vadd.f32 %v4460, %v4535
      %v4593 = vadd.f32 %v4461, %v4535
      %v4594 = vadd.f32 %v4462, %v4535
      %v4595 = vadd.f32 %v4463, %v4535
      %v4596 = vadd.f32 %v4464, %v4535
      %v4597 = vadd.f32 %v4465, %v4535
      %v4598 = vadd.f32 %v4466, %v4535
      %v4599 = vadd.f32 %v4467, %v4535
      %v4600 = vadd.f32 %v4468, %v4535
      %v4601 = vadd.f32 %v4469, %v4535
      %v4602 = vadd.f32 %v4470, %v4535
      %v4603 = vadd.f32 %v4471, %v4535
      %v4604 = vadd.f32 %v4472, %v4535
      %v4605 = vadd.f32 %v4473, %v4535
      %v4606 = vadd.f32 %v4474, %v4535
      %v4607 = vadd.f32 %v4475, %v4535
      %v4608 = vadd.f32 %v4476, %v4535
      %v4609 = vadd.f32 %v4477, %v4535
      %v4610 = vadd.f32 %v4478, %v4535
      %v4611 = vadd.f32 %v4479, %v4535
      %v4612 = vadd.f32 %v4480, %v4535
      %v4613 = vadd.f32 %v4481, %v4535
      %v4614 = vadd.f32 %v4482, %v4535
      %v4615 = vadd.f32 %v4483, %v4535
      %v4616 = vadd.f32 %v4484, %v4535
      %v4617 = vadd.f32 %v4485, %v4535
      %v4618 = vadd.f32 %v4486, %v4535
      %v4619 = vadd.f32 %v4487, %v4535
      %v4620 = vadd.f32 %v4488, %v4535
      %v4621 = vadd.f32 %v4489, %v4535
      %v4622 = vadd.f32 %v4490, %v4535
      %v4623 = vadd.f32 %v4491, %v4535
      %v4624 = vadd.f32 %v4492, %v4535
      %v4625 = vadd.f32 %v4493, %v4535
      %v4626 = vadd.f32 %v4494, %v4535
      %v4627 = vadd.f32 %v4495, %v4535
      %v4628 = vadd.f32 %v4496, %v4535
      %v4629 = vadd.f32 %v4497, %v4535
      %v4630 = vadd.f32 %v4498, %v4535
      %v4631 = vadd.f32 %v4499, %v4535
      %v4632 = vadd.f32 %v4500, %v4535
      %v4633 = vadd.f32 %v4501, %v4535
      %v4634 = vadd.f32 %v4502, %v4535
      %v4635 = vadd.f32 %v4503, %v4535
      %v4636 = vadd.f32 %v4504, %v4535
      %v4637 = vadd.f32 %v4505, %v4535
      %v4638 = vadd.f32 %v4506, %v4535
      %v4639 = vadd.f32 %v4507, %v4535
      %v4640 = vadd.f32 %v4508, %v4535
      %v4641 = vadd.f32 %v4509, %v4535
      %v4642 = vadd.f32 %v4510, %v4535
      %v4643 = vadd.f32 %v4511, %v4535
      %v4644 = vadd.f32 %v4512, %v4535
      %v4645 = vadd.f32 %v4513, %v4535
      %v4646 = vadd.f32 %v4514, %v4535
      %v4647 = vadd.f32 %v4515, %v4535
      %v4648 = vadd.f32 %v4516, %v4535
      %v4649 = vadd.f32 %v4517, %v4535
      %v4650 = vadd.f32 %v4518, %v4535
      %v4651 = vadd.f32 %v4519, %v4535
      %v4652 = vadd.f32 %v4520, %v4535
      %v4653 = vadd.f32 %v4521, %v4535
      %v4654 = vadd.f32 %v4522, %v4535
      %v4655 = vadd.f32 %v4523, %v4535
      %v4656 = vadd.f32 %v4524, %v4535
      %v4657 = vadd.f32 %v4525, %v4535
      %v4658 = vadd.f32 %v4526, %v4535
      %v4659 = vadd.f32 %v4527, %v4535
      %v4660 = vadd.f32 %v4528, %v4535
      %v4661 = vadd.f32 %v4529, %v4535
      %v4662 = vadd.f32 %v4530, %v4535
      %v4663 = vadd.f32 %v4531, %v4535
      %v4664 = vadd.f32 %v4532, %v4535
      %vm4665 = vcmask 162816
      %4666 = vst.msk [vmem:[%s302] sm:$0xff] %vm4665, %v4537
      %4667 = vst.msk [vmem:[%s302 + $0x8] sm:$0xff] %vm4665, %v4538
      %4668 = vst.msk [vmem:[%s302 + $0x10] sm:$0xff] %vm4665, %v4539
      %4669 = vst.msk [vmem:[%s302 + $0x18] sm:$0xff] %vm4665, %v4540
      %4670 = vst.msk [vmem:[%s302 + $0x20] sm:$0xff] %vm4665, %v4541
      %4671 = vst.msk [vmem:[%s302 + $0x28] sm:$0xff] %vm4665, %v4542
      %4672 = vst.msk [vmem:[%s302 + $0x30] sm:$0xff] %vm4665, %v4543
      %4673 = vst.msk [vmem:[%s302 + $0x38] sm:$0xff] %vm4665, %v4544
      %4674 = vst.msk [vmem:[%s302 + $0x40] sm:$0xff] %vm4665, %v4545
      %4675 = vst.msk [vmem:[%s302 + $0x48] sm:$0xff] %vm4665, %v4546
      %4676 = vst.msk [vmem:[%s302 + $0x50] sm:$0xff] %vm4665, %v4547
      %4677 = vst.msk [vmem:[%s302 + $0x58] sm:$0xff] %vm4665, %v4548
      %4678 = vst.msk [vmem:[%s302 + $0x60] sm:$0xff] %vm4665, %v4549
      %4679 = vst.msk [vmem:[%s302 + $0x68] sm:$0xff] %vm4665, %v4550
      %4680 = vst.msk [vmem:[%s302 + $0x70] sm:$0xff] %vm4665, %v4551
      %4681 = vst.msk [vmem:[%s302 + $0x78] sm:$0xff] %vm4665, %v4552
      %4682 = vst.msk [vmem:[%s302 + $0x80] sm:$0xff] %vm4665, %v4553
      %4683 = vst.msk [vmem:[%s302 + $0x88] sm:$0xff] %vm4665, %v4554
      %4684 = vst.msk [vmem:[%s302 + $0x90] sm:$0xff] %vm4665, %v4555
      %4685 = vst.msk [vmem:[%s302 + $0x98] sm:$0xff] %vm4665, %v4556
      %4686 = vst.msk [vmem:[%s302 + $0xa0] sm:$0xff] %vm4665, %v4557
      %4687 = vst.msk [vmem:[%s302 + $0xa8] sm:$0xff] %vm4665, %v4558
      %4688 = vst.msk [vmem:[%s302 + $0xb0] sm:$0xff] %vm4665, %v4559
      %4689 = vst.msk [vmem:[%s302 + $0xb8] sm:$0xff] %vm4665, %v4560
      %4690 = vst.msk [vmem:[%s302 + $0xc0] sm:$0xff] %vm4665, %v4561
      %4691 = vst.msk [vmem:[%s302 + $0xc8] sm:$0xff] %vm4665, %v4562
      %4692 = vst.msk [vmem:[%s302 + $0xd0] sm:$0xff] %vm4665, %v4563
      %4693 = vst.msk [vmem:[%s302 + $0xd8] sm:$0xff] %vm4665, %v4564
      %4694 = vst.msk [vmem:[%s302 + $0xe0] sm:$0xff] %vm4665, %v4565
      %4695 = vst.msk [vmem:[%s302 + $0xe8] sm:$0xff] %vm4665, %v4566
      %4696 = vst.msk [vmem:[%s302 + $0xf0] sm:$0xff] %vm4665, %v4567
      %4697 = vst.msk [vmem:[%s302 + $0xf8] sm:$0xff] %vm4665, %v4568
      %4698 = vst.msk [vmem:[%s302 + $0x100] sm:$0xff] %vm4665, %v4569
      %4699 = vst.msk [vmem:[%s302 + $0x108] sm:$0xff] %vm4665, %v4570
      %4700 = vst.msk [vmem:[%s302 + $0x110] sm:$0xff] %vm4665, %v4571
      %4701 = vst.msk [vmem:[%s302 + $0x118] sm:$0xff] %vm4665, %v4572
      %4702 = vst.msk [vmem:[%s302 + $0x120] sm:$0xff] %vm4665, %v4573
      %4703 = vst.msk [vmem:[%s302 + $0x128] sm:$0xff] %vm4665, %v4574
      %4704 = vst.msk [vmem:[%s302 + $0x130] sm:$0xff] %vm4665, %v4575
      %4705 = vst.msk [vmem:[%s302 + $0x138] sm:$0xff] %vm4665, %v4576
      %4706 = vst.msk [vmem:[%s302 + $0x140] sm:$0xff] %vm4665, %v4577
      %4707 = vst.msk [vmem:[%s302 + $0x148] sm:$0xff] %vm4665, %v4578
      %4708 = vst.msk [vmem:[%s302 + $0x150] sm:$0xff] %vm4665, %v4579
      %4709 = vst.msk [vmem:[%s302 + $0x158] sm:$0xff] %vm4665, %v4580
      %4710 = vst.msk [vmem:[%s302 + $0x160] sm:$0xff] %vm4665, %v4581
      %4711 = vst.msk [vmem:[%s302 + $0x168] sm:$0xff] %vm4665, %v4582
      %4712 = vst.msk [vmem:[%s302 + $0x170] sm:$0xff] %vm4665, %v4583
      %4713 = vst.msk [vmem:[%s302 + $0x178] sm:$0xff] %vm4665, %v4584
      %4714 = vst.msk [vmem:[%s302 + $0x180] sm:$0xff] %vm4665, %v4585
      %4715 = vst.msk [vmem:[%s302 + $0x188] sm:$0xff] %vm4665, %v4586
      %4716 = vst.msk [vmem:[%s302 + $0x190] sm:$0xff] %vm4665, %v4587
      %4717 = vst.msk [vmem:[%s302 + $0x198] sm:$0xff] %vm4665, %v4588
      %4718 = vst.msk [vmem:[%s302 + $0x1a0] sm:$0xff] %vm4665, %v4589
      %4719 = vst.msk [vmem:[%s302 + $0x1a8] sm:$0xff] %vm4665, %v4590
      %4720 = vst.msk [vmem:[%s302 + $0x1b0] sm:$0xff] %vm4665, %v4591
      %4721 = vst.msk [vmem:[%s302 + $0x1b8] sm:$0xff] %vm4665, %v4592
      %4722 = vst.msk [vmem:[%s302 + $0x1c0] sm:$0xff] %vm4665, %v4593
      %4723 = vst.msk [vmem:[%s302 + $0x1c8] sm:$0xff] %vm4665, %v4594
      %4724 = vst.msk [vmem:[%s302 + $0x1d0] sm:$0xff] %vm4665, %v4595
      %4725 = vst.msk [vmem:[%s302 + $0x1d8] sm:$0xff] %vm4665, %v4596
      %4726 = vst.msk [vmem:[%s302 + $0x1e0] sm:$0xff] %vm4665, %v4597
      %4727 = vst.msk [vmem:[%s302 + $0x1e8] sm:$0xff] %vm4665, %v4598
      %4728 = vst.msk [vmem:[%s302 + $0x1f0] sm:$0xff] %vm4665, %v4599
      %4729 = vst.msk [vmem:[%s302 + $0x1f8] sm:$0xff] %vm4665, %v4600
      %4730 = vst.msk [vmem:[%s302 + $0x200] sm:$0xff] %vm4665, %v4601
      %4731 = vst.msk [vmem:[%s302 + $0x208] sm:$0xff] %vm4665, %v4602
      %4732 = vst.msk [vmem:[%s302 + $0x210] sm:$0xff] %vm4665, %v4603
      %4733 = vst.msk [vmem:[%s302 + $0x218] sm:$0xff] %vm4665, %v4604
      %4734 = vst.msk [vmem:[%s302 + $0x220] sm:$0xff] %vm4665, %v4605
      %4735 = vst.msk [vmem:[%s302 + $0x228] sm:$0xff] %vm4665, %v4606
      %4736 = vst.msk [vmem:[%s302 + $0x230] sm:$0xff] %vm4665, %v4607
      %4737 = vst.msk [vmem:[%s302 + $0x238] sm:$0xff] %vm4665, %v4608
      %4738 = vst.msk [vmem:[%s302 + $0x240] sm:$0xff] %vm4665, %v4609
      %4739 = vst.msk [vmem:[%s302 + $0x248] sm:$0xff] %vm4665, %v4610
      %4740 = vst.msk [vmem:[%s302 + $0x250] sm:$0xff] %vm4665, %v4611
      %4741 = vst.msk [vmem:[%s302 + $0x258] sm:$0xff] %vm4665, %v4612
      %4742 = vst.msk [vmem:[%s302 + $0x260] sm:$0xff] %vm4665, %v4613
      %4743 = vst.msk [vmem:[%s302 + $0x268] sm:$0xff] %vm4665, %v4614
      %4744 = vst.msk [vmem:[%s302 + $0x270] sm:$0xff] %vm4665, %v4615
      %4745 = vst.msk [vmem:[%s302 + $0x278] sm:$0xff] %vm4665, %v4616
      %4746 = vst.msk [vmem:[%s302 + $0x280] sm:$0xff] %vm4665, %v4617
      %4747 = vst.msk [vmem:[%s302 + $0x288] sm:$0xff] %vm4665, %v4618
      %4748 = vst.msk [vmem:[%s302 + $0x290] sm:$0xff] %vm4665, %v4619
      %4749 = vst.msk [vmem:[%s302 + $0x298] sm:$0xff] %vm4665, %v4620
      %4750 = vst.msk [vmem:[%s302 + $0x2a0] sm:$0xff] %vm4665, %v4621
      %4751 = vst.msk [vmem:[%s302 + $0x2a8] sm:$0xff] %vm4665, %v4622
      %4752 = vst.msk [vmem:[%s302 + $0x2b0] sm:$0xff] %vm4665, %v4623
      %4753 = vst.msk [vmem:[%s302 + $0x2b8] sm:$0xff] %vm4665, %v4624
      %4754 = vst.msk [vmem:[%s302 + $0x2c0] sm:$0xff] %vm4665, %v4625
      %4755 = vst.msk [vmem:[%s302 + $0x2c8] sm:$0xff] %vm4665, %v4626
      %4756 = vst.msk [vmem:[%s302 + $0x2d0] sm:$0xff] %vm4665, %v4627
      %4757 = vst.msk [vmem:[%s302 + $0x2d8] sm:$0xff] %vm4665, %v4628
      %4758 = vst.msk [vmem:[%s302 + $0x2e0] sm:$0xff] %vm4665, %v4629
      %4759 = vst.msk [vmem:[%s302 + $0x2e8] sm:$0xff] %vm4665, %v4630
      %4760 = vst.msk [vmem:[%s302 + $0x2f0] sm:$0xff] %vm4665, %v4631
      %4761 = vst.msk [vmem:[%s302 + $0x2f8] sm:$0xff] %vm4665, %v4632
      %4762 = vst.msk [vmem:[%s302 + $0x300] sm:$0xff] %vm4665, %v4633
      %4763 = vst.msk [vmem:[%s302 + $0x308] sm:$0xff] %vm4665, %v4634
      %4764 = vst.msk [vmem:[%s302 + $0x310] sm:$0xff] %vm4665, %v4635
      %4765 = vst.msk [vmem:[%s302 + $0x318] sm:$0xff] %vm4665, %v4636
      %4766 = vst.msk [vmem:[%s302 + $0x320] sm:$0xff] %vm4665, %v4637
      %4767 = vst.msk [vmem:[%s302 + $0x328] sm:$0xff] %vm4665, %v4638
      %4768 = vst.msk [vmem:[%s302 + $0x330] sm:$0xff] %vm4665, %v4639
      %4769 = vst.msk [vmem:[%s302 + $0x338] sm:$0xff] %vm4665, %v4640
      %4770 = vst.msk [vmem:[%s302 + $0x340] sm:$0xff] %vm4665, %v4641
      %4771 = vst.msk [vmem:[%s302 + $0x348] sm:$0xff] %vm4665, %v4642
      %4772 = vst.msk [vmem:[%s302 + $0x350] sm:$0xff] %vm4665, %v4643
      %4773 = vst.msk [vmem:[%s302 + $0x358] sm:$0xff] %vm4665, %v4644
      %4774 = vst.msk [vmem:[%s302 + $0x360] sm:$0xff] %vm4665, %v4645
      %4775 = vst.msk [vmem:[%s302 + $0x368] sm:$0xff] %vm4665, %v4646
      %4776 = vst.msk [vmem:[%s302 + $0x370] sm:$0xff] %vm4665, %v4647
      %4777 = vst.msk [vmem:[%s302 + $0x378] sm:$0xff] %vm4665, %v4648
      %4778 = vst.msk [vmem:[%s302 + $0x380] sm:$0xff] %vm4665, %v4649
      %4779 = vst.msk [vmem:[%s302 + $0x388] sm:$0xff] %vm4665, %v4650
      %4780 = vst.msk [vmem:[%s302 + $0x390] sm:$0xff] %vm4665, %v4651
      %4781 = vst.msk [vmem:[%s302 + $0x398] sm:$0xff] %vm4665, %v4652
      %4782 = vst.msk [vmem:[%s302 + $0x3a0] sm:$0xff] %vm4665, %v4653
      %4783 = vst.msk [vmem:[%s302 + $0x3a8] sm:$0xff] %vm4665, %v4654
      %4784 = vst.msk [vmem:[%s302 + $0x3b0] sm:$0xff] %vm4665, %v4655
      %4785 = vst.msk [vmem:[%s302 + $0x3b8] sm:$0xff] %vm4665, %v4656
      %4786 = vst.msk [vmem:[%s302 + $0x3c0] sm:$0xff] %vm4665, %v4657
      %4787 = vst.msk [vmem:[%s302 + $0x3c8] sm:$0xff] %vm4665, %v4658
      %4788 = vst.msk [vmem:[%s302 + $0x3d0] sm:$0xff] %vm4665, %v4659
      %4789 = vst.msk [vmem:[%s302 + $0x3d8] sm:$0xff] %vm4665, %v4660
      %4790 = vst.msk [vmem:[%s302 + $0x3e0] sm:$0xff] %vm4665, %v4661
      %4791 = vst.msk [vmem:[%s302 + $0x3e8] sm:$0xff] %vm4665, %v4662
      %4792 = vst.msk [vmem:[%s302 + $0x3f0] sm:$0xff] %vm4665, %v4663
      %4793 = vst.msk [vmem:[%s302 + $0x3f8] sm:$0xff] %vm4665, %v4664
      %s4794 = smul.u32 32, %s20
      %p4795 = scmp.lt.s32.totalorder %s19, 1
      %s4796 = scalar_select %p4795, %s19, 1
      %p4797 = scmp.lt.s32.totalorder %s4794, 31
      %s4798 = scalar_select %p4797, %s4794, 31
      %s4799 = smul.addr %s4798, 4
      %s4800 = smul.addr %s4796, 128
      %s4801 = sadd.s32 %s4799, %s4800
      %s4802 = smul.addr %s4801, 8
      %s4803 = scalar_lea.vmem %s4, %s4802
      // Predicated region
      $region37: #{_lambda_.7} parent=35 // pred_check
        %p4804 = pneg %p153
      $region38: #{_lambda_.7} parent=35 // pred_check_branch
        %4806 = sbr.rel (%p4804) target = $region40
      $region39: #{_lambda_.7} parent=35 // pred_region
        %s4807 = smul.u32 32, %s20
      $region40: #{_lambda_.7} parent=35 // pred_fallthru
        _
    $region36: #{_lambda_.7} parent=5 // pred_fallthru
      _
    %p4808 = scmp.le.s32.totalorder 2, %s10
    // Predicated region
    $region41: #{_lambda_.7} parent=5 // pred_check
      %p4809 = pneg %p4808
    $region42: #{_lambda_.7} parent=5 // pred_check_branch
      %4811 = sbr.rel (%p4809) target = $region44
    $region43: #{_lambda_.7} parent=5 // pred_region
      %s4812 = ssub.s32 %s10, 2
      // Predicated region
      $region45: #{_lambda_.7} parent=43 // pred_check
        %p4813 = pneg %p159
      $region46: #{_lambda_.7} parent=43 // pred_check_branch
        %4815 = sbr.rel (%p4813) target = $region48
      $region47: #{_lambda_.7} parent=43 // pred_region
        %s4816 = smul.u32 32, %s22
        %p4817 = scmp.lt.s32.totalorder %s21, 1
        %s4818 = scalar_select %p4817, %s21, 1
        %p4819 = scmp.lt.s32.totalorder %s4816, 31
        %s4820 = scalar_select %p4819, %s4816, 31
        %s4821 = smul.addr %s4820, 4
        %s4822 = smul.addr %s4818, 128
        %s4823 = sadd.s32 %s4821, %s4822
        %s4824 = smul.addr %s4823, 8
        %s4825 = scalar_lea.vmem %s4, %s4824
      $region48: #{_lambda_.7} parent=43 // pred_fallthru
        _
    $region44: #{_lambda_.7} parent=5 // pred_fallthru
      _
  $region6: #{_lambda_.7} parent=0 // loop_footer
    %s14 = sadd.s32 1, %s10
  $region7: #{_lambda_.7} parent=0 // loop_footer_branch
    %9 = sbr.rel target = $region3
  $region8: #{_lambda_.7} parent=0 // loop_exit
    _

</llo_original>
